<compile_context>
chip_gen: v5e
topology: v5e:2x2
jax: 0.10.0
libtpu: 0.0.40
codegen_flags: <defaults>
</compile_context>

<pallas_src>
import math
from functools import partial

import jax
import jax.numpy as jnp
from jax.experimental import pallas as pl
from jax.experimental.pallas import tpu as pltpu

EPS = 1e-6                          # LayerNorm3d eps
INV_SQRT2 = 1.0 / math.sqrt(2.0)
MATMUL_DTYPE = jnp.bfloat16         # MXU operand dtype (accumulation stays f32)
INTERMEDIATE_DTYPE = jnp.bfloat16   # HBM dtype of the upsampled intermediate


# --------------------------------------------------------------- tiling helpers
def _largest_divisor(n, cap):
    best = 1
    for t in range(1, n + 1):
        if n % t == 0 and t <= cap:
            best = t
    return best


def _pick_td(nd, hw, row_cap=1024, min_steps=2):
    """# of (n, d) slabs per kernel-1 step: big tiles, >=2 steps only when free."""
    td = _largest_divisor(nd, max(1, row_cap // hw))
    if nd // td < min_steps:
        for t in range(td - 1, 0, -1):
            if nd % t == 0 and nd // t >= min_steps:
                td = t
                break
    return td


# ---- kernel 1: ConvTranspose3d(k=stride=2) + LN1 + GELU + Conv1x1 + LN2 (fused),
# ----           writing the stride-2 interleaved layout directly.
def _fused_upsample_kernel(x_ref, wfull_ref, avg_ref, w1bd_ref, vecs_ref, o_ref,
                           *, td, h, w, cout):
    vecs = vecs_ref[...]                                   # (6, 8*C) f32
    b_ct, g1, be1, b1, g2, be2 = (vecs[i:i + 1, :] for i in range(6))
    avgm = avg_ref[...]                                    # (8*C, 8*C) block averaging

    # ConvTranspose3d: all 8 kernel positions in one lane-dense matmul.
    y = jnp.dot(x_ref[...], wfull_ref[...],
                preferred_element_type=jnp.float32) + b_ct          # (tm, 8*C) f32

    # LayerNorm3d over each 16-channel group via block-diagonal averaging matmuls.
    # E[x] and E[x^2] are independent (no mu -> d -> var serialization).
    mu = jnp.dot(y.astype(avgm.dtype), avgm, preferred_element_type=jnp.float32)
    ex2 = jnp.dot((y * y).astype(avgm.dtype), avgm, preferred_element_type=jnp.float32)
    var = jnp.maximum(ex2 - mu * mu, 0.0)
    y = (y - mu) * jax.lax.rsqrt(var + EPS) * g1 + be1

    # exact-erf GELU (nn.GELU default)
    y = 0.5 * y * (1.0 + jax.lax.erf(y * INV_SQRT2))

    # Conv3d 1x1x1 as block-diagonal kron(I_8, w1).
    y = jnp.dot(y.astype(w1bd_ref.dtype), w1bd_ref[...],
                preferred_element_type=jnp.float32) + b1

    # second LayerNorm3d
    mu2 = jnp.dot(y.astype(avgm.dtype), avgm, preferred_element_type=jnp.float32)
    ex22 = jnp.dot((y * y).astype(avgm.dtype), avgm, preferred_element_type=jnp.float32)
    var2 = jnp.maximum(ex22 - mu2 * mu2, 0.0)
    y = (y - mu2) * jax.lax.rsqrt(var2 + EPS) * g2 + be2            # (tm, 8*C) f32

    # Store straight into the stride-2 interleaved layout (no XLA relayout):
    # for fixed (kd, kh), the 32 contiguous lanes are ordered (kw, c), which is exactly
    # the interleaved ((2w+kw), c) order once w is split back out of the row dim.
    two_c = 2 * cout
    for kd in range(2):
        for kh in range(2):
            s = (kd * 2 + kh) * two_c
            blk = y[:, s:s + two_c].reshape(td, h, w, two_c)
            o_ref[:, kd, :, kh, :, :] = blk.astype(o_ref.dtype)


def fused_upsample(x2d, wfull, avg, w1bd, vecs, *, nd, h, w, cout, out_dtype):
    hw = h * w
    cin = x2d.shape[1]
    k8 = 8 * cout
    td = _pick_td(nd, hw)
    tm = td * hw
    return pl.pallas_call(
        partial(_fused_upsample_kernel, td=td, h=h, w=w, cout=cout),
        out_shape=jax.ShapeDtypeStruct((nd, 2, h, 2, w, 2 * cout), out_dtype),
        grid_spec=pltpu.PrefetchScalarGridSpec(
            num_scalar_prefetch=0,
            grid=(nd // td,),
            in_specs=[
                pl.BlockSpec((tm, cin), lambda i: (i, 0)),
                pl.BlockSpec((cin, k8), lambda i: (0, 0)),
                pl.BlockSpec((k8, k8), lambda i: (0, 0)),
                pl.BlockSpec((k8, k8), lambda i: (0, 0)),
                pl.BlockSpec((6, k8), lambda i: (0, 0)),
            ],
            out_specs=pl.BlockSpec((td, 2, h, 2, w, 2 * cout),
                                   lambda i: (i, 0, 0, 0, 0, 0)),
        ),
        compiler_params=pltpu.CompilerParams(
            dimension_semantics=("parallel",),
            vmem_limit_bytes=32 * 1024 * 1024),
    )(x2d, wfull, avg, w1bd, vecs)


# ---- kernel 2: Conv3d 3x3x3 (pad=1).  Activation fetched once per batch element,
# ----           D/H zero padding built in a persistent VMEM scratch, W padding folded
# ----           into banded weights; td3 output D-planes per step -> tall matmuls.
def _conv3x3x3_kernel(x_ref, wb_ref, b_ref, o_ref, xpad_ref, *, td3, d2, h2, w2c):
    j = pl.program_id(1)

    @pl.when(j == 0)
    def _():
        xpad_ref[...] = jnp.zeros_like(xpad_ref)
        xpad_ref[pl.ds(1, d2), pl.ds(1, h2), :] = x_ref[0]

    d0 = j * td3
    acc = jnp.zeros((td3 * h2, w2c), jnp.float32)
    for kd in range(3):
        for kh in range(3):
            lhs = xpad_ref[pl.ds(d0 + kd, td3), pl.ds(kh, h2), :]   # (td3, H2, W2*C)
            acc = acc + jnp.dot(lhs.reshape(td3 * h2, w2c), wb_ref[kd, kh],
                                preferred_element_type=jnp.float32)
    acc = acc + b_ref[...]
    o_ref[0] = acc.reshape(td3, h2, w2c)


def conv3x3x3(y, wband, b3t):
    n, d2, h2, w2c = y.shape
    td3 = _largest_divisor(d2, max(1, 512 // h2))
    return pl.pallas_call(
        partial(_conv3x3x3_kernel, td3=td3, d2=d2, h2=h2, w2c=w2c),
        out_shape=jax.ShapeDtypeStruct((n, d2, h2, w2c), jnp.float32),
        grid_spec=pltpu.PrefetchScalarGridSpec(
            num_scalar_prefetch=0,
            grid=(n, d2 // td3),
            in_specs=[
                pl.BlockSpec((1, d2, h2, w2c), lambda i, j: (i, 0, 0, 0)),
                pl.BlockSpec((3, 3, w2c, w2c), lambda i, j: (0, 0, 0, 0)),
                pl.BlockSpec((1, w2c), lambda i, j: (0, 0)),
            ],
            out_specs=pl.BlockSpec((1, td3, h2, w2c), lambda i, j: (i, j, 0, 0)),
            scratch_shapes=[pltpu.VMEM((d2 + 2, h2 + 2, w2c), y.dtype)],
        ),
        compiler_params=pltpu.CompilerParams(
            dimension_semantics=("parallel", "arbitrary"),
            vmem_limit_bytes=48 * 1024 * 1024),
    )(y, wband, b3t)


# ------------------------------------------------------ operand preparation
def _prepare_fused_operands(params, cout):
    eye8 = jnp.eye(8, dtype=jnp.float32)
    avg = jnp.kron(eye8, jnp.full((cout, cout), 1.0 / cout, jnp.float32))
    w1bd = jnp.kron(eye8, params["w1"])
    tile8 = lambda v: jnp.tile(v.reshape(-1), 8)
    vecs = jnp.stack([tile8(params["ct_bias"]), tile8(params["ln1_g"]),
                      tile8(params["ln1_b"]), tile8(params["b1"]),
                      tile8(params["ln2_g"]), tile8(params["ln2_b"])], axis=0)
    return (params["ct_w2d"].astype(MATMUL_DTYPE), avg.astype(MATMUL_DTYPE),
            w1bd.astype(MATMUL_DTYPE), vecs)


def _prepare_conv3_operands(params, cout, w2):
    # W padding is absorbed here: eye(W2, W2, k=1-kw) drops out-of-range taps.
    w3 = params["w3"].reshape(3, 3, 3, cout, cout)           # (kd, kh, kw, ci, co)
    rows = []
    for kd in range(3):
        cols = []
        for kh in range(3):
            band = jnp.zeros((w2 * cout, w2 * cout), jnp.float32)
            for kw in range(3):
                band = band + jnp.kron(
                    jnp.eye(w2, w2, k=1 - kw, dtype=jnp.float32), w3[kd, kh, kw])
            cols.append(band)
        rows.append(jnp.stack(cols))
    wband = jnp.stack(rows).astype(MATMUL_DTYPE)              # (3, 3, W2*C, W2*C)
    b3t = jnp.tile(params["b3"].reshape(-1), w2).reshape(1, w2 * cout)
    return wband, b3t


# ------------------------------------------------------------------ full forward
def decoder_map_forward(x_nchw, params):
    n, cin, d, h, w = x_nchw.shape
    cout = params["ct_bias"].shape[-1]
    d2, h2, w2 = 2 * d, 2 * h, 2 * w
    nd = n * d

    # NCDHW -> channels-last voxels; the only XLA relayout of an activation
    # (the input has 8x fewer voxels than the upsampled intermediate).
    x2d = jnp.transpose(x_nchw, (0, 2, 3, 4, 1)).reshape(nd * h * w, cin)
    x2d = x2d.astype(MATMUL_DTYPE)

    wfull, avg, w1bd, vecs = _prepare_fused_operands(params, cout)
    # Kernel 1 output (N*D, 2, H, 2, W, 2C) is row-major identical to (N, D2, H2, W2*C).
    y = fused_upsample(x2d, wfull, avg, w1bd, vecs, nd=nd, h=h, w=w, cout=cout,
                       out_dtype=INTERMEDIATE_DTYPE)
    y = y.reshape(n, d2, h2, w2 * cout)          # free reshape (contiguous dim merge)

    wband, b3t = _prepare_conv3_operands(params, cout, w2)
    out = conv3x3x3(y, wband, b3t)               # (N, D2, H2, W2*C) f32
    out = out.reshape(n, d2, h2, w2, cout)
    return jnp.transpose(out, (0, 4, 1, 2, 3))   # -> NCDHW


# --------------------------------------------------------- parameter init
def init_params(key, in_planes, out_planes):
    ks = jax.random.split(key, 10)
    # ConvTranspose3d weight, torch layout (Cin, Cout, 2, 2, 2)
    ct_w = 0.05 * jax.random.normal(ks[0], (in_planes, out_planes, 2, 2, 2), jnp.float32)
    ct_w2d = jnp.transpose(ct_w, (0, 2, 3, 4, 1)).reshape(in_planes, 8 * out_planes)
    ct_b = 0.05 * jax.random.normal(ks[1], (1, out_planes), jnp.float32)
    ln1_g = 1.0 + 0.1 * jax.random.normal(ks[2], (1, out_planes), jnp.float32)
    ln1_b = 0.1 * jax.random.normal(ks[3], (1, out_planes), jnp.float32)
    # Conv3d 1x1x1 weight, torch layout (Cout, Cin, 1, 1, 1) -> (in, out)
    w1t = 0.05 * jax.random.normal(ks[4], (out_planes, out_planes, 1, 1, 1), jnp.float32)
    w1 = jnp.transpose(w1t[:, :, 0, 0, 0], (1, 0))
    b1 = 0.05 * jax.random.normal(ks[5], (1, out_planes), jnp.float32)
    ln2_g = 1.0 + 0.1 * jax.random.normal(ks[6], (1, out_planes), jnp.float32)
    ln2_b = 0.1 * jax.random.normal(ks[7], (1, out_planes), jnp.float32)
    # Conv3d 3x3x3 weight, torch layout (Cout, Cin, 3, 3, 3) -> (kd,kh,kw,ci,co)
    w3t = 0.05 * jax.random.normal(ks[8], (out_planes, out_planes, 3, 3, 3), jnp.float32)
    w3 = jnp.transpose(w3t, (2, 3, 4, 1, 0)).reshape(27, out_planes, out_planes)
    b3 = 0.05 * jax.random.normal(ks[9], (1, out_planes), jnp.float32)
    return dict(ct_w2d=ct_w2d, ct_bias=ct_b, ln1_g=ln1_g, ln1_b=ln1_b,
                w1=w1, b1=b1, ln2_g=ln2_g, ln2_b=ln2_b, w3=w3, b3=b3)


# ---------------------------------------------------- pure-JAX reference
def _ln_lastdim(y, g, b):
    u = jnp.mean(y, axis=-1, keepdims=True)
    d = y - u
    v = jnp.mean(d * d, axis=-1, keepdims=True)
    return d * jax.lax.rsqrt(v + EPS) * g + b


def reference_forward(x_nchw, params, in_planes, out_planes):
    HI = jax.lax.Precision.HIGHEST
    x = jnp.transpose(x_nchw, (0, 2, 3, 4, 1))
    N, D, H, W, _ = x.shape
    wt = params["ct_w2d"].reshape(in_planes, 2, 2, 2, out_planes)
    y = jnp.einsum("ndhwc,cijko->ndhwijko", x, wt, precision=HI)
    y = y + params["ct_bias"].reshape(-1)
    y = jnp.transpose(y, (0, 1, 4, 2, 5, 3, 6, 7)).reshape(N, 2 * D, 2 * H, 2 * W, out_planes)
    y = _ln_lastdim(y, params["ln1_g"].reshape(-1), params["ln1_b"].reshape(-1))
    y = 0.5 * y * (1.0 + jax.lax.erf(y * INV_SQRT2))
    y = jnp.einsum("ndhwc,co->ndhwo", y, params["w1"], precision=HI) + params["b1"].reshape(-1)
    y = _ln_lastdim(y, params["ln2_g"].reshape(-1), params["ln2_b"].reshape(-1))
    D2, H2, W2 = 2 * D, 2 * H, 2 * W
    xp = jnp.pad(y, ((0, 0), (1, 1), (1, 1), (1, 1), (0, 0)))
    out = jnp.zeros((N, D2, H2, W2, out_planes), jnp.float32) + params["b3"].reshape(-1)
    k = 0
    for kd in range(3):
        for kh in range(3):
            for kw in range(3):
                out = out + jnp.einsum("ndhwc,co->ndhwo",
                                       xp[:, kd:kd + D2, kh:kh + H2, kw:kw + W2, :],
                                       params["w3"][k], precision=HI)
                k += 1
    return jnp.transpose(out, (0, 4, 1, 2, 3))


# ------------------------------------------------------------------ main
if __name__ == "__main__":
    in_planes, out_planes = 32, 16
    input_size = (4, 8, 8)           # (D, H, W) of the encoder feature map
    output_size = (8, 16, 16)        # ConvTranspose k=stride=2, pool=Identity
    N = 2

    key = jax.random.PRNGKey(0)
    kx, kp = jax.random.split(key)
    x = jax.random.normal(kx, (N, in_planes) + input_size, jnp.float32)
    params = init_params(kp, in_planes, out_planes)

    fwd = jax.jit(decoder_map_forward)
    out = jax.block_until_ready(fwd(x, params))

    assert out.shape == (N, out_planes) + output_size, out.shape
    ref = reference_forward(x, params, in_planes, out_planes)
    # Tolerance accounts for bf16 MXU operands + bf16 HBM intermediate (accumulation,
    # LN statistics and elementwise math stay f32) vs the HIGHEST-precision f32
    # reference; output magnitudes are O(4), so this is ~1% relative.
    max_err = float(jnp.max(jnp.abs(out - ref)))
    assert max_err < 5e-2, f"mismatch vs reference: {max_err}"

    print("KERNEL_OK")
</pallas_src>

<mosaic_0001>
module attributes {stable_mosaic.version = 11 : i64} {
  func.func @_fused_upsample_kernel(%arg0: i32, %arg1: memref<256x32xbf16, #tpu.memory_space<vmem>>, %arg2: memref<32x128xbf16, #tpu.memory_space<vmem>>, %arg3: memref<128x128xbf16, #tpu.memory_space<vmem>>, %arg4: memref<128x128xbf16, #tpu.memory_space<vmem>>, %arg5: memref<6x128xf32, #tpu.memory_space<vmem>>, %arg6: memref<4x2x8x2x8x32xbf16, #tpu.memory_space<vmem>>) attributes {dimension_semantics = [#tpu.dimension_semantics<parallel>], iteration_bounds = array<i64: 2>, scalar_prefetch = 0 : i64, scratch_operands = 0 : i64, tpu.core_type = #tpu.core_type<tc>, window_params = [{transform_indices = @transform_0, window_bounds = array<i64: 256, 32>}, {pipeline_mode = #tpu.pipeline_mode<synchronous>, transform_indices = @transform_1, window_bounds = array<i64: 32, 128>}, {pipeline_mode = #tpu.pipeline_mode<synchronous>, transform_indices = @transform_2, window_bounds = array<i64: 128, 128>}, {pipeline_mode = #tpu.pipeline_mode<synchronous>, transform_indices = @transform_3, window_bounds = array<i64: 128, 128>}, {pipeline_mode = #tpu.pipeline_mode<synchronous>, transform_indices = @transform_4, window_bounds = array<i64: 6, 128>}, {transform_indices = @transform_5, window_bounds = array<i64: 4, 2, 8, 2, 8, 32>}]} {
    %c0 = arith.constant 0 : index
    %c0_0 = arith.constant 0 : index
    %0 = vector.load %arg5[%c0, %c0_0] : memref<6x128xf32, #tpu.memory_space<vmem>>, vector<6x128xf32>
    %1 = vector.extract_strided_slice %0 {offsets = [0, 0], sizes = [1, 128], strides = [1, 1]} : vector<6x128xf32> to vector<1x128xf32>
    %2 = vector.extract_strided_slice %0 {offsets = [1, 0], sizes = [1, 128], strides = [1, 1]} : vector<6x128xf32> to vector<1x128xf32>
    %3 = vector.extract_strided_slice %0 {offsets = [2, 0], sizes = [1, 128], strides = [1, 1]} : vector<6x128xf32> to vector<1x128xf32>
    %4 = vector.extract_strided_slice %0 {offsets = [3, 0], sizes = [1, 128], strides = [1, 1]} : vector<6x128xf32> to vector<1x128xf32>
    %5 = vector.extract_strided_slice %0 {offsets = [4, 0], sizes = [1, 128], strides = [1, 1]} : vector<6x128xf32> to vector<1x128xf32>
    %6 = vector.extract_strided_slice %0 {offsets = [5, 0], sizes = [1, 128], strides = [1, 1]} : vector<6x128xf32> to vector<1x128xf32>
    %c0_1 = arith.constant 0 : index
    %c0_2 = arith.constant 0 : index
    %7 = vector.load %arg3[%c0_1, %c0_2] : memref<128x128xbf16, #tpu.memory_space<vmem>>, vector<128x128xbf16>
    %c0_3 = arith.constant 0 : index
    %c0_4 = arith.constant 0 : index
    %8 = vector.load %arg1[%c0_3, %c0_4] : memref<256x32xbf16, #tpu.memory_space<vmem>>, vector<256x32xbf16>
    %c0_5 = arith.constant 0 : index
    %c0_6 = arith.constant 0 : index
    %9 = vector.load %arg2[%c0_5, %c0_6] : memref<32x128xbf16, #tpu.memory_space<vmem>>, vector<32x128xbf16>
    %cst = arith.constant dense<0.000000e+00> : vector<256x128xf32>
    %10 = tpu.matmul %8, %9, %cst {dimension_numbers = #tpu.dot_dimension_numbers<[1], [0], [0], [1], [0, 0, 1, 1], [], []>} : vector<256x32xbf16>, vector<32x128xbf16>, vector<256x128xf32> -> vector<256x128xf32>
    %11 = vector.broadcast %1 : vector<1x128xf32> to vector<256x128xf32>
    %12 = arith.addf %10, %11 : vector<256x128xf32>
    %13 = arith.truncf %12 : vector<256x128xf32> to vector<256x128xbf16>
    %cst_7 = arith.constant dense<0.000000e+00> : vector<256x128xf32>
    %14 = tpu.matmul %13, %7, %cst_7 {dimension_numbers = #tpu.dot_dimension_numbers<[1], [0], [0], [1], [0, 0, 1, 1], [], []>} : vector<256x128xbf16>, vector<128x128xbf16>, vector<256x128xf32> -> vector<256x128xf32>
    %15 = arith.mulf %12, %12 : vector<256x128xf32>
    %16 = arith.truncf %15 : vector<256x128xf32> to vector<256x128xbf16>
    %cst_8 = arith.constant dense<0.000000e+00> : vector<256x128xf32>
    %17 = tpu.matmul %16, %7, %cst_8 {dimension_numbers = #tpu.dot_dimension_numbers<[1], [0], [0], [1], [0, 0, 1, 1], [], []>} : vector<256x128xbf16>, vector<128x128xbf16>, vector<256x128xf32> -> vector<256x128xf32>
    %18 = arith.mulf %14, %14 : vector<256x128xf32>
    %19 = arith.subf %17, %18 : vector<256x128xf32>
    %cst_9 = arith.constant 0.000000e+00 : f32
    %20 = vector.broadcast %cst_9 : f32 to vector<256x128xf32>
    %21 = arith.maximumf %19, %20 : vector<256x128xf32>
    %22 = arith.subf %12, %14 : vector<256x128xf32>
    %cst_10 = arith.constant 9.99999997E-7 : f32
    %23 = vector.broadcast %cst_10 : f32 to vector<256x128xf32>
    %24 = arith.addf %21, %23 : vector<256x128xf32>
    %25 = math.rsqrt %24 : vector<256x128xf32>
    %26 = arith.mulf %22, %25 : vector<256x128xf32>
    %27 = vector.broadcast %2 : vector<1x128xf32> to vector<256x128xf32>
    %28 = arith.mulf %26, %27 : vector<256x128xf32>
    %29 = vector.broadcast %3 : vector<1x128xf32> to vector<256x128xf32>
    %30 = arith.addf %28, %29 : vector<256x128xf32>
    %cst_11 = arith.constant 5.000000e-01 : f32
    %31 = vector.broadcast %cst_11 : f32 to vector<256x128xf32>
    %32 = arith.mulf %31, %30 : vector<256x128xf32>
    %cst_12 = arith.constant 0.707106769 : f32
    %33 = vector.broadcast %cst_12 : f32 to vector<256x128xf32>
    %34 = arith.mulf %30, %33 : vector<256x128xf32>
    %35 = math.erf %34 : vector<256x128xf32>
    %cst_13 = arith.constant 1.000000e+00 : f32
    %36 = vector.broadcast %cst_13 : f32 to vector<256x128xf32>
    %37 = arith.addf %36, %35 : vector<256x128xf32>
    %38 = arith.mulf %32, %37 : vector<256x128xf32>
    %39 = arith.truncf %38 : vector<256x128xf32> to vector<256x128xbf16>
    %c0_14 = arith.constant 0 : index
    %c0_15 = arith.constant 0 : index
    %40 = vector.load %arg4[%c0_14, %c0_15] : memref<128x128xbf16, #tpu.memory_space<vmem>>, vector<128x128xbf16>
    %cst_16 = arith.constant dense<0.000000e+00> : vector<256x128xf32>
    %41 = tpu.matmul %39, %40, %cst_16 {dimension_numbers = #tpu.dot_dimension_numbers<[1], [0], [0], [1], [0, 0, 1, 1], [], []>} : vector<256x128xbf16>, vector<128x128xbf16>, vector<256x128xf32> -> vector<256x128xf32>
    %42 = vector.broadcast %4 : vector<1x128xf32> to vector<256x128xf32>
    %43 = arith.addf %41, %42 : vector<256x128xf32>
    %44 = arith.truncf %43 : vector<256x128xf32> to vector<256x128xbf16>
    %cst_17 = arith.constant dense<0.000000e+00> : vector<256x128xf32>
    %45 = tpu.matmul %44, %7, %cst_17 {dimension_numbers = #tpu.dot_dimension_numbers<[1], [0], [0], [1], [0, 0, 1, 1], [], []>} : vector<256x128xbf16>, vector<128x128xbf16>, vector<256x128xf32> -> vector<256x128xf32>
    %46 = arith.mulf %43, %43 : vector<256x128xf32>
    %47 = arith.truncf %46 : vector<256x128xf32> to vector<256x128xbf16>
    %cst_18 = arith.constant dense<0.000000e+00> : vector<256x128xf32>
    %48 = tpu.matmul %47, %7, %cst_18 {dimension_numbers = #tpu.dot_dimension_numbers<[1], [0], [0], [1], [0, 0, 1, 1], [], []>} : vector<256x128xbf16>, vector<128x128xbf16>, vector<256x128xf32> -> vector<256x128xf32>
    %49 = arith.mulf %45, %45 : vector<256x128xf32>
    %50 = arith.subf %48, %49 : vector<256x128xf32>
    %cst_19 = arith.constant 0.000000e+00 : f32
    %51 = vector.broadcast %cst_19 : f32 to vector<256x128xf32>
    %52 = arith.maximumf %50, %51 : vector<256x128xf32>
    %53 = arith.subf %43, %45 : vector<256x128xf32>
    %cst_20 = arith.constant 9.99999997E-7 : f32
    %54 = vector.broadcast %cst_20 : f32 to vector<256x128xf32>
    %55 = arith.addf %52, %54 : vector<256x128xf32>
    %56 = math.rsqrt %55 : vector<256x128xf32>
    %57 = arith.mulf %53, %56 : vector<256x128xf32>
    %58 = vector.broadcast %5 : vector<1x128xf32> to vector<256x128xf32>
    %59 = arith.mulf %57, %58 : vector<256x128xf32>
    %60 = vector.broadcast %6 : vector<1x128xf32> to vector<256x128xf32>
    %61 = arith.addf %59, %60 : vector<256x128xf32>
    %62 = vector.extract_strided_slice %61 {offsets = [0, 0], sizes = [256, 32], strides = [1, 1]} : vector<256x128xf32> to vector<256x32xf32>
    %63 = vector.shape_cast %62 : vector<256x32xf32> to vector<4x8x8x32xf32>
    %64 = arith.truncf %63 : vector<4x8x8x32xf32> to vector<4x8x8x32xbf16>
    %c0_21 = arith.constant 0 : index
    %c0_22 = arith.constant 0 : index
    %c0_23 = arith.constant 0 : index
    %c0_24 = arith.constant 0 : index
    %c0_25 = arith.constant 0 : index
    %c0_26 = arith.constant 0 : index
    %65 = vector.load %arg6[%c0_21, %c0_22, %c0_23, %c0_24, %c0_25, %c0_26] : memref<4x2x8x2x8x32xbf16, #tpu.memory_space<vmem>>, vector<4x1x8x1x8x32xbf16>
    %66 = vector.shape_cast %65 : vector<4x1x8x1x8x32xbf16> to vector<4x8x8x32xbf16>
    %67 = vector.shape_cast %64 : vector<4x8x8x32xbf16> to vector<4x1x8x1x8x32xbf16>
    tpu.vector_store %arg6[%c0_21, %c0_22, %c0_23, %c0_24, %c0_25, %c0_26], %67 {strides = array<i32>} : memref<4x2x8x2x8x32xbf16, #tpu.memory_space<vmem>>, vector<4x1x8x1x8x32xbf16>,
    %68 = vector.extract_strided_slice %61 {offsets = [0, 32], sizes = [256, 32], strides = [1, 1]} : vector<256x128xf32> to vector<256x32xf32>
    %69 = vector.shape_cast %68 : vector<256x32xf32> to vector<4x8x8x32xf32>
    %70 = arith.truncf %69 : vector<4x8x8x32xf32> to vector<4x8x8x32xbf16>
    %c0_27 = arith.constant 0 : index
    %c0_28 = arith.constant 0 : index
    %c0_29 = arith.constant 0 : index
    %c1 = arith.constant 1 : index
    %c0_30 = arith.constant 0 : index
    %c0_31 = arith.constant 0 : index
    %71 = vector.load %arg6[%c0_27, %c0_28, %c0_29, %c1, %c0_30, %c0_31] : memref<4x2x8x2x8x32xbf16, #tpu.memory_space<vmem>>, vector<4x1x8x1x8x32xbf16>
    %72 = vector.shape_cast %71 : vector<4x1x8x1x8x32xbf16> to vector<4x8x8x32xbf16>
    %73 = vector.shape_cast %70 : vector<4x8x8x32xbf16> to vector<4x1x8x1x8x32xbf16>
    tpu.vector_store %arg6[%c0_27, %c0_28, %c0_29, %c1, %c0_30, %c0_31], %73 {strides = array<i32>} : memref<4x2x8x2x8x32xbf16, #tpu.memory_space<vmem>>, vector<4x1x8x1x8x32xbf16>,
    %74 = vector.extract_strided_slice %61 {offsets = [0, 64], sizes = [256, 32], strides = [1, 1]} : vector<256x128xf32> to vector<256x32xf32>
    %75 = vector.shape_cast %74 : vector<256x32xf32> to vector<4x8x8x32xf32>
    %76 = arith.truncf %75 : vector<4x8x8x32xf32> to vector<4x8x8x32xbf16>
    %c0_32 = arith.constant 0 : index
    %c1_33 = arith.constant 1 : index
    %c0_34 = arith.constant 0 : index
    %c0_35 = arith.constant 0 : index
    %c0_36 = arith.constant 0 : index
    %c0_37 = arith.constant 0 : index
    %77 = vector.load %arg6[%c0_32, %c1_33, %c0_34, %c0_35, %c0_36, %c0_37] : memref<4x2x8x2x8x32xbf16, #tpu.memory_space<vmem>>, vector<4x1x8x1x8x32xbf16>
    %78 = vector.shape_cast %77 : vector<4x1x8x1x8x32xbf16> to vector<4x8x8x32xbf16>
    %79 = vector.shape_cast %76 : vector<4x8x8x32xbf16> to vector<4x1x8x1x8x32xbf16>
    tpu.vector_store %arg6[%c0_32, %c1_33, %c0_34, %c0_35, %c0_36, %c0_37], %79 {strides = array<i32>} : memref<4x2x8x2x8x32xbf16, #tpu.memory_space<vmem>>, vector<4x1x8x1x8x32xbf16>,
    %80 = vector.extract_strided_slice %61 {offsets = [0, 96], sizes = [256, 32], strides = [1, 1]} : vector<256x128xf32> to vector<256x32xf32>
    %81 = vector.shape_cast %80 : vector<256x32xf32> to vector<4x8x8x32xf32>
    %82 = arith.truncf %81 : vector<4x8x8x32xf32> to vector<4x8x8x32xbf16>
    %c0_38 = arith.constant 0 : index
    %c1_39 = arith.constant 1 : index
    %c0_40 = arith.constant 0 : index
    %c1_41 = arith.constant 1 : index
    %c0_42 = arith.constant 0 : index
    %c0_43 = arith.constant 0 : index
    %83 = vector.load %arg6[%c0_38, %c1_39, %c0_40, %c1_41, %c0_42, %c0_43] : memref<4x2x8x2x8x32xbf16, #tpu.memory_space<vmem>>, vector<4x1x8x1x8x32xbf16>
    %84 = vector.shape_cast %83 : vector<4x1x8x1x8x32xbf16> to vector<4x8x8x32xbf16>
    %85 = vector.shape_cast %82 : vector<4x8x8x32xbf16> to vector<4x1x8x1x8x32xbf16>
    tpu.vector_store %arg6[%c0_38, %c1_39, %c0_40, %c1_41, %c0_42, %c0_43], %85 {strides = array<i32>} : memref<4x2x8x2x8x32xbf16, #tpu.memory_space<vmem>>, vector<4x1x8x1x8x32xbf16>,
    return
  }
  func.func @transform_0(%arg0: i32) -> (i32, i32) {
    %c0_i32 = arith.constant 0 : i32
    %c0_i32_0 = arith.constant 0 : i32
    return %arg0, %c0_i32 : i32, i32
  }
  func.func @transform_1(%arg0: i32) -> (i32, i32) {
    %c0_i32 = arith.constant 0 : i32
    %c0_i32_0 = arith.constant 0 : i32
    %c0_i32_1 = arith.constant 0 : i32
    return %c0_i32, %c0_i32_0 : i32, i32
  }
  func.func @transform_2(%arg0: i32) -> (i32, i32) {
    %c0_i32 = arith.constant 0 : i32
    %c0_i32_0 = arith.constant 0 : i32
    %c0_i32_1 = arith.constant 0 : i32
    return %c0_i32, %c0_i32_0 : i32, i32
  }
  func.func @transform_3(%arg0: i32) -> (i32, i32) {
    %c0_i32 = arith.constant 0 : i32
    %c0_i32_0 = arith.constant 0 : i32
    %c0_i32_1 = arith.constant 0 : i32
    return %c0_i32, %c0_i32_0 : i32, i32
  }
  func.func @transform_4(%arg0: i32) -> (i32, i32) {
    %c0_i32 = arith.constant 0 : i32
    %c0_i32_0 = arith.constant 0 : i32
    %c0_i32_1 = arith.constant 0 : i32
    return %c0_i32, %c0_i32_0 : i32, i32
  }
  func.func @transform_5(%arg0: i32) -> (i32, i32, i32, i32, i32, i32) {
    %c0_i32 = arith.constant 0 : i32
    %c0_i32_0 = arith.constant 0 : i32
    %c0_i32_1 = arith.constant 0 : i32
    %c0_i32_2 = arith.constant 0 : i32
    %c0_i32_3 = arith.constant 0 : i32
    %c0_i32_4 = arith.constant 0 : i32
    return %arg0, %c0_i32, %c0_i32_0, %c0_i32_1, %c0_i32_2, %c0_i32_3 : i32, i32, i32, i32, i32, i32
  }
}

module attributes {stable_mosaic.version = 11 : i64} {
  func.func @_conv3x3x3_kernel(%arg0: i32, %arg1: i32, %arg2: memref<1x8x16x256xbf16, #tpu.memory_space<vmem>>, %arg3: memref<3x3x256x256xbf16, #tpu.memory_space<vmem>>, %arg4: memref<1x256xf32, #tpu.memory_space<vmem>>, %arg5: memref<1x8x16x256xf32, #tpu.memory_space<vmem>>, %arg6: memref<10x18x256xbf16, #tpu.memory_space<vmem>>) attributes {dimension_semantics = [#tpu.dimension_semantics<parallel>, #tpu.dimension_semantics<arbitrary>], iteration_bounds = array<i64: 2, 1>, scalar_prefetch = 0 : i64, scratch_operands = 1 : i64, tpu.core_type = #tpu.core_type<tc>, window_params = [{transform_indices = @transform_0, window_bounds = array<i64: 1, 8, 16, 256>}, {pipeline_mode = #tpu.pipeline_mode<synchronous>, transform_indices = @transform_1, window_bounds = array<i64: 3, 3, 256, 256>}, {pipeline_mode = #tpu.pipeline_mode<synchronous>, transform_indices = @transform_2, window_bounds = array<i64: 1, 256>}, {transform_indices = @transform_3, window_bounds = array<i64: 1, 8, 16, 256>}]} {
    %c0_i32 = arith.constant 0 : i32
    %0 = arith.cmpi eq, %arg1, %c0_i32 : i32
    %1 = arith.extui %0 : i1 to i32
    %c0_i32_0 = arith.constant 0 : i32
    %2 = arith.cmpi ne, %1, %c0_i32_0 : i32
    scf.if %2 {
      %cst_74 = arith.constant 0.000000e+00 : bf16
      %84 = vector.broadcast %cst_74 : bf16 to vector<10x18x256xbf16>
      %c0_75 = arith.constant 0 : index
      %c0_76 = arith.constant 0 : index
      %c0_77 = arith.constant 0 : index
      %85 = vector.load %arg6[%c0_75, %c0_76, %c0_77] : memref<10x18x256xbf16, #tpu.memory_space<vmem>>, vector<10x18x256xbf16>
      tpu.vector_store %arg6[%c0_75, %c0_76, %c0_77], %84 {strides = array<i32>} : memref<10x18x256xbf16, #tpu.memory_space<vmem>>, vector<10x18x256xbf16>,
      %c0_78 = arith.constant 0 : index
      %c0_79 = arith.constant 0 : index
      %c0_80 = arith.constant 0 : index
      %c0_81 = arith.constant 0 : index
      %86 = vector.load %arg2[%c0_78, %c0_79, %c0_80, %c0_81] : memref<1x8x16x256xbf16, #tpu.memory_space<vmem>>, vector<1x8x16x256xbf16>
      %87 = vector.shape_cast %86 : vector<1x8x16x256xbf16> to vector<8x16x256xbf16>
      %c1_82 = arith.constant 1 : index
      %c1_83 = arith.constant 1 : index
      %c0_84 = arith.constant 0 : index
      %88 = vector.load %arg6[%c1_82, %c1_83, %c0_84] : memref<10x18x256xbf16, #tpu.memory_space<vmem>>, vector<8x16x256xbf16>
      tpu.vector_store %arg6[%c1_82, %c1_83, %c0_84], %87 {strides = array<i32>} : memref<10x18x256xbf16, #tpu.memory_space<vmem>>, vector<8x16x256xbf16>,
    } else {
    }
    %c8_i32 = arith.constant 8 : i32
    %3 = arith.muli %arg1, %c8_i32 : i32
    %cst = arith.constant 0.000000e+00 : f32
    %4 = vector.broadcast %cst : f32 to vector<128x256xf32>
    %c0_i32_1 = arith.constant 0 : i32
    %5 = arith.addi %3, %c0_i32_1 : i32
    %6 = arith.index_cast %5 : i32 to index
    %c0 = arith.constant 0 : index
    %c0_2 = arith.constant 0 : index
    %7 = vector.load %arg6[%6, %c0, %c0_2] : memref<10x18x256xbf16, #tpu.memory_space<vmem>>, vector<8x16x256xbf16>
    %8 = vector.shape_cast %7 : vector<8x16x256xbf16> to vector<128x256xbf16>
    %c0_3 = arith.constant 0 : index
    %c0_4 = arith.constant 0 : index
    %c0_5 = arith.constant 0 : index
    %c0_6 = arith.constant 0 : index
    %9 = vector.load %arg3[%c0_3, %c0_4, %c0_5, %c0_6] : memref<3x3x256x256xbf16, #tpu.memory_space<vmem>>, vector<1x1x256x256xbf16>
    %10 = vector.shape_cast %9 : vector<1x1x256x256xbf16> to vector<256x256xbf16>
    %cst_7 = arith.constant dense<0.000000e+00> : vector<128x256xf32>
    %11 = tpu.matmul %8, %10, %cst_7 {dimension_numbers = #tpu.dot_dimension_numbers<[1], [0], [0], [1], [0, 0, 1, 1], [], []>} : vector<128x256xbf16>, vector<256x256xbf16>, vector<128x256xf32> -> vector<128x256xf32>
    %12 = arith.addf %4, %11 : vector<128x256xf32>
    %c0_i32_8 = arith.constant 0 : i32
    %13 = arith.addi %3, %c0_i32_8 : i32
    %14 = arith.index_cast %13 : i32 to index
    %c1 = arith.constant 1 : index
    %c0_9 = arith.constant 0 : index
    %15 = vector.load %arg6[%14, %c1, %c0_9] : memref<10x18x256xbf16, #tpu.memory_space<vmem>>, vector<8x16x256xbf16>
    %16 = vector.shape_cast %15 : vector<8x16x256xbf16> to vector<128x256xbf16>
    %c0_10 = arith.constant 0 : index
    %c1_11 = arith.constant 1 : index
    %c0_12 = arith.constant 0 : index
    %c0_13 = arith.constant 0 : index
    %17 = vector.load %arg3[%c0_10, %c1_11, %c0_12, %c0_13] : memref<3x3x256x256xbf16, #tpu.memory_space<vmem>>, vector<1x1x256x256xbf16>
    %18 = vector.shape_cast %17 : vector<1x1x256x256xbf16> to vector<256x256xbf16>
    %cst_14 = arith.constant dense<0.000000e+00> : vector<128x256xf32>
    %19 = tpu.matmul %16, %18, %cst_14 {dimension_numbers = #tpu.dot_dimension_numbers<[1], [0], [0], [1], [0, 0, 1, 1], [], []>} : vector<128x256xbf16>, vector<256x256xbf16>, vector<128x256xf32> -> vector<128x256xf32>
    %20 = arith.addf %12, %19 : vector<128x256xf32>
    %c0_i32_15 = arith.constant 0 : i32
    %21 = arith.addi %3, %c0_i32_15 : i32
    %22 = arith.index_cast %21 : i32 to index
    %c2 = arith.constant 2 : index
    %c0_16 = arith.constant 0 : index
    %23 = vector.load %arg6[%22, %c2, %c0_16] : memref<10x18x256xbf16, #tpu.memory_space<vmem>>, vector<8x16x256xbf16>
    %24 = vector.shape_cast %23 : vector<8x16x256xbf16> to vector<128x256xbf16>
    %c0_17 = arith.constant 0 : index
    %c2_18 = arith.constant 2 : index
    %c0_19 = arith.constant 0 : index
    %c0_20 = arith.constant 0 : index
    %25 = vector.load %arg3[%c0_17, %c2_18, %c0_19, %c0_20] : memref<3x3x256x256xbf16, #tpu.memory_space<vmem>>, vector<1x1x256x256xbf16>
    %26 = vector.shape_cast %25 : vector<1x1x256x256xbf16> to vector<256x256xbf16>
    %cst_21 = arith.constant dense<0.000000e+00> : vector<128x256xf32>
    %27 = tpu.matmul %24, %26, %cst_21 {dimension_numbers = #tpu.dot_dimension_numbers<[1], [0], [0], [1], [0, 0, 1, 1], [], []>} : vector<128x256xbf16>, vector<256x256xbf16>, vector<128x256xf32> -> vector<128x256xf32>
    %28 = arith.addf %20, %27 : vector<128x256xf32>
    %c1_i32 = arith.constant 1 : i32
    %29 = arith.addi %3, %c1_i32 : i32
    %30 = arith.index_cast %29 : i32 to index
    %c0_22 = arith.constant 0 : index
    %c0_23 = arith.constant 0 : index
    %31 = vector.load %arg6[%30, %c0_22, %c0_23] : memref<10x18x256xbf16, #tpu.memory_space<vmem>>, vector<8x16x256xbf16>
    %32 = vector.shape_cast %31 : vector<8x16x256xbf16> to vector<128x256xbf16>
    %c1_24 = arith.constant 1 : index
    %c0_25 = arith.constant 0 : index
    %c0_26 = arith.constant 0 : index
    %c0_27 = arith.constant 0 : index
    %33 = vector.load %arg3[%c1_24, %c0_25, %c0_26, %c0_27] : memref<3x3x256x256xbf16, #tpu.memory_space<vmem>>, vector<1x1x256x256xbf16>
    %34 = vector.shape_cast %33 : vector<1x1x256x256xbf16> to vector<256x256xbf16>
    %cst_28 = arith.constant dense<0.000000e+00> : vector<128x256xf32>
    %35 = tpu.matmul %32, %34, %cst_28 {dimension_numbers = #tpu.dot_dimension_numbers<[1], [0], [0], [1], [0, 0, 1, 1], [], []>} : vector<128x256xbf16>, vector<256x256xbf16>, vector<128x256xf32> -> vector<128x256xf32>
    %36 = arith.addf %28, %35 : vector<128x256xf32>
    %c1_i32_29 = arith.constant 1 : i32
    %37 = arith.addi %3, %c1_i32_29 : i32
    %38 = arith.index_cast %37 : i32 to index
    %c1_30 = arith.constant 1 : index
    %c0_31 = arith.constant 0 : index
    %39 = vector.load %arg6[%38, %c1_30, %c0_31] : memref<10x18x256xbf16, #tpu.memory_space<vmem>>, vector<8x16x256xbf16>
    %40 = vector.shape_cast %39 : vector<8x16x256xbf16> to vector<128x256xbf16>
    %c1_32 = arith.constant 1 : index
    %c1_33 = arith.constant 1 : index
    %c0_34 = arith.constant 0 : index
    %c0_35 = arith.constant 0 : index
    %41 = vector.load %arg3[%c1_32, %c1_33, %c0_34, %c0_35] : memref<3x3x256x256xbf16, #tpu.memory_space<vmem>>, vector<1x1x256x256xbf16>
    %42 = vector.shape_cast %41 : vector<1x1x256x256xbf16> to vector<256x256xbf16>
    %cst_36 = arith.constant dense<0.000000e+00> : vector<128x256xf32>
    %43 = tpu.matmul %40, %42, %cst_36 {dimension_numbers = #tpu.dot_dimension_numbers<[1], [0], [0], [1], [0, 0, 1, 1], [], []>} : vector<128x256xbf16>, vector<256x256xbf16>, vector<128x256xf32> -> vector<128x256xf32>
    %44 = arith.addf %36, %43 : vector<128x256xf32>
    %c1_i32_37 = arith.constant 1 : i32
    %45 = arith.addi %3, %c1_i32_37 : i32
    %46 = arith.index_cast %45 : i32 to index
    %c2_38 = arith.constant 2 : index
    %c0_39 = arith.constant 0 : index
    %47 = vector.load %arg6[%46, %c2_38, %c0_39] : memref<10x18x256xbf16, #tpu.memory_space<vmem>>, vector<8x16x256xbf16>
    %48 = vector.shape_cast %47 : vector<8x16x256xbf16> to vector<128x256xbf16>
    %c1_40 = arith.constant 1 : index
    %c2_41 = arith.constant 2 : index
    %c0_42 = arith.constant 0 : index
    %c0_43 = arith.constant 0 : index
    %49 = vector.load %arg3[%c1_40, %c2_41, %c0_42, %c0_43] : memref<3x3x256x256xbf16, #tpu.memory_space<vmem>>, vector<1x1x256x256xbf16>
    %50 = vector.shape_cast %49 : vector<1x1x256x256xbf16> to vector<256x256xbf16>
    %cst_44 = arith.constant dense<0.000000e+00> : vector<128x256xf32>
    %51 = tpu.matmul %48, %50, %cst_44 {dimension_numbers = #tpu.dot_dimension_numbers<[1], [0], [0], [1], [0, 0, 1, 1], [], []>} : vector<128x256xbf16>, vector<256x256xbf16>, vector<128x256xf32> -> vector<128x256xf32>
    %52 = arith.addf %44, %51 : vector<128x256xf32>
    %c2_i32 = arith.constant 2 : i32
    %53 = arith.addi %3, %c2_i32 : i32
    %54 = arith.index_cast %53 : i32 to index
    %c0_45 = arith.constant 0 : index
    %c0_46 = arith.constant 0 : index
    %55 = vector.load %arg6[%54, %c0_45, %c0_46] : memref<10x18x256xbf16, #tpu.memory_space<vmem>>, vector<8x16x256xbf16>
    %56 = vector.shape_cast %55 : vector<8x16x256xbf16> to vector<128x256xbf16>
    %c2_47 = arith.constant 2 : index
    %c0_48 = arith.constant 0 : index
    %c0_49 = arith.constant 0 : index
    %c0_50 = arith.constant 0 : index
    %57 = vector.load %arg3[%c2_47, %c0_48, %c0_49, %c0_50] : memref<3x3x256x256xbf16, #tpu.memory_space<vmem>>, vector<1x1x256x256xbf16>
    %58 = vector.shape_cast %57 : vector<1x1x256x256xbf16> to vector<256x256xbf16>
    %cst_51 = arith.constant dense<0.000000e+00> : vector<128x256xf32>
    %59 = tpu.matmul %56, %58, %cst_51 {dimension_numbers = #tpu.dot_dimension_numbers<[1], [0], [0], [1], [0, 0, 1, 1], [], []>} : vector<128x256xbf16>, vector<256x256xbf16>, vector<128x256xf32> -> vector<128x256xf32>
    %60 = arith.addf %52, %59 : vector<128x256xf32>
    %c2_i32_52 = arith.constant 2 : i32
    %61 = arith.addi %3, %c2_i32_52 : i32
    %62 = arith.index_cast %61 : i32 to index
    %c1_53 = arith.constant 1 : index
    %c0_54 = arith.constant 0 : index
    %63 = vector.load %arg6[%62, %c1_53, %c0_54] : memref<10x18x256xbf16, #tpu.memory_space<vmem>>, vector<8x16x256xbf16>
    %64 = vector.shape_cast %63 : vector<8x16x256xbf16> to vector<128x256xbf16>
    %c2_55 = arith.constant 2 : index
    %c1_56 = arith.constant 1 : index
    %c0_57 = arith.constant 0 : index
    %c0_58 = arith.constant 0 : index
    %65 = vector.load %arg3[%c2_55, %c1_56, %c0_57, %c0_58] : memref<3x3x256x256xbf16, #tpu.memory_space<vmem>>, vector<1x1x256x256xbf16>
    %66 = vector.shape_cast %65 : vector<1x1x256x256xbf16> to vector<256x256xbf16>
    %cst_59 = arith.constant dense<0.000000e+00> : vector<128x256xf32>
    %67 = tpu.matmul %64, %66, %cst_59 {dimension_numbers = #tpu.dot_dimension_numbers<[1], [0], [0], [1], [0, 0, 1, 1], [], []>} : vector<128x256xbf16>, vector<256x256xbf16>, vector<128x256xf32> -> vector<128x256xf32>
    %68 = arith.addf %60, %67 : vector<128x256xf32>
    %c2_i32_60 = arith.constant 2 : i32
    %69 = arith.addi %3, %c2_i32_60 : i32
    %70 = arith.index_cast %69 : i32 to index
    %c2_61 = arith.constant 2 : index
    %c0_62 = arith.constant 0 : index
    %71 = vector.load %arg6[%70, %c2_61, %c0_62] : memref<10x18x256xbf16, #tpu.memory_space<vmem>>, vector<8x16x256xbf16>
    %72 = vector.shape_cast %71 : vector<8x16x256xbf16> to vector<128x256xbf16>
    %c2_63 = arith.constant 2 : index
    %c2_64 = arith.constant 2 : index
    %c0_65 = arith.constant 0 : index
    %c0_66 = arith.constant 0 : index
    %73 = vector.load %arg3[%c2_63, %c2_64, %c0_65, %c0_66] : memref<3x3x256x256xbf16, #tpu.memory_space<vmem>>, vector<1x1x256x256xbf16>
    %74 = vector.shape_cast %73 : vector<1x1x256x256xbf16> to vector<256x256xbf16>
    %cst_67 = arith.constant dense<0.000000e+00> : vector<128x256xf32>
    %75 = tpu.matmul %72, %74, %cst_67 {dimension_numbers = #tpu.dot_dimension_numbers<[1], [0], [0], [1], [0, 0, 1, 1], [], []>} : vector<128x256xbf16>, vector<256x256xbf16>, vector<128x256xf32> -> vector<128x256xf32>
    %76 = arith.addf %68, %75 : vector<128x256xf32>
    %c0_68 = arith.constant 0 : index
    %c0_69 = arith.constant 0 : index
    %77 = vector.load %arg4[%c0_68, %c0_69] : memref<1x256xf32, #tpu.memory_space<vmem>>, vector<1x256xf32>
    %78 = vector.broadcast %77 : vector<1x256xf32> to vector<128x256xf32>
    %79 = arith.addf %76, %78 : vector<128x256xf32>
    %80 = vector.shape_cast %79 : vector<128x256xf32> to vector<8x16x256xf32>
    %c0_70 = arith.constant 0 : index
    %c0_71 = arith.constant 0 : index
    %c0_72 = arith.constant 0 : index
    %c0_73 = arith.constant 0 : index
    %81 = vector.load %arg5[%c0_70, %c0_71, %c0_72, %c0_73] : memref<1x8x16x256xf32, #tpu.memory_space<vmem>>, vector<1x8x16x256xf32>
    %82 = vector.shape_cast %81 : vector<1x8x16x256xf32> to vector<8x16x256xf32>
    %83 = vector.shape_cast %80 : vector<8x16x256xf32> to vector<1x8x16x256xf32>
    tpu.vector_store %arg5[%c0_70, %c0_71, %c0_72, %c0_73], %83 {strides = array<i32>} : memref<1x8x16x256xf32, #tpu.memory_space<vmem>>, vector<1x8x16x256xf32>,
    return
  }
  func.func @transform_0(%arg0: i32, %arg1: i32) -> (i32, i32, i32, i32) {
    %c0_i32 = arith.constant 0 : i32
    %c0_i32_0 = arith.constant 0 : i32
    %c0_i32_1 = arith.constant 0 : i32
    %c0_i32_2 = arith.constant 0 : i32
    return %arg0, %c0_i32, %c0_i32_0, %c0_i32_1 : i32, i32, i32, i32
  }
  func.func @transform_1(%arg0: i32, %arg1: i32) -> (i32, i32, i32, i32) {
    %c0_i32 = arith.constant 0 : i32
    %c0_i32_0 = arith.constant 0 : i32
    %c0_i32_1 = arith.constant 0 : i32
    %c0_i32_2 = arith.constant 0 : i32
    %c0_i32_3 = arith.constant 0 : i32
    return %c0_i32, %c0_i32_0, %c0_i32_1, %c0_i32_2 : i32, i32, i32, i32
  }
  func.func @transform_2(%arg0: i32, %arg1: i32) -> (i32, i32) {
    %c0_i32 = arith.constant 0 : i32
    %c0_i32_0 = arith.constant 0 : i32
    %c0_i32_1 = arith.constant 0 : i32
    return %c0_i32, %c0_i32_0 : i32, i32
  }
  func.func @transform_3(%arg0: i32, %arg1: i32) -> (i32, i32, i32, i32) {
    %c0_i32 = arith.constant 0 : i32
    %c0_i32_0 = arith.constant 0 : i32
    %c0_i32_1 = arith.constant 0 : i32
    return %arg0, %arg1, %c0_i32, %c0_i32_0 : i32, i32, i32, i32
  }
}

</mosaic_0001>

<llo_original>
// kernel: tile.30
$region0: #{tile.30}
  #allocation0 [shape = 's32[1]{0}', space=sflag, size = 0x4, scoped, tag = 'scoped memory for tile.30']
  %s0 = inlined_call_operand.vmem [shape: f32[16], index: 0, kind: input, shape index: {}]
  %s1 = inlined_call_operand.vmem [shape: f32[8,16], index: 1, kind: output, shape index: {}]
  // Predicated region
  $region2: #{tile.30} parent=0 // pred_check
    _
  $region3: #{tile.30} parent=0 // pred_check_branch
    %3 = sbr.rel (0) target = $region5
  $region4: #{tile.30} parent=0 // pred_region
    _
  $region5: #{tile.30} parent=0 // pred_fallthru
    _
  %v4 = vld [vmem:[%s0] ss:$0 sm:$0xff]
  %5 = vst [vmem:[%s1] sm:$0xff] %v4

// kernel: tile.46
$region0: #{tile.46}
  %s0 = inlined_call_operand.vmem [shape: f32[8,16], index: 0, kind: input, shape index: {}]
  %s1 = inlined_call_operand.vmem [shape: f32[1,128], index: 1, kind: output, shape index: {}]
  $region1: #{tile.46} parent=0
    #allocation0 [shape = 'u8[4096]{0}', space=vmem, size = 0x1000, scoped, tag = 'scoped mem for output reshape']
    %v2 = vld [vmem:[%s0] sm:$0x1]
    %vm3 = vcmask 130048
    %4 = vst.msk [vmem:[#allocation0] sm:$0x1] %vm3, %v2
    %s5 = scalar_lea.vmem %s0, 7
    %v6 = vld [vmem:[%s5] sm:$0x1]
    %7 = vrot.lane.b32.xlu0 %v6, 112
    %v8 = vpop.permute.xlu0 %7
    %vm9 = vcmask 1048448
    %10 = vst.msk [vmem:[#allocation0] sm:$0x1] %vm9, %v8
    %s11 = scalar_lea.vmem %s0, 6
    %v12 = vld [vmem:[%s11] sm:$0x1]
    %13 = vrot.lane.b32.xlu0 %v12, 96
    %v14 = vpop.permute.xlu0 %13
    %vm15 = vcmask 917248
    %16 = vst.msk [vmem:[#allocation0] sm:$0x1] %vm15, %v14
    %s17 = scalar_lea.vmem %s0, 5
    %v18 = vld [vmem:[%s17] sm:$0x1]
    %19 = vrot.lane.b32.xlu0 %v18, 80
    %v20 = vpop.permute.xlu0 %19
    %vm21 = vcmask 786048
    %22 = vst.msk [vmem:[#allocation0] sm:$0x1] %vm21, %v20
    %s23 = scalar_lea.vmem %s0, 4
    %v24 = vld [vmem:[%s23] sm:$0x1]
    %25 = vrot.lane.b32.xlu0 %v24, 64
    %v26 = vpop.permute.xlu0 %25
    %vm27 = vcmask 654848
    %28 = vst.msk [vmem:[#allocation0] sm:$0x1] %vm27, %v26
    %s29 = scalar_lea.vmem %s0, 3
    %v30 = vld [vmem:[%s29] sm:$0x1]
    %31 = vrot.lane.b32.xlu0 %v30, 48
    %v32 = vpop.permute.xlu0 %31
    %vm33 = vcmask 523648
    %34 = vst.msk [vmem:[#allocation0] sm:$0x1] %vm33, %v32
    %s35 = scalar_lea.vmem %s0, 2
    %v36 = vld [vmem:[%s35] sm:$0x1]
    %37 = vrot.lane.b32.xlu0 %v36, 32
    %v38 = vpop.permute.xlu0 %37
    %vm39 = vcmask 392448
    %40 = vst.msk [vmem:[#allocation0] sm:$0x1] %vm39, %v38
    %s41 = scalar_lea.vmem %s0, 1
    %v42 = vld [vmem:[%s41] sm:$0x1]
    %43 = vrot.lane.b32.xlu0 %v42, 16
    %v44 = vpop.permute.xlu0 %43
    %vm45 = vcmask 261248
    %46 = vst.msk [vmem:[#allocation0] sm:$0x1] %vm45, %v44
    %s48 = ssub.s32 2, 1
    %v49 = vld [vmem:[#allocation0] sm:%s48]
    %s51 = ssub.s32 2, 1
    %52 = vst [vmem:[%s1] sm:%s51] %v49

// kernel: decoder_map_forward.2
$region0: #{decoder_map_forward.2}
  #allocation0 [shape = 'u32[]', space=smem, size = 0x4, offset = 0x4, fixed_abs, tag = 'smem constant byte address 0x4 - core index']
  #allocation1 [shape = 'u32[72,128]{1,0:T(1,128)}', space=vmem, size = 0x9000, scoped, tag = 'internal scratch']
  %s0 = inlined_call_operand.vmem [shape: bf16[512,32], index: 0, kind: input, shape index: {}]
  %s1 = inlined_call_operand.vmem [shape: bf16[32,128], index: 1, kind: input, shape index: {}]
  %s2 = inlined_call_operand.vmem [shape: bf16[128,128], index: 2, kind: input, shape index: {}]
  %s3 = inlined_call_operand.vmem [shape: bf16[128,128], index: 3, kind: input, shape index: {}]
  %s4 = inlined_call_operand.vmem [shape: f32[6,128], index: 4, kind: input, shape index: {}]
  %s5 = inlined_call_operand.vmem [shape: bf16[8,2,8,2,8,32], index: 5, kind: output, shape index: {}]
  %s6 = sld [smem:[#allocation0]]
  $region53: #{decoder_map_forward.2} parent=0
    _
  %s8 = ssub.s32 1, %s6
  %s9 = scalar_select 0, %s8, %s6
  loop: start=0, step=1, limit=4
  $region2: #{decoder_map_forward.2} parent=0 // loop_pre_header
    _
  $region3: #{decoder_map_forward.2} parent=0 // loop_header
    %s11 = sphi 0, %s15
    %p12 = scmp.ge.s32.totalorder %s11, 4
    %s21 = sphi 0, %s23
    %s24 = sphi 0, %s21
    %s25 = sphi 0, %s24
    %s41 = sphi 0, %s25
    %s45 = sphi 0, %s45
    %s47 = sphi 0, %s45
    %s48 = sphi 0, %s47
    %s62 = sphi 0, %s48
    %s66 = sphi 0, %s66
    %s68 = sphi 0, %s66
    %s69 = sphi 0, %s68
    %s83 = sphi 0, %s69
    %s87 = sphi 0, %s87
    %s89 = sphi 0, %s87
    %s90 = sphi 0, %s89
    %s104 = sphi 0, %s90
    %s108 = sphi 0, %s108
    %s110 = sphi 0, %s108
    %s111 = sphi 0, %s110
    %s125 = sphi 0, %s111
    %s131 = sphi 0, %s133
    %s134 = sphi 0, %s131
    %s135 = sphi 0, %s134
    %s151 = sphi 0, %s135
  $region4: #{decoder_map_forward.2} parent=0 // loop_header_branch
    %14 = sbr.rel (%p12) target = $region8
  $region5: #{decoder_map_forward.2} parent=0 // loop_body
    %s16 = ssub.s32 %s11, 1
    %s17 = ssub.s32 %s11, 2
    %s18 = sadd.s32 %s11, 1
    %s19 = ssub.s32 %s11, %s18
    %p20 = scmp.eq.s32.totalorder %s19, 0
    %s22 = sadd.s32 %s21, 1
    %s23 = scalar_select %p20, %s21, %s22
    %p26 = pneg %p20
    %p27 = scmp.eq.s32.totalorder %s11, 1
    %p28 = por %p26, %p27
    %p29 = scmp.ne.s32.totalorder %s21, %s24
    %p30 = scmp.eq.s32.totalorder %s11, 0
    %p31 = por %p29, %p30
    %p32 = scmp.ne.s32.totalorder %s21, %s24
    %p33 = scmp.eq.s32.totalorder %s16, 1
    %p34 = por %p32, %p33
    %p35 = scmp.ne.s32.totalorder %s24, %s25
    %p36 = scmp.eq.s32.totalorder %s16, 0
    %p37 = por %p35, %p36
    %p38 = scmp.ne.s32.totalorder %s24, %s25
    %p39 = scmp.eq.s32.totalorder %s17, 1
    %p40 = por %p38, %p39
    %p42 = scmp.ne.s32.totalorder %s25, %s41
    %p43 = scmp.eq.s32.totalorder %s17, 0
    %p44 = por %p42, %p43
    %s46 = sadd.s32 %s45, 1
    %p49 = scmp.eq.s32.totalorder %s11, 1
    %p50 = scmp.ne.s32.totalorder %s45, %s47
    %p51 = scmp.eq.s32.totalorder %s11, 0
    %p52 = por %p50, %p51
    %p53 = scmp.ne.s32.totalorder %s45, %s47
    %p54 = scmp.eq.s32.totalorder %s16, 1
    %p55 = por %p53, %p54
    %p56 = scmp.ne.s32.totalorder %s47, %s48
    %p57 = scmp.eq.s32.totalorder %s16, 0
    %p58 = por %p56, %p57
    %p59 = scmp.ne.s32.totalorder %s47, %s48
    %p60 = scmp.eq.s32.totalorder %s17, 1
    %p61 = por %p59, %p60
    %p63 = scmp.ne.s32.totalorder %s48, %s62
    %p64 = scmp.eq.s32.totalorder %s17, 0
    %p65 = por %p63, %p64
    %s67 = sadd.s32 %s66, 1
    %p70 = scmp.eq.s32.totalorder %s11, 1
    %p71 = scmp.ne.s32.totalorder %s66, %s68
    %p72 = scmp.eq.s32.totalorder %s11, 0
    %p73 = por %p71, %p72
    %p74 = scmp.ne.s32.totalorder %s66, %s68
    %p75 = scmp.eq.s32.totalorder %s16, 1
    %p76 = por %p74, %p75
    %p77 = scmp.ne.s32.totalorder %s68, %s69
    %p78 = scmp.eq.s32.totalorder %s16, 0
    %p79 = por %p77, %p78
    %p80 = scmp.ne.s32.totalorder %s68, %s69
    %p81 = scmp.eq.s32.totalorder %s17, 1
    %p82 = por %p80, %p81
    %p84 = scmp.ne.s32.totalorder %s69, %s83
    %p85 = scmp.eq.s32.totalorder %s17, 0
    %p86 = por %p84, %p85
    %s88 = sadd.s32 %s87, 1
    %p91 = scmp.eq.s32.totalorder %s11, 1
    %p92 = scmp.ne.s32.totalorder %s87, %s89
    %p93 = scmp.eq.s32.totalorder %s11, 0
    %p94 = por %p92, %p93
    %p95 = scmp.ne.s32.totalorder %s87, %s89
    %p96 = scmp.eq.s32.totalorder %s16, 1
    %p97 = por %p95, %p96
    %p98 = scmp.ne.s32.totalorder %s89, %s90
    %p99 = scmp.eq.s32.totalorder %s16, 0
    %p100 = por %p98, %p99
    %p101 = scmp.ne.s32.totalorder %s89, %s90
    %p102 = scmp.eq.s32.totalorder %s17, 1
    %p103 = por %p101, %p102
    %p105 = scmp.ne.s32.totalorder %s90, %s104
    %p106 = scmp.eq.s32.totalorder %s17, 0
    %p107 = por %p105, %p106
    %s109 = sadd.s32 %s108, 1
    %p112 = scmp.eq.s32.totalorder %s11, 1
    %p113 = scmp.ne.s32.totalorder %s108, %s110
    %p114 = scmp.eq.s32.totalorder %s11, 0
    %p115 = por %p113, %p114
    %p116 = scmp.ne.s32.totalorder %s108, %s110
    %p117 = scmp.eq.s32.totalorder %s16, 1
    %p118 = por %p116, %p117
    %p119 = scmp.ne.s32.totalorder %s110, %s111
    %p120 = scmp.eq.s32.totalorder %s16, 0
    %p121 = por %p119, %p120
    %p122 = scmp.ne.s32.totalorder %s110, %s111
    %p123 = scmp.eq.s32.totalorder %s17, 1
    %p124 = por %p122, %p123
    %p126 = scmp.ne.s32.totalorder %s111, %s125
    %p127 = scmp.eq.s32.totalorder %s17, 0
    %p128 = por %p126, %p127
    %s129 = ssub.s32 %s11, %s18
    %p130 = scmp.eq.s32.totalorder %s129, 0
    %s132 = sadd.s32 %s131, 1
    %s133 = scalar_select %p130, %s131, %s132
    %p136 = pneg %p130
    %p137 = scmp.eq.s32.totalorder %s11, 1
    %p138 = por %p136, %p137
    %p139 = scmp.ne.s32.totalorder %s131, %s134
    %p140 = scmp.eq.s32.totalorder %s11, 0
    %p141 = por %p139, %p140
    %p142 = scmp.ne.s32.totalorder %s131, %s134
    %p143 = scmp.eq.s32.totalorder %s16, 1
    %p144 = por %p142, %p143
    %p145 = scmp.ne.s32.totalorder %s134, %s135
    %p146 = scmp.eq.s32.totalorder %s16, 0
    %p147 = por %p145, %p146
    %p148 = scmp.ne.s32.totalorder %s134, %s135
    %p149 = scmp.eq.s32.totalorder %s17, 1
    %p150 = por %p148, %p149
    %p152 = scmp.ne.s32.totalorder %s135, %s151
    %p153 = scmp.eq.s32.totalorder %s17, 0
    %p154 = por %p152, %p153
    %p155 = scmp.le.s32.totalorder 1, %s11
    %p156 = scmp.lt.s32.totalorder %s11, 3
    %p157 = pnand %p155, %p156
    %p158 = pneg %p157
    // Predicated region
    $region9: #{decoder_map_forward.2} parent=5 // pred_check
      _
    $region10: #{decoder_map_forward.2} parent=5 // pred_check_branch
      %160 = sbr.rel (%p157) target = $region12
    $region11: #{decoder_map_forward.2} parent=5 // pred_region
      %s161 = ssub.s32 %s11, 1
      // Predicated region
      $region13: #{decoder_map_forward.2} parent=11 // pred_check
        %p162 = pneg %p58
      $region14: #{decoder_map_forward.2} parent=11 // pred_check_branch
        %164 = sbr.rel (%p162) target = $region16
      $region15: #{decoder_map_forward.2} parent=11 // pred_region
        _
      $region16: #{decoder_map_forward.2} parent=11 // pred_fallthru
        _
      // Predicated region
      $region17: #{decoder_map_forward.2} parent=11 // pred_check
        %p165 = pneg %p79
      $region18: #{decoder_map_forward.2} parent=11 // pred_check_branch
        %167 = sbr.rel (%p165) target = $region20
      $region19: #{decoder_map_forward.2} parent=11 // pred_region
        _
      $region20: #{decoder_map_forward.2} parent=11 // pred_fallthru
        _
      // Predicated region
      $region21: #{decoder_map_forward.2} parent=11 // pred_check
        %p168 = pneg %p100
      $region22: #{decoder_map_forward.2} parent=11 // pred_check_branch
        %170 = sbr.rel (%p168) target = $region24
      $region23: #{decoder_map_forward.2} parent=11 // pred_region
        _
      $region24: #{decoder_map_forward.2} parent=11 // pred_fallthru
        _
      // Predicated region
      $region25: #{decoder_map_forward.2} parent=11 // pred_check
        %p171 = pneg %p121
      $region26: #{decoder_map_forward.2} parent=11 // pred_check_branch
        %173 = sbr.rel (%p171) target = $region28
      $region27: #{decoder_map_forward.2} parent=11 // pred_region
        _
      $region28: #{decoder_map_forward.2} parent=11 // pred_fallthru
        _
    $region12: #{decoder_map_forward.2} parent=5 // pred_fallthru
      _
    %p174 = scmp.lt.s32.totalorder %s11, 2
    // Predicated region
    $region29: #{decoder_map_forward.2} parent=5 // pred_check
      %p175 = pneg %p174
    $region30: #{decoder_map_forward.2} parent=5 // pred_check_branch
      %177 = sbr.rel (%p175) target = $region32
    $region31: #{decoder_map_forward.2} parent=5 // pred_region
      // Predicated region
      $region33: #{decoder_map_forward.2} parent=31 // pred_check
        %p178 = pneg %p31
      $region34: #{decoder_map_forward.2} parent=31 // pred_check_branch
        %180 = sbr.rel (%p178) target = $region36
      $region35: #{decoder_map_forward.2} parent=31 // pred_region
        %s181 = smul.u32 32, %s11
        %p182 = scmp.lt.s32.totalorder %s181, 63
        %s183 = scalar_select %p182, %s181, 63
        %s184 = smul.addr %s183, 4
        %s185 = scalar_lea.vmem %s0, %s184
        %s186 = smul.u32 32, %s11
      $region36: #{decoder_map_forward.2} parent=31 // pred_fallthru
        _
    $region32: #{decoder_map_forward.2} parent=5 // pred_fallthru
      _
    %p187 = scmp.le.s32.totalorder 1, %s11
    %p188 = scmp.lt.s32.totalorder %s11, 3
    %p189 = pnand %p187, %p188
    %p190 = pneg %p189
    // Predicated region
    $region37: #{decoder_map_forward.2} parent=5 // pred_check
      _
    $region38: #{decoder_map_forward.2} parent=5 // pred_check_branch
      %192 = sbr.rel (%p189) target = $region40
    $region39: #{decoder_map_forward.2} parent=5 // pred_region
      %s193 = ssub.s32 %s11, 1
      %s194 = smul.u32 32, %s16
      %p195 = scmp.lt.s32.totalorder %s194, 63
      %s196 = scalar_select %p195, %s194, 63
      %s197 = smul.addr %s196, 4
      %s198 = scalar_lea.vmem %s0, %s197
      %p199 = pneg %p37
      %p200 = pneg %p34
      %p201 = pneg %p58
      %p202 = pneg %p55
      %p203 = pneg %p79
      %p204 = pneg %p76
      %p205 = pneg %p100
      %p206 = pneg %p97
      %p207 = pneg %p121
      %p208 = pneg %p118
      %p209 = pneg %p147
      %p210 = pneg %p144
      %s211 = smul.u32 4, %s16
      %p212 = scmp.lt.s32.totalorder %s211, 7
      %s213 = scalar_select %p212, %s211, 7
      %s214 = smul.addr %s213, 32
      %s215 = smul.addr %s214, 4
      %s216 = scalar_lea.vmem %s5, %s215
      %s217 = smul.u32 32, %s16
      %p218 = scmp.lt.s32.totalorder %s217, 63
      %s219 = scalar_select %p218, %s217, 63
      %s220 = smul.addr %s219, 4
      %s221 = scalar_lea.vmem %s0, %s220
      %s222 = smul.u32 32, %s16
      %s223 = smul.u32 4, %s16
      %p224 = scmp.lt.s32.totalorder %s223, 7
      %s225 = scalar_select %p224, %s223, 7
      %s226 = smul.addr %s225, 32
      %s227 = smul.addr %s226, 4
      %s228 = scalar_lea.vmem %s5, %s227
      %s229 = smul.u32 4, %s16
      %v231 = vld [vmem:[%s4] sm:$0x3f]
      %v232 = vld [vmem:[%s2] sm:$0xf]
      %v233 = vld [vmem:[%s2 + $0x4] sm:$0xf]
      %v234 = vld [vmem:[%s2 + $0x8] sm:$0xf]
      %v235 = vld [vmem:[%s2 + $0xc] sm:$0xf]
      %v236 = vld [vmem:[%s2 + $0x10] sm:$0xf]
      %v237 = vld [vmem:[%s2 + $0x14] sm:$0xf]
      %v238 = vld [vmem:[%s2 + $0x18] sm:$0xf]
      %v239 = vld [vmem:[%s2 + $0x1c] sm:$0xf]
      %v240 = vld [vmem:[%s2 + $0x20] sm:$0xf]
      %v241 = vld [vmem:[%s2 + $0x24] sm:$0xf]
      %v242 = vld [vmem:[%s2 + $0x28] sm:$0xf]
      %v243 = vld [vmem:[%s2 + $0x2c] sm:$0xf]
      %v244 = vld [vmem:[%s2 + $0x30] sm:$0xf]
      %v245 = vld [vmem:[%s2 + $0x34] sm:$0xf]
      %v246 = vld [vmem:[%s2 + $0x38] sm:$0xf]
      %v247 = vld [vmem:[%s2 + $0x3c] sm:$0xf]
      %v248 = vld [vmem:[%s221] sm:$0xf]
      %v249 = vld [vmem:[%s221 + $0x4] sm:$0xf]
      %v250 = vld [vmem:[%s221 + $0x8] sm:$0xf]
      %v251 = vld [vmem:[%s221 + $0xc] sm:$0xf]
      %v252 = vld [vmem:[%s221 + $0x10] sm:$0xf]
      %v253 = vld [vmem:[%s221 + $0x14] sm:$0xf]
      %v254 = vld [vmem:[%s221 + $0x18] sm:$0xf]
      %v255 = vld [vmem:[%s221 + $0x1c] sm:$0xf]
      %v256 = vld [vmem:[%s221 + $0x20] sm:$0xf]
      %v257 = vld [vmem:[%s221 + $0x24] sm:$0xf]
      %v258 = vld [vmem:[%s221 + $0x28] sm:$0xf]
      %v259 = vld [vmem:[%s221 + $0x2c] sm:$0xf]
      %v260 = vld [vmem:[%s221 + $0x30] sm:$0xf]
      %v261 = vld [vmem:[%s221 + $0x34] sm:$0xf]
      %v262 = vld [vmem:[%s221 + $0x38] sm:$0xf]
      %v263 = vld [vmem:[%s221 + $0x3c] sm:$0xf]
      %v264 = vld [vmem:[%s221 + $0x40] sm:$0xf]
      %v265 = vld [vmem:[%s221 + $0x44] sm:$0xf]
      %v266 = vld [vmem:[%s221 + $0x48] sm:$0xf]
      %v267 = vld [vmem:[%s221 + $0x4c] sm:$0xf]
      %v268 = vld [vmem:[%s221 + $0x50] sm:$0xf]
      %v269 = vld [vmem:[%s221 + $0x54] sm:$0xf]
      %v270 = vld [vmem:[%s221 + $0x58] sm:$0xf]
      %v271 = vld [vmem:[%s221 + $0x5c] sm:$0xf]
      %v272 = vld [vmem:[%s221 + $0x60] sm:$0xf]
      %v273 = vld [vmem:[%s221 + $0x64] sm:$0xf]
      %v274 = vld [vmem:[%s221 + $0x68] sm:$0xf]
      %v275 = vld [vmem:[%s221 + $0x6c] sm:$0xf]
      %v276 = vld [vmem:[%s221 + $0x70] sm:$0xf]
      %v277 = vld [vmem:[%s221 + $0x74] sm:$0xf]
      %v278 = vld [vmem:[%s221 + $0x78] sm:$0xf]
      %v279 = vld [vmem:[%s221 + $0x7c] sm:$0xf]
      %v280 = vld [vmem:[%s1] sm:$0xf]
      %v281 = vld [vmem:[%s1 + $0x4] sm:$0xf]
      %v282 = vld [vmem:[%s1 + $0x8] sm:$0xf]
      %v283 = vld [vmem:[%s1 + $0xc] sm:$0xf]
      %v284 = vperm.slane %v231, 0
      %v317 = vunpack.c.l.b16 %v248
      %v318 = vunpack.c.l.b16 %v249
      %v319 = vunpack.c.l.b16 %v250
      %v320 = vunpack.c.l.b16 %v251
      %v321 = vunpack.c.l.b16 %v252
      %v322 = vunpack.c.l.b16 %v253
      %v323 = vunpack.c.l.b16 %v254
      %v324 = vunpack.c.l.b16 %v255
      %v325 = vunpack.c.l.b16 %v256
      %v326 = vunpack.c.l.b16 %v257
      %v327 = vunpack.c.l.b16 %v258
      %v328 = vunpack.c.l.b16 %v259
      %v329 = vunpack.c.l.b16 %v260
      %v330 = vunpack.c.l.b16 %v261
      %v331 = vunpack.c.l.b16 %v262
      %v332 = vunpack.c.l.b16 %v263
      %v333 = vunpack.c.l.b16 %v264
      %v334 = vunpack.c.l.b16 %v265
      %v335 = vunpack.c.l.b16 %v266
      %v336 = vunpack.c.l.b16 %v267
      %v337 = vunpack.c.l.b16 %v268
      %v338 = vunpack.c.l.b16 %v269
      %v339 = vunpack.c.l.b16 %v270
      %v340 = vunpack.c.l.b16 %v271
      %v341 = vunpack.c.l.b16 %v272
      %v342 = vunpack.c.l.b16 %v273
      %v343 = vunpack.c.l.b16 %v274
      %v344 = vunpack.c.l.b16 %v275
      %v345 = vunpack.c.l.b16 %v276
      %v346 = vunpack.c.l.b16 %v277
      %v347 = vunpack.c.l.b16 %v278
      %v348 = vunpack.c.l.b16 %v279
      %v349 = vpack.c.b16 %v318, %v317
      %v350 = vpack.c.b16 %v320, %v319
      %v351 = vpack.c.b16 %v322, %v321
      %v352 = vpack.c.b16 %v324, %v323
      %v353 = vpack.c.b16 %v326, %v325
      %v354 = vpack.c.b16 %v328, %v327
      %v355 = vpack.c.b16 %v330, %v329
      %v356 = vpack.c.b16 %v332, %v331
      %v357 = vpack.c.b16 %v334, %v333
      %v358 = vpack.c.b16 %v336, %v335
      %v359 = vpack.c.b16 %v338, %v337
      %v360 = vpack.c.b16 %v340, %v339
      %v361 = vpack.c.b16 %v342, %v341
      %v362 = vpack.c.b16 %v344, %v343
      %v363 = vpack.c.b16 %v346, %v345
      %v364 = vpack.c.b16 %v348, %v347
      %v369 = vunpack.c.l.b16 %v280
      %v370 = vunpack.c.l.b16 %v281
      %v371 = vunpack.c.l.b16 %v282
      %v372 = vunpack.c.l.b16 %v283
      %v373 = vpack.c.b16 %v370, %v369
      %v374 = vpack.c.b16 %v372, %v371
      %vm377 = vcmask 261120
      %v379 = vsel %vm377, %v349, 0
      %v382 = vsel %vm377, %v350, 0
      %v385 = vsel %vm377, %v351, 0
      %v388 = vsel %vm377, %v352, 0
      %v391 = vsel %vm377, %v353, 0
      %v394 = vsel %vm377, %v354, 0
      %v397 = vsel %vm377, %v355, 0
      %v400 = vsel %vm377, %v356, 0
      %v403 = vsel %vm377, %v357, 0
      %v406 = vsel %vm377, %v358, 0
      %v409 = vsel %vm377, %v359, 0
      %v412 = vsel %vm377, %v360, 0
      %v415 = vsel %vm377, %v361, 0
      %v418 = vsel %vm377, %v362, 0
      %v421 = vsel %vm377, %v363, 0
      %v424 = vsel %vm377, %v364, 0
      %426 = vmatpush.bf16.msra.mxu0 0
      %427 = vmatpush.bf16.msra.mxu0 0
      %428 = vmatpush.bf16.msra.mxu0 0
      %429 = vmatpush.bf16.msra.mxu0 0
      %430 = vmatpush.bf16.msra.mxu0 0
      %431 = vmatpush.bf16.msra.mxu0 0
      %432 = vmatpush.bf16.msra.mxu0 %v374
      %433 = vmatpush.bf16.msra.mxu0 %v373
      %434 = vmatmul.bf16.gmra.mxu0 %v379
      %v435 = vpop.f32.mrf.mxu0
      %v436 = vadd.f32 %v284, %v435
      %v437 = vpop.f32.mrf.mxu0
      %v438 = vadd.f32 %v284, %v437
      %439 = vmatmul.bf16.gmra.mxu0 %v382
      %v440 = vpop.f32.mrf.mxu0
      %v441 = vadd.f32 %v284, %v440
      %v442 = vpop.f32.mrf.mxu0
      %v443 = vadd.f32 %v284, %v442
      %444 = vmatmul.bf16.gmra.mxu0 %v385
      %v445 = vpop.f32.mrf.mxu0
      %v446 = vadd.f32 %v284, %v445
      %v447 = vpop.f32.mrf.mxu0
      %v448 = vadd.f32 %v284, %v447
      %449 = vmatmul.bf16.gmra.mxu0 %v388
      %v450 = vpop.f32.mrf.mxu0
      %v451 = vadd.f32 %v284, %v450
      %v452 = vpop.f32.mrf.mxu0
      %v453 = vadd.f32 %v284, %v452
      %454 = vmatmul.bf16.gmra.mxu0 %v391
      %v455 = vpop.f32.mrf.mxu0
      %v456 = vadd.f32 %v284, %v455
      %v457 = vpop.f32.mrf.mxu0
      %v458 = vadd.f32 %v284, %v457
      %459 = vmatmul.bf16.gmra.mxu0 %v394
      %v460 = vpop.f32.mrf.mxu0
      %v461 = vadd.f32 %v284, %v460
      %v462 = vpop.f32.mrf.mxu0
      %v463 = vadd.f32 %v284, %v462
      %464 = vmatmul.bf16.gmra.mxu0 %v397
      %v465 = vpop.f32.mrf.mxu0
      %v466 = vadd.f32 %v284, %v465
      %v467 = vpop.f32.mrf.mxu0
      %v468 = vadd.f32 %v284, %v467
      %469 = vmatmul.bf16.gmra.mxu0 %v400
      %v470 = vpop.f32.mrf.mxu0
      %v471 = vadd.f32 %v284, %v470
      %v472 = vpop.f32.mrf.mxu0
      %v473 = vadd.f32 %v284, %v472
      %474 = vmatmul.bf16.gmra.mxu0 %v403
      %v475 = vpop.f32.mrf.mxu0
      %v476 = vadd.f32 %v284, %v475
      %v477 = vpop.f32.mrf.mxu0
      %v478 = vadd.f32 %v284, %v477
      %479 = vmatmul.bf16.gmra.mxu0 %v406
      %v480 = vpop.f32.mrf.mxu0
      %v481 = vadd.f32 %v284, %v480
      %v482 = vpop.f32.mrf.mxu0
      %v483 = vadd.f32 %v284, %v482
      %484 = vmatmul.bf16.gmra.mxu0 %v409
      %v485 = vpop.f32.mrf.mxu0
      %v486 = vadd.f32 %v284, %v485
      %v487 = vpop.f32.mrf.mxu0
      %v488 = vadd.f32 %v284, %v487
      %489 = vmatmul.bf16.gmra.mxu0 %v412
      %v490 = vpop.f32.mrf.mxu0
      %v491 = vadd.f32 %v284, %v490
      %v492 = vpop.f32.mrf.mxu0
      %v493 = vadd.f32 %v284, %v492
      %494 = vmatmul.bf16.gmra.mxu0 %v415
      %v495 = vpop.f32.mrf.mxu0
      %v496 = vadd.f32 %v284, %v495
      %v497 = vpop.f32.mrf.mxu0
      %v498 = vadd.f32 %v284, %v497
      %499 = vmatmul.bf16.gmra.mxu0 %v418
      %v500 = vpop.f32.mrf.mxu0
      %v501 = vadd.f32 %v284, %v500
      %v502 = vpop.f32.mrf.mxu0
      %v503 = vadd.f32 %v284, %v502
      %504 = vmatmul.bf16.gmra.mxu0 %v421
      %v505 = vpop.f32.mrf.mxu0
      %v506 = vadd.f32 %v284, %v505
      %v507 = vpop.f32.mrf.mxu0
      %v508 = vadd.f32 %v284, %v507
      %509 = vmatmul.bf16.gmra.mxu0 %v424
      %v510 = vpop.f32.mrf.mxu0
      %v511 = vadd.f32 %v284, %v510
      %v512 = vpop.f32.mrf.mxu0
      %v513 = vadd.f32 %v284, %v512
      %514 = vdwg.mxu0
      %v515 = vpack.c.bf16 %v438, %v436
      %v516 = vpack.c.bf16 %v443, %v441
      %v517 = vpack.c.bf16 %v448, %v446
      %v518 = vpack.c.bf16 %v453, %v451
      %v519 = vpack.c.bf16 %v458, %v456
      %v520 = vpack.c.bf16 %v463, %v461
      %v521 = vpack.c.bf16 %v468, %v466
      %v522 = vpack.c.bf16 %v473, %v471
      %v523 = vpack.c.bf16 %v478, %v476
      %v524 = vpack.c.bf16 %v483, %v481
      %v525 = vpack.c.bf16 %v488, %v486
      %v526 = vpack.c.bf16 %v493, %v491
      %v527 = vpack.c.bf16 %v498, %v496
      %v528 = vpack.c.bf16 %v503, %v501
      %v529 = vpack.c.bf16 %v508, %v506
      %v530 = vpack.c.bf16 %v513, %v511
      %v547 = vunpack.c.l.b16 %v232
      %v548 = vunpack.c.l.b16 %v233
      %v549 = vunpack.c.l.b16 %v234
      %v550 = vunpack.c.l.b16 %v235
      %v551 = vunpack.c.l.b16 %v236
      %v552 = vunpack.c.l.b16 %v237
      %v553 = vunpack.c.l.b16 %v238
      %v554 = vunpack.c.l.b16 %v239
      %v555 = vunpack.c.l.b16 %v240
      %v556 = vunpack.c.l.b16 %v241
      %v557 = vunpack.c.l.b16 %v242
      %v558 = vunpack.c.l.b16 %v243
      %v559 = vunpack.c.l.b16 %v244
      %v560 = vunpack.c.l.b16 %v245
      %v561 = vunpack.c.l.b16 %v246
      %v562 = vunpack.c.l.b16 %v247
      %v563 = vpack.c.b16 %v548, %v547
      %v564 = vpack.c.b16 %v550, %v549
      %v565 = vpack.c.b16 %v552, %v551
      %v566 = vpack.c.b16 %v554, %v553
      %v567 = vpack.c.b16 %v556, %v555
      %v568 = vpack.c.b16 %v558, %v557
      %v569 = vpack.c.b16 %v560, %v559
      %v570 = vpack.c.b16 %v562, %v561
      %579 = vmatpush.bf16.msra.mxu0 %v570
      %580 = vmatpush.bf16.msra.mxu0 %v569
      %581 = vmatpush.bf16.msra.mxu0 %v568
      %582 = vmatpush.bf16.msra.mxu0 %v567
      %583 = vmatpush.bf16.msra.mxu0 %v566
      %584 = vmatpush.bf16.msra.mxu0 %v565
      %585 = vmatpush.bf16.msra.mxu0 %v564
      %586 = vmatpush.bf16.msra.mxu0 %v563
      %587 = vmatmul.bf16.gmra.mxu0 %v515
      %v588 = vpop.f32.mrf.mxu0
      %v589 = vadd.f32 0.0, %v588
      %v590 = vpop.f32.mrf.mxu0
      %v591 = vadd.f32 0.0, %v590
      %592 = vmatmul.bf16.gmra.mxu0 %v516
      %v593 = vpop.f32.mrf.mxu0
      %v594 = vadd.f32 0.0, %v593
      %v595 = vpop.f32.mrf.mxu0
      %v596 = vadd.f32 0.0, %v595
      %597 = vmatmul.bf16.gmra.mxu0 %v517
      %v598 = vpop.f32.mrf.mxu0
      %v599 = vadd.f32 0.0, %v598
      %v600 = vpop.f32.mrf.mxu0
      %v601 = vadd.f32 0.0, %v600
      %602 = vmatmul.bf16.gmra.mxu0 %v518
      %v603 = vpop.f32.mrf.mxu0
      %v604 = vadd.f32 0.0, %v603
      %v605 = vpop.f32.mrf.mxu0
      %v606 = vadd.f32 0.0, %v605
      %607 = vmatmul.bf16.gmra.mxu0 %v519
      %v608 = vpop.f32.mrf.mxu0
      %v609 = vadd.f32 0.0, %v608
      %v610 = vpop.f32.mrf.mxu0
      %v611 = vadd.f32 0.0, %v610
      %612 = vmatmul.bf16.gmra.mxu0 %v520
      %v613 = vpop.f32.mrf.mxu0
      %v614 = vadd.f32 0.0, %v613
      %v615 = vpop.f32.mrf.mxu0
      %v616 = vadd.f32 0.0, %v615
      %617 = vmatmul.bf16.gmra.mxu0 %v521
      %v618 = vpop.f32.mrf.mxu0
      %v619 = vadd.f32 0.0, %v618
      %v620 = vpop.f32.mrf.mxu0
      %v621 = vadd.f32 0.0, %v620
      %622 = vmatmul.bf16.gmra.mxu0 %v522
      %v623 = vpop.f32.mrf.mxu0
      %v624 = vadd.f32 0.0, %v623
      %v625 = vpop.f32.mrf.mxu0
      %v626 = vadd.f32 0.0, %v625
      %627 = vmatmul.bf16.gmra.mxu0 %v523
      %v628 = vpop.f32.mrf.mxu0
      %v629 = vadd.f32 0.0, %v628
      %v630 = vpop.f32.mrf.mxu0
      %v631 = vadd.f32 0.0, %v630
      %632 = vmatmul.bf16.gmra.mxu0 %v524
      %v633 = vpop.f32.mrf.mxu0
      %v634 = vadd.f32 0.0, %v633
      %v635 = vpop.f32.mrf.mxu0
      %v636 = vadd.f32 0.0, %v635
      %637 = vmatmul.bf16.gmra.mxu0 %v525
      %v638 = vpop.f32.mrf.mxu0
      %v639 = vadd.f32 0.0, %v638
      %v640 = vpop.f32.mrf.mxu0
      %v641 = vadd.f32 0.0, %v640
      %642 = vmatmul.bf16.gmra.mxu0 %v526
      %v643 = vpop.f32.mrf.mxu0
      %v644 = vadd.f32 0.0, %v643
      %v645 = vpop.f32.mrf.mxu0
      %v646 = vadd.f32 0.0, %v645
      %647 = vmatmul.bf16.gmra.mxu0 %v527
      %v648 = vpop.f32.mrf.mxu0
      %v649 = vadd.f32 0.0, %v648
      %v650 = vpop.f32.mrf.mxu0
      %v651 = vadd.f32 0.0, %v650
      %652 = vmatmul.bf16.gmra.mxu0 %v528
      %v653 = vpop.f32.mrf.mxu0
      %v654 = vadd.f32 0.0, %v653
      %v655 = vpop.f32.mrf.mxu0
      %v656 = vadd.f32 0.0, %v655
      %657 = vmatmul.bf16.gmra.mxu0 %v529
      %v658 = vpop.f32.mrf.mxu0
      %v659 = vadd.f32 0.0, %v658
      %v660 = vpop.f32.mrf.mxu0
      %v661 = vadd.f32 0.0, %v660
      %662 = vmatmul.bf16.gmra.mxu0 %v530
      %v663 = vpop.f32.mrf.mxu0
      %v664 = vadd.f32 0.0, %v663
      %v665 = vpop.f32.mrf.mxu0
      %v666 = vadd.f32 0.0, %v665
      %667 = vdwg.mxu0
      %v668 = vmul.f32 %v436, %v436
      %v669 = vmul.f32 %v438, %v438
      %v670 = vmul.f32 %v441, %v441
      %v671 = vmul.f32 %v443, %v443
      %v672 = vmul.f32 %v446, %v446
      %v673 = vmul.f32 %v448, %v448
      %v674 = vmul.f32 %v451, %v451
      %v675 = vmul.f32 %v453, %v453
      %v676 = vmul.f32 %v456, %v456
      %v677 = vmul.f32 %v458, %v458
      %v678 = vmul.f32 %v461, %v461
      %v679 = vmul.f32 %v463, %v463
      %v680 = vmul.f32 %v466, %v466
      %v681 = vmul.f32 %v468, %v468
      %v682 = vmul.f32 %v471, %v471
      %v683 = vmul.f32 %v473, %v473
      %v684 = vmul.f32 %v476, %v476
      %v685 = vmul.f32 %v478, %v478
      %v686 = vmul.f32 %v481, %v481
      %v687 = vmul.f32 %v483, %v483
      %v688 = vmul.f32 %v486, %v486
      %v689 = vmul.f32 %v488, %v488
      %v690 = vmul.f32 %v491, %v491
      %v691 = vmul.f32 %v493, %v493
      %v692 = vmul.f32 %v496, %v496
      %v693 = vmul.f32 %v498, %v498
      %v694 = vmul.f32 %v501, %v501
      %v695 = vmul.f32 %v503, %v503
      %v696 = vmul.f32 %v506, %v506
      %v697 = vmul.f32 %v508, %v508
      %v698 = vmul.f32 %v511, %v511
      %v699 = vmul.f32 %v513, %v513
      %v700 = vpack.c.bf16 %v669, %v668
      %v701 = vpack.c.bf16 %v671, %v670
      %v702 = vpack.c.bf16 %v673, %v672
      %v703 = vpack.c.bf16 %v675, %v674
      %v704 = vpack.c.bf16 %v677, %v676
      %v705 = vpack.c.bf16 %v679, %v678
      %v706 = vpack.c.bf16 %v681, %v680
      %v707 = vpack.c.bf16 %v683, %v682
      %v708 = vpack.c.bf16 %v685, %v684
      %v709 = vpack.c.bf16 %v687, %v686
      %v710 = vpack.c.bf16 %v689, %v688
      %v711 = vpack.c.bf16 %v691, %v690
      %v712 = vpack.c.bf16 %v693, %v692
      %v713 = vpack.c.bf16 %v695, %v694
      %v714 = vpack.c.bf16 %v697, %v696
      %v715 = vpack.c.bf16 %v699, %v698
      %716 = vmatpush.bf16.msra.mxu0 %v570
      %717 = vmatpush.bf16.msra.mxu0 %v569
      %718 = vmatpush.bf16.msra.mxu0 %v568
      %719 = vmatpush.bf16.msra.mxu0 %v567
      %720 = vmatpush.bf16.msra.mxu0 %v566
      %721 = vmatpush.bf16.msra.mxu0 %v565
      %722 = vmatpush.bf16.msra.mxu0 %v564
      %723 = vmatpush.bf16.msra.mxu0 %v563
      %724 = vmatmul.bf16.gmra.mxu0 %v700
      %v725 = vpop.f32.mrf.mxu0
      %v726 = vadd.f32 0.0, %v725
      %v727 = vpop.f32.mrf.mxu0
      %v728 = vadd.f32 0.0, %v727
      %729 = vmatmul.bf16.gmra.mxu0 %v701
      %v730 = vpop.f32.mrf.mxu0
      %v731 = vadd.f32 0.0, %v730
      %v732 = vpop.f32.mrf.mxu0
      %v733 = vadd.f32 0.0, %v732
      %734 = vmatmul.bf16.gmra.mxu0 %v702
      %v735 = vpop.f32.mrf.mxu0
      %v736 = vadd.f32 0.0, %v735
      %v737 = vpop.f32.mrf.mxu0
      %v738 = vadd.f32 0.0, %v737
      %739 = vmatmul.bf16.gmra.mxu0 %v703
      %v740 = vpop.f32.mrf.mxu0
      %v741 = vadd.f32 0.0, %v740
      %v742 = vpop.f32.mrf.mxu0
      %v743 = vadd.f32 0.0, %v742
      %744 = vmatmul.bf16.gmra.mxu0 %v704
      %v745 = vpop.f32.mrf.mxu0
      %v746 = vadd.f32 0.0, %v745
      %v747 = vpop.f32.mrf.mxu0
      %v748 = vadd.f32 0.0, %v747
      %749 = vmatmul.bf16.gmra.mxu0 %v705
      %v750 = vpop.f32.mrf.mxu0
      %v751 = vadd.f32 0.0, %v750
      %v752 = vpop.f32.mrf.mxu0
      %v753 = vadd.f32 0.0, %v752
      %754 = vmatmul.bf16.gmra.mxu0 %v706
      %v755 = vpop.f32.mrf.mxu0
      %v756 = vadd.f32 0.0, %v755
      %v757 = vpop.f32.mrf.mxu0
      %v758 = vadd.f32 0.0, %v757
      %759 = vmatmul.bf16.gmra.mxu0 %v707
      %v760 = vpop.f32.mrf.mxu0
      %v761 = vadd.f32 0.0, %v760
      %v762 = vpop.f32.mrf.mxu0
      %v763 = vadd.f32 0.0, %v762
      %764 = vmatmul.bf16.gmra.mxu0 %v708
      %v765 = vpop.f32.mrf.mxu0
      %v766 = vadd.f32 0.0, %v765
      %v767 = vpop.f32.mrf.mxu0
      %v768 = vadd.f32 0.0, %v767
      %769 = vmatmul.bf16.gmra.mxu0 %v709
      %v770 = vpop.f32.mrf.mxu0
      %v771 = vadd.f32 0.0, %v770
      %v772 = vpop.f32.mrf.mxu0
      %v773 = vadd.f32 0.0, %v772
      %774 = vmatmul.bf16.gmra.mxu0 %v710
      %v775 = vpop.f32.mrf.mxu0
      %v776 = vadd.f32 0.0, %v775
      %v777 = vpop.f32.mrf.mxu0
      %v778 = vadd.f32 0.0, %v777
      %779 = vmatmul.bf16.gmra.mxu0 %v711
      %v780 = vpop.f32.mrf.mxu0
      %v781 = vadd.f32 0.0, %v780
      %v782 = vpop.f32.mrf.mxu0
      %v783 = vadd.f32 0.0, %v782
      %784 = vmatmul.bf16.gmra.mxu0 %v712
      %v785 = vpop.f32.mrf.mxu0
      %v786 = vadd.f32 0.0, %v785
      %v787 = vpop.f32.mrf.mxu0
      %v788 = vadd.f32 0.0, %v787
      %789 = vmatmul.bf16.gmra.mxu0 %v713
      %v790 = vpop.f32.mrf.mxu0
      %v791 = vadd.f32 0.0, %v790
      %v792 = vpop.f32.mrf.mxu0
      %v793 = vadd.f32 0.0, %v792
      %794 = vmatmul.bf16.gmra.mxu0 %v714
      %v795 = vpop.f32.mrf.mxu0
      %v796 = vadd.f32 0.0, %v795
      %v797 = vpop.f32.mrf.mxu0
      %v798 = vadd.f32 0.0, %v797
      %799 = vmatmul.bf16.gmra.mxu0 %v715
      %v800 = vpop.f32.mrf.mxu0
      %v801 = vadd.f32 0.0, %v800
      %v802 = vpop.f32.mrf.mxu0
      %v803 = vadd.f32 0.0, %v802
      %804 = vdwg.mxu0
      %v805 = vmul.f32 %v589, %v589
      %v806 = vmul.f32 %v591, %v591
      %v807 = vmul.f32 %v594, %v594
      %v808 = vmul.f32 %v596, %v596
      %v809 = vmul.f32 %v599, %v599
      %v810 = vmul.f32 %v601, %v601
      %v811 = vmul.f32 %v604, %v604
      %v812 = vmul.f32 %v606, %v606
      %v813 = vmul.f32 %v609, %v609
      %v814 = vmul.f32 %v611, %v611
      %v815 = vmul.f32 %v614, %v614
      %v816 = vmul.f32 %v616, %v616
      %v817 = vmul.f32 %v619, %v619
      %v818 = vmul.f32 %v621, %v621
      %v819 = vmul.f32 %v624, %v624
      %v820 = vmul.f32 %v626, %v626
      %v821 = vmul.f32 %v629, %v629
      %v822 = vmul.f32 %v631, %v631
      %v823 = vmul.f32 %v634, %v634
      %v824 = vmul.f32 %v636, %v636
      %v825 = vmul.f32 %v639, %v639
      %v826 = vmul.f32 %v641, %v641
      %v827 = vmul.f32 %v644, %v644
      %v828 = vmul.f32 %v646, %v646
      %v829 = vmul.f32 %v649, %v649
      %v830 = vmul.f32 %v651, %v651
      %v831 = vmul.f32 %v654, %v654
      %v832 = vmul.f32 %v656, %v656
      %v833 = vmul.f32 %v659, %v659
      %v834 = vmul.f32 %v661, %v661
      %v835 = vmul.f32 %v664, %v664
      %v836 = vmul.f32 %v666, %v666
      %v837 = vsub.f32 %v726, %v805
      %v838 = vsub.f32 %v728, %v806
      %v839 = vsub.f32 %v731, %v807
      %v840 = vsub.f32 %v733, %v808
      %v841 = vsub.f32 %v736, %v809
      %v842 = vsub.f32 %v738, %v810
      %v843 = vsub.f32 %v741, %v811
      %v844 = vsub.f32 %v743, %v812
      %v845 = vsub.f32 %v746, %v813
      %v846 = vsub.f32 %v748, %v814
      %v847 = vsub.f32 %v751, %v815
      %v848 = vsub.f32 %v753, %v816
      %v849 = vsub.f32 %v756, %v817
      %v850 = vsub.f32 %v758, %v818
      %v851 = vsub.f32 %v761, %v819
      %v852 = vsub.f32 %v763, %v820
      %v853 = vsub.f32 %v766, %v821
      %v854 = vsub.f32 %v768, %v822
      %v855 = vsub.f32 %v771, %v823
      %v856 = vsub.f32 %v773, %v824
      %v857 = vsub.f32 %v776, %v825
      %v858 = vsub.f32 %v778, %v826
      %v859 = vsub.f32 %v781, %v827
      %v860 = vsub.f32 %v783, %v828
      %v861 = vsub.f32 %v786, %v829
      %v862 = vsub.f32 %v788, %v830
      %v863 = vsub.f32 %v791, %v831
      %v864 = vsub.f32 %v793, %v832
      %v865 = vsub.f32 %v796, %v833
      %v866 = vsub.f32 %v798, %v834
      %v867 = vsub.f32 %v801, %v835
      %v868 = vsub.f32 %v803, %v836
      %v869 = vmax.f32 %v837, 0.0
      %v870 = vmax.f32 %v838, 0.0
      %v871 = vmax.f32 %v839, 0.0
      %v872 = vmax.f32 %v840, 0.0
      %v873 = vmax.f32 %v841, 0.0
      %v874 = vmax.f32 %v842, 0.0
      %v875 = vmax.f32 %v843, 0.0
      %v876 = vmax.f32 %v844, 0.0
      %v877 = vmax.f32 %v845, 0.0
      %v878 = vmax.f32 %v846, 0.0
      %v879 = vmax.f32 %v847, 0.0
      %v880 = vmax.f32 %v848, 0.0
      %v881 = vmax.f32 %v849, 0.0
      %v882 = vmax.f32 %v850, 0.0
      %v883 = vmax.f32 %v851, 0.0
      %v884 = vmax.f32 %v852, 0.0
      %v885 = vmax.f32 %v853, 0.0
      %v886 = vmax.f32 %v854, 0.0
      %v887 = vmax.f32 %v855, 0.0
      %v888 = vmax.f32 %v856, 0.0
      %v889 = vmax.f32 %v857, 0.0
      %v890 = vmax.f32 %v858, 0.0
      %v891 = vmax.f32 %v859, 0.0
      %v892 = vmax.f32 %v860, 0.0
      %v893 = vmax.f32 %v861, 0.0
      %v894 = vmax.f32 %v862, 0.0
      %v895 = vmax.f32 %v863, 0.0
      %v896 = vmax.f32 %v864, 0.0
      %v897 = vmax.f32 %v865, 0.0
      %v898 = vmax.f32 %v866, 0.0
      %v899 = vmax.f32 %v867, 0.0
      %v900 = vmax.f32 %v868, 0.0
      %v901 = vsub.f32 %v436, %v589
      %v902 = vsub.f32 %v438, %v591
      %v903 = vsub.f32 %v441, %v594
      %v904 = vsub.f32 %v443, %v596
      %v905 = vsub.f32 %v446, %v599
      %v906 = vsub.f32 %v448, %v601
      %v907 = vsub.f32 %v451, %v604
      %v908 = vsub.f32 %v453, %v606
      %v909 = vsub.f32 %v456, %v609
      %v910 = vsub.f32 %v458, %v611
      %v911 = vsub.f32 %v461, %v614
      %v912 = vsub.f32 %v463, %v616
      %v913 = vsub.f32 %v466, %v619
      %v914 = vsub.f32 %v468, %v621
      %v915 = vsub.f32 %v471, %v624
      %v916 = vsub.f32 %v473, %v626
      %v917 = vsub.f32 %v476, %v629
      %v918 = vsub.f32 %v478, %v631
      %v919 = vsub.f32 %v481, %v634
      %v920 = vsub.f32 %v483, %v636
      %v921 = vsub.f32 %v486, %v639
      %v922 = vsub.f32 %v488, %v641
      %v923 = vsub.f32 %v491, %v644
      %v924 = vsub.f32 %v493, %v646
      %v925 = vsub.f32 %v496, %v649
      %v926 = vsub.f32 %v498, %v651
      %v927 = vsub.f32 %v501, %v654
      %v928 = vsub.f32 %v503, %v656
      %v929 = vsub.f32 %v506, %v659
      %v930 = vsub.f32 %v508, %v661
      %v931 = vsub.f32 %v511, %v664
      %v932 = vsub.f32 %v513, %v666
      %v933 = vadd.f32 %v869, 1e-06
      %v934 = vadd.f32 %v870, 1e-06
      %v935 = vadd.f32 %v871, 1e-06
      %v936 = vadd.f32 %v872, 1e-06
      %v937 = vadd.f32 %v873, 1e-06
      %v938 = vadd.f32 %v874, 1e-06
      %v939 = vadd.f32 %v875, 1e-06
      %v940 = vadd.f32 %v876, 1e-06
      %v941 = vadd.f32 %v877, 1e-06
      %v942 = vadd.f32 %v878, 1e-06
      %v943 = vadd.f32 %v879, 1e-06
      %v944 = vadd.f32 %v880, 1e-06
      %v945 = vadd.f32 %v881, 1e-06
      %v946 = vadd.f32 %v882, 1e-06
      %v947 = vadd.f32 %v883, 1e-06
      %v948 = vadd.f32 %v884, 1e-06
      %v949 = vadd.f32 %v885, 1e-06
      %v950 = vadd.f32 %v886, 1e-06
      %v951 = vadd.f32 %v887, 1e-06
      %v952 = vadd.f32 %v888, 1e-06
      %v953 = vadd.f32 %v889, 1e-06
      %v954 = vadd.f32 %v890, 1e-06
      %v955 = vadd.f32 %v891, 1e-06
      %v956 = vadd.f32 %v892, 1e-06
      %v957 = vadd.f32 %v893, 1e-06
      %v958 = vadd.f32 %v894, 1e-06
      %v959 = vadd.f32 %v895, 1e-06
      %v960 = vadd.f32 %v896, 1e-06
      %v961 = vadd.f32 %v897, 1e-06
      %v962 = vadd.f32 %v898, 1e-06
      %v963 = vadd.f32 %v899, 1e-06
      %v964 = vadd.f32 %v900, 1e-06
      %v965 = vrsqrt.pop %v933
      %v966 = vmul.f32 %v965, %v933
      %v967 = vmul.f32 %v966, %v965
      %v968 = vmul.f32 0.5, %v967
      %v969 = vsub.f32 1.5, %v968
      %v970 = vmul.f32 %v965, %v969
      %vm971 = vweird.f32 %v933
      %vm972 = vweird.f32 %v965
      %vm973 = vmor %vm971, %vm972
      %v974 = vsel %vm973, %v965, %v970
      %v975 = vrsqrt.pop %v934
      %v976 = vmul.f32 %v975, %v934
      %v977 = vmul.f32 %v976, %v975
      %v978 = vmul.f32 0.5, %v977
      %v979 = vsub.f32 1.5, %v978
      %v980 = vmul.f32 %v975, %v979
      %vm981 = vweird.f32 %v934
      %vm982 = vweird.f32 %v975
      %vm983 = vmor %vm981, %vm982
      %v984 = vsel %vm983, %v975, %v980
      %v985 = vrsqrt.pop %v935
      %v986 = vmul.f32 %v985, %v935
      %v987 = vmul.f32 %v986, %v985
      %v988 = vmul.f32 0.5, %v987
      %v989 = vsub.f32 1.5, %v988
      %v990 = vmul.f32 %v985, %v989
      %vm991 = vweird.f32 %v935
      %vm992 = vweird.f32 %v985
      %vm993 = vmor %vm991, %vm992
      %v994 = vsel %vm993, %v985, %v990
      %v995 = vrsqrt.pop %v936
      %v996 = vmul.f32 %v995, %v936
      %v997 = vmul.f32 %v996, %v995
      %v998 = vmul.f32 0.5, %v997
      %v999 = vsub.f32 1.5, %v998
      %v1000 = vmul.f32 %v995, %v999
      %vm1001 = vweird.f32 %v936
      %vm1002 = vweird.f32 %v995
      %vm1003 = vmor %vm1001, %vm1002
      %v1004 = vsel %vm1003, %v995, %v1000
      %v1005 = vrsqrt.pop %v937
      %v1006 = vmul.f32 %v1005, %v937
      %v1007 = vmul.f32 %v1006, %v1005
      %v1008 = vmul.f32 0.5, %v1007
      %v1009 = vsub.f32 1.5, %v1008
      %v1010 = vmul.f32 %v1005, %v1009
      %vm1011 = vweird.f32 %v937
      %vm1012 = vweird.f32 %v1005
      %vm1013 = vmor %vm1011, %vm1012
      %v1014 = vsel %vm1013, %v1005, %v1010
      %v1015 = vrsqrt.pop %v938
      %v1016 = vmul.f32 %v1015, %v938
      %v1017 = vmul.f32 %v1016, %v1015
      %v1018 = vmul.f32 0.5, %v1017
      %v1019 = vsub.f32 1.5, %v1018
      %v1020 = vmul.f32 %v1015, %v1019
      %vm1021 = vweird.f32 %v938
      %vm1022 = vweird.f32 %v1015
      %vm1023 = vmor %vm1021, %vm1022
      %v1024 = vsel %vm1023, %v1015, %v1020
      %v1025 = vrsqrt.pop %v939
      %v1026 = vmul.f32 %v1025, %v939
      %v1027 = vmul.f32 %v1026, %v1025
      %v1028 = vmul.f32 0.5, %v1027
      %v1029 = vsub.f32 1.5, %v1028
      %v1030 = vmul.f32 %v1025, %v1029
      %vm1031 = vweird.f32 %v939
      %vm1032 = vweird.f32 %v1025
      %vm1033 = vmor %vm1031, %vm1032
      %v1034 = vsel %vm1033, %v1025, %v1030
      %v1035 = vrsqrt.pop %v940
      %v1036 = vmul.f32 %v1035, %v940
      %v1037 = vmul.f32 %v1036, %v1035
      %v1038 = vmul.f32 0.5, %v1037
      %v1039 = vsub.f32 1.5, %v1038
      %v1040 = vmul.f32 %v1035, %v1039
      %vm1041 = vweird.f32 %v940
      %vm1042 = vweird.f32 %v1035
      %vm1043 = vmor %vm1041, %vm1042
      %v1044 = vsel %vm1043, %v1035, %v1040
      %v1045 = vrsqrt.pop %v941
      %v1046 = vmul.f32 %v1045, %v941
      %v1047 = vmul.f32 %v1046, %v1045
      %v1048 = vmul.f32 0.5, %v1047
      %v1049 = vsub.f32 1.5, %v1048
      %v1050 = vmul.f32 %v1045, %v1049
      %vm1051 = vweird.f32 %v941
      %vm1052 = vweird.f32 %v1045
      %vm1053 = vmor %vm1051, %vm1052
      %v1054 = vsel %vm1053, %v1045, %v1050
      %v1055 = vrsqrt.pop %v942
      %v1056 = vmul.f32 %v1055, %v942
      %v1057 = vmul.f32 %v1056, %v1055
      %v1058 = vmul.f32 0.5, %v1057
      %v1059 = vsub.f32 1.5, %v1058
      %v1060 = vmul.f32 %v1055, %v1059
      %vm1061 = vweird.f32 %v942
      %vm1062 = vweird.f32 %v1055
      %vm1063 = vmor %vm1061, %vm1062
      %v1064 = vsel %vm1063, %v1055, %v1060
      %v1065 = vrsqrt.pop %v943
      %v1066 = vmul.f32 %v1065, %v943
      %v1067 = vmul.f32 %v1066, %v1065
      %v1068 = vmul.f32 0.5, %v1067
      %v1069 = vsub.f32 1.5, %v1068
      %v1070 = vmul.f32 %v1065, %v1069
      %vm1071 = vweird.f32 %v943
      %vm1072 = vweird.f32 %v1065
      %vm1073 = vmor %vm1071, %vm1072
      %v1074 = vsel %vm1073, %v1065, %v1070
      %v1075 = vrsqrt.pop %v944
      %v1076 = vmul.f32 %v1075, %v944
      %v1077 = vmul.f32 %v1076, %v1075
      %v1078 = vmul.f32 0.5, %v1077
      %v1079 = vsub.f32 1.5, %v1078
      %v1080 = vmul.f32 %v1075, %v1079
      %vm1081 = vweird.f32 %v944
      %vm1082 = vweird.f32 %v1075
      %vm1083 = vmor %vm1081, %vm1082
      %v1084 = vsel %vm1083, %v1075, %v1080
      %v1085 = vrsqrt.pop %v945
      %v1086 = vmul.f32 %v1085, %v945
      %v1087 = vmul.f32 %v1086, %v1085
      %v1088 = vmul.f32 0.5, %v1087
      %v1089 = vsub.f32 1.5, %v1088
      %v1090 = vmul.f32 %v1085, %v1089
      %vm1091 = vweird.f32 %v945
      %vm1092 = vweird.f32 %v1085
      %vm1093 = vmor %vm1091, %vm1092
      %v1094 = vsel %vm1093, %v1085, %v1090
      %v1095 = vrsqrt.pop %v946
      %v1096 = vmul.f32 %v1095, %v946
      %v1097 = vmul.f32 %v1096, %v1095
      %v1098 = vmul.f32 0.5, %v1097
      %v1099 = vsub.f32 1.5, %v1098
      %v1100 = vmul.f32 %v1095, %v1099
      %vm1101 = vweird.f32 %v946
      %vm1102 = vweird.f32 %v1095
      %vm1103 = vmor %vm1101, %vm1102
      %v1104 = vsel %vm1103, %v1095, %v1100
      %v1105 = vrsqrt.pop %v947
      %v1106 = vmul.f32 %v1105, %v947
      %v1107 = vmul.f32 %v1106, %v1105
      %v1108 = vmul.f32 0.5, %v1107
      %v1109 = vsub.f32 1.5, %v1108
      %v1110 = vmul.f32 %v1105, %v1109
      %vm1111 = vweird.f32 %v947
      %vm1112 = vweird.f32 %v1105
      %vm1113 = vmor %vm1111, %vm1112
      %v1114 = vsel %vm1113, %v1105, %v1110
      %v1115 = vrsqrt.pop %v948
      %v1116 = vmul.f32 %v1115, %v948
      %v1117 = vmul.f32 %v1116, %v1115
      %v1118 = vmul.f32 0.5, %v1117
      %v1119 = vsub.f32 1.5, %v1118
      %v1120 = vmul.f32 %v1115, %v1119
      %vm1121 = vweird.f32 %v948
      %vm1122 = vweird.f32 %v1115
      %vm1123 = vmor %vm1121, %vm1122
      %v1124 = vsel %vm1123, %v1115, %v1120
      %v1125 = vrsqrt.pop %v949
      %v1126 = vmul.f32 %v1125, %v949
      %v1127 = vmul.f32 %v1126, %v1125
      %v1128 = vmul.f32 0.5, %v1127
      %v1129 = vsub.f32 1.5, %v1128
      %v1130 = vmul.f32 %v1125, %v1129
      %vm1131 = vweird.f32 %v949
      %vm1132 = vweird.f32 %v1125
      %vm1133 = vmor %vm1131, %vm1132
      %v1134 = vsel %vm1133, %v1125, %v1130
      %v1135 = vrsqrt.pop %v950
      %v1136 = vmul.f32 %v1135, %v950
      %v1137 = vmul.f32 %v1136, %v1135
      %v1138 = vmul.f32 0.5, %v1137
      %v1139 = vsub.f32 1.5, %v1138
      %v1140 = vmul.f32 %v1135, %v1139
      %vm1141 = vweird.f32 %v950
      %vm1142 = vweird.f32 %v1135
      %vm1143 = vmor %vm1141, %vm1142
      %v1144 = vsel %vm1143, %v1135, %v1140
      %v1145 = vrsqrt.pop %v951
      %v1146 = vmul.f32 %v1145, %v951
      %v1147 = vmul.f32 %v1146, %v1145
      %v1148 = vmul.f32 0.5, %v1147
      %v1149 = vsub.f32 1.5, %v1148
      %v1150 = vmul.f32 %v1145, %v1149
      %vm1151 = vweird.f32 %v951
      %vm1152 = vweird.f32 %v1145
      %vm1153 = vmor %vm1151, %vm1152
      %v1154 = vsel %vm1153, %v1145, %v1150
      %v1155 = vrsqrt.pop %v952
      %v1156 = vmul.f32 %v1155, %v952
      %v1157 = vmul.f32 %v1156, %v1155
      %v1158 = vmul.f32 0.5, %v1157
      %v1159 = vsub.f32 1.5, %v1158
      %v1160 = vmul.f32 %v1155, %v1159
      %vm1161 = vweird.f32 %v952
      %vm1162 = vweird.f32 %v1155
      %vm1163 = vmor %vm1161, %vm1162
      %v1164 = vsel %vm1163, %v1155, %v1160
      %v1165 = vrsqrt.pop %v953
      %v1166 = vmul.f32 %v1165, %v953
      %v1167 = vmul.f32 %v1166, %v1165
      %v1168 = vmul.f32 0.5, %v1167
      %v1169 = vsub.f32 1.5, %v1168
      %v1170 = vmul.f32 %v1165, %v1169
      %vm1171 = vweird.f32 %v953
      %vm1172 = vweird.f32 %v1165
      %vm1173 = vmor %vm1171, %vm1172
      %v1174 = vsel %vm1173, %v1165, %v1170
      %v1175 = vrsqrt.pop %v954
      %v1176 = vmul.f32 %v1175, %v954
      %v1177 = vmul.f32 %v1176, %v1175
      %v1178 = vmul.f32 0.5, %v1177
      %v1179 = vsub.f32 1.5, %v1178
      %v1180 = vmul.f32 %v1175, %v1179
      %vm1181 = vweird.f32 %v954
      %vm1182 = vweird.f32 %v1175
      %vm1183 = vmor %vm1181, %vm1182
      %v1184 = vsel %vm1183, %v1175, %v1180
      %v1185 = vrsqrt.pop %v955
      %v1186 = vmul.f32 %v1185, %v955
      %v1187 = vmul.f32 %v1186, %v1185
      %v1188 = vmul.f32 0.5, %v1187
      %v1189 = vsub.f32 1.5, %v1188
      %v1190 = vmul.f32 %v1185, %v1189
      %vm1191 = vweird.f32 %v955
      %vm1192 = vweird.f32 %v1185
      %vm1193 = vmor %vm1191, %vm1192
      %v1194 = vsel %vm1193, %v1185, %v1190
      %v1195 = vrsqrt.pop %v956
      %v1196 = vmul.f32 %v1195, %v956
      %v1197 = vmul.f32 %v1196, %v1195
      %v1198 = vmul.f32 0.5, %v1197
      %v1199 = vsub.f32 1.5, %v1198
      %v1200 = vmul.f32 %v1195, %v1199
      %vm1201 = vweird.f32 %v956
      %vm1202 = vweird.f32 %v1195
      %vm1203 = vmor %vm1201, %vm1202
      %v1204 = vsel %vm1203, %v1195, %v1200
      %v1205 = vrsqrt.pop %v957
      %v1206 = vmul.f32 %v1205, %v957
      %v1207 = vmul.f32 %v1206, %v1205
      %v1208 = vmul.f32 0.5, %v1207
      %v1209 = vsub.f32 1.5, %v1208
      %v1210 = vmul.f32 %v1205, %v1209
      %vm1211 = vweird.f32 %v957
      %vm1212 = vweird.f32 %v1205
      %vm1213 = vmor %vm1211, %vm1212
      %v1214 = vsel %vm1213, %v1205, %v1210
      %v1215 = vrsqrt.pop %v958
      %v1216 = vmul.f32 %v1215, %v958
      %v1217 = vmul.f32 %v1216, %v1215
      %v1218 = vmul.f32 0.5, %v1217
      %v1219 = vsub.f32 1.5, %v1218
      %v1220 = vmul.f32 %v1215, %v1219
      %vm1221 = vweird.f32 %v958
      %vm1222 = vweird.f32 %v1215
      %vm1223 = vmor %vm1221, %vm1222
      %v1224 = vsel %vm1223, %v1215, %v1220
      %v1225 = vrsqrt.pop %v959
      %v1226 = vmul.f32 %v1225, %v959
      %v1227 = vmul.f32 %v1226, %v1225
      %v1228 = vmul.f32 0.5, %v1227
      %v1229 = vsub.f32 1.5, %v1228
      %v1230 = vmul.f32 %v1225, %v1229
      %vm1231 = vweird.f32 %v959
      %vm1232 = vweird.f32 %v1225
      %vm1233 = vmor %vm1231, %vm1232
      %v1234 = vsel %vm1233, %v1225, %v1230
      %v1235 = vrsqrt.pop %v960
      %v1236 = vmul.f32 %v1235, %v960
      %v1237 = vmul.f32 %v1236, %v1235
      %v1238 = vmul.f32 0.5, %v1237
      %v1239 = vsub.f32 1.5, %v1238
      %v1240 = vmul.f32 %v1235, %v1239
      %vm1241 = vweird.f32 %v960
      %vm1242 = vweird.f32 %v1235
      %vm1243 = vmor %vm1241, %vm1242
      %v1244 = vsel %vm1243, %v1235, %v1240
      %v1245 = vrsqrt.pop %v961
      %v1246 = vmul.f32 %v1245, %v961
      %v1247 = vmul.f32 %v1246, %v1245
      %v1248 = vmul.f32 0.5, %v1247
      %v1249 = vsub.f32 1.5, %v1248
      %v1250 = vmul.f32 %v1245, %v1249
      %vm1251 = vweird.f32 %v961
      %vm1252 = vweird.f32 %v1245
      %vm1253 = vmor %vm1251, %vm1252
      %v1254 = vsel %vm1253, %v1245, %v1250
      %v1255 = vrsqrt.pop %v962
      %v1256 = vmul.f32 %v1255, %v962
      %v1257 = vmul.f32 %v1256, %v1255
      %v1258 = vmul.f32 0.5, %v1257
      %v1259 = vsub.f32 1.5, %v1258
      %v1260 = vmul.f32 %v1255, %v1259
      %vm1261 = vweird.f32 %v962
      %vm1262 = vweird.f32 %v1255
      %vm1263 = vmor %vm1261, %vm1262
      %v1264 = vsel %vm1263, %v1255, %v1260
      %v1265 = vrsqrt.pop %v963
      %v1266 = vmul.f32 %v1265, %v963
      %v1267 = vmul.f32 %v1266, %v1265
      %v1268 = vmul.f32 0.5, %v1267
      %v1269 = vsub.f32 1.5, %v1268
      %v1270 = vmul.f32 %v1265, %v1269
      %vm1271 = vweird.f32 %v963
      %vm1272 = vweird.f32 %v1265
      %vm1273 = vmor %vm1271, %vm1272
      %v1274 = vsel %vm1273, %v1265, %v1270
      %v1275 = vrsqrt.pop %v964
      %v1276 = vmul.f32 %v1275, %v964
      %v1277 = vmul.f32 %v1276, %v1275
      %v1278 = vmul.f32 0.5, %v1277
      %v1279 = vsub.f32 1.5, %v1278
      %v1280 = vmul.f32 %v1275, %v1279
      %vm1281 = vweird.f32 %v964
      %vm1282 = vweird.f32 %v1275
      %vm1283 = vmor %vm1281, %vm1282
      %v1284 = vsel %vm1283, %v1275, %v1280
      %v1285 = vmul.f32 %v901, %v974
      %v1286 = vmul.f32 %v902, %v984
      %v1287 = vmul.f32 %v903, %v994
      %v1288 = vmul.f32 %v904, %v1004
      %v1289 = vmul.f32 %v905, %v1014
      %v1290 = vmul.f32 %v906, %v1024
      %v1291 = vmul.f32 %v907, %v1034
      %v1292 = vmul.f32 %v908, %v1044
      %v1293 = vmul.f32 %v909, %v1054
      %v1294 = vmul.f32 %v910, %v1064
      %v1295 = vmul.f32 %v911, %v1074
      %v1296 = vmul.f32 %v912, %v1084
      %v1297 = vmul.f32 %v913, %v1094
      %v1298 = vmul.f32 %v914, %v1104
      %v1299 = vmul.f32 %v915, %v1114
      %v1300 = vmul.f32 %v916, %v1124
      %v1301 = vmul.f32 %v917, %v1134
      %v1302 = vmul.f32 %v918, %v1144
      %v1303 = vmul.f32 %v919, %v1154
      %v1304 = vmul.f32 %v920, %v1164
      %v1305 = vmul.f32 %v921, %v1174
      %v1306 = vmul.f32 %v922, %v1184
      %v1307 = vmul.f32 %v923, %v1194
      %v1308 = vmul.f32 %v924, %v1204
      %v1309 = vmul.f32 %v925, %v1214
      %v1310 = vmul.f32 %v926, %v1224
      %v1311 = vmul.f32 %v927, %v1234
      %v1312 = vmul.f32 %v928, %v1244
      %v1313 = vmul.f32 %v929, %v1254
      %v1314 = vmul.f32 %v930, %v1264
      %v1315 = vmul.f32 %v931, %v1274
      %v1316 = vmul.f32 %v932, %v1284
      %v1317 = vperm.slane %v231, 1
      %v1318 = vmul.f32 %v1285, %v1317
      %v1319 = vmul.f32 %v1286, %v1317
      %v1320 = vmul.f32 %v1287, %v1317
      %v1321 = vmul.f32 %v1288, %v1317
      %v1322 = vmul.f32 %v1289, %v1317
      %v1323 = vmul.f32 %v1290, %v1317
      %v1324 = vmul.f32 %v1291, %v1317
      %v1325 = vmul.f32 %v1292, %v1317
      %v1326 = vmul.f32 %v1293, %v1317
      %v1327 = vmul.f32 %v1294, %v1317
      %v1328 = vmul.f32 %v1295, %v1317
      %v1329 = vmul.f32 %v1296, %v1317
      %v1330 = vmul.f32 %v1297, %v1317
      %v1331 = vmul.f32 %v1298, %v1317
      %v1332 = vmul.f32 %v1299, %v1317
      %v1333 = vmul.f32 %v1300, %v1317
      %v1334 = vmul.f32 %v1301, %v1317
      %v1335 = vmul.f32 %v1302, %v1317
      %v1336 = vmul.f32 %v1303, %v1317
      %v1337 = vmul.f32 %v1304, %v1317
      %v1338 = vmul.f32 %v1305, %v1317
      %v1339 = vmul.f32 %v1306, %v1317
      %v1340 = vmul.f32 %v1307, %v1317
      %v1341 = vmul.f32 %v1308, %v1317
      %v1342 = vmul.f32 %v1309, %v1317
      %v1343 = vmul.f32 %v1310, %v1317
      %v1344 = vmul.f32 %v1311, %v1317
      %v1345 = vmul.f32 %v1312, %v1317
      %v1346 = vmul.f32 %v1313, %v1317
      %v1347 = vmul.f32 %v1314, %v1317
      %v1348 = vmul.f32 %v1315, %v1317
      %v1349 = vmul.f32 %v1316, %v1317
      %v1350 = vperm.slane %v231, 2
      %v1351 = vadd.f32 %v1318, %v1350
      %v1352 = vadd.f32 %v1319, %v1350
      %v1353 = vadd.f32 %v1320, %v1350
      %v1354 = vadd.f32 %v1321, %v1350
      %v1355 = vadd.f32 %v1322, %v1350
      %v1356 = vadd.f32 %v1323, %v1350
      %v1357 = vadd.f32 %v1324, %v1350
      %v1358 = vadd.f32 %v1325, %v1350
      %v1359 = vadd.f32 %v1326, %v1350
      %v1360 = vadd.f32 %v1327, %v1350
      %v1361 = vadd.f32 %v1328, %v1350
      %v1362 = vadd.f32 %v1329, %v1350
      %v1363 = vadd.f32 %v1330, %v1350
      %v1364 = vadd.f32 %v1331, %v1350
      %v1365 = vadd.f32 %v1332, %v1350
      %v1366 = vadd.f32 %v1333, %v1350
      %v1367 = vadd.f32 %v1334, %v1350
      %v1368 = vadd.f32 %v1335, %v1350
      %v1369 = vadd.f32 %v1336, %v1350
      %v1370 = vadd.f32 %v1337, %v1350
      %v1371 = vadd.f32 %v1338, %v1350
      %v1372 = vadd.f32 %v1339, %v1350
      %v1373 = vadd.f32 %v1340, %v1350
      %v1374 = vadd.f32 %v1341, %v1350
      %v1375 = vadd.f32 %v1342, %v1350
      %v1376 = vadd.f32 %v1343, %v1350
      %v1377 = vadd.f32 %v1344, %v1350
      %v1378 = vadd.f32 %v1345, %v1350
      %v1379 = vadd.f32 %v1346, %v1350
      %v1380 = vadd.f32 %v1347, %v1350
      %v1381 = vadd.f32 %v1348, %v1350
      %v1382 = vadd.f32 %v1349, %v1350
      %v1383 = vmul.f32 %v1351, 0.5
      %v1384 = vmul.f32 %v1352, 0.5
      %v1385 = vmul.f32 %v1353, 0.5
      %v1386 = vmul.f32 %v1354, 0.5
      %v1387 = vmul.f32 %v1355, 0.5
      %v1388 = vmul.f32 %v1356, 0.5
      %v1389 = vmul.f32 %v1357, 0.5
      %v1390 = vmul.f32 %v1358, 0.5
      %v1391 = vmul.f32 %v1359, 0.5
      %v1392 = vmul.f32 %v1360, 0.5
      %v1393 = vmul.f32 %v1361, 0.5
      %v1394 = vmul.f32 %v1362, 0.5
      %v1395 = vmul.f32 %v1363, 0.5
      %v1396 = vmul.f32 %v1364, 0.5
      %v1397 = vmul.f32 %v1365, 0.5
      %v1398 = vmul.f32 %v1366, 0.5
      %v1399 = vmul.f32 %v1367, 0.5
      %v1400 = vmul.f32 %v1368, 0.5
      %v1401 = vmul.f32 %v1369, 0.5
      %v1402 = vmul.f32 %v1370, 0.5
      %v1403 = vmul.f32 %v1371, 0.5
      %v1404 = vmul.f32 %v1372, 0.5
      %v1405 = vmul.f32 %v1373, 0.5
      %v1406 = vmul.f32 %v1374, 0.5
      %v1407 = vmul.f32 %v1375, 0.5
      %v1408 = vmul.f32 %v1376, 0.5
      %v1409 = vmul.f32 %v1377, 0.5
      %v1410 = vmul.f32 %v1378, 0.5
      %v1411 = vmul.f32 %v1379, 0.5
      %v1412 = vmul.f32 %v1380, 0.5
      %v1413 = vmul.f32 %v1381, 0.5
      %v1414 = vmul.f32 %v1382, 0.5
      %v1415 = vmul.f32 %v1351, 0.70710677
      %v1416 = vmul.f32 %v1352, 0.70710677
      %v1417 = vmul.f32 %v1353, 0.70710677
      %v1418 = vmul.f32 %v1354, 0.70710677
      %v1419 = vmul.f32 %v1355, 0.70710677
      %v1420 = vmul.f32 %v1356, 0.70710677
      %v1421 = vmul.f32 %v1357, 0.70710677
      %v1422 = vmul.f32 %v1358, 0.70710677
      %v1423 = vmul.f32 %v1359, 0.70710677
      %v1424 = vmul.f32 %v1360, 0.70710677
      %v1425 = vmul.f32 %v1361, 0.70710677
      %v1426 = vmul.f32 %v1362, 0.70710677
      %v1427 = vmul.f32 %v1363, 0.70710677
      %v1428 = vmul.f32 %v1364, 0.70710677
      %v1429 = vmul.f32 %v1365, 0.70710677
      %v1430 = vmul.f32 %v1366, 0.70710677
      %v1431 = vmul.f32 %v1367, 0.70710677
      %v1432 = vmul.f32 %v1368, 0.70710677
      %v1433 = vmul.f32 %v1369, 0.70710677
      %v1434 = vmul.f32 %v1370, 0.70710677
      %v1435 = vmul.f32 %v1371, 0.70710677
      %v1436 = vmul.f32 %v1372, 0.70710677
      %v1437 = vmul.f32 %v1373, 0.70710677
      %v1438 = vmul.f32 %v1374, 0.70710677
      %v1439 = vmul.f32 %v1375, 0.70710677
      %v1440 = vmul.f32 %v1376, 0.70710677
      %v1441 = vmul.f32 %v1377, 0.70710677
      %v1442 = vmul.f32 %v1378, 0.70710677
      %v1443 = vmul.f32 %v1379, 0.70710677
      %v1444 = vmul.f32 %v1380, 0.70710677
      %v1445 = vmul.f32 %v1381, 0.70710677
      %v1446 = vmul.f32 %v1382, 0.70710677
      %v1447 = vmul.f32 %v1415, %v1415
      %v1448 = vmin.f32 16.0, %v1447
      %v1449 = vmul.f32 %v1448, 2.1237322e-06
      %v1450 = vadd.f32 %v1449, 0.00028619796
      %v1451 = vmul.f32 %v1448, %v1450
      %v1452 = vadd.f32 %v1451, 0.0036580483
      %v1453 = vmul.f32 %v1448, %v1452
      %v1454 = vadd.f32 %v1453, 0.05243302
      %v1455 = vmul.f32 %v1448, %v1454
      %v1456 = vadd.f32 %v1455, 0.18741608
      %v1457 = vmul.f32 %v1448, %v1456
      %v1458 = vadd.f32 %v1457, 1.1283791
      %v1459 = vmul.f32 %v1415, %v1458
      %v1460 = vmul.f32 %v1448, 3.8918573e-05
      %v1461 = vadd.f32 %v1460, 0.001143296
      %v1462 = vmul.f32 %v1448, %v1461
      %v1463 = vadd.f32 %v1462, 0.014752088
      %v1464 = vmul.f32 %v1448, %v1463
      %v1465 = vadd.f32 %v1464, 0.112945676
      %v1466 = vmul.f32 %v1448, %v1465
      %v1467 = vadd.f32 %v1466, 0.4994258
      %v1468 = vmul.f32 %v1448, %v1467
      %v1469 = vadd.f32 %v1468, 1.0
      %v1470 = vrcp.pop %v1469
      %v1471 = vmul.f32 %v1469, %v1470
      %v1472 = vsub.f32 1.0, %v1471
      %v1473 = vmul.f32 %v1470, %v1472
      %v1474 = vadd.f32 %v1470, %v1473
      %vm1475 = vweird.f32 %v1469
      %vm1476 = vweird.f32 %v1470
      %vm1477 = vmor %vm1475, %vm1476
      %v1478 = vsel %vm1477, %v1470, %v1474
      %v1479 = vand.u32 2147483647, %v1469
      %vm1480 = vcmp.eq.f32.partialorder %v1479, 8.507059e+37
      %v1481 = vand.u32 %v1469, 2147483648
      %v1482 = vor.u32 1.1754944e-38, %v1481
      %v1483 = vsel %vm1480, %v1482, %v1478
      %v1484 = vmul.f32 %v1459, %v1483
      %v1485 = vmin.f32 %v1484, 1.0
      %v1486 = vmax.f32 %v1485, -1.0
      %v1487 = vmul.f32 %v1416, %v1416
      %v1488 = vmin.f32 16.0, %v1487
      %v1489 = vmul.f32 %v1488, 2.1237322e-06
      %v1490 = vadd.f32 %v1489, 0.00028619796
      %v1491 = vmul.f32 %v1488, %v1490
      %v1492 = vadd.f32 %v1491, 0.0036580483
      %v1493 = vmul.f32 %v1488, %v1492
      %v1494 = vadd.f32 %v1493, 0.05243302
      %v1495 = vmul.f32 %v1488, %v1494
      %v1496 = vadd.f32 %v1495, 0.18741608
      %v1497 = vmul.f32 %v1488, %v1496
      %v1498 = vadd.f32 %v1497, 1.1283791
      %v1499 = vmul.f32 %v1416, %v1498
      %v1500 = vmul.f32 %v1488, 3.8918573e-05
      %v1501 = vadd.f32 %v1500, 0.001143296
      %v1502 = vmul.f32 %v1488, %v1501
      %v1503 = vadd.f32 %v1502, 0.014752088
      %v1504 = vmul.f32 %v1488, %v1503
      %v1505 = vadd.f32 %v1504, 0.112945676
      %v1506 = vmul.f32 %v1488, %v1505
      %v1507 = vadd.f32 %v1506, 0.4994258
      %v1508 = vmul.f32 %v1488, %v1507
      %v1509 = vadd.f32 %v1508, 1.0
      %v1510 = vrcp.pop %v1509
      %v1511 = vmul.f32 %v1509, %v1510
      %v1512 = vsub.f32 1.0, %v1511
      %v1513 = vmul.f32 %v1510, %v1512
      %v1514 = vadd.f32 %v1510, %v1513
      %vm1515 = vweird.f32 %v1509
      %vm1516 = vweird.f32 %v1510
      %vm1517 = vmor %vm1515, %vm1516
      %v1518 = vsel %vm1517, %v1510, %v1514
      %v1519 = vand.u32 2147483647, %v1509
      %vm1520 = vcmp.eq.f32.partialorder %v1519, 8.507059e+37
      %v1521 = vand.u32 %v1509, 2147483648
      %v1522 = vor.u32 1.1754944e-38, %v1521
      %v1523 = vsel %vm1520, %v1522, %v1518
      %v1524 = vmul.f32 %v1499, %v1523
      %v1525 = vmin.f32 %v1524, 1.0
      %v1526 = vmax.f32 %v1525, -1.0
      %v1527 = vmul.f32 %v1417, %v1417
      %v1528 = vmin.f32 16.0, %v1527
      %v1529 = vmul.f32 %v1528, 2.1237322e-06
      %v1530 = vadd.f32 %v1529, 0.00028619796
      %v1531 = vmul.f32 %v1528, %v1530
      %v1532 = vadd.f32 %v1531, 0.0036580483
      %v1533 = vmul.f32 %v1528, %v1532
      %v1534 = vadd.f32 %v1533, 0.05243302
      %v1535 = vmul.f32 %v1528, %v1534
      %v1536 = vadd.f32 %v1535, 0.18741608
      %v1537 = vmul.f32 %v1528, %v1536
      %v1538 = vadd.f32 %v1537, 1.1283791
      %v1539 = vmul.f32 %v1417, %v1538
      %v1540 = vmul.f32 %v1528, 3.8918573e-05
      %v1541 = vadd.f32 %v1540, 0.001143296
      %v1542 = vmul.f32 %v1528, %v1541
      %v1543 = vadd.f32 %v1542, 0.014752088
      %v1544 = vmul.f32 %v1528, %v1543
      %v1545 = vadd.f32 %v1544, 0.112945676
      %v1546 = vmul.f32 %v1528, %v1545
      %v1547 = vadd.f32 %v1546, 0.4994258
      %v1548 = vmul.f32 %v1528, %v1547
      %v1549 = vadd.f32 %v1548, 1.0
      %v1550 = vrcp.pop %v1549
      %v1551 = vmul.f32 %v1549, %v1550
      %v1552 = vsub.f32 1.0, %v1551
      %v1553 = vmul.f32 %v1550, %v1552
      %v1554 = vadd.f32 %v1550, %v1553
      %vm1555 = vweird.f32 %v1549
      %vm1556 = vweird.f32 %v1550
      %vm1557 = vmor %vm1555, %vm1556
      %v1558 = vsel %vm1557, %v1550, %v1554
      %v1559 = vand.u32 2147483647, %v1549
      %vm1560 = vcmp.eq.f32.partialorder %v1559, 8.507059e+37
      %v1561 = vand.u32 %v1549, 2147483648
      %v1562 = vor.u32 1.1754944e-38, %v1561
      %v1563 = vsel %vm1560, %v1562, %v1558
      %v1564 = vmul.f32 %v1539, %v1563
      %v1565 = vmin.f32 %v1564, 1.0
      %v1566 = vmax.f32 %v1565, -1.0
      %v1567 = vmul.f32 %v1418, %v1418
      %v1568 = vmin.f32 16.0, %v1567
      %v1569 = vmul.f32 %v1568, 2.1237322e-06
      %v1570 = vadd.f32 %v1569, 0.00028619796
      %v1571 = vmul.f32 %v1568, %v1570
      %v1572 = vadd.f32 %v1571, 0.0036580483
      %v1573 = vmul.f32 %v1568, %v1572
      %v1574 = vadd.f32 %v1573, 0.05243302
      %v1575 = vmul.f32 %v1568, %v1574
      %v1576 = vadd.f32 %v1575, 0.18741608
      %v1577 = vmul.f32 %v1568, %v1576
      %v1578 = vadd.f32 %v1577, 1.1283791
      %v1579 = vmul.f32 %v1418, %v1578
      %v1580 = vmul.f32 %v1568, 3.8918573e-05
      %v1581 = vadd.f32 %v1580, 0.001143296
      %v1582 = vmul.f32 %v1568, %v1581
      %v1583 = vadd.f32 %v1582, 0.014752088
      %v1584 = vmul.f32 %v1568, %v1583
      %v1585 = vadd.f32 %v1584, 0.112945676
      %v1586 = vmul.f32 %v1568, %v1585
      %v1587 = vadd.f32 %v1586, 0.4994258
      %v1588 = vmul.f32 %v1568, %v1587
      %v1589 = vadd.f32 %v1588, 1.0
      %v1590 = vrcp.pop %v1589
      %v1591 = vmul.f32 %v1589, %v1590
      %v1592 = vsub.f32 1.0, %v1591
      %v1593 = vmul.f32 %v1590, %v1592
      %v1594 = vadd.f32 %v1590, %v1593
      %vm1595 = vweird.f32 %v1589
      %vm1596 = vweird.f32 %v1590
      %vm1597 = vmor %vm1595, %vm1596
      %v1598 = vsel %vm1597, %v1590, %v1594
      %v1599 = vand.u32 2147483647, %v1589
      %vm1600 = vcmp.eq.f32.partialorder %v1599, 8.507059e+37
      %v1601 = vand.u32 %v1589, 2147483648
      %v1602 = vor.u32 1.1754944e-38, %v1601
      %v1603 = vsel %vm1600, %v1602, %v1598
      %v1604 = vmul.f32 %v1579, %v1603
      %v1605 = vmin.f32 %v1604, 1.0
      %v1606 = vmax.f32 %v1605, -1.0
      %v1607 = vmul.f32 %v1419, %v1419
      %v1608 = vmin.f32 16.0, %v1607
      %v1609 = vmul.f32 %v1608, 2.1237322e-06
      %v1610 = vadd.f32 %v1609, 0.00028619796
      %v1611 = vmul.f32 %v1608, %v1610
      %v1612 = vadd.f32 %v1611, 0.0036580483
      %v1613 = vmul.f32 %v1608, %v1612
      %v1614 = vadd.f32 %v1613, 0.05243302
      %v1615 = vmul.f32 %v1608, %v1614
      %v1616 = vadd.f32 %v1615, 0.18741608
      %v1617 = vmul.f32 %v1608, %v1616
      %v1618 = vadd.f32 %v1617, 1.1283791
      %v1619 = vmul.f32 %v1419, %v1618
      %v1620 = vmul.f32 %v1608, 3.8918573e-05
      %v1621 = vadd.f32 %v1620, 0.001143296
      %v1622 = vmul.f32 %v1608, %v1621
      %v1623 = vadd.f32 %v1622, 0.014752088
      %v1624 = vmul.f32 %v1608, %v1623
      %v1625 = vadd.f32 %v1624, 0.112945676
      %v1626 = vmul.f32 %v1608, %v1625
      %v1627 = vadd.f32 %v1626, 0.4994258
      %v1628 = vmul.f32 %v1608, %v1627
      %v1629 = vadd.f32 %v1628, 1.0
      %v1630 = vrcp.pop %v1629
      %v1631 = vmul.f32 %v1629, %v1630
      %v1632 = vsub.f32 1.0, %v1631
      %v1633 = vmul.f32 %v1630, %v1632
      %v1634 = vadd.f32 %v1630, %v1633
      %vm1635 = vweird.f32 %v1629
      %vm1636 = vweird.f32 %v1630
      %vm1637 = vmor %vm1635, %vm1636
      %v1638 = vsel %vm1637, %v1630, %v1634
      %v1639 = vand.u32 2147483647, %v1629
      %vm1640 = vcmp.eq.f32.partialorder %v1639, 8.507059e+37
      %v1641 = vand.u32 %v1629, 2147483648
      %v1642 = vor.u32 1.1754944e-38, %v1641
      %v1643 = vsel %vm1640, %v1642, %v1638
      %v1644 = vmul.f32 %v1619, %v1643
      %v1645 = vmin.f32 %v1644, 1.0
      %v1646 = vmax.f32 %v1645, -1.0
      %v1647 = vmul.f32 %v1420, %v1420
      %v1648 = vmin.f32 16.0, %v1647
      %v1649 = vmul.f32 %v1648, 2.1237322e-06
      %v1650 = vadd.f32 %v1649, 0.00028619796
      %v1651 = vmul.f32 %v1648, %v1650
      %v1652 = vadd.f32 %v1651, 0.0036580483
      %v1653 = vmul.f32 %v1648, %v1652
      %v1654 = vadd.f32 %v1653, 0.05243302
      %v1655 = vmul.f32 %v1648, %v1654
      %v1656 = vadd.f32 %v1655, 0.18741608
      %v1657 = vmul.f32 %v1648, %v1656
      %v1658 = vadd.f32 %v1657, 1.1283791
      %v1659 = vmul.f32 %v1420, %v1658
      %v1660 = vmul.f32 %v1648, 3.8918573e-05
      %v1661 = vadd.f32 %v1660, 0.001143296
      %v1662 = vmul.f32 %v1648, %v1661
      %v1663 = vadd.f32 %v1662, 0.014752088
      %v1664 = vmul.f32 %v1648, %v1663
      %v1665 = vadd.f32 %v1664, 0.112945676
      %v1666 = vmul.f32 %v1648, %v1665
      %v1667 = vadd.f32 %v1666, 0.4994258
      %v1668 = vmul.f32 %v1648, %v1667
      %v1669 = vadd.f32 %v1668, 1.0
      %v1670 = vrcp.pop %v1669
      %v1671 = vmul.f32 %v1669, %v1670
      %v1672 = vsub.f32 1.0, %v1671
      %v1673 = vmul.f32 %v1670, %v1672
      %v1674 = vadd.f32 %v1670, %v1673
      %vm1675 = vweird.f32 %v1669
      %vm1676 = vweird.f32 %v1670
      %vm1677 = vmor %vm1675, %vm1676
      %v1678 = vsel %vm1677, %v1670, %v1674
      %v1679 = vand.u32 2147483647, %v1669
      %vm1680 = vcmp.eq.f32.partialorder %v1679, 8.507059e+37
      %v1681 = vand.u32 %v1669, 2147483648
      %v1682 = vor.u32 1.1754944e-38, %v1681
      %v1683 = vsel %vm1680, %v1682, %v1678
      %v1684 = vmul.f32 %v1659, %v1683
      %v1685 = vmin.f32 %v1684, 1.0
      %v1686 = vmax.f32 %v1685, -1.0
      %v1687 = vmul.f32 %v1421, %v1421
      %v1688 = vmin.f32 16.0, %v1687
      %v1689 = vmul.f32 %v1688, 2.1237322e-06
      %v1690 = vadd.f32 %v1689, 0.00028619796
      %v1691 = vmul.f32 %v1688, %v1690
      %v1692 = vadd.f32 %v1691, 0.0036580483
      %v1693 = vmul.f32 %v1688, %v1692
      %v1694 = vadd.f32 %v1693, 0.05243302
      %v1695 = vmul.f32 %v1688, %v1694
      %v1696 = vadd.f32 %v1695, 0.18741608
      %v1697 = vmul.f32 %v1688, %v1696
      %v1698 = vadd.f32 %v1697, 1.1283791
      %v1699 = vmul.f32 %v1421, %v1698
      %v1700 = vmul.f32 %v1688, 3.8918573e-05
      %v1701 = vadd.f32 %v1700, 0.001143296
      %v1702 = vmul.f32 %v1688, %v1701
      %v1703 = vadd.f32 %v1702, 0.014752088
      %v1704 = vmul.f32 %v1688, %v1703
      %v1705 = vadd.f32 %v1704, 0.112945676
      %v1706 = vmul.f32 %v1688, %v1705
      %v1707 = vadd.f32 %v1706, 0.4994258
      %v1708 = vmul.f32 %v1688, %v1707
      %v1709 = vadd.f32 %v1708, 1.0
      %v1710 = vrcp.pop %v1709
      %v1711 = vmul.f32 %v1709, %v1710
      %v1712 = vsub.f32 1.0, %v1711
      %v1713 = vmul.f32 %v1710, %v1712
      %v1714 = vadd.f32 %v1710, %v1713
      %vm1715 = vweird.f32 %v1709
      %vm1716 = vweird.f32 %v1710
      %vm1717 = vmor %vm1715, %vm1716
      %v1718 = vsel %vm1717, %v1710, %v1714
      %v1719 = vand.u32 2147483647, %v1709
      %vm1720 = vcmp.eq.f32.partialorder %v1719, 8.507059e+37
      %v1721 = vand.u32 %v1709, 2147483648
      %v1722 = vor.u32 1.1754944e-38, %v1721
      %v1723 = vsel %vm1720, %v1722, %v1718
      %v1724 = vmul.f32 %v1699, %v1723
      %v1725 = vmin.f32 %v1724, 1.0
      %v1726 = vmax.f32 %v1725, -1.0
      %v1727 = vmul.f32 %v1422, %v1422
      %v1728 = vmin.f32 16.0, %v1727
      %v1729 = vmul.f32 %v1728, 2.1237322e-06
      %v1730 = vadd.f32 %v1729, 0.00028619796
      %v1731 = vmul.f32 %v1728, %v1730
      %v1732 = vadd.f32 %v1731, 0.0036580483
      %v1733 = vmul.f32 %v1728, %v1732
      %v1734 = vadd.f32 %v1733, 0.05243302
      %v1735 = vmul.f32 %v1728, %v1734
      %v1736 = vadd.f32 %v1735, 0.18741608
      %v1737 = vmul.f32 %v1728, %v1736
      %v1738 = vadd.f32 %v1737, 1.1283791
      %v1739 = vmul.f32 %v1422, %v1738
      %v1740 = vmul.f32 %v1728, 3.8918573e-05
      %v1741 = vadd.f32 %v1740, 0.001143296
      %v1742 = vmul.f32 %v1728, %v1741
      %v1743 = vadd.f32 %v1742, 0.014752088
      %v1744 = vmul.f32 %v1728, %v1743
      %v1745 = vadd.f32 %v1744, 0.112945676
      %v1746 = vmul.f32 %v1728, %v1745
      %v1747 = vadd.f32 %v1746, 0.4994258
      %v1748 = vmul.f32 %v1728, %v1747
      %v1749 = vadd.f32 %v1748, 1.0
      %v1750 = vrcp.pop %v1749
      %v1751 = vmul.f32 %v1749, %v1750
      %v1752 = vsub.f32 1.0, %v1751
      %v1753 = vmul.f32 %v1750, %v1752
      %v1754 = vadd.f32 %v1750, %v1753
      %vm1755 = vweird.f32 %v1749
      %vm1756 = vweird.f32 %v1750
      %vm1757 = vmor %vm1755, %vm1756
      %v1758 = vsel %vm1757, %v1750, %v1754
      %v1759 = vand.u32 2147483647, %v1749
      %vm1760 = vcmp.eq.f32.partialorder %v1759, 8.507059e+37
      %v1761 = vand.u32 %v1749, 2147483648
      %v1762 = vor.u32 1.1754944e-38, %v1761
      %v1763 = vsel %vm1760, %v1762, %v1758
      %v1764 = vmul.f32 %v1739, %v1763
      %v1765 = vmin.f32 %v1764, 1.0
      %v1766 = vmax.f32 %v1765, -1.0
      %v1767 = vmul.f32 %v1423, %v1423
      %v1768 = vmin.f32 16.0, %v1767
      %v1769 = vmul.f32 %v1768, 2.1237322e-06
      %v1770 = vadd.f32 %v1769, 0.00028619796
      %v1771 = vmul.f32 %v1768, %v1770
      %v1772 = vadd.f32 %v1771, 0.0036580483
      %v1773 = vmul.f32 %v1768, %v1772
      %v1774 = vadd.f32 %v1773, 0.05243302
      %v1775 = vmul.f32 %v1768, %v1774
      %v1776 = vadd.f32 %v1775, 0.18741608
      %v1777 = vmul.f32 %v1768, %v1776
      %v1778 = vadd.f32 %v1777, 1.1283791
      %v1779 = vmul.f32 %v1423, %v1778
      %v1780 = vmul.f32 %v1768, 3.8918573e-05
      %v1781 = vadd.f32 %v1780, 0.001143296
      %v1782 = vmul.f32 %v1768, %v1781
      %v1783 = vadd.f32 %v1782, 0.014752088
      %v1784 = vmul.f32 %v1768, %v1783
      %v1785 = vadd.f32 %v1784, 0.112945676
      %v1786 = vmul.f32 %v1768, %v1785
      %v1787 = vadd.f32 %v1786, 0.4994258
      %v1788 = vmul.f32 %v1768, %v1787
      %v1789 = vadd.f32 %v1788, 1.0
      %v1790 = vrcp.pop %v1789
      %v1791 = vmul.f32 %v1789, %v1790
      %v1792 = vsub.f32 1.0, %v1791
      %v1793 = vmul.f32 %v1790, %v1792
      %v1794 = vadd.f32 %v1790, %v1793
      %vm1795 = vweird.f32 %v1789
      %vm1796 = vweird.f32 %v1790
      %vm1797 = vmor %vm1795, %vm1796
      %v1798 = vsel %vm1797, %v1790, %v1794
      %v1799 = vand.u32 2147483647, %v1789
      %vm1800 = vcmp.eq.f32.partialorder %v1799, 8.507059e+37
      %v1801 = vand.u32 %v1789, 2147483648
      %v1802 = vor.u32 1.1754944e-38, %v1801
      %v1803 = vsel %vm1800, %v1802, %v1798
      %v1804 = vmul.f32 %v1779, %v1803
      %v1805 = vmin.f32 %v1804, 1.0
      %v1806 = vmax.f32 %v1805, -1.0
      %v1807 = vmul.f32 %v1424, %v1424
      %v1808 = vmin.f32 16.0, %v1807
      %v1809 = vmul.f32 %v1808, 2.1237322e-06
      %v1810 = vadd.f32 %v1809, 0.00028619796
      %v1811 = vmul.f32 %v1808, %v1810
      %v1812 = vadd.f32 %v1811, 0.0036580483
      %v1813 = vmul.f32 %v1808, %v1812
      %v1814 = vadd.f32 %v1813, 0.05243302
      %v1815 = vmul.f32 %v1808, %v1814
      %v1816 = vadd.f32 %v1815, 0.18741608
      %v1817 = vmul.f32 %v1808, %v1816
      %v1818 = vadd.f32 %v1817, 1.1283791
      %v1819 = vmul.f32 %v1424, %v1818
      %v1820 = vmul.f32 %v1808, 3.8918573e-05
      %v1821 = vadd.f32 %v1820, 0.001143296
      %v1822 = vmul.f32 %v1808, %v1821
      %v1823 = vadd.f32 %v1822, 0.014752088
      %v1824 = vmul.f32 %v1808, %v1823
      %v1825 = vadd.f32 %v1824, 0.112945676
      %v1826 = vmul.f32 %v1808, %v1825
      %v1827 = vadd.f32 %v1826, 0.4994258
      %v1828 = vmul.f32 %v1808, %v1827
      %v1829 = vadd.f32 %v1828, 1.0
      %v1830 = vrcp.pop %v1829
      %v1831 = vmul.f32 %v1829, %v1830
      %v1832 = vsub.f32 1.0, %v1831
      %v1833 = vmul.f32 %v1830, %v1832
      %v1834 = vadd.f32 %v1830, %v1833
      %vm1835 = vweird.f32 %v1829
      %vm1836 = vweird.f32 %v1830
      %vm1837 = vmor %vm1835, %vm1836
      %v1838 = vsel %vm1837, %v1830, %v1834
      %v1839 = vand.u32 2147483647, %v1829
      %vm1840 = vcmp.eq.f32.partialorder %v1839, 8.507059e+37
      %v1841 = vand.u32 %v1829, 2147483648
      %v1842 = vor.u32 1.1754944e-38, %v1841
      %v1843 = vsel %vm1840, %v1842, %v1838
      %v1844 = vmul.f32 %v1819, %v1843
      %v1845 = vmin.f32 %v1844, 1.0
      %v1846 = vmax.f32 %v1845, -1.0
      %v1847 = vmul.f32 %v1425, %v1425
      %v1848 = vmin.f32 16.0, %v1847
      %v1849 = vmul.f32 %v1848, 2.1237322e-06
      %v1850 = vadd.f32 %v1849, 0.00028619796
      %v1851 = vmul.f32 %v1848, %v1850
      %v1852 = vadd.f32 %v1851, 0.0036580483
      %v1853 = vmul.f32 %v1848, %v1852
      %v1854 = vadd.f32 %v1853, 0.05243302
      %v1855 = vmul.f32 %v1848, %v1854
      %v1856 = vadd.f32 %v1855, 0.18741608
      %v1857 = vmul.f32 %v1848, %v1856
      %v1858 = vadd.f32 %v1857, 1.1283791
      %v1859 = vmul.f32 %v1425, %v1858
      %v1860 = vmul.f32 %v1848, 3.8918573e-05
      %v1861 = vadd.f32 %v1860, 0.001143296
      %v1862 = vmul.f32 %v1848, %v1861
      %v1863 = vadd.f32 %v1862, 0.014752088
      %v1864 = vmul.f32 %v1848, %v1863
      %v1865 = vadd.f32 %v1864, 0.112945676
      %v1866 = vmul.f32 %v1848, %v1865
      %v1867 = vadd.f32 %v1866, 0.4994258
      %v1868 = vmul.f32 %v1848, %v1867
      %v1869 = vadd.f32 %v1868, 1.0
      %v1870 = vrcp.pop %v1869
      %v1871 = vmul.f32 %v1869, %v1870
      %v1872 = vsub.f32 1.0, %v1871
      %v1873 = vmul.f32 %v1870, %v1872
      %v1874 = vadd.f32 %v1870, %v1873
      %vm1875 = vweird.f32 %v1869
      %vm1876 = vweird.f32 %v1870
      %vm1877 = vmor %vm1875, %vm1876
      %v1878 = vsel %vm1877, %v1870, %v1874
      %v1879 = vand.u32 2147483647, %v1869
      %vm1880 = vcmp.eq.f32.partialorder %v1879, 8.507059e+37
      %v1881 = vand.u32 %v1869, 2147483648
      %v1882 = vor.u32 1.1754944e-38, %v1881
      %v1883 = vsel %vm1880, %v1882, %v1878
      %v1884 = vmul.f32 %v1859, %v1883
      %v1885 = vmin.f32 %v1884, 1.0
      %v1886 = vmax.f32 %v1885, -1.0
      %v1887 = vmul.f32 %v1426, %v1426
      %v1888 = vmin.f32 16.0, %v1887
      %v1889 = vmul.f32 %v1888, 2.1237322e-06
      %v1890 = vadd.f32 %v1889, 0.00028619796
      %v1891 = vmul.f32 %v1888, %v1890
      %v1892 = vadd.f32 %v1891, 0.0036580483
      %v1893 = vmul.f32 %v1888, %v1892
      %v1894 = vadd.f32 %v1893, 0.05243302
      %v1895 = vmul.f32 %v1888, %v1894
      %v1896 = vadd.f32 %v1895, 0.18741608
      %v1897 = vmul.f32 %v1888, %v1896
      %v1898 = vadd.f32 %v1897, 1.1283791
      %v1899 = vmul.f32 %v1426, %v1898
      %v1900 = vmul.f32 %v1888, 3.8918573e-05
      %v1901 = vadd.f32 %v1900, 0.001143296
      %v1902 = vmul.f32 %v1888, %v1901
      %v1903 = vadd.f32 %v1902, 0.014752088
      %v1904 = vmul.f32 %v1888, %v1903
      %v1905 = vadd.f32 %v1904, 0.112945676
      %v1906 = vmul.f32 %v1888, %v1905
      %v1907 = vadd.f32 %v1906, 0.4994258
      %v1908 = vmul.f32 %v1888, %v1907
      %v1909 = vadd.f32 %v1908, 1.0
      %v1910 = vrcp.pop %v1909
      %v1911 = vmul.f32 %v1909, %v1910
      %v1912 = vsub.f32 1.0, %v1911
      %v1913 = vmul.f32 %v1910, %v1912
      %v1914 = vadd.f32 %v1910, %v1913
      %vm1915 = vweird.f32 %v1909
      %vm1916 = vweird.f32 %v1910
      %vm1917 = vmor %vm1915, %vm1916
      %v1918 = vsel %vm1917, %v1910, %v1914
      %v1919 = vand.u32 2147483647, %v1909
      %vm1920 = vcmp.eq.f32.partialorder %v1919, 8.507059e+37
      %v1921 = vand.u32 %v1909, 2147483648
      %v1922 = vor.u32 1.1754944e-38, %v1921
      %v1923 = vsel %vm1920, %v1922, %v1918
      %v1924 = vmul.f32 %v1899, %v1923
      %v1925 = vmin.f32 %v1924, 1.0
      %v1926 = vmax.f32 %v1925, -1.0
      %v1927 = vmul.f32 %v1427, %v1427
      %v1928 = vmin.f32 16.0, %v1927
      %v1929 = vmul.f32 %v1928, 2.1237322e-06
      %v1930 = vadd.f32 %v1929, 0.00028619796
      %v1931 = vmul.f32 %v1928, %v1930
      %v1932 = vadd.f32 %v1931, 0.0036580483
      %v1933 = vmul.f32 %v1928, %v1932
      %v1934 = vadd.f32 %v1933, 0.05243302
      %v1935 = vmul.f32 %v1928, %v1934
      %v1936 = vadd.f32 %v1935, 0.18741608
      %v1937 = vmul.f32 %v1928, %v1936
      %v1938 = vadd.f32 %v1937, 1.1283791
      %v1939 = vmul.f32 %v1427, %v1938
      %v1940 = vmul.f32 %v1928, 3.8918573e-05
      %v1941 = vadd.f32 %v1940, 0.001143296
      %v1942 = vmul.f32 %v1928, %v1941
      %v1943 = vadd.f32 %v1942, 0.014752088
      %v1944 = vmul.f32 %v1928, %v1943
      %v1945 = vadd.f32 %v1944, 0.112945676
      %v1946 = vmul.f32 %v1928, %v1945
      %v1947 = vadd.f32 %v1946, 0.4994258
      %v1948 = vmul.f32 %v1928, %v1947
      %v1949 = vadd.f32 %v1948, 1.0
      %v1950 = vrcp.pop %v1949
      %v1951 = vmul.f32 %v1949, %v1950
      %v1952 = vsub.f32 1.0, %v1951
      %v1953 = vmul.f32 %v1950, %v1952
      %v1954 = vadd.f32 %v1950, %v1953
      %vm1955 = vweird.f32 %v1949
      %vm1956 = vweird.f32 %v1950
      %vm1957 = vmor %vm1955, %vm1956
      %v1958 = vsel %vm1957, %v1950, %v1954
      %v1959 = vand.u32 2147483647, %v1949
      %vm1960 = vcmp.eq.f32.partialorder %v1959, 8.507059e+37
      %v1961 = vand.u32 %v1949, 2147483648
      %v1962 = vor.u32 1.1754944e-38, %v1961
      %v1963 = vsel %vm1960, %v1962, %v1958
      %v1964 = vmul.f32 %v1939, %v1963
      %v1965 = vmin.f32 %v1964, 1.0
      %v1966 = vmax.f32 %v1965, -1.0
      %v1967 = vmul.f32 %v1428, %v1428
      %v1968 = vmin.f32 16.0, %v1967
      %v1969 = vmul.f32 %v1968, 2.1237322e-06
      %v1970 = vadd.f32 %v1969, 0.00028619796
      %v1971 = vmul.f32 %v1968, %v1970
      %v1972 = vadd.f32 %v1971, 0.0036580483
      %v1973 = vmul.f32 %v1968, %v1972
      %v1974 = vadd.f32 %v1973, 0.05243302
      %v1975 = vmul.f32 %v1968, %v1974
      %v1976 = vadd.f32 %v1975, 0.18741608
      %v1977 = vmul.f32 %v1968, %v1976
      %v1978 = vadd.f32 %v1977, 1.1283791
      %v1979 = vmul.f32 %v1428, %v1978
      %v1980 = vmul.f32 %v1968, 3.8918573e-05
      %v1981 = vadd.f32 %v1980, 0.001143296
      %v1982 = vmul.f32 %v1968, %v1981
      %v1983 = vadd.f32 %v1982, 0.014752088
      %v1984 = vmul.f32 %v1968, %v1983
      %v1985 = vadd.f32 %v1984, 0.112945676
      %v1986 = vmul.f32 %v1968, %v1985
      %v1987 = vadd.f32 %v1986, 0.4994258
      %v1988 = vmul.f32 %v1968, %v1987
      %v1989 = vadd.f32 %v1988, 1.0
      %v1990 = vrcp.pop %v1989
      %v1991 = vmul.f32 %v1989, %v1990
      %v1992 = vsub.f32 1.0, %v1991
      %v1993 = vmul.f32 %v1990, %v1992
      %v1994 = vadd.f32 %v1990, %v1993
      %vm1995 = vweird.f32 %v1989
      %vm1996 = vweird.f32 %v1990
      %vm1997 = vmor %vm1995, %vm1996
      %v1998 = vsel %vm1997, %v1990, %v1994
      %v1999 = vand.u32 2147483647, %v1989
      %vm2000 = vcmp.eq.f32.partialorder %v1999, 8.507059e+37
      %v2001 = vand.u32 %v1989, 2147483648
      %v2002 = vor.u32 1.1754944e-38, %v2001
      %v2003 = vsel %vm2000, %v2002, %v1998
      %v2004 = vmul.f32 %v1979, %v2003
      %v2005 = vmin.f32 %v2004, 1.0
      %v2006 = vmax.f32 %v2005, -1.0
      %v2007 = vmul.f32 %v1429, %v1429
      %v2008 = vmin.f32 16.0, %v2007
      %v2009 = vmul.f32 %v2008, 2.1237322e-06
      %v2010 = vadd.f32 %v2009, 0.00028619796
      %v2011 = vmul.f32 %v2008, %v2010
      %v2012 = vadd.f32 %v2011, 0.0036580483
      %v2013 = vmul.f32 %v2008, %v2012
      %v2014 = vadd.f32 %v2013, 0.05243302
      %v2015 = vmul.f32 %v2008, %v2014
      %v2016 = vadd.f32 %v2015, 0.18741608
      %v2017 = vmul.f32 %v2008, %v2016
      %v2018 = vadd.f32 %v2017, 1.1283791
      %v2019 = vmul.f32 %v1429, %v2018
      %v2020 = vmul.f32 %v2008, 3.8918573e-05
      %v2021 = vadd.f32 %v2020, 0.001143296
      %v2022 = vmul.f32 %v2008, %v2021
      %v2023 = vadd.f32 %v2022, 0.014752088
      %v2024 = vmul.f32 %v2008, %v2023
      %v2025 = vadd.f32 %v2024, 0.112945676
      %v2026 = vmul.f32 %v2008, %v2025
      %v2027 = vadd.f32 %v2026, 0.4994258
      %v2028 = vmul.f32 %v2008, %v2027
      %v2029 = vadd.f32 %v2028, 1.0
      %v2030 = vrcp.pop %v2029
      %v2031 = vmul.f32 %v2029, %v2030
      %v2032 = vsub.f32 1.0, %v2031
      %v2033 = vmul.f32 %v2030, %v2032
      %v2034 = vadd.f32 %v2030, %v2033
      %vm2035 = vweird.f32 %v2029
      %vm2036 = vweird.f32 %v2030
      %vm2037 = vmor %vm2035, %vm2036
      %v2038 = vsel %vm2037, %v2030, %v2034
      %v2039 = vand.u32 2147483647, %v2029
      %vm2040 = vcmp.eq.f32.partialorder %v2039, 8.507059e+37
      %v2041 = vand.u32 %v2029, 2147483648
      %v2042 = vor.u32 1.1754944e-38, %v2041
      %v2043 = vsel %vm2040, %v2042, %v2038
      %v2044 = vmul.f32 %v2019, %v2043
      %v2045 = vmin.f32 %v2044, 1.0
      %v2046 = vmax.f32 %v2045, -1.0
      %v2047 = vmul.f32 %v1430, %v1430
      %v2048 = vmin.f32 16.0, %v2047
      %v2049 = vmul.f32 %v2048, 2.1237322e-06
      %v2050 = vadd.f32 %v2049, 0.00028619796
      %v2051 = vmul.f32 %v2048, %v2050
      %v2052 = vadd.f32 %v2051, 0.0036580483
      %v2053 = vmul.f32 %v2048, %v2052
      %v2054 = vadd.f32 %v2053, 0.05243302
      %v2055 = vmul.f32 %v2048, %v2054
      %v2056 = vadd.f32 %v2055, 0.18741608
      %v2057 = vmul.f32 %v2048, %v2056
      %v2058 = vadd.f32 %v2057, 1.1283791
      %v2059 = vmul.f32 %v1430, %v2058
      %v2060 = vmul.f32 %v2048, 3.8918573e-05
      %v2061 = vadd.f32 %v2060, 0.001143296
      %v2062 = vmul.f32 %v2048, %v2061
      %v2063 = vadd.f32 %v2062, 0.014752088
      %v2064 = vmul.f32 %v2048, %v2063
      %v2065 = vadd.f32 %v2064, 0.112945676
      %v2066 = vmul.f32 %v2048, %v2065
      %v2067 = vadd.f32 %v2066, 0.4994258
      %v2068 = vmul.f32 %v2048, %v2067
      %v2069 = vadd.f32 %v2068, 1.0
      %v2070 = vrcp.pop %v2069
      %v2071 = vmul.f32 %v2069, %v2070
      %v2072 = vsub.f32 1.0, %v2071
      %v2073 = vmul.f32 %v2070, %v2072
      %v2074 = vadd.f32 %v2070, %v2073
      %vm2075 = vweird.f32 %v2069
      %vm2076 = vweird.f32 %v2070
      %vm2077 = vmor %vm2075, %vm2076
      %v2078 = vsel %vm2077, %v2070, %v2074
      %v2079 = vand.u32 2147483647, %v2069
      %vm2080 = vcmp.eq.f32.partialorder %v2079, 8.507059e+37
      %v2081 = vand.u32 %v2069, 2147483648
      %v2082 = vor.u32 1.1754944e-38, %v2081
      %v2083 = vsel %vm2080, %v2082, %v2078
      %v2084 = vmul.f32 %v2059, %v2083
      %v2085 = vmin.f32 %v2084, 1.0
      %v2086 = vmax.f32 %v2085, -1.0
      %v2087 = vmul.f32 %v1431, %v1431
      %v2088 = vmin.f32 16.0, %v2087
      %v2089 = vmul.f32 %v2088, 2.1237322e-06
      %v2090 = vadd.f32 %v2089, 0.00028619796
      %v2091 = vmul.f32 %v2088, %v2090
      %v2092 = vadd.f32 %v2091, 0.0036580483
      %v2093 = vmul.f32 %v2088, %v2092
      %v2094 = vadd.f32 %v2093, 0.05243302
      %v2095 = vmul.f32 %v2088, %v2094
      %v2096 = vadd.f32 %v2095, 0.18741608
      %v2097 = vmul.f32 %v2088, %v2096
      %v2098 = vadd.f32 %v2097, 1.1283791
      %v2099 = vmul.f32 %v1431, %v2098
      %v2100 = vmul.f32 %v2088, 3.8918573e-05
      %v2101 = vadd.f32 %v2100, 0.001143296
      %v2102 = vmul.f32 %v2088, %v2101
      %v2103 = vadd.f32 %v2102, 0.014752088
      %v2104 = vmul.f32 %v2088, %v2103
      %v2105 = vadd.f32 %v2104, 0.112945676
      %v2106 = vmul.f32 %v2088, %v2105
      %v2107 = vadd.f32 %v2106, 0.4994258
      %v2108 = vmul.f32 %v2088, %v2107
      %v2109 = vadd.f32 %v2108, 1.0
      %v2110 = vrcp.pop %v2109
      %v2111 = vmul.f32 %v2109, %v2110
      %v2112 = vsub.f32 1.0, %v2111
      %v2113 = vmul.f32 %v2110, %v2112
      %v2114 = vadd.f32 %v2110, %v2113
      %vm2115 = vweird.f32 %v2109
      %vm2116 = vweird.f32 %v2110
      %vm2117 = vmor %vm2115, %vm2116
      %v2118 = vsel %vm2117, %v2110, %v2114
      %v2119 = vand.u32 2147483647, %v2109
      %vm2120 = vcmp.eq.f32.partialorder %v2119, 8.507059e+37
      %v2121 = vand.u32 %v2109, 2147483648
      %v2122 = vor.u32 1.1754944e-38, %v2121
      %v2123 = vsel %vm2120, %v2122, %v2118
      %v2124 = vmul.f32 %v2099, %v2123
      %v2125 = vmin.f32 %v2124, 1.0
      %v2126 = vmax.f32 %v2125, -1.0
      %v2127 = vmul.f32 %v1432, %v1432
      %v2128 = vmin.f32 16.0, %v2127
      %v2129 = vmul.f32 %v2128, 2.1237322e-06
      %v2130 = vadd.f32 %v2129, 0.00028619796
      %v2131 = vmul.f32 %v2128, %v2130
      %v2132 = vadd.f32 %v2131, 0.0036580483
      %v2133 = vmul.f32 %v2128, %v2132
      %v2134 = vadd.f32 %v2133, 0.05243302
      %v2135 = vmul.f32 %v2128, %v2134
      %v2136 = vadd.f32 %v2135, 0.18741608
      %v2137 = vmul.f32 %v2128, %v2136
      %v2138 = vadd.f32 %v2137, 1.1283791
      %v2139 = vmul.f32 %v1432, %v2138
      %v2140 = vmul.f32 %v2128, 3.8918573e-05
      %v2141 = vadd.f32 %v2140, 0.001143296
      %v2142 = vmul.f32 %v2128, %v2141
      %v2143 = vadd.f32 %v2142, 0.014752088
      %v2144 = vmul.f32 %v2128, %v2143
      %v2145 = vadd.f32 %v2144, 0.112945676
      %v2146 = vmul.f32 %v2128, %v2145
      %v2147 = vadd.f32 %v2146, 0.4994258
      %v2148 = vmul.f32 %v2128, %v2147
      %v2149 = vadd.f32 %v2148, 1.0
      %v2150 = vrcp.pop %v2149
      %v2151 = vmul.f32 %v2149, %v2150
      %v2152 = vsub.f32 1.0, %v2151
      %v2153 = vmul.f32 %v2150, %v2152
      %v2154 = vadd.f32 %v2150, %v2153
      %vm2155 = vweird.f32 %v2149
      %vm2156 = vweird.f32 %v2150
      %vm2157 = vmor %vm2155, %vm2156
      %v2158 = vsel %vm2157, %v2150, %v2154
      %v2159 = vand.u32 2147483647, %v2149
      %vm2160 = vcmp.eq.f32.partialorder %v2159, 8.507059e+37
      %v2161 = vand.u32 %v2149, 2147483648
      %v2162 = vor.u32 1.1754944e-38, %v2161
      %v2163 = vsel %vm2160, %v2162, %v2158
      %v2164 = vmul.f32 %v2139, %v2163
      %v2165 = vmin.f32 %v2164, 1.0
      %v2166 = vmax.f32 %v2165, -1.0
      %v2167 = vmul.f32 %v1433, %v1433
      %v2168 = vmin.f32 16.0, %v2167
      %v2169 = vmul.f32 %v2168, 2.1237322e-06
      %v2170 = vadd.f32 %v2169, 0.00028619796
      %v2171 = vmul.f32 %v2168, %v2170
      %v2172 = vadd.f32 %v2171, 0.0036580483
      %v2173 = vmul.f32 %v2168, %v2172
      %v2174 = vadd.f32 %v2173, 0.05243302
      %v2175 = vmul.f32 %v2168, %v2174
      %v2176 = vadd.f32 %v2175, 0.18741608
      %v2177 = vmul.f32 %v2168, %v2176
      %v2178 = vadd.f32 %v2177, 1.1283791
      %v2179 = vmul.f32 %v1433, %v2178
      %v2180 = vmul.f32 %v2168, 3.8918573e-05
      %v2181 = vadd.f32 %v2180, 0.001143296
      %v2182 = vmul.f32 %v2168, %v2181
      %v2183 = vadd.f32 %v2182, 0.014752088
      %v2184 = vmul.f32 %v2168, %v2183
      %v2185 = vadd.f32 %v2184, 0.112945676
      %v2186 = vmul.f32 %v2168, %v2185
      %v2187 = vadd.f32 %v2186, 0.4994258
      %v2188 = vmul.f32 %v2168, %v2187
      %v2189 = vadd.f32 %v2188, 1.0
      %v2190 = vrcp.pop %v2189
      %v2191 = vmul.f32 %v2189, %v2190
      %v2192 = vsub.f32 1.0, %v2191
      %v2193 = vmul.f32 %v2190, %v2192
      %v2194 = vadd.f32 %v2190, %v2193
      %vm2195 = vweird.f32 %v2189
      %vm2196 = vweird.f32 %v2190
      %vm2197 = vmor %vm2195, %vm2196
      %v2198 = vsel %vm2197, %v2190, %v2194
      %v2199 = vand.u32 2147483647, %v2189
      %vm2200 = vcmp.eq.f32.partialorder %v2199, 8.507059e+37
      %v2201 = vand.u32 %v2189, 2147483648
      %v2202 = vor.u32 1.1754944e-38, %v2201
      %v2203 = vsel %vm2200, %v2202, %v2198
      %v2204 = vmul.f32 %v2179, %v2203
      %v2205 = vmin.f32 %v2204, 1.0
      %v2206 = vmax.f32 %v2205, -1.0
      %v2207 = vmul.f32 %v1434, %v1434
      %v2208 = vmin.f32 16.0, %v2207
      %v2209 = vmul.f32 %v2208, 2.1237322e-06
      %v2210 = vadd.f32 %v2209, 0.00028619796
      %v2211 = vmul.f32 %v2208, %v2210
      %v2212 = vadd.f32 %v2211, 0.0036580483
      %v2213 = vmul.f32 %v2208, %v2212
      %v2214 = vadd.f32 %v2213, 0.05243302
      %v2215 = vmul.f32 %v2208, %v2214
      %v2216 = vadd.f32 %v2215, 0.18741608
      %v2217 = vmul.f32 %v2208, %v2216
      %v2218 = vadd.f32 %v2217, 1.1283791
      %v2219 = vmul.f32 %v1434, %v2218
      %v2220 = vmul.f32 %v2208, 3.8918573e-05
      %v2221 = vadd.f32 %v2220, 0.001143296
      %v2222 = vmul.f32 %v2208, %v2221
      %v2223 = vadd.f32 %v2222, 0.014752088
      %v2224 = vmul.f32 %v2208, %v2223
      %v2225 = vadd.f32 %v2224, 0.112945676
      %v2226 = vmul.f32 %v2208, %v2225
      %v2227 = vadd.f32 %v2226, 0.4994258
      %v2228 = vmul.f32 %v2208, %v2227
      %v2229 = vadd.f32 %v2228, 1.0
      %v2230 = vrcp.pop %v2229
      %v2231 = vmul.f32 %v2229, %v2230
      %v2232 = vsub.f32 1.0, %v2231
      %v2233 = vmul.f32 %v2230, %v2232
      %v2234 = vadd.f32 %v2230, %v2233
      %vm2235 = vweird.f32 %v2229
      %vm2236 = vweird.f32 %v2230
      %vm2237 = vmor %vm2235, %vm2236
      %v2238 = vsel %vm2237, %v2230, %v2234
      %v2239 = vand.u32 2147483647, %v2229
      %vm2240 = vcmp.eq.f32.partialorder %v2239, 8.507059e+37
      %v2241 = vand.u32 %v2229, 2147483648
      %v2242 = vor.u32 1.1754944e-38, %v2241
      %v2243 = vsel %vm2240, %v2242, %v2238
      %v2244 = vmul.f32 %v2219, %v2243
      %v2245 = vmin.f32 %v2244, 1.0
      %v2246 = vmax.f32 %v2245, -1.0
      %v2247 = vmul.f32 %v1435, %v1435
      %v2248 = vmin.f32 16.0, %v2247
      %v2249 = vmul.f32 %v2248, 2.1237322e-06
      %v2250 = vadd.f32 %v2249, 0.00028619796
      %v2251 = vmul.f32 %v2248, %v2250
      %v2252 = vadd.f32 %v2251, 0.0036580483
      %v2253 = vmul.f32 %v2248, %v2252
      %v2254 = vadd.f32 %v2253, 0.05243302
      %v2255 = vmul.f32 %v2248, %v2254
      %v2256 = vadd.f32 %v2255, 0.18741608
      %v2257 = vmul.f32 %v2248, %v2256
      %v2258 = vadd.f32 %v2257, 1.1283791
      %v2259 = vmul.f32 %v1435, %v2258
      %v2260 = vmul.f32 %v2248, 3.8918573e-05
      %v2261 = vadd.f32 %v2260, 0.001143296
      %v2262 = vmul.f32 %v2248, %v2261
      %v2263 = vadd.f32 %v2262, 0.014752088
      %v2264 = vmul.f32 %v2248, %v2263
      %v2265 = vadd.f32 %v2264, 0.112945676
      %v2266 = vmul.f32 %v2248, %v2265
      %v2267 = vadd.f32 %v2266, 0.4994258
      %v2268 = vmul.f32 %v2248, %v2267
      %v2269 = vadd.f32 %v2268, 1.0
      %v2270 = vrcp.pop %v2269
      %v2271 = vmul.f32 %v2269, %v2270
      %v2272 = vsub.f32 1.0, %v2271
      %v2273 = vmul.f32 %v2270, %v2272
      %v2274 = vadd.f32 %v2270, %v2273
      %vm2275 = vweird.f32 %v2269
      %vm2276 = vweird.f32 %v2270
      %vm2277 = vmor %vm2275, %vm2276
      %v2278 = vsel %vm2277, %v2270, %v2274
      %v2279 = vand.u32 2147483647, %v2269
      %vm2280 = vcmp.eq.f32.partialorder %v2279, 8.507059e+37
      %v2281 = vand.u32 %v2269, 2147483648
      %v2282 = vor.u32 1.1754944e-38, %v2281
      %v2283 = vsel %vm2280, %v2282, %v2278
      %v2284 = vmul.f32 %v2259, %v2283
      %v2285 = vmin.f32 %v2284, 1.0
      %v2286 = vmax.f32 %v2285, -1.0
      %v2287 = vmul.f32 %v1436, %v1436
      %v2288 = vmin.f32 16.0, %v2287
      %v2289 = vmul.f32 %v2288, 2.1237322e-06
      %v2290 = vadd.f32 %v2289, 0.00028619796
      %v2291 = vmul.f32 %v2288, %v2290
      %v2292 = vadd.f32 %v2291, 0.0036580483
      %v2293 = vmul.f32 %v2288, %v2292
      %v2294 = vadd.f32 %v2293, 0.05243302
      %v2295 = vmul.f32 %v2288, %v2294
      %v2296 = vadd.f32 %v2295, 0.18741608
      %v2297 = vmul.f32 %v2288, %v2296
      %v2298 = vadd.f32 %v2297, 1.1283791
      %v2299 = vmul.f32 %v1436, %v2298
      %v2300 = vmul.f32 %v2288, 3.8918573e-05
      %v2301 = vadd.f32 %v2300, 0.001143296
      %v2302 = vmul.f32 %v2288, %v2301
      %v2303 = vadd.f32 %v2302, 0.014752088
      %v2304 = vmul.f32 %v2288, %v2303
      %v2305 = vadd.f32 %v2304, 0.112945676
      %v2306 = vmul.f32 %v2288, %v2305
      %v2307 = vadd.f32 %v2306, 0.4994258
      %v2308 = vmul.f32 %v2288, %v2307
      %v2309 = vadd.f32 %v2308, 1.0
      %v2310 = vrcp.pop %v2309
      %v2311 = vmul.f32 %v2309, %v2310
      %v2312 = vsub.f32 1.0, %v2311
      %v2313 = vmul.f32 %v2310, %v2312
      %v2314 = vadd.f32 %v2310, %v2313
      %vm2315 = vweird.f32 %v2309
      %vm2316 = vweird.f32 %v2310
      %vm2317 = vmor %vm2315, %vm2316
      %v2318 = vsel %vm2317, %v2310, %v2314
      %v2319 = vand.u32 2147483647, %v2309
      %vm2320 = vcmp.eq.f32.partialorder %v2319, 8.507059e+37
      %v2321 = vand.u32 %v2309, 2147483648
      %v2322 = vor.u32 1.1754944e-38, %v2321
      %v2323 = vsel %vm2320, %v2322, %v2318
      %v2324 = vmul.f32 %v2299, %v2323
      %v2325 = vmin.f32 %v2324, 1.0
      %v2326 = vmax.f32 %v2325, -1.0
      %v2327 = vmul.f32 %v1437, %v1437
      %v2328 = vmin.f32 16.0, %v2327
      %v2329 = vmul.f32 %v2328, 2.1237322e-06
      %v2330 = vadd.f32 %v2329, 0.00028619796
      %v2331 = vmul.f32 %v2328, %v2330
      %v2332 = vadd.f32 %v2331, 0.0036580483
      %v2333 = vmul.f32 %v2328, %v2332
      %v2334 = vadd.f32 %v2333, 0.05243302
      %v2335 = vmul.f32 %v2328, %v2334
      %v2336 = vadd.f32 %v2335, 0.18741608
      %v2337 = vmul.f32 %v2328, %v2336
      %v2338 = vadd.f32 %v2337, 1.1283791
      %v2339 = vmul.f32 %v1437, %v2338
      %v2340 = vmul.f32 %v2328, 3.8918573e-05
      %v2341 = vadd.f32 %v2340, 0.001143296
      %v2342 = vmul.f32 %v2328, %v2341
      %v2343 = vadd.f32 %v2342, 0.014752088
      %v2344 = vmul.f32 %v2328, %v2343
      %v2345 = vadd.f32 %v2344, 0.112945676
      %v2346 = vmul.f32 %v2328, %v2345
      %v2347 = vadd.f32 %v2346, 0.4994258
      %v2348 = vmul.f32 %v2328, %v2347
      %v2349 = vadd.f32 %v2348, 1.0
      %v2350 = vrcp.pop %v2349
      %v2351 = vmul.f32 %v2349, %v2350
      %v2352 = vsub.f32 1.0, %v2351
      %v2353 = vmul.f32 %v2350, %v2352
      %v2354 = vadd.f32 %v2350, %v2353
      %vm2355 = vweird.f32 %v2349
      %vm2356 = vweird.f32 %v2350
      %vm2357 = vmor %vm2355, %vm2356
      %v2358 = vsel %vm2357, %v2350, %v2354
      %v2359 = vand.u32 2147483647, %v2349
      %vm2360 = vcmp.eq.f32.partialorder %v2359, 8.507059e+37
      %v2361 = vand.u32 %v2349, 2147483648
      %v2362 = vor.u32 1.1754944e-38, %v2361
      %v2363 = vsel %vm2360, %v2362, %v2358
      %v2364 = vmul.f32 %v2339, %v2363
      %v2365 = vmin.f32 %v2364, 1.0
      %v2366 = vmax.f32 %v2365, -1.0
      %v2367 = vmul.f32 %v1438, %v1438
      %v2368 = vmin.f32 16.0, %v2367
      %v2369 = vmul.f32 %v2368, 2.1237322e-06
      %v2370 = vadd.f32 %v2369, 0.00028619796
      %v2371 = vmul.f32 %v2368, %v2370
      %v2372 = vadd.f32 %v2371, 0.0036580483
      %v2373 = vmul.f32 %v2368, %v2372
      %v2374 = vadd.f32 %v2373, 0.05243302
      %v2375 = vmul.f32 %v2368, %v2374
      %v2376 = vadd.f32 %v2375, 0.18741608
      %v2377 = vmul.f32 %v2368, %v2376
      %v2378 = vadd.f32 %v2377, 1.1283791
      %v2379 = vmul.f32 %v1438, %v2378
      %v2380 = vmul.f32 %v2368, 3.8918573e-05
      %v2381 = vadd.f32 %v2380, 0.001143296
      %v2382 = vmul.f32 %v2368, %v2381
      %v2383 = vadd.f32 %v2382, 0.014752088
      %v2384 = vmul.f32 %v2368, %v2383
      %v2385 = vadd.f32 %v2384, 0.112945676
      %v2386 = vmul.f32 %v2368, %v2385
      %v2387 = vadd.f32 %v2386, 0.4994258
      %v2388 = vmul.f32 %v2368, %v2387
      %v2389 = vadd.f32 %v2388, 1.0
      %v2390 = vrcp.pop %v2389
      %v2391 = vmul.f32 %v2389, %v2390
      %v2392 = vsub.f32 1.0, %v2391
      %v2393 = vmul.f32 %v2390, %v2392
      %v2394 = vadd.f32 %v2390, %v2393
      %vm2395 = vweird.f32 %v2389
      %vm2396 = vweird.f32 %v2390
      %vm2397 = vmor %vm2395, %vm2396
      %v2398 = vsel %vm2397, %v2390, %v2394
      %v2399 = vand.u32 2147483647, %v2389
      %vm2400 = vcmp.eq.f32.partialorder %v2399, 8.507059e+37
      %v2401 = vand.u32 %v2389, 2147483648
      %v2402 = vor.u32 1.1754944e-38, %v2401
      %v2403 = vsel %vm2400, %v2402, %v2398
      %v2404 = vmul.f32 %v2379, %v2403
      %v2405 = vmin.f32 %v2404, 1.0
      %v2406 = vmax.f32 %v2405, -1.0
      %v2407 = vmul.f32 %v1439, %v1439
      %v2408 = vmin.f32 16.0, %v2407
      %v2409 = vmul.f32 %v2408, 2.1237322e-06
      %v2410 = vadd.f32 %v2409, 0.00028619796
      %v2411 = vmul.f32 %v2408, %v2410
      %v2412 = vadd.f32 %v2411, 0.0036580483
      %v2413 = vmul.f32 %v2408, %v2412
      %v2414 = vadd.f32 %v2413, 0.05243302
      %v2415 = vmul.f32 %v2408, %v2414
      %v2416 = vadd.f32 %v2415, 0.18741608
      %v2417 = vmul.f32 %v2408, %v2416
      %v2418 = vadd.f32 %v2417, 1.1283791
      %v2419 = vmul.f32 %v1439, %v2418
      %v2420 = vmul.f32 %v2408, 3.8918573e-05
      %v2421 = vadd.f32 %v2420, 0.001143296
      %v2422 = vmul.f32 %v2408, %v2421
      %v2423 = vadd.f32 %v2422, 0.014752088
      %v2424 = vmul.f32 %v2408, %v2423
      %v2425 = vadd.f32 %v2424, 0.112945676
      %v2426 = vmul.f32 %v2408, %v2425
      %v2427 = vadd.f32 %v2426, 0.4994258
      %v2428 = vmul.f32 %v2408, %v2427
      %v2429 = vadd.f32 %v2428, 1.0
      %v2430 = vrcp.pop %v2429
      %v2431 = vmul.f32 %v2429, %v2430
      %v2432 = vsub.f32 1.0, %v2431
      %v2433 = vmul.f32 %v2430, %v2432
      %v2434 = vadd.f32 %v2430, %v2433
      %vm2435 = vweird.f32 %v2429
      %vm2436 = vweird.f32 %v2430
      %vm2437 = vmor %vm2435, %vm2436
      %v2438 = vsel %vm2437, %v2430, %v2434
      %v2439 = vand.u32 2147483647, %v2429
      %vm2440 = vcmp.eq.f32.partialorder %v2439, 8.507059e+37
      %v2441 = vand.u32 %v2429, 2147483648
      %v2442 = vor.u32 1.1754944e-38, %v2441
      %v2443 = vsel %vm2440, %v2442, %v2438
      %v2444 = vmul.f32 %v2419, %v2443
      %v2445 = vmin.f32 %v2444, 1.0
      %v2446 = vmax.f32 %v2445, -1.0
      %v2447 = vmul.f32 %v1440, %v1440
      %v2448 = vmin.f32 16.0, %v2447
      %v2449 = vmul.f32 %v2448, 2.1237322e-06
      %v2450 = vadd.f32 %v2449, 0.00028619796
      %v2451 = vmul.f32 %v2448, %v2450
      %v2452 = vadd.f32 %v2451, 0.0036580483
      %v2453 = vmul.f32 %v2448, %v2452
      %v2454 = vadd.f32 %v2453, 0.05243302
      %v2455 = vmul.f32 %v2448, %v2454
      %v2456 = vadd.f32 %v2455, 0.18741608
      %v2457 = vmul.f32 %v2448, %v2456
      %v2458 = vadd.f32 %v2457, 1.1283791
      %v2459 = vmul.f32 %v1440, %v2458
      %v2460 = vmul.f32 %v2448, 3.8918573e-05
      %v2461 = vadd.f32 %v2460, 0.001143296
      %v2462 = vmul.f32 %v2448, %v2461
      %v2463 = vadd.f32 %v2462, 0.014752088
      %v2464 = vmul.f32 %v2448, %v2463
      %v2465 = vadd.f32 %v2464, 0.112945676
      %v2466 = vmul.f32 %v2448, %v2465
      %v2467 = vadd.f32 %v2466, 0.4994258
      %v2468 = vmul.f32 %v2448, %v2467
      %v2469 = vadd.f32 %v2468, 1.0
      %v2470 = vrcp.pop %v2469
      %v2471 = vmul.f32 %v2469, %v2470
      %v2472 = vsub.f32 1.0, %v2471
      %v2473 = vmul.f32 %v2470, %v2472
      %v2474 = vadd.f32 %v2470, %v2473
      %vm2475 = vweird.f32 %v2469
      %vm2476 = vweird.f32 %v2470
      %vm2477 = vmor %vm2475, %vm2476
      %v2478 = vsel %vm2477, %v2470, %v2474
      %v2479 = vand.u32 2147483647, %v2469
      %vm2480 = vcmp.eq.f32.partialorder %v2479, 8.507059e+37
      %v2481 = vand.u32 %v2469, 2147483648
      %v2482 = vor.u32 1.1754944e-38, %v2481
      %v2483 = vsel %vm2480, %v2482, %v2478
      %v2484 = vmul.f32 %v2459, %v2483
      %v2485 = vmin.f32 %v2484, 1.0
      %v2486 = vmax.f32 %v2485, -1.0
      %v2487 = vmul.f32 %v1441, %v1441
      %v2488 = vmin.f32 16.0, %v2487
      %v2489 = vmul.f32 %v2488, 2.1237322e-06
      %v2490 = vadd.f32 %v2489, 0.00028619796
      %v2491 = vmul.f32 %v2488, %v2490
      %v2492 = vadd.f32 %v2491, 0.0036580483
      %v2493 = vmul.f32 %v2488, %v2492
      %v2494 = vadd.f32 %v2493, 0.05243302
      %v2495 = vmul.f32 %v2488, %v2494
      %v2496 = vadd.f32 %v2495, 0.18741608
      %v2497 = vmul.f32 %v2488, %v2496
      %v2498 = vadd.f32 %v2497, 1.1283791
      %v2499 = vmul.f32 %v1441, %v2498
      %v2500 = vmul.f32 %v2488, 3.8918573e-05
      %v2501 = vadd.f32 %v2500, 0.001143296
      %v2502 = vmul.f32 %v2488, %v2501
      %v2503 = vadd.f32 %v2502, 0.014752088
      %v2504 = vmul.f32 %v2488, %v2503
      %v2505 = vadd.f32 %v2504, 0.112945676
      %v2506 = vmul.f32 %v2488, %v2505
      %v2507 = vadd.f32 %v2506, 0.4994258
      %v2508 = vmul.f32 %v2488, %v2507
      %v2509 = vadd.f32 %v2508, 1.0
      %v2510 = vrcp.pop %v2509
      %v2511 = vmul.f32 %v2509, %v2510
      %v2512 = vsub.f32 1.0, %v2511
      %v2513 = vmul.f32 %v2510, %v2512
      %v2514 = vadd.f32 %v2510, %v2513
      %vm2515 = vweird.f32 %v2509
      %vm2516 = vweird.f32 %v2510
      %vm2517 = vmor %vm2515, %vm2516
      %v2518 = vsel %vm2517, %v2510, %v2514
      %v2519 = vand.u32 2147483647, %v2509
      %vm2520 = vcmp.eq.f32.partialorder %v2519, 8.507059e+37
      %v2521 = vand.u32 %v2509, 2147483648
      %v2522 = vor.u32 1.1754944e-38, %v2521
      %v2523 = vsel %vm2520, %v2522, %v2518
      %v2524 = vmul.f32 %v2499, %v2523
      %v2525 = vmin.f32 %v2524, 1.0
      %v2526 = vmax.f32 %v2525, -1.0
      %v2527 = vmul.f32 %v1442, %v1442
      %v2528 = vmin.f32 16.0, %v2527
      %v2529 = vmul.f32 %v2528, 2.1237322e-06
      %v2530 = vadd.f32 %v2529, 0.00028619796
      %v2531 = vmul.f32 %v2528, %v2530
      %v2532 = vadd.f32 %v2531, 0.0036580483
      %v2533 = vmul.f32 %v2528, %v2532
      %v2534 = vadd.f32 %v2533, 0.05243302
      %v2535 = vmul.f32 %v2528, %v2534
      %v2536 = vadd.f32 %v2535, 0.18741608
      %v2537 = vmul.f32 %v2528, %v2536
      %v2538 = vadd.f32 %v2537, 1.1283791
      %v2539 = vmul.f32 %v1442, %v2538
      %v2540 = vmul.f32 %v2528, 3.8918573e-05
      %v2541 = vadd.f32 %v2540, 0.001143296
      %v2542 = vmul.f32 %v2528, %v2541
      %v2543 = vadd.f32 %v2542, 0.014752088
      %v2544 = vmul.f32 %v2528, %v2543
      %v2545 = vadd.f32 %v2544, 0.112945676
      %v2546 = vmul.f32 %v2528, %v2545
      %v2547 = vadd.f32 %v2546, 0.4994258
      %v2548 = vmul.f32 %v2528, %v2547
      %v2549 = vadd.f32 %v2548, 1.0
      %v2550 = vrcp.pop %v2549
      %v2551 = vmul.f32 %v2549, %v2550
      %v2552 = vsub.f32 1.0, %v2551
      %v2553 = vmul.f32 %v2550, %v2552
      %v2554 = vadd.f32 %v2550, %v2553
      %vm2555 = vweird.f32 %v2549
      %vm2556 = vweird.f32 %v2550
      %vm2557 = vmor %vm2555, %vm2556
      %v2558 = vsel %vm2557, %v2550, %v2554
      %v2559 = vand.u32 2147483647, %v2549
      %vm2560 = vcmp.eq.f32.partialorder %v2559, 8.507059e+37
      %v2561 = vand.u32 %v2549, 2147483648
      %v2562 = vor.u32 1.1754944e-38, %v2561
      %v2563 = vsel %vm2560, %v2562, %v2558
      %v2564 = vmul.f32 %v2539, %v2563
      %v2565 = vmin.f32 %v2564, 1.0
      %v2566 = vmax.f32 %v2565, -1.0
      %v2567 = vmul.f32 %v1443, %v1443
      %v2568 = vmin.f32 16.0, %v2567
      %v2569 = vmul.f32 %v2568, 2.1237322e-06
      %v2570 = vadd.f32 %v2569, 0.00028619796
      %v2571 = vmul.f32 %v2568, %v2570
      %v2572 = vadd.f32 %v2571, 0.0036580483
      %v2573 = vmul.f32 %v2568, %v2572
      %v2574 = vadd.f32 %v2573, 0.05243302
      %v2575 = vmul.f32 %v2568, %v2574
      %v2576 = vadd.f32 %v2575, 0.18741608
      %v2577 = vmul.f32 %v2568, %v2576
      %v2578 = vadd.f32 %v2577, 1.1283791
      %v2579 = vmul.f32 %v1443, %v2578
      %v2580 = vmul.f32 %v2568, 3.8918573e-05
      %v2581 = vadd.f32 %v2580, 0.001143296
      %v2582 = vmul.f32 %v2568, %v2581
      %v2583 = vadd.f32 %v2582, 0.014752088
      %v2584 = vmul.f32 %v2568, %v2583
      %v2585 = vadd.f32 %v2584, 0.112945676
      %v2586 = vmul.f32 %v2568, %v2585
      %v2587 = vadd.f32 %v2586, 0.4994258
      %v2588 = vmul.f32 %v2568, %v2587
      %v2589 = vadd.f32 %v2588, 1.0
      %v2590 = vrcp.pop %v2589
      %v2591 = vmul.f32 %v2589, %v2590
      %v2592 = vsub.f32 1.0, %v2591
      %v2593 = vmul.f32 %v2590, %v2592
      %v2594 = vadd.f32 %v2590, %v2593
      %vm2595 = vweird.f32 %v2589
      %vm2596 = vweird.f32 %v2590
      %vm2597 = vmor %vm2595, %vm2596
      %v2598 = vsel %vm2597, %v2590, %v2594
      %v2599 = vand.u32 2147483647, %v2589
      %vm2600 = vcmp.eq.f32.partialorder %v2599, 8.507059e+37
      %v2601 = vand.u32 %v2589, 2147483648
      %v2602 = vor.u32 1.1754944e-38, %v2601
      %v2603 = vsel %vm2600, %v2602, %v2598
      %v2604 = vmul.f32 %v2579, %v2603
      %v2605 = vmin.f32 %v2604, 1.0
      %v2606 = vmax.f32 %v2605, -1.0
      %v2607 = vmul.f32 %v1444, %v1444
      %v2608 = vmin.f32 16.0, %v2607
      %v2609 = vmul.f32 %v2608, 2.1237322e-06
      %v2610 = vadd.f32 %v2609, 0.00028619796
      %v2611 = vmul.f32 %v2608, %v2610
      %v2612 = vadd.f32 %v2611, 0.0036580483
      %v2613 = vmul.f32 %v2608, %v2612
      %v2614 = vadd.f32 %v2613, 0.05243302
      %v2615 = vmul.f32 %v2608, %v2614
      %v2616 = vadd.f32 %v2615, 0.18741608
      %v2617 = vmul.f32 %v2608, %v2616
      %v2618 = vadd.f32 %v2617, 1.1283791
      %v2619 = vmul.f32 %v1444, %v2618
      %v2620 = vmul.f32 %v2608, 3.8918573e-05
      %v2621 = vadd.f32 %v2620, 0.001143296
      %v2622 = vmul.f32 %v2608, %v2621
      %v2623 = vadd.f32 %v2622, 0.014752088
      %v2624 = vmul.f32 %v2608, %v2623
      %v2625 = vadd.f32 %v2624, 0.112945676
      %v2626 = vmul.f32 %v2608, %v2625
      %v2627 = vadd.f32 %v2626, 0.4994258
      %v2628 = vmul.f32 %v2608, %v2627
      %v2629 = vadd.f32 %v2628, 1.0
      %v2630 = vrcp.pop %v2629
      %v2631 = vmul.f32 %v2629, %v2630
      %v2632 = vsub.f32 1.0, %v2631
      %v2633 = vmul.f32 %v2630, %v2632
      %v2634 = vadd.f32 %v2630, %v2633
      %vm2635 = vweird.f32 %v2629
      %vm2636 = vweird.f32 %v2630
      %vm2637 = vmor %vm2635, %vm2636
      %v2638 = vsel %vm2637, %v2630, %v2634
      %v2639 = vand.u32 2147483647, %v2629
      %vm2640 = vcmp.eq.f32.partialorder %v2639, 8.507059e+37
      %v2641 = vand.u32 %v2629, 2147483648
      %v2642 = vor.u32 1.1754944e-38, %v2641
      %v2643 = vsel %vm2640, %v2642, %v2638
      %v2644 = vmul.f32 %v2619, %v2643
      %v2645 = vmin.f32 %v2644, 1.0
      %v2646 = vmax.f32 %v2645, -1.0
      %v2647 = vmul.f32 %v1445, %v1445
      %v2648 = vmin.f32 16.0, %v2647
      %v2649 = vmul.f32 %v2648, 2.1237322e-06
      %v2650 = vadd.f32 %v2649, 0.00028619796
      %v2651 = vmul.f32 %v2648, %v2650
      %v2652 = vadd.f32 %v2651, 0.0036580483
      %v2653 = vmul.f32 %v2648, %v2652
      %v2654 = vadd.f32 %v2653, 0.05243302
      %v2655 = vmul.f32 %v2648, %v2654
      %v2656 = vadd.f32 %v2655, 0.18741608
      %v2657 = vmul.f32 %v2648, %v2656
      %v2658 = vadd.f32 %v2657, 1.1283791
      %v2659 = vmul.f32 %v1445, %v2658
      %v2660 = vmul.f32 %v2648, 3.8918573e-05
      %v2661 = vadd.f32 %v2660, 0.001143296
      %v2662 = vmul.f32 %v2648, %v2661
      %v2663 = vadd.f32 %v2662, 0.014752088
      %v2664 = vmul.f32 %v2648, %v2663
      %v2665 = vadd.f32 %v2664, 0.112945676
      %v2666 = vmul.f32 %v2648, %v2665
      %v2667 = vadd.f32 %v2666, 0.4994258
      %v2668 = vmul.f32 %v2648, %v2667
      %v2669 = vadd.f32 %v2668, 1.0
      %v2670 = vrcp.pop %v2669
      %v2671 = vmul.f32 %v2669, %v2670
      %v2672 = vsub.f32 1.0, %v2671
      %v2673 = vmul.f32 %v2670, %v2672
      %v2674 = vadd.f32 %v2670, %v2673
      %vm2675 = vweird.f32 %v2669
      %vm2676 = vweird.f32 %v2670
      %vm2677 = vmor %vm2675, %vm2676
      %v2678 = vsel %vm2677, %v2670, %v2674
      %v2679 = vand.u32 2147483647, %v2669
      %vm2680 = vcmp.eq.f32.partialorder %v2679, 8.507059e+37
      %v2681 = vand.u32 %v2669, 2147483648
      %v2682 = vor.u32 1.1754944e-38, %v2681
      %v2683 = vsel %vm2680, %v2682, %v2678
      %v2684 = vmul.f32 %v2659, %v2683
      %v2685 = vmin.f32 %v2684, 1.0
      %v2686 = vmax.f32 %v2685, -1.0
      %v2687 = vmul.f32 %v1446, %v1446
      %v2688 = vmin.f32 16.0, %v2687
      %v2689 = vmul.f32 %v2688, 2.1237322e-06
      %v2690 = vadd.f32 %v2689, 0.00028619796
      %v2691 = vmul.f32 %v2688, %v2690
      %v2692 = vadd.f32 %v2691, 0.0036580483
      %v2693 = vmul.f32 %v2688, %v2692
      %v2694 = vadd.f32 %v2693, 0.05243302
      %v2695 = vmul.f32 %v2688, %v2694
      %v2696 = vadd.f32 %v2695, 0.18741608
      %v2697 = vmul.f32 %v2688, %v2696
      %v2698 = vadd.f32 %v2697, 1.1283791
      %v2699 = vmul.f32 %v1446, %v2698
      %v2700 = vmul.f32 %v2688, 3.8918573e-05
      %v2701 = vadd.f32 %v2700, 0.001143296
      %v2702 = vmul.f32 %v2688, %v2701
      %v2703 = vadd.f32 %v2702, 0.014752088
      %v2704 = vmul.f32 %v2688, %v2703
      %v2705 = vadd.f32 %v2704, 0.112945676
      %v2706 = vmul.f32 %v2688, %v2705
      %v2707 = vadd.f32 %v2706, 0.4994258
      %v2708 = vmul.f32 %v2688, %v2707
      %v2709 = vadd.f32 %v2708, 1.0
      %v2710 = vrcp.pop %v2709
      %v2711 = vmul.f32 %v2709, %v2710
      %v2712 = vsub.f32 1.0, %v2711
      %v2713 = vmul.f32 %v2710, %v2712
      %v2714 = vadd.f32 %v2710, %v2713
      %vm2715 = vweird.f32 %v2709
      %vm2716 = vweird.f32 %v2710
      %vm2717 = vmor %vm2715, %vm2716
      %v2718 = vsel %vm2717, %v2710, %v2714
      %v2719 = vand.u32 2147483647, %v2709
      %vm2720 = vcmp.eq.f32.partialorder %v2719, 8.507059e+37
      %v2721 = vand.u32 %v2709, 2147483648
      %v2722 = vor.u32 1.1754944e-38, %v2721
      %v2723 = vsel %vm2720, %v2722, %v2718
      %v2724 = vmul.f32 %v2699, %v2723
      %v2725 = vmin.f32 %v2724, 1.0
      %v2726 = vmax.f32 %v2725, -1.0
      %v2727 = vadd.f32 %v1486, 1.0
      %v2728 = vadd.f32 %v1526, 1.0
      %v2729 = vadd.f32 %v1566, 1.0
      %v2730 = vadd.f32 %v1606, 1.0
      %v2731 = vadd.f32 %v1646, 1.0
      %v2732 = vadd.f32 %v1686, 1.0
      %v2733 = vadd.f32 %v1726, 1.0
      %v2734 = vadd.f32 %v1766, 1.0
      %v2735 = vadd.f32 %v1806, 1.0
      %v2736 = vadd.f32 %v1846, 1.0
      %v2737 = vadd.f32 %v1886, 1.0
      %v2738 = vadd.f32 %v1926, 1.0
      %v2739 = vadd.f32 %v1966, 1.0
      %v2740 = vadd.f32 %v2006, 1.0
      %v2741 = vadd.f32 %v2046, 1.0
      %v2742 = vadd.f32 %v2086, 1.0
      %v2743 = vadd.f32 %v2126, 1.0
      %v2744 = vadd.f32 %v2166, 1.0
      %v2745 = vadd.f32 %v2206, 1.0
      %v2746 = vadd.f32 %v2246, 1.0
      %v2747 = vadd.f32 %v2286, 1.0
      %v2748 = vadd.f32 %v2326, 1.0
      %v2749 = vadd.f32 %v2366, 1.0
      %v2750 = vadd.f32 %v2406, 1.0
      %v2751 = vadd.f32 %v2446, 1.0
      %v2752 = vadd.f32 %v2486, 1.0
      %v2753 = vadd.f32 %v2526, 1.0
      %v2754 = vadd.f32 %v2566, 1.0
      %v2755 = vadd.f32 %v2606, 1.0
      %v2756 = vadd.f32 %v2646, 1.0
      %v2757 = vadd.f32 %v2686, 1.0
      %v2758 = vadd.f32 %v2726, 1.0
      %v2759 = vmul.f32 %v1383, %v2727
      %v2760 = vmul.f32 %v1384, %v2728
      %v2761 = vmul.f32 %v1385, %v2729
      %v2762 = vmul.f32 %v1386, %v2730
      %v2763 = vmul.f32 %v1387, %v2731
      %v2764 = vmul.f32 %v1388, %v2732
      %v2765 = vmul.f32 %v1389, %v2733
      %v2766 = vmul.f32 %v1390, %v2734
      %v2767 = vmul.f32 %v1391, %v2735
      %v2768 = vmul.f32 %v1392, %v2736
      %v2769 = vmul.f32 %v1393, %v2737
      %v2770 = vmul.f32 %v1394, %v2738
      %v2771 = vmul.f32 %v1395, %v2739
      %v2772 = vmul.f32 %v1396, %v2740
      %v2773 = vmul.f32 %v1397, %v2741
      %v2774 = vmul.f32 %v1398, %v2742
      %v2775 = vmul.f32 %v1399, %v2743
      %v2776 = vmul.f32 %v1400, %v2744
      %v2777 = vmul.f32 %v1401, %v2745
      %v2778 = vmul.f32 %v1402, %v2746
      %v2779 = vmul.f32 %v1403, %v2747
      %v2780 = vmul.f32 %v1404, %v2748
      %v2781 = vmul.f32 %v1405, %v2749
      %v2782 = vmul.f32 %v1406, %v2750
      %v2783 = vmul.f32 %v1407, %v2751
      %v2784 = vmul.f32 %v1408, %v2752
      %v2785 = vmul.f32 %v1409, %v2753
      %v2786 = vmul.f32 %v1410, %v2754
      %v2787 = vmul.f32 %v1411, %v2755
      %v2788 = vmul.f32 %v1412, %v2756
      %v2789 = vmul.f32 %v1413, %v2757
      %v2790 = vmul.f32 %v1414, %v2758
      %v2791 = vpack.c.bf16 %v2760, %v2759
      %v2792 = vpack.c.bf16 %v2762, %v2761
      %v2793 = vpack.c.bf16 %v2764, %v2763
      %v2794 = vpack.c.bf16 %v2766, %v2765
      %v2795 = vpack.c.bf16 %v2768, %v2767
      %v2796 = vpack.c.bf16 %v2770, %v2769
      %v2797 = vpack.c.bf16 %v2772, %v2771
      %v2798 = vpack.c.bf16 %v2774, %v2773
      %v2799 = vpack.c.bf16 %v2776, %v2775
      %v2800 = vpack.c.bf16 %v2778, %v2777
      %v2801 = vpack.c.bf16 %v2780, %v2779
      %v2802 = vpack.c.bf16 %v2782, %v2781
      %v2803 = vpack.c.bf16 %v2784, %v2783
      %v2804 = vpack.c.bf16 %v2786, %v2785
      %v2805 = vpack.c.bf16 %v2788, %v2787
      %v2806 = vpack.c.bf16 %v2790, %v2789
      %v2807 = vld [vmem:[%s3] sm:$0xf]
      %v2808 = vld [vmem:[%s3 + $0x4] sm:$0xf]
      %v2809 = vld [vmem:[%s3 + $0x8] sm:$0xf]
      %v2810 = vld [vmem:[%s3 + $0xc] sm:$0xf]
      %v2811 = vld [vmem:[%s3 + $0x10] sm:$0xf]
      %v2812 = vld [vmem:[%s3 + $0x14] sm:$0xf]
      %v2813 = vld [vmem:[%s3 + $0x18] sm:$0xf]
      %v2814 = vld [vmem:[%s3 + $0x1c] sm:$0xf]
      %v2815 = vld [vmem:[%s3 + $0x20] sm:$0xf]
      %v2816 = vld [vmem:[%s3 + $0x24] sm:$0xf]
      %v2817 = vld [vmem:[%s3 + $0x28] sm:$0xf]
      %v2818 = vld [vmem:[%s3 + $0x2c] sm:$0xf]
      %v2819 = vld [vmem:[%s3 + $0x30] sm:$0xf]
      %v2820 = vld [vmem:[%s3 + $0x34] sm:$0xf]
      %v2821 = vld [vmem:[%s3 + $0x38] sm:$0xf]
      %v2822 = vld [vmem:[%s3 + $0x3c] sm:$0xf]
      %v2823 = vperm.slane %v231, 3
      %v2840 = vunpack.c.l.b16 %v2807
      %v2841 = vunpack.c.l.b16 %v2808
      %v2842 = vunpack.c.l.b16 %v2809
      %v2843 = vunpack.c.l.b16 %v2810
      %v2844 = vunpack.c.l.b16 %v2811
      %v2845 = vunpack.c.l.b16 %v2812
      %v2846 = vunpack.c.l.b16 %v2813
      %v2847 = vunpack.c.l.b16 %v2814
      %v2848 = vunpack.c.l.b16 %v2815
      %v2849 = vunpack.c.l.b16 %v2816
      %v2850 = vunpack.c.l.b16 %v2817
      %v2851 = vunpack.c.l.b16 %v2818
      %v2852 = vunpack.c.l.b16 %v2819
      %v2853 = vunpack.c.l.b16 %v2820
      %v2854 = vunpack.c.l.b16 %v2821
      %v2855 = vunpack.c.l.b16 %v2822
      %v2856 = vpack.c.b16 %v2841, %v2840
      %v2857 = vpack.c.b16 %v2843, %v2842
      %v2858 = vpack.c.b16 %v2845, %v2844
      %v2859 = vpack.c.b16 %v2847, %v2846
      %v2860 = vpack.c.b16 %v2849, %v2848
      %v2861 = vpack.c.b16 %v2851, %v2850
      %v2862 = vpack.c.b16 %v2853, %v2852
      %v2863 = vpack.c.b16 %v2855, %v2854
      %2872 = vmatpush.bf16.msra.mxu0 %v2863
      %2873 = vmatpush.bf16.msra.mxu0 %v2862
      %2874 = vmatpush.bf16.msra.mxu0 %v2861
      %2875 = vmatpush.bf16.msra.mxu0 %v2860
      %2876 = vmatpush.bf16.msra.mxu0 %v2859
      %2877 = vmatpush.bf16.msra.mxu0 %v2858
      %2878 = vmatpush.bf16.msra.mxu0 %v2857
      %2879 = vmatpush.bf16.msra.mxu0 %v2856
      %2880 = vmatmul.bf16.gmra.mxu0 %v2791
      %v2881 = vpop.f32.mrf.mxu0
      %v2882 = vadd.f32 %v2823, %v2881
      %v2883 = vpop.f32.mrf.mxu0
      %v2884 = vadd.f32 %v2823, %v2883
      %2885 = vmatmul.bf16.gmra.mxu0 %v2792
      %v2886 = vpop.f32.mrf.mxu0
      %v2887 = vadd.f32 %v2823, %v2886
      %v2888 = vpop.f32.mrf.mxu0
      %v2889 = vadd.f32 %v2823, %v2888
      %2890 = vmatmul.bf16.gmra.mxu0 %v2793
      %v2891 = vpop.f32.mrf.mxu0
      %v2892 = vadd.f32 %v2823, %v2891
      %v2893 = vpop.f32.mrf.mxu0
      %v2894 = vadd.f32 %v2823, %v2893
      %2895 = vmatmul.bf16.gmra.mxu0 %v2794
      %v2896 = vpop.f32.mrf.mxu0
      %v2897 = vadd.f32 %v2823, %v2896
      %v2898 = vpop.f32.mrf.mxu0
      %v2899 = vadd.f32 %v2823, %v2898
      %2900 = vmatmul.bf16.gmra.mxu0 %v2795
      %v2901 = vpop.f32.mrf.mxu0
      %v2902 = vadd.f32 %v2823, %v2901
      %v2903 = vpop.f32.mrf.mxu0
      %v2904 = vadd.f32 %v2823, %v2903
      %2905 = vmatmul.bf16.gmra.mxu0 %v2796
      %v2906 = vpop.f32.mrf.mxu0
      %v2907 = vadd.f32 %v2823, %v2906
      %v2908 = vpop.f32.mrf.mxu0
      %v2909 = vadd.f32 %v2823, %v2908
      %2910 = vmatmul.bf16.gmra.mxu0 %v2797
      %v2911 = vpop.f32.mrf.mxu0
      %v2912 = vadd.f32 %v2823, %v2911
      %v2913 = vpop.f32.mrf.mxu0
      %v2914 = vadd.f32 %v2823, %v2913
      %2915 = vmatmul.bf16.gmra.mxu0 %v2798
      %v2916 = vpop.f32.mrf.mxu0
      %v2917 = vadd.f32 %v2823, %v2916
      %v2918 = vpop.f32.mrf.mxu0
      %v2919 = vadd.f32 %v2823, %v2918
      %2920 = vmatmul.bf16.gmra.mxu0 %v2799
      %v2921 = vpop.f32.mrf.mxu0
      %v2922 = vadd.f32 %v2823, %v2921
      %v2923 = vpop.f32.mrf.mxu0
      %v2924 = vadd.f32 %v2823, %v2923
      %2925 = vmatmul.bf16.gmra.mxu0 %v2800
      %v2926 = vpop.f32.mrf.mxu0
      %v2927 = vadd.f32 %v2823, %v2926
      %v2928 = vpop.f32.mrf.mxu0
      %v2929 = vadd.f32 %v2823, %v2928
      %2930 = vmatmul.bf16.gmra.mxu0 %v2801
      %v2931 = vpop.f32.mrf.mxu0
      %v2932 = vadd.f32 %v2823, %v2931
      %v2933 = vpop.f32.mrf.mxu0
      %v2934 = vadd.f32 %v2823, %v2933
      %2935 = vmatmul.bf16.gmra.mxu0 %v2802
      %v2936 = vpop.f32.mrf.mxu0
      %v2937 = vadd.f32 %v2823, %v2936
      %v2938 = vpop.f32.mrf.mxu0
      %v2939 = vadd.f32 %v2823, %v2938
      %2940 = vmatmul.bf16.gmra.mxu0 %v2803
      %v2941 = vpop.f32.mrf.mxu0
      %v2942 = vadd.f32 %v2823, %v2941
      %v2943 = vpop.f32.mrf.mxu0
      %v2944 = vadd.f32 %v2823, %v2943
      %2945 = vmatmul.bf16.gmra.mxu0 %v2804
      %v2946 = vpop.f32.mrf.mxu0
      %v2947 = vadd.f32 %v2823, %v2946
      %v2948 = vpop.f32.mrf.mxu0
      %v2949 = vadd.f32 %v2823, %v2948
      %2950 = vmatmul.bf16.gmra.mxu0 %v2805
      %v2951 = vpop.f32.mrf.mxu0
      %v2952 = vadd.f32 %v2823, %v2951
      %v2953 = vpop.f32.mrf.mxu0
      %v2954 = vadd.f32 %v2823, %v2953
      %2955 = vmatmul.bf16.gmra.mxu0 %v2806
      %v2956 = vpop.f32.mrf.mxu0
      %v2957 = vadd.f32 %v2823, %v2956
      %v2958 = vpop.f32.mrf.mxu0
      %v2959 = vadd.f32 %v2823, %v2958
      %2960 = vdwg.mxu0
      %v2961 = vpack.c.bf16 %v2884, %v2882
      %v2962 = vpack.c.bf16 %v2889, %v2887
      %v2963 = vpack.c.bf16 %v2894, %v2892
      %v2964 = vpack.c.bf16 %v2899, %v2897
      %v2965 = vpack.c.bf16 %v2904, %v2902
      %v2966 = vpack.c.bf16 %v2909, %v2907
      %v2967 = vpack.c.bf16 %v2914, %v2912
      %v2968 = vpack.c.bf16 %v2919, %v2917
      %v2969 = vpack.c.bf16 %v2924, %v2922
      %v2970 = vpack.c.bf16 %v2929, %v2927
      %v2971 = vpack.c.bf16 %v2934, %v2932
      %v2972 = vpack.c.bf16 %v2939, %v2937
      %v2973 = vpack.c.bf16 %v2944, %v2942
      %v2974 = vpack.c.bf16 %v2949, %v2947
      %v2975 = vpack.c.bf16 %v2954, %v2952
      %v2976 = vpack.c.bf16 %v2959, %v2957
      %2977 = vmatpush.bf16.msra.mxu0 %v570
      %2978 = vmatpush.bf16.msra.mxu0 %v569
      %2979 = vmatpush.bf16.msra.mxu0 %v568
      %2980 = vmatpush.bf16.msra.mxu0 %v567
      %2981 = vmatpush.bf16.msra.mxu0 %v566
      %2982 = vmatpush.bf16.msra.mxu0 %v565
      %2983 = vmatpush.bf16.msra.mxu0 %v564
      %2984 = vmatpush.bf16.msra.mxu0 %v563
      %2985 = vmatmul.bf16.gmra.mxu0 %v2961
      %v2986 = vpop.f32.mrf.mxu0
      %v2987 = vadd.f32 0.0, %v2986
      %v2988 = vpop.f32.mrf.mxu0
      %v2989 = vadd.f32 0.0, %v2988
      %2990 = vmatmul.bf16.gmra.mxu0 %v2962
      %v2991 = vpop.f32.mrf.mxu0
      %v2992 = vadd.f32 0.0, %v2991
      %v2993 = vpop.f32.mrf.mxu0
      %v2994 = vadd.f32 0.0, %v2993
      %2995 = vmatmul.bf16.gmra.mxu0 %v2963
      %v2996 = vpop.f32.mrf.mxu0
      %v2997 = vadd.f32 0.0, %v2996
      %v2998 = vpop.f32.mrf.mxu0
      %v2999 = vadd.f32 0.0, %v2998
      %3000 = vmatmul.bf16.gmra.mxu0 %v2964
      %v3001 = vpop.f32.mrf.mxu0
      %v3002 = vadd.f32 0.0, %v3001
      %v3003 = vpop.f32.mrf.mxu0
      %v3004 = vadd.f32 0.0, %v3003
      %3005 = vmatmul.bf16.gmra.mxu0 %v2965
      %v3006 = vpop.f32.mrf.mxu0
      %v3007 = vadd.f32 0.0, %v3006
      %v3008 = vpop.f32.mrf.mxu0
      %v3009 = vadd.f32 0.0, %v3008
      %3010 = vmatmul.bf16.gmra.mxu0 %v2966
      %v3011 = vpop.f32.mrf.mxu0
      %v3012 = vadd.f32 0.0, %v3011
      %v3013 = vpop.f32.mrf.mxu0
      %v3014 = vadd.f32 0.0, %v3013
      %3015 = vmatmul.bf16.gmra.mxu0 %v2967
      %v3016 = vpop.f32.mrf.mxu0
      %v3017 = vadd.f32 0.0, %v3016
      %v3018 = vpop.f32.mrf.mxu0
      %v3019 = vadd.f32 0.0, %v3018
      %3020 = vmatmul.bf16.gmra.mxu0 %v2968
      %v3021 = vpop.f32.mrf.mxu0
      %v3022 = vadd.f32 0.0, %v3021
      %v3023 = vpop.f32.mrf.mxu0
      %v3024 = vadd.f32 0.0, %v3023
      %3025 = vmatmul.bf16.gmra.mxu0 %v2969
      %v3026 = vpop.f32.mrf.mxu0
      %v3027 = vadd.f32 0.0, %v3026
      %v3028 = vpop.f32.mrf.mxu0
      %v3029 = vadd.f32 0.0, %v3028
      %3030 = vmatmul.bf16.gmra.mxu0 %v2970
      %v3031 = vpop.f32.mrf.mxu0
      %v3032 = vadd.f32 0.0, %v3031
      %v3033 = vpop.f32.mrf.mxu0
      %v3034 = vadd.f32 0.0, %v3033
      %3035 = vmatmul.bf16.gmra.mxu0 %v2971
      %v3036 = vpop.f32.mrf.mxu0
      %v3037 = vadd.f32 0.0, %v3036
      %v3038 = vpop.f32.mrf.mxu0
      %v3039 = vadd.f32 0.0, %v3038
      %3040 = vmatmul.bf16.gmra.mxu0 %v2972
      %v3041 = vpop.f32.mrf.mxu0
      %v3042 = vadd.f32 0.0, %v3041
      %v3043 = vpop.f32.mrf.mxu0
      %v3044 = vadd.f32 0.0, %v3043
      %3045 = vmatmul.bf16.gmra.mxu0 %v2973
      %v3046 = vpop.f32.mrf.mxu0
      %v3047 = vadd.f32 0.0, %v3046
      %v3048 = vpop.f32.mrf.mxu0
      %v3049 = vadd.f32 0.0, %v3048
      %3050 = vmatmul.bf16.gmra.mxu0 %v2974
      %v3051 = vpop.f32.mrf.mxu0
      %v3052 = vadd.f32 0.0, %v3051
      %v3053 = vpop.f32.mrf.mxu0
      %v3054 = vadd.f32 0.0, %v3053
      %3055 = vmatmul.bf16.gmra.mxu0 %v2975
      %v3056 = vpop.f32.mrf.mxu0
      %v3057 = vadd.f32 0.0, %v3056
      %v3058 = vpop.f32.mrf.mxu0
      %v3059 = vadd.f32 0.0, %v3058
      %3060 = vmatmul.bf16.gmra.mxu0 %v2976
      %v3061 = vpop.f32.mrf.mxu0
      %v3062 = vadd.f32 0.0, %v3061
      %v3063 = vpop.f32.mrf.mxu0
      %v3064 = vadd.f32 0.0, %v3063
      %3065 = vdwg.mxu0
      %v3066 = vmul.f32 %v2882, %v2882
      %v3067 = vmul.f32 %v2884, %v2884
      %v3068 = vmul.f32 %v2887, %v2887
      %v3069 = vmul.f32 %v2889, %v2889
      %v3070 = vmul.f32 %v2892, %v2892
      %v3071 = vmul.f32 %v2894, %v2894
      %v3072 = vmul.f32 %v2897, %v2897
      %v3073 = vmul.f32 %v2899, %v2899
      %v3074 = vmul.f32 %v2902, %v2902
      %v3075 = vmul.f32 %v2904, %v2904
      %v3076 = vmul.f32 %v2907, %v2907
      %v3077 = vmul.f32 %v2909, %v2909
      %v3078 = vmul.f32 %v2912, %v2912
      %v3079 = vmul.f32 %v2914, %v2914
      %v3080 = vmul.f32 %v2917, %v2917
      %v3081 = vmul.f32 %v2919, %v2919
      %v3082 = vmul.f32 %v2922, %v2922
      %v3083 = vmul.f32 %v2924, %v2924
      %v3084 = vmul.f32 %v2927, %v2927
      %v3085 = vmul.f32 %v2929, %v2929
      %v3086 = vmul.f32 %v2932, %v2932
      %v3087 = vmul.f32 %v2934, %v2934
      %v3088 = vmul.f32 %v2937, %v2937
      %v3089 = vmul.f32 %v2939, %v2939
      %v3090 = vmul.f32 %v2942, %v2942
      %v3091 = vmul.f32 %v2944, %v2944
      %v3092 = vmul.f32 %v2947, %v2947
      %v3093 = vmul.f32 %v2949, %v2949
      %v3094 = vmul.f32 %v2952, %v2952
      %v3095 = vmul.f32 %v2954, %v2954
      %v3096 = vmul.f32 %v2957, %v2957
      %v3097 = vmul.f32 %v2959, %v2959
      %v3098 = vpack.c.bf16 %v3067, %v3066
      %v3099 = vpack.c.bf16 %v3069, %v3068
      %v3100 = vpack.c.bf16 %v3071, %v3070
      %v3101 = vpack.c.bf16 %v3073, %v3072
      %v3102 = vpack.c.bf16 %v3075, %v3074
      %v3103 = vpack.c.bf16 %v3077, %v3076
      %v3104 = vpack.c.bf16 %v3079, %v3078
      %v3105 = vpack.c.bf16 %v3081, %v3080
      %v3106 = vpack.c.bf16 %v3083, %v3082
      %v3107 = vpack.c.bf16 %v3085, %v3084
      %v3108 = vpack.c.bf16 %v3087, %v3086
      %v3109 = vpack.c.bf16 %v3089, %v3088
      %v3110 = vpack.c.bf16 %v3091, %v3090
      %v3111 = vpack.c.bf16 %v3093, %v3092
      %v3112 = vpack.c.bf16 %v3095, %v3094
      %v3113 = vpack.c.bf16 %v3097, %v3096
      %3114 = vmatpush.bf16.msra.mxu0 %v570
      %3115 = vmatpush.bf16.msra.mxu0 %v569
      %3116 = vmatpush.bf16.msra.mxu0 %v568
      %3117 = vmatpush.bf16.msra.mxu0 %v567
      %3118 = vmatpush.bf16.msra.mxu0 %v566
      %3119 = vmatpush.bf16.msra.mxu0 %v565
      %3120 = vmatpush.bf16.msra.mxu0 %v564
      %3121 = vmatpush.bf16.msra.mxu0 %v563
      %3122 = vmatmul.bf16.gmra.mxu0 %v3098
      %v3123 = vpop.f32.mrf.mxu0
      %v3124 = vadd.f32 0.0, %v3123
      %v3125 = vpop.f32.mrf.mxu0
      %v3126 = vadd.f32 0.0, %v3125
      %3127 = vmatmul.bf16.gmra.mxu0 %v3099
      %v3128 = vpop.f32.mrf.mxu0
      %v3129 = vadd.f32 0.0, %v3128
      %v3130 = vpop.f32.mrf.mxu0
      %v3131 = vadd.f32 0.0, %v3130
      %3132 = vmatmul.bf16.gmra.mxu0 %v3100
      %v3133 = vpop.f32.mrf.mxu0
      %v3134 = vadd.f32 0.0, %v3133
      %v3135 = vpop.f32.mrf.mxu0
      %v3136 = vadd.f32 0.0, %v3135
      %3137 = vmatmul.bf16.gmra.mxu0 %v3101
      %v3138 = vpop.f32.mrf.mxu0
      %v3139 = vadd.f32 0.0, %v3138
      %v3140 = vpop.f32.mrf.mxu0
      %v3141 = vadd.f32 0.0, %v3140
      %3142 = vmatmul.bf16.gmra.mxu0 %v3102
      %v3143 = vpop.f32.mrf.mxu0
      %v3144 = vadd.f32 0.0, %v3143
      %v3145 = vpop.f32.mrf.mxu0
      %v3146 = vadd.f32 0.0, %v3145
      %3147 = vmatmul.bf16.gmra.mxu0 %v3103
      %v3148 = vpop.f32.mrf.mxu0
      %v3149 = vadd.f32 0.0, %v3148
      %v3150 = vpop.f32.mrf.mxu0
      %v3151 = vadd.f32 0.0, %v3150
      %3152 = vmatmul.bf16.gmra.mxu0 %v3104
      %v3153 = vpop.f32.mrf.mxu0
      %v3154 = vadd.f32 0.0, %v3153
      %v3155 = vpop.f32.mrf.mxu0
      %v3156 = vadd.f32 0.0, %v3155
      %3157 = vmatmul.bf16.gmra.mxu0 %v3105
      %v3158 = vpop.f32.mrf.mxu0
      %v3159 = vadd.f32 0.0, %v3158
      %v3160 = vpop.f32.mrf.mxu0
      %v3161 = vadd.f32 0.0, %v3160
      %3162 = vmatmul.bf16.gmra.mxu0 %v3106
      %v3163 = vpop.f32.mrf.mxu0
      %v3164 = vadd.f32 0.0, %v3163
      %v3165 = vpop.f32.mrf.mxu0
      %v3166 = vadd.f32 0.0, %v3165
      %3167 = vmatmul.bf16.gmra.mxu0 %v3107
      %v3168 = vpop.f32.mrf.mxu0
      %v3169 = vadd.f32 0.0, %v3168
      %v3170 = vpop.f32.mrf.mxu0
      %v3171 = vadd.f32 0.0, %v3170
      %3172 = vmatmul.bf16.gmra.mxu0 %v3108
      %v3173 = vpop.f32.mrf.mxu0
      %v3174 = vadd.f32 0.0, %v3173
      %v3175 = vpop.f32.mrf.mxu0
      %v3176 = vadd.f32 0.0, %v3175
      %3177 = vmatmul.bf16.gmra.mxu0 %v3109
      %v3178 = vpop.f32.mrf.mxu0
      %v3179 = vadd.f32 0.0, %v3178
      %v3180 = vpop.f32.mrf.mxu0
      %v3181 = vadd.f32 0.0, %v3180
      %3182 = vmatmul.bf16.gmra.mxu0 %v3110
      %v3183 = vpop.f32.mrf.mxu0
      %v3184 = vadd.f32 0.0, %v3183
      %v3185 = vpop.f32.mrf.mxu0
      %v3186 = vadd.f32 0.0, %v3185
      %3187 = vmatmul.bf16.gmra.mxu0 %v3111
      %v3188 = vpop.f32.mrf.mxu0
      %v3189 = vadd.f32 0.0, %v3188
      %v3190 = vpop.f32.mrf.mxu0
      %v3191 = vadd.f32 0.0, %v3190
      %3192 = vmatmul.bf16.gmra.mxu0 %v3112
      %v3193 = vpop.f32.mrf.mxu0
      %v3194 = vadd.f32 0.0, %v3193
      %v3195 = vpop.f32.mrf.mxu0
      %v3196 = vadd.f32 0.0, %v3195
      %3197 = vmatmul.bf16.gmra.mxu0 %v3113
      %v3198 = vpop.f32.mrf.mxu0
      %v3199 = vadd.f32 0.0, %v3198
      %v3200 = vpop.f32.mrf.mxu0
      %v3201 = vadd.f32 0.0, %v3200
      %3202 = vdwg.mxu0
      %v3203 = vmul.f32 %v2987, %v2987
      %v3204 = vmul.f32 %v2989, %v2989
      %v3205 = vmul.f32 %v2992, %v2992
      %v3206 = vmul.f32 %v2994, %v2994
      %v3207 = vmul.f32 %v2997, %v2997
      %v3208 = vmul.f32 %v2999, %v2999
      %v3209 = vmul.f32 %v3002, %v3002
      %v3210 = vmul.f32 %v3004, %v3004
      %v3211 = vmul.f32 %v3007, %v3007
      %v3212 = vmul.f32 %v3009, %v3009
      %v3213 = vmul.f32 %v3012, %v3012
      %v3214 = vmul.f32 %v3014, %v3014
      %v3215 = vmul.f32 %v3017, %v3017
      %v3216 = vmul.f32 %v3019, %v3019
      %v3217 = vmul.f32 %v3022, %v3022
      %v3218 = vmul.f32 %v3024, %v3024
      %v3219 = vmul.f32 %v3027, %v3027
      %v3220 = vmul.f32 %v3029, %v3029
      %v3221 = vmul.f32 %v3032, %v3032
      %v3222 = vmul.f32 %v3034, %v3034
      %v3223 = vmul.f32 %v3037, %v3037
      %v3224 = vmul.f32 %v3039, %v3039
      %v3225 = vmul.f32 %v3042, %v3042
      %v3226 = vmul.f32 %v3044, %v3044
      %v3227 = vmul.f32 %v3047, %v3047
      %v3228 = vmul.f32 %v3049, %v3049
      %v3229 = vmul.f32 %v3052, %v3052
      %v3230 = vmul.f32 %v3054, %v3054
      %v3231 = vmul.f32 %v3057, %v3057
      %v3232 = vmul.f32 %v3059, %v3059
      %v3233 = vmul.f32 %v3062, %v3062
      %v3234 = vmul.f32 %v3064, %v3064
      %v3235 = vsub.f32 %v3124, %v3203
      %v3236 = vsub.f32 %v3126, %v3204
      %v3237 = vsub.f32 %v3129, %v3205
      %v3238 = vsub.f32 %v3131, %v3206
      %v3239 = vsub.f32 %v3134, %v3207
      %v3240 = vsub.f32 %v3136, %v3208
      %v3241 = vsub.f32 %v3139, %v3209
      %v3242 = vsub.f32 %v3141, %v3210
      %v3243 = vsub.f32 %v3144, %v3211
      %v3244 = vsub.f32 %v3146, %v3212
      %v3245 = vsub.f32 %v3149, %v3213
      %v3246 = vsub.f32 %v3151, %v3214
      %v3247 = vsub.f32 %v3154, %v3215
      %v3248 = vsub.f32 %v3156, %v3216
      %v3249 = vsub.f32 %v3159, %v3217
      %v3250 = vsub.f32 %v3161, %v3218
      %v3251 = vsub.f32 %v3164, %v3219
      %v3252 = vsub.f32 %v3166, %v3220
      %v3253 = vsub.f32 %v3169, %v3221
      %v3254 = vsub.f32 %v3171, %v3222
      %v3255 = vsub.f32 %v3174, %v3223
      %v3256 = vsub.f32 %v3176, %v3224
      %v3257 = vsub.f32 %v3179, %v3225
      %v3258 = vsub.f32 %v3181, %v3226
      %v3259 = vsub.f32 %v3184, %v3227
      %v3260 = vsub.f32 %v3186, %v3228
      %v3261 = vsub.f32 %v3189, %v3229
      %v3262 = vsub.f32 %v3191, %v3230
      %v3263 = vsub.f32 %v3194, %v3231
      %v3264 = vsub.f32 %v3196, %v3232
      %v3265 = vsub.f32 %v3199, %v3233
      %v3266 = vsub.f32 %v3201, %v3234
      %v3267 = vmax.f32 %v3235, 0.0
      %v3268 = vmax.f32 %v3236, 0.0
      %v3269 = vmax.f32 %v3237, 0.0
      %v3270 = vmax.f32 %v3238, 0.0
      %v3271 = vmax.f32 %v3239, 0.0
      %v3272 = vmax.f32 %v3240, 0.0
      %v3273 = vmax.f32 %v3241, 0.0
      %v3274 = vmax.f32 %v3242, 0.0
      %v3275 = vmax.f32 %v3243, 0.0
      %v3276 = vmax.f32 %v3244, 0.0
      %v3277 = vmax.f32 %v3245, 0.0
      %v3278 = vmax.f32 %v3246, 0.0
      %v3279 = vmax.f32 %v3247, 0.0
      %v3280 = vmax.f32 %v3248, 0.0
      %v3281 = vmax.f32 %v3249, 0.0
      %v3282 = vmax.f32 %v3250, 0.0
      %v3283 = vmax.f32 %v3251, 0.0
      %v3284 = vmax.f32 %v3252, 0.0
      %v3285 = vmax.f32 %v3253, 0.0
      %v3286 = vmax.f32 %v3254, 0.0
      %v3287 = vmax.f32 %v3255, 0.0
      %v3288 = vmax.f32 %v3256, 0.0
      %v3289 = vmax.f32 %v3257, 0.0
      %v3290 = vmax.f32 %v3258, 0.0
      %v3291 = vmax.f32 %v3259, 0.0
      %v3292 = vmax.f32 %v3260, 0.0
      %v3293 = vmax.f32 %v3261, 0.0
      %v3294 = vmax.f32 %v3262, 0.0
      %v3295 = vmax.f32 %v3263, 0.0
      %v3296 = vmax.f32 %v3264, 0.0
      %v3297 = vmax.f32 %v3265, 0.0
      %v3298 = vmax.f32 %v3266, 0.0
      %v3299 = vsub.f32 %v2882, %v2987
      %v3300 = vsub.f32 %v2884, %v2989
      %v3301 = vsub.f32 %v2887, %v2992
      %v3302 = vsub.f32 %v2889, %v2994
      %v3303 = vsub.f32 %v2892, %v2997
      %v3304 = vsub.f32 %v2894, %v2999
      %v3305 = vsub.f32 %v2897, %v3002
      %v3306 = vsub.f32 %v2899, %v3004
      %v3307 = vsub.f32 %v2902, %v3007
      %v3308 = vsub.f32 %v2904, %v3009
      %v3309 = vsub.f32 %v2907, %v3012
      %v3310 = vsub.f32 %v2909, %v3014
      %v3311 = vsub.f32 %v2912, %v3017
      %v3312 = vsub.f32 %v2914, %v3019
      %v3313 = vsub.f32 %v2917, %v3022
      %v3314 = vsub.f32 %v2919, %v3024
      %v3315 = vsub.f32 %v2922, %v3027
      %v3316 = vsub.f32 %v2924, %v3029
      %v3317 = vsub.f32 %v2927, %v3032
      %v3318 = vsub.f32 %v2929, %v3034
      %v3319 = vsub.f32 %v2932, %v3037
      %v3320 = vsub.f32 %v2934, %v3039
      %v3321 = vsub.f32 %v2937, %v3042
      %v3322 = vsub.f32 %v2939, %v3044
      %v3323 = vsub.f32 %v2942, %v3047
      %v3324 = vsub.f32 %v2944, %v3049
      %v3325 = vsub.f32 %v2947, %v3052
      %v3326 = vsub.f32 %v2949, %v3054
      %v3327 = vsub.f32 %v2952, %v3057
      %v3328 = vsub.f32 %v2954, %v3059
      %v3329 = vsub.f32 %v2957, %v3062
      %v3330 = vsub.f32 %v2959, %v3064
      %v3331 = vadd.f32 %v3267, 1e-06
      %v3332 = vadd.f32 %v3268, 1e-06
      %v3333 = vadd.f32 %v3269, 1e-06
      %v3334 = vadd.f32 %v3270, 1e-06
      %v3335 = vadd.f32 %v3271, 1e-06
      %v3336 = vadd.f32 %v3272, 1e-06
      %v3337 = vadd.f32 %v3273, 1e-06
      %v3338 = vadd.f32 %v3274, 1e-06
      %v3339 = vadd.f32 %v3275, 1e-06
      %v3340 = vadd.f32 %v3276, 1e-06
      %v3341 = vadd.f32 %v3277, 1e-06
      %v3342 = vadd.f32 %v3278, 1e-06
      %v3343 = vadd.f32 %v3279, 1e-06
      %v3344 = vadd.f32 %v3280, 1e-06
      %v3345 = vadd.f32 %v3281, 1e-06
      %v3346 = vadd.f32 %v3282, 1e-06
      %v3347 = vadd.f32 %v3283, 1e-06
      %v3348 = vadd.f32 %v3284, 1e-06
      %v3349 = vadd.f32 %v3285, 1e-06
      %v3350 = vadd.f32 %v3286, 1e-06
      %v3351 = vadd.f32 %v3287, 1e-06
      %v3352 = vadd.f32 %v3288, 1e-06
      %v3353 = vadd.f32 %v3289, 1e-06
      %v3354 = vadd.f32 %v3290, 1e-06
      %v3355 = vadd.f32 %v3291, 1e-06
      %v3356 = vadd.f32 %v3292, 1e-06
      %v3357 = vadd.f32 %v3293, 1e-06
      %v3358 = vadd.f32 %v3294, 1e-06
      %v3359 = vadd.f32 %v3295, 1e-06
      %v3360 = vadd.f32 %v3296, 1e-06
      %v3361 = vadd.f32 %v3297, 1e-06
      %v3362 = vadd.f32 %v3298, 1e-06
      %v3363 = vrsqrt.pop %v3331
      %v3364 = vmul.f32 %v3363, %v3331
      %v3365 = vmul.f32 %v3364, %v3363
      %v3366 = vmul.f32 0.5, %v3365
      %v3367 = vsub.f32 1.5, %v3366
      %v3368 = vmul.f32 %v3363, %v3367
      %vm3369 = vweird.f32 %v3331
      %vm3370 = vweird.f32 %v3363
      %vm3371 = vmor %vm3369, %vm3370
      %v3372 = vsel %vm3371, %v3363, %v3368
      %v3373 = vrsqrt.pop %v3332
      %v3374 = vmul.f32 %v3373, %v3332
      %v3375 = vmul.f32 %v3374, %v3373
      %v3376 = vmul.f32 0.5, %v3375
      %v3377 = vsub.f32 1.5, %v3376
      %v3378 = vmul.f32 %v3373, %v3377
      %vm3379 = vweird.f32 %v3332
      %vm3380 = vweird.f32 %v3373
      %vm3381 = vmor %vm3379, %vm3380
      %v3382 = vsel %vm3381, %v3373, %v3378
      %v3383 = vrsqrt.pop %v3333
      %v3384 = vmul.f32 %v3383, %v3333
      %v3385 = vmul.f32 %v3384, %v3383
      %v3386 = vmul.f32 0.5, %v3385
      %v3387 = vsub.f32 1.5, %v3386
      %v3388 = vmul.f32 %v3383, %v3387
      %vm3389 = vweird.f32 %v3333
      %vm3390 = vweird.f32 %v3383
      %vm3391 = vmor %vm3389, %vm3390
      %v3392 = vsel %vm3391, %v3383, %v3388
      %v3393 = vrsqrt.pop %v3334
      %v3394 = vmul.f32 %v3393, %v3334
      %v3395 = vmul.f32 %v3394, %v3393
      %v3396 = vmul.f32 0.5, %v3395
      %v3397 = vsub.f32 1.5, %v3396
      %v3398 = vmul.f32 %v3393, %v3397
      %vm3399 = vweird.f32 %v3334
      %vm3400 = vweird.f32 %v3393
      %vm3401 = vmor %vm3399, %vm3400
      %v3402 = vsel %vm3401, %v3393, %v3398
      %v3403 = vrsqrt.pop %v3335
      %v3404 = vmul.f32 %v3403, %v3335
      %v3405 = vmul.f32 %v3404, %v3403
      %v3406 = vmul.f32 0.5, %v3405
      %v3407 = vsub.f32 1.5, %v3406
      %v3408 = vmul.f32 %v3403, %v3407
      %vm3409 = vweird.f32 %v3335
      %vm3410 = vweird.f32 %v3403
      %vm3411 = vmor %vm3409, %vm3410
      %v3412 = vsel %vm3411, %v3403, %v3408
      %v3413 = vrsqrt.pop %v3336
      %v3414 = vmul.f32 %v3413, %v3336
      %v3415 = vmul.f32 %v3414, %v3413
      %v3416 = vmul.f32 0.5, %v3415
      %v3417 = vsub.f32 1.5, %v3416
      %v3418 = vmul.f32 %v3413, %v3417
      %vm3419 = vweird.f32 %v3336
      %vm3420 = vweird.f32 %v3413
      %vm3421 = vmor %vm3419, %vm3420
      %v3422 = vsel %vm3421, %v3413, %v3418
      %v3423 = vrsqrt.pop %v3337
      %v3424 = vmul.f32 %v3423, %v3337
      %v3425 = vmul.f32 %v3424, %v3423
      %v3426 = vmul.f32 0.5, %v3425
      %v3427 = vsub.f32 1.5, %v3426
      %v3428 = vmul.f32 %v3423, %v3427
      %vm3429 = vweird.f32 %v3337
      %vm3430 = vweird.f32 %v3423
      %vm3431 = vmor %vm3429, %vm3430
      %v3432 = vsel %vm3431, %v3423, %v3428
      %v3433 = vrsqrt.pop %v3338
      %v3434 = vmul.f32 %v3433, %v3338
      %v3435 = vmul.f32 %v3434, %v3433
      %v3436 = vmul.f32 0.5, %v3435
      %v3437 = vsub.f32 1.5, %v3436
      %v3438 = vmul.f32 %v3433, %v3437
      %vm3439 = vweird.f32 %v3338
      %vm3440 = vweird.f32 %v3433
      %vm3441 = vmor %vm3439, %vm3440
      %v3442 = vsel %vm3441, %v3433, %v3438
      %v3443 = vrsqrt.pop %v3339
      %v3444 = vmul.f32 %v3443, %v3339
      %v3445 = vmul.f32 %v3444, %v3443
      %v3446 = vmul.f32 0.5, %v3445
      %v3447 = vsub.f32 1.5, %v3446
      %v3448 = vmul.f32 %v3443, %v3447
      %vm3449 = vweird.f32 %v3339
      %vm3450 = vweird.f32 %v3443
      %vm3451 = vmor %vm3449, %vm3450
      %v3452 = vsel %vm3451, %v3443, %v3448
      %v3453 = vrsqrt.pop %v3340
      %v3454 = vmul.f32 %v3453, %v3340
      %v3455 = vmul.f32 %v3454, %v3453
      %v3456 = vmul.f32 0.5, %v3455
      %v3457 = vsub.f32 1.5, %v3456
      %v3458 = vmul.f32 %v3453, %v3457
      %vm3459 = vweird.f32 %v3340
      %vm3460 = vweird.f32 %v3453
      %vm3461 = vmor %vm3459, %vm3460
      %v3462 = vsel %vm3461, %v3453, %v3458
      %v3463 = vrsqrt.pop %v3341
      %v3464 = vmul.f32 %v3463, %v3341
      %v3465 = vmul.f32 %v3464, %v3463
      %v3466 = vmul.f32 0.5, %v3465
      %v3467 = vsub.f32 1.5, %v3466
      %v3468 = vmul.f32 %v3463, %v3467
      %vm3469 = vweird.f32 %v3341
      %vm3470 = vweird.f32 %v3463
      %vm3471 = vmor %vm3469, %vm3470
      %v3472 = vsel %vm3471, %v3463, %v3468
      %v3473 = vrsqrt.pop %v3342
      %v3474 = vmul.f32 %v3473, %v3342
      %v3475 = vmul.f32 %v3474, %v3473
      %v3476 = vmul.f32 0.5, %v3475
      %v3477 = vsub.f32 1.5, %v3476
      %v3478 = vmul.f32 %v3473, %v3477
      %vm3479 = vweird.f32 %v3342
      %vm3480 = vweird.f32 %v3473
      %vm3481 = vmor %vm3479, %vm3480
      %v3482 = vsel %vm3481, %v3473, %v3478
      %v3483 = vrsqrt.pop %v3343
      %v3484 = vmul.f32 %v3483, %v3343
      %v3485 = vmul.f32 %v3484, %v3483
      %v3486 = vmul.f32 0.5, %v3485
      %v3487 = vsub.f32 1.5, %v3486
      %v3488 = vmul.f32 %v3483, %v3487
      %vm3489 = vweird.f32 %v3343
      %vm3490 = vweird.f32 %v3483
      %vm3491 = vmor %vm3489, %vm3490
      %v3492 = vsel %vm3491, %v3483, %v3488
      %v3493 = vrsqrt.pop %v3344
      %v3494 = vmul.f32 %v3493, %v3344
      %v3495 = vmul.f32 %v3494, %v3493
      %v3496 = vmul.f32 0.5, %v3495
      %v3497 = vsub.f32 1.5, %v3496
      %v3498 = vmul.f32 %v3493, %v3497
      %vm3499 = vweird.f32 %v3344
      %vm3500 = vweird.f32 %v3493
      %vm3501 = vmor %vm3499, %vm3500
      %v3502 = vsel %vm3501, %v3493, %v3498
      %v3503 = vrsqrt.pop %v3345
      %v3504 = vmul.f32 %v3503, %v3345
      %v3505 = vmul.f32 %v3504, %v3503
      %v3506 = vmul.f32 0.5, %v3505
      %v3507 = vsub.f32 1.5, %v3506
      %v3508 = vmul.f32 %v3503, %v3507
      %vm3509 = vweird.f32 %v3345
      %vm3510 = vweird.f32 %v3503
      %vm3511 = vmor %vm3509, %vm3510
      %v3512 = vsel %vm3511, %v3503, %v3508
      %v3513 = vrsqrt.pop %v3346
      %v3514 = vmul.f32 %v3513, %v3346
      %v3515 = vmul.f32 %v3514, %v3513
      %v3516 = vmul.f32 0.5, %v3515
      %v3517 = vsub.f32 1.5, %v3516
      %v3518 = vmul.f32 %v3513, %v3517
      %vm3519 = vweird.f32 %v3346
      %vm3520 = vweird.f32 %v3513
      %vm3521 = vmor %vm3519, %vm3520
      %v3522 = vsel %vm3521, %v3513, %v3518
      %v3523 = vrsqrt.pop %v3347
      %v3524 = vmul.f32 %v3523, %v3347
      %v3525 = vmul.f32 %v3524, %v3523
      %v3526 = vmul.f32 0.5, %v3525
      %v3527 = vsub.f32 1.5, %v3526
      %v3528 = vmul.f32 %v3523, %v3527
      %vm3529 = vweird.f32 %v3347
      %vm3530 = vweird.f32 %v3523
      %vm3531 = vmor %vm3529, %vm3530
      %v3532 = vsel %vm3531, %v3523, %v3528
      %v3533 = vrsqrt.pop %v3348
      %v3534 = vmul.f32 %v3533, %v3348
      %v3535 = vmul.f32 %v3534, %v3533
      %v3536 = vmul.f32 0.5, %v3535
      %v3537 = vsub.f32 1.5, %v3536
      %v3538 = vmul.f32 %v3533, %v3537
      %vm3539 = vweird.f32 %v3348
      %vm3540 = vweird.f32 %v3533
      %vm3541 = vmor %vm3539, %vm3540
      %v3542 = vsel %vm3541, %v3533, %v3538
      %v3543 = vrsqrt.pop %v3349
      %v3544 = vmul.f32 %v3543, %v3349
      %v3545 = vmul.f32 %v3544, %v3543
      %v3546 = vmul.f32 0.5, %v3545
      %v3547 = vsub.f32 1.5, %v3546
      %v3548 = vmul.f32 %v3543, %v3547
      %vm3549 = vweird.f32 %v3349
      %vm3550 = vweird.f32 %v3543
      %vm3551 = vmor %vm3549, %vm3550
      %v3552 = vsel %vm3551, %v3543, %v3548
      %v3553 = vrsqrt.pop %v3350
      %v3554 = vmul.f32 %v3553, %v3350
      %v3555 = vmul.f32 %v3554, %v3553
      %v3556 = vmul.f32 0.5, %v3555
      %v3557 = vsub.f32 1.5, %v3556
      %v3558 = vmul.f32 %v3553, %v3557
      %vm3559 = vweird.f32 %v3350
      %vm3560 = vweird.f32 %v3553
      %vm3561 = vmor %vm3559, %vm3560
      %v3562 = vsel %vm3561, %v3553, %v3558
      %v3563 = vrsqrt.pop %v3351
      %v3564 = vmul.f32 %v3563, %v3351
      %v3565 = vmul.f32 %v3564, %v3563
      %v3566 = vmul.f32 0.5, %v3565
      %v3567 = vsub.f32 1.5, %v3566
      %v3568 = vmul.f32 %v3563, %v3567
      %vm3569 = vweird.f32 %v3351
      %vm3570 = vweird.f32 %v3563
      %vm3571 = vmor %vm3569, %vm3570
      %v3572 = vsel %vm3571, %v3563, %v3568
      %v3573 = vrsqrt.pop %v3352
      %v3574 = vmul.f32 %v3573, %v3352
      %v3575 = vmul.f32 %v3574, %v3573
      %v3576 = vmul.f32 0.5, %v3575
      %v3577 = vsub.f32 1.5, %v3576
      %v3578 = vmul.f32 %v3573, %v3577
      %vm3579 = vweird.f32 %v3352
      %vm3580 = vweird.f32 %v3573
      %vm3581 = vmor %vm3579, %vm3580
      %v3582 = vsel %vm3581, %v3573, %v3578
      %v3583 = vrsqrt.pop %v3353
      %v3584 = vmul.f32 %v3583, %v3353
      %v3585 = vmul.f32 %v3584, %v3583
      %v3586 = vmul.f32 0.5, %v3585
      %v3587 = vsub.f32 1.5, %v3586
      %v3588 = vmul.f32 %v3583, %v3587
      %vm3589 = vweird.f32 %v3353
      %vm3590 = vweird.f32 %v3583
      %vm3591 = vmor %vm3589, %vm3590
      %v3592 = vsel %vm3591, %v3583, %v3588
      %v3593 = vrsqrt.pop %v3354
      %v3594 = vmul.f32 %v3593, %v3354
      %v3595 = vmul.f32 %v3594, %v3593
      %v3596 = vmul.f32 0.5, %v3595
      %v3597 = vsub.f32 1.5, %v3596
      %v3598 = vmul.f32 %v3593, %v3597
      %vm3599 = vweird.f32 %v3354
      %vm3600 = vweird.f32 %v3593
      %vm3601 = vmor %vm3599, %vm3600
      %v3602 = vsel %vm3601, %v3593, %v3598
      %v3603 = vrsqrt.pop %v3355
      %v3604 = vmul.f32 %v3603, %v3355
      %v3605 = vmul.f32 %v3604, %v3603
      %v3606 = vmul.f32 0.5, %v3605
      %v3607 = vsub.f32 1.5, %v3606
      %v3608 = vmul.f32 %v3603, %v3607
      %vm3609 = vweird.f32 %v3355
      %vm3610 = vweird.f32 %v3603
      %vm3611 = vmor %vm3609, %vm3610
      %v3612 = vsel %vm3611, %v3603, %v3608
      %v3613 = vrsqrt.pop %v3356
      %v3614 = vmul.f32 %v3613, %v3356
      %v3615 = vmul.f32 %v3614, %v3613
      %v3616 = vmul.f32 0.5, %v3615
      %v3617 = vsub.f32 1.5, %v3616
      %v3618 = vmul.f32 %v3613, %v3617
      %vm3619 = vweird.f32 %v3356
      %vm3620 = vweird.f32 %v3613
      %vm3621 = vmor %vm3619, %vm3620
      %v3622 = vsel %vm3621, %v3613, %v3618
      %v3623 = vrsqrt.pop %v3357
      %v3624 = vmul.f32 %v3623, %v3357
      %v3625 = vmul.f32 %v3624, %v3623
      %v3626 = vmul.f32 0.5, %v3625
      %v3627 = vsub.f32 1.5, %v3626
      %v3628 = vmul.f32 %v3623, %v3627
      %vm3629 = vweird.f32 %v3357
      %vm3630 = vweird.f32 %v3623
      %vm3631 = vmor %vm3629, %vm3630
      %v3632 = vsel %vm3631, %v3623, %v3628
      %v3633 = vrsqrt.pop %v3358
      %v3634 = vmul.f32 %v3633, %v3358
      %v3635 = vmul.f32 %v3634, %v3633
      %v3636 = vmul.f32 0.5, %v3635
      %v3637 = vsub.f32 1.5, %v3636
      %v3638 = vmul.f32 %v3633, %v3637
      %vm3639 = vweird.f32 %v3358
      %vm3640 = vweird.f32 %v3633
      %vm3641 = vmor %vm3639, %vm3640
      %v3642 = vsel %vm3641, %v3633, %v3638
      %v3643 = vrsqrt.pop %v3359
      %v3644 = vmul.f32 %v3643, %v3359
      %v3645 = vmul.f32 %v3644, %v3643
      %v3646 = vmul.f32 0.5, %v3645
      %v3647 = vsub.f32 1.5, %v3646
      %v3648 = vmul.f32 %v3643, %v3647
      %vm3649 = vweird.f32 %v3359
      %vm3650 = vweird.f32 %v3643
      %vm3651 = vmor %vm3649, %vm3650
      %v3652 = vsel %vm3651, %v3643, %v3648
      %v3653 = vrsqrt.pop %v3360
      %v3654 = vmul.f32 %v3653, %v3360
      %v3655 = vmul.f32 %v3654, %v3653
      %v3656 = vmul.f32 0.5, %v3655
      %v3657 = vsub.f32 1.5, %v3656
      %v3658 = vmul.f32 %v3653, %v3657
      %vm3659 = vweird.f32 %v3360
      %vm3660 = vweird.f32 %v3653
      %vm3661 = vmor %vm3659, %vm3660
      %v3662 = vsel %vm3661, %v3653, %v3658
      %v3663 = vrsqrt.pop %v3361
      %v3664 = vmul.f32 %v3663, %v3361
      %v3665 = vmul.f32 %v3664, %v3663
      %v3666 = vmul.f32 0.5, %v3665
      %v3667 = vsub.f32 1.5, %v3666
      %v3668 = vmul.f32 %v3663, %v3667
      %vm3669 = vweird.f32 %v3361
      %vm3670 = vweird.f32 %v3663
      %vm3671 = vmor %vm3669, %vm3670
      %v3672 = vsel %vm3671, %v3663, %v3668
      %v3673 = vrsqrt.pop %v3362
      %v3674 = vmul.f32 %v3673, %v3362
      %v3675 = vmul.f32 %v3674, %v3673
      %v3676 = vmul.f32 0.5, %v3675
      %v3677 = vsub.f32 1.5, %v3676
      %v3678 = vmul.f32 %v3673, %v3677
      %vm3679 = vweird.f32 %v3362
      %vm3680 = vweird.f32 %v3673
      %vm3681 = vmor %vm3679, %vm3680
      %v3682 = vsel %vm3681, %v3673, %v3678
      %v3683 = vmul.f32 %v3299, %v3372
      %v3684 = vmul.f32 %v3300, %v3382
      %v3685 = vmul.f32 %v3301, %v3392
      %v3686 = vmul.f32 %v3302, %v3402
      %v3687 = vmul.f32 %v3303, %v3412
      %v3688 = vmul.f32 %v3304, %v3422
      %v3689 = vmul.f32 %v3305, %v3432
      %v3690 = vmul.f32 %v3306, %v3442
      %v3691 = vmul.f32 %v3307, %v3452
      %v3692 = vmul.f32 %v3308, %v3462
      %v3693 = vmul.f32 %v3309, %v3472
      %v3694 = vmul.f32 %v3310, %v3482
      %v3695 = vmul.f32 %v3311, %v3492
      %v3696 = vmul.f32 %v3312, %v3502
      %v3697 = vmul.f32 %v3313, %v3512
      %v3698 = vmul.f32 %v3314, %v3522
      %v3699 = vmul.f32 %v3315, %v3532
      %v3700 = vmul.f32 %v3316, %v3542
      %v3701 = vmul.f32 %v3317, %v3552
      %v3702 = vmul.f32 %v3318, %v3562
      %v3703 = vmul.f32 %v3319, %v3572
      %v3704 = vmul.f32 %v3320, %v3582
      %v3705 = vmul.f32 %v3321, %v3592
      %v3706 = vmul.f32 %v3322, %v3602
      %v3707 = vmul.f32 %v3323, %v3612
      %v3708 = vmul.f32 %v3324, %v3622
      %v3709 = vmul.f32 %v3325, %v3632
      %v3710 = vmul.f32 %v3326, %v3642
      %v3711 = vmul.f32 %v3327, %v3652
      %v3712 = vmul.f32 %v3328, %v3662
      %v3713 = vmul.f32 %v3329, %v3672
      %v3714 = vmul.f32 %v3330, %v3682
      %v3715 = vperm.slane %v231, 4
      %v3716 = vmul.f32 %v3683, %v3715
      %v3717 = vmul.f32 %v3684, %v3715
      %v3718 = vmul.f32 %v3685, %v3715
      %v3719 = vmul.f32 %v3686, %v3715
      %v3720 = vmul.f32 %v3687, %v3715
      %v3721 = vmul.f32 %v3688, %v3715
      %v3722 = vmul.f32 %v3689, %v3715
      %v3723 = vmul.f32 %v3690, %v3715
      %v3724 = vmul.f32 %v3691, %v3715
      %v3725 = vmul.f32 %v3692, %v3715
      %v3726 = vmul.f32 %v3693, %v3715
      %v3727 = vmul.f32 %v3694, %v3715
      %v3728 = vmul.f32 %v3695, %v3715
      %v3729 = vmul.f32 %v3696, %v3715
      %v3730 = vmul.f32 %v3697, %v3715
      %v3731 = vmul.f32 %v3698, %v3715
      %v3732 = vmul.f32 %v3699, %v3715
      %v3733 = vmul.f32 %v3700, %v3715
      %v3734 = vmul.f32 %v3701, %v3715
      %v3735 = vmul.f32 %v3702, %v3715
      %v3736 = vmul.f32 %v3703, %v3715
      %v3737 = vmul.f32 %v3704, %v3715
      %v3738 = vmul.f32 %v3705, %v3715
      %v3739 = vmul.f32 %v3706, %v3715
      %v3740 = vmul.f32 %v3707, %v3715
      %v3741 = vmul.f32 %v3708, %v3715
      %v3742 = vmul.f32 %v3709, %v3715
      %v3743 = vmul.f32 %v3710, %v3715
      %v3744 = vmul.f32 %v3711, %v3715
      %v3745 = vmul.f32 %v3712, %v3715
      %v3746 = vmul.f32 %v3713, %v3715
      %v3747 = vmul.f32 %v3714, %v3715
      %v3748 = vperm.slane %v231, 5
      %v3749 = vadd.f32 %v3716, %v3748
      %v3750 = vadd.f32 %v3717, %v3748
      %v3751 = vadd.f32 %v3718, %v3748
      %v3752 = vadd.f32 %v3719, %v3748
      %v3753 = vadd.f32 %v3720, %v3748
      %v3754 = vadd.f32 %v3721, %v3748
      %v3755 = vadd.f32 %v3722, %v3748
      %v3756 = vadd.f32 %v3723, %v3748
      %v3757 = vadd.f32 %v3724, %v3748
      %v3758 = vadd.f32 %v3725, %v3748
      %v3759 = vadd.f32 %v3726, %v3748
      %v3760 = vadd.f32 %v3727, %v3748
      %v3761 = vadd.f32 %v3728, %v3748
      %v3762 = vadd.f32 %v3729, %v3748
      %v3763 = vadd.f32 %v3730, %v3748
      %v3764 = vadd.f32 %v3731, %v3748
      %v3765 = vadd.f32 %v3732, %v3748
      %v3766 = vadd.f32 %v3733, %v3748
      %v3767 = vadd.f32 %v3734, %v3748
      %v3768 = vadd.f32 %v3735, %v3748
      %v3769 = vadd.f32 %v3736, %v3748
      %v3770 = vadd.f32 %v3737, %v3748
      %v3771 = vadd.f32 %v3738, %v3748
      %v3772 = vadd.f32 %v3739, %v3748
      %v3773 = vadd.f32 %v3740, %v3748
      %v3774 = vadd.f32 %v3741, %v3748
      %v3775 = vadd.f32 %v3742, %v3748
      %v3776 = vadd.f32 %v3743, %v3748
      %v3777 = vadd.f32 %v3744, %v3748
      %v3778 = vadd.f32 %v3745, %v3748
      %v3779 = vadd.f32 %v3746, %v3748
      %v3780 = vadd.f32 %v3747, %v3748
      %v3781 = vpack.c.bf16 %v3749, %v3749
      %v3782 = vpack.c.bf16 %v3750, %v3750
      %v3783 = vpack.c.bf16 %v3751, %v3751
      %v3784 = vpack.c.bf16 %v3752, %v3752
      %v3785 = vpack.c.bf16 %v3753, %v3753
      %v3786 = vpack.c.bf16 %v3754, %v3754
      %v3787 = vpack.c.bf16 %v3755, %v3755
      %v3788 = vpack.c.bf16 %v3756, %v3756
      %v3789 = vpack.c.bf16 %v3757, %v3757
      %v3790 = vpack.c.bf16 %v3758, %v3758
      %v3791 = vpack.c.bf16 %v3759, %v3759
      %v3792 = vpack.c.bf16 %v3760, %v3760
      %v3793 = vpack.c.bf16 %v3761, %v3761
      %v3794 = vpack.c.bf16 %v3762, %v3762
      %v3795 = vpack.c.bf16 %v3763, %v3763
      %v3796 = vpack.c.bf16 %v3764, %v3764
      %v3797 = vpack.c.bf16 %v3765, %v3765
      %v3798 = vpack.c.bf16 %v3766, %v3766
      %v3799 = vpack.c.bf16 %v3767, %v3767
      %v3800 = vpack.c.bf16 %v3768, %v3768
      %v3801 = vpack.c.bf16 %v3769, %v3769
      %v3802 = vpack.c.bf16 %v3770, %v3770
      %v3803 = vpack.c.bf16 %v3771, %v3771
      %v3804 = vpack.c.bf16 %v3772, %v3772
      %v3805 = vpack.c.bf16 %v3773, %v3773
      %v3806 = vpack.c.bf16 %v3774, %v3774
      %v3807 = vpack.c.bf16 %v3775, %v3775
      %v3808 = vpack.c.bf16 %v3776, %v3776
      %v3809 = vpack.c.bf16 %v3777, %v3777
      %v3810 = vpack.c.bf16 %v3778, %v3778
      %v3811 = vpack.c.bf16 %v3779, %v3779
      %v3812 = vpack.c.bf16 %v3780, %v3780
      %vm3813 = vcmask 257024
      %3814 = vst.msk [vmem:[%s228] sm:$0xf] %vm3813, %v3781
      %3815 = vst.msk [vmem:[%s228 + $0x8] sm:$0xf] %vm3813, %v3782
      %3816 = vst.msk [vmem:[%s228 + $0x10] sm:$0xf] %vm3813, %v3783
      %3817 = vst.msk [vmem:[%s228 + $0x18] sm:$0xf] %vm3813, %v3784
      %3818 = vst.msk [vmem:[%s228 + $0x20] sm:$0xf] %vm3813, %v3785
      %3819 = vst.msk [vmem:[%s228 + $0x28] sm:$0xf] %vm3813, %v3786
      %3820 = vst.msk [vmem:[%s228 + $0x30] sm:$0xf] %vm3813, %v3787
      %3821 = vst.msk [vmem:[%s228 + $0x38] sm:$0xf] %vm3813, %v3788
      %3822 = vst.msk [vmem:[%s228 + $0x80] sm:$0xf] %vm3813, %v3789
      %3823 = vst.msk [vmem:[%s228 + $0x88] sm:$0xf] %vm3813, %v3790
      %3824 = vst.msk [vmem:[%s228 + $0x90] sm:$0xf] %vm3813, %v3791
      %3825 = vst.msk [vmem:[%s228 + $0x98] sm:$0xf] %vm3813, %v3792
      %3826 = vst.msk [vmem:[%s228 + $0xa0] sm:$0xf] %vm3813, %v3793
      %3827 = vst.msk [vmem:[%s228 + $0xa8] sm:$0xf] %vm3813, %v3794
      %3828 = vst.msk [vmem:[%s228 + $0xb0] sm:$0xf] %vm3813, %v3795
      %3829 = vst.msk [vmem:[%s228 + $0xb8] sm:$0xf] %vm3813, %v3796
      %3830 = vst.msk [vmem:[%s228 + $0x100] sm:$0xf] %vm3813, %v3797
      %3831 = vst.msk [vmem:[%s228 + $0x108] sm:$0xf] %vm3813, %v3798
      %3832 = vst.msk [vmem:[%s228 + $0x110] sm:$0xf] %vm3813, %v3799
      %3833 = vst.msk [vmem:[%s228 + $0x118] sm:$0xf] %vm3813, %v3800
      %3834 = vst.msk [vmem:[%s228 + $0x120] sm:$0xf] %vm3813, %v3801
      %3835 = vst.msk [vmem:[%s228 + $0x128] sm:$0xf] %vm3813, %v3802
      %3836 = vst.msk [vmem:[%s228 + $0x130] sm:$0xf] %vm3813, %v3803
      %3837 = vst.msk [vmem:[%s228 + $0x138] sm:$0xf] %vm3813, %v3804
      %3838 = vst.msk [vmem:[%s228 + $0x180] sm:$0xf] %vm3813, %v3805
      %3839 = vst.msk [vmem:[%s228 + $0x188] sm:$0xf] %vm3813, %v3806
      %3840 = vst.msk [vmem:[%s228 + $0x190] sm:$0xf] %vm3813, %v3807
      %3841 = vst.msk [vmem:[%s228 + $0x198] sm:$0xf] %vm3813, %v3808
      %3842 = vst.msk [vmem:[%s228 + $0x1a0] sm:$0xf] %vm3813, %v3809
      %3843 = vst.msk [vmem:[%s228 + $0x1a8] sm:$0xf] %vm3813, %v3810
      %3844 = vst.msk [vmem:[%s228 + $0x1b0] sm:$0xf] %vm3813, %v3811
      %3845 = vst.msk [vmem:[%s228 + $0x1b8] sm:$0xf] %vm3813, %v3812
      %3878 = vrot.lane.b32.xlu0 %v3781, 96
      %v3879 = vpop.permute.xlu0 %3878
      %3880 = vrot.lane.b32.xlu0 %v3782, 96
      %v3881 = vpop.permute.xlu0 %3880
      %3882 = vrot.lane.b32.xlu0 %v3783, 96
      %v3883 = vpop.permute.xlu0 %3882
      %3884 = vrot.lane.b32.xlu0 %v3784, 96
      %v3885 = vpop.permute.xlu0 %3884
      %3886 = vrot.lane.b32.xlu0 %v3785, 96
      %v3887 = vpop.permute.xlu0 %3886
      %3888 = vrot.lane.b32.xlu0 %v3786, 96
      %v3889 = vpop.permute.xlu0 %3888
      %3890 = vrot.lane.b32.xlu0 %v3787, 96
      %v3891 = vpop.permute.xlu0 %3890
      %3892 = vrot.lane.b32.xlu0 %v3788, 96
      %v3893 = vpop.permute.xlu0 %3892
      %3894 = vrot.lane.b32.xlu0 %v3789, 96
      %v3895 = vpop.permute.xlu0 %3894
      %3896 = vrot.lane.b32.xlu0 %v3790, 96
      %v3897 = vpop.permute.xlu0 %3896
      %3898 = vrot.lane.b32.xlu0 %v3791, 96
      %v3899 = vpop.permute.xlu0 %3898
      %3900 = vrot.lane.b32.xlu0 %v3792, 96
      %v3901 = vpop.permute.xlu0 %3900
      %3902 = vrot.lane.b32.xlu0 %v3793, 96
      %v3903 = vpop.permute.xlu0 %3902
      %3904 = vrot.lane.b32.xlu0 %v3794, 96
      %v3905 = vpop.permute.xlu0 %3904
      %3906 = vrot.lane.b32.xlu0 %v3795, 96
      %v3907 = vpop.permute.xlu0 %3906
      %3908 = vrot.lane.b32.xlu0 %v3796, 96
      %v3909 = vpop.permute.xlu0 %3908
      %3910 = vrot.lane.b32.xlu0 %v3797, 96
      %v3911 = vpop.permute.xlu0 %3910
      %3912 = vrot.lane.b32.xlu0 %v3798, 96
      %v3913 = vpop.permute.xlu0 %3912
      %3914 = vrot.lane.b32.xlu0 %v3799, 96
      %v3915 = vpop.permute.xlu0 %3914
      %3916 = vrot.lane.b32.xlu0 %v3800, 96
      %v3917 = vpop.permute.xlu0 %3916
      %3918 = vrot.lane.b32.xlu0 %v3801, 96
      %v3919 = vpop.permute.xlu0 %3918
      %3920 = vrot.lane.b32.xlu0 %v3802, 96
      %v3921 = vpop.permute.xlu0 %3920
      %3922 = vrot.lane.b32.xlu0 %v3803, 96
      %v3923 = vpop.permute.xlu0 %3922
      %3924 = vrot.lane.b32.xlu0 %v3804, 96
      %v3925 = vpop.permute.xlu0 %3924
      %3926 = vrot.lane.b32.xlu0 %v3805, 96
      %v3927 = vpop.permute.xlu0 %3926
      %3928 = vrot.lane.b32.xlu0 %v3806, 96
      %v3929 = vpop.permute.xlu0 %3928
      %3930 = vrot.lane.b32.xlu0 %v3807, 96
      %v3931 = vpop.permute.xlu0 %3930
      %3932 = vrot.lane.b32.xlu0 %v3808, 96
      %v3933 = vpop.permute.xlu0 %3932
      %3934 = vrot.lane.b32.xlu0 %v3809, 96
      %v3935 = vpop.permute.xlu0 %3934
      %3936 = vrot.lane.b32.xlu0 %v3810, 96
      %v3937 = vpop.permute.xlu0 %3936
      %3938 = vrot.lane.b32.xlu0 %v3811, 96
      %v3939 = vpop.permute.xlu0 %3938
      %3940 = vrot.lane.b32.xlu0 %v3812, 96
      %v3941 = vpop.permute.xlu0 %3940
      %s3974 = scalar_lea.vmem %s228, 4
      %3975 = vst.msk [vmem:[%s3974] sm:$0xf] %vm3813, %v3879
      %3976 = vst.msk [vmem:[%s3974 + $0x8] sm:$0xf] %vm3813, %v3881
      %3977 = vst.msk [vmem:[%s3974 + $0x10] sm:$0xf] %vm3813, %v3883
      %3978 = vst.msk [vmem:[%s3974 + $0x18] sm:$0xf] %vm3813, %v3885
      %3979 = vst.msk [vmem:[%s3974 + $0x20] sm:$0xf] %vm3813, %v3887
      %3980 = vst.msk [vmem:[%s3974 + $0x28] sm:$0xf] %vm3813, %v3889
      %3981 = vst.msk [vmem:[%s3974 + $0x30] sm:$0xf] %vm3813, %v3891
      %3982 = vst.msk [vmem:[%s3974 + $0x38] sm:$0xf] %vm3813, %v3893
      %3983 = vst.msk [vmem:[%s3974 + $0x80] sm:$0xf] %vm3813, %v3895
      %3984 = vst.msk [vmem:[%s3974 + $0x88] sm:$0xf] %vm3813, %v3897
      %3985 = vst.msk [vmem:[%s3974 + $0x90] sm:$0xf] %vm3813, %v3899
      %3986 = vst.msk [vmem:[%s3974 + $0x98] sm:$0xf] %vm3813, %v3901
      %3987 = vst.msk [vmem:[%s3974 + $0xa0] sm:$0xf] %vm3813, %v3903
      %3988 = vst.msk [vmem:[%s3974 + $0xa8] sm:$0xf] %vm3813, %v3905
      %3989 = vst.msk [vmem:[%s3974 + $0xb0] sm:$0xf] %vm3813, %v3907
      %3990 = vst.msk [vmem:[%s3974 + $0xb8] sm:$0xf] %vm3813, %v3909
      %3991 = vst.msk [vmem:[%s3974 + $0x100] sm:$0xf] %vm3813, %v3911
      %3992 = vst.msk [vmem:[%s3974 + $0x108] sm:$0xf] %vm3813, %v3913
      %3993 = vst.msk [vmem:[%s3974 + $0x110] sm:$0xf] %vm3813, %v3915
      %3994 = vst.msk [vmem:[%s3974 + $0x118] sm:$0xf] %vm3813, %v3917
      %3995 = vst.msk [vmem:[%s3974 + $0x120] sm:$0xf] %vm3813, %v3919
      %3996 = vst.msk [vmem:[%s3974 + $0x128] sm:$0xf] %vm3813, %v3921
      %3997 = vst.msk [vmem:[%s3974 + $0x130] sm:$0xf] %vm3813, %v3923
      %3998 = vst.msk [vmem:[%s3974 + $0x138] sm:$0xf] %vm3813, %v3925
      %3999 = vst.msk [vmem:[%s3974 + $0x180] sm:$0xf] %vm3813, %v3927
      %4000 = vst.msk [vmem:[%s3974 + $0x188] sm:$0xf] %vm3813, %v3929
      %4001 = vst.msk [vmem:[%s3974 + $0x190] sm:$0xf] %vm3813, %v3931
      %4002 = vst.msk [vmem:[%s3974 + $0x198] sm:$0xf] %vm3813, %v3933
      %4003 = vst.msk [vmem:[%s3974 + $0x1a0] sm:$0xf] %vm3813, %v3935
      %4004 = vst.msk [vmem:[%s3974 + $0x1a8] sm:$0xf] %vm3813, %v3937
      %4005 = vst.msk [vmem:[%s3974 + $0x1b0] sm:$0xf] %vm3813, %v3939
      %4006 = vst.msk [vmem:[%s3974 + $0x1b8] sm:$0xf] %vm3813, %v3941
      %4007 = vrot.lane.b32.xlu0 %v3781, 64
      %v4008 = vpop.permute.xlu0 %4007
      %4009 = vrot.lane.b32.xlu0 %v3782, 64
      %v4010 = vpop.permute.xlu0 %4009
      %4011 = vrot.lane.b32.xlu0 %v3783, 64
      %v4012 = vpop.permute.xlu0 %4011
      %4013 = vrot.lane.b32.xlu0 %v3784, 64
      %v4014 = vpop.permute.xlu0 %4013
      %4015 = vrot.lane.b32.xlu0 %v3785, 64
      %v4016 = vpop.permute.xlu0 %4015
      %4017 = vrot.lane.b32.xlu0 %v3786, 64
      %v4018 = vpop.permute.xlu0 %4017
      %4019 = vrot.lane.b32.xlu0 %v3787, 64
      %v4020 = vpop.permute.xlu0 %4019
      %4021 = vrot.lane.b32.xlu0 %v3788, 64
      %v4022 = vpop.permute.xlu0 %4021
      %4023 = vrot.lane.b32.xlu0 %v3789, 64
      %v4024 = vpop.permute.xlu0 %4023
      %4025 = vrot.lane.b32.xlu0 %v3790, 64
      %v4026 = vpop.permute.xlu0 %4025
      %4027 = vrot.lane.b32.xlu0 %v3791, 64
      %v4028 = vpop.permute.xlu0 %4027
      %4029 = vrot.lane.b32.xlu0 %v3792, 64
      %v4030 = vpop.permute.xlu0 %4029
      %4031 = vrot.lane.b32.xlu0 %v3793, 64
      %v4032 = vpop.permute.xlu0 %4031
      %4033 = vrot.lane.b32.xlu0 %v3794, 64
      %v4034 = vpop.permute.xlu0 %4033
      %4035 = vrot.lane.b32.xlu0 %v3795, 64
      %v4036 = vpop.permute.xlu0 %4035
      %4037 = vrot.lane.b32.xlu0 %v3796, 64
      %v4038 = vpop.permute.xlu0 %4037
      %4039 = vrot.lane.b32.xlu0 %v3797, 64
      %v4040 = vpop.permute.xlu0 %4039
      %4041 = vrot.lane.b32.xlu0 %v3798, 64
      %v4042 = vpop.permute.xlu0 %4041
      %4043 = vrot.lane.b32.xlu0 %v3799, 64
      %v4044 = vpop.permute.xlu0 %4043
      %4045 = vrot.lane.b32.xlu0 %v3800, 64
      %v4046 = vpop.permute.xlu0 %4045
      %4047 = vrot.lane.b32.xlu0 %v3801, 64
      %v4048 = vpop.permute.xlu0 %4047
      %4049 = vrot.lane.b32.xlu0 %v3802, 64
      %v4050 = vpop.permute.xlu0 %4049
      %4051 = vrot.lane.b32.xlu0 %v3803, 64
      %v4052 = vpop.permute.xlu0 %4051
      %4053 = vrot.lane.b32.xlu0 %v3804, 64
      %v4054 = vpop.permute.xlu0 %4053
      %4055 = vrot.lane.b32.xlu0 %v3805, 64
      %v4056 = vpop.permute.xlu0 %4055
      %4057 = vrot.lane.b32.xlu0 %v3806, 64
      %v4058 = vpop.permute.xlu0 %4057
      %4059 = vrot.lane.b32.xlu0 %v3807, 64
      %v4060 = vpop.permute.xlu0 %4059
      %4061 = vrot.lane.b32.xlu0 %v3808, 64
      %v4062 = vpop.permute.xlu0 %4061
      %4063 = vrot.lane.b32.xlu0 %v3809, 64
      %v4064 = vpop.permute.xlu0 %4063
      %4065 = vrot.lane.b32.xlu0 %v3810, 64
      %v4066 = vpop.permute.xlu0 %4065
      %4067 = vrot.lane.b32.xlu0 %v3811, 64
      %v4068 = vpop.permute.xlu0 %4067
      %4069 = vrot.lane.b32.xlu0 %v3812, 64
      %v4070 = vpop.permute.xlu0 %4069
      %s4103 = scalar_lea.vmem %s228, 64
      %4104 = vst.msk [vmem:[%s4103] sm:$0xf] %vm3813, %v4008
      %4105 = vst.msk [vmem:[%s4103 + $0x8] sm:$0xf] %vm3813, %v4010
      %4106 = vst.msk [vmem:[%s4103 + $0x10] sm:$0xf] %vm3813, %v4012
      %4107 = vst.msk [vmem:[%s4103 + $0x18] sm:$0xf] %vm3813, %v4014
      %4108 = vst.msk [vmem:[%s4103 + $0x20] sm:$0xf] %vm3813, %v4016
      %4109 = vst.msk [vmem:[%s4103 + $0x28] sm:$0xf] %vm3813, %v4018
      %4110 = vst.msk [vmem:[%s4103 + $0x30] sm:$0xf] %vm3813, %v4020
      %4111 = vst.msk [vmem:[%s4103 + $0x38] sm:$0xf] %vm3813, %v4022
      %4112 = vst.msk [vmem:[%s4103 + $0x80] sm:$0xf] %vm3813, %v4024
      %4113 = vst.msk [vmem:[%s4103 + $0x88] sm:$0xf] %vm3813, %v4026
      %4114 = vst.msk [vmem:[%s4103 + $0x90] sm:$0xf] %vm3813, %v4028
      %4115 = vst.msk [vmem:[%s4103 + $0x98] sm:$0xf] %vm3813, %v4030
      %4116 = vst.msk [vmem:[%s4103 + $0xa0] sm:$0xf] %vm3813, %v4032
      %4117 = vst.msk [vmem:[%s4103 + $0xa8] sm:$0xf] %vm3813, %v4034
      %4118 = vst.msk [vmem:[%s4103 + $0xb0] sm:$0xf] %vm3813, %v4036
      %4119 = vst.msk [vmem:[%s4103 + $0xb8] sm:$0xf] %vm3813, %v4038
      %4120 = vst.msk [vmem:[%s4103 + $0x100] sm:$0xf] %vm3813, %v4040
      %4121 = vst.msk [vmem:[%s4103 + $0x108] sm:$0xf] %vm3813, %v4042
      %4122 = vst.msk [vmem:[%s4103 + $0x110] sm:$0xf] %vm3813, %v4044
      %4123 = vst.msk [vmem:[%s4103 + $0x118] sm:$0xf] %vm3813, %v4046
      %4124 = vst.msk [vmem:[%s4103 + $0x120] sm:$0xf] %vm3813, %v4048
      %4125 = vst.msk [vmem:[%s4103 + $0x128] sm:$0xf] %vm3813, %v4050
      %4126 = vst.msk [vmem:[%s4103 + $0x130] sm:$0xf] %vm3813, %v4052
      %4127 = vst.msk [vmem:[%s4103 + $0x138] sm:$0xf] %vm3813, %v4054
      %4128 = vst.msk [vmem:[%s4103 + $0x180] sm:$0xf] %vm3813, %v4056
      %4129 = vst.msk [vmem:[%s4103 + $0x188] sm:$0xf] %vm3813, %v4058
      %4130 = vst.msk [vmem:[%s4103 + $0x190] sm:$0xf] %vm3813, %v4060
      %4131 = vst.msk [vmem:[%s4103 + $0x198] sm:$0xf] %vm3813, %v4062
      %4132 = vst.msk [vmem:[%s4103 + $0x1a0] sm:$0xf] %vm3813, %v4064
      %4133 = vst.msk [vmem:[%s4103 + $0x1a8] sm:$0xf] %vm3813, %v4066
      %4134 = vst.msk [vmem:[%s4103 + $0x1b0] sm:$0xf] %vm3813, %v4068
      %4135 = vst.msk [vmem:[%s4103 + $0x1b8] sm:$0xf] %vm3813, %v4070
      %4136 = vrot.lane.b32.xlu0 %v3781, 32
      %v4137 = vpop.permute.xlu0 %4136
      %4138 = vrot.lane.b32.xlu0 %v3782, 32
      %v4139 = vpop.permute.xlu0 %4138
      %4140 = vrot.lane.b32.xlu0 %v3783, 32
      %v4141 = vpop.permute.xlu0 %4140
      %4142 = vrot.lane.b32.xlu0 %v3784, 32
      %v4143 = vpop.permute.xlu0 %4142
      %4144 = vrot.lane.b32.xlu0 %v3785, 32
      %v4145 = vpop.permute.xlu0 %4144
      %4146 = vrot.lane.b32.xlu0 %v3786, 32
      %v4147 = vpop.permute.xlu0 %4146
      %4148 = vrot.lane.b32.xlu0 %v3787, 32
      %v4149 = vpop.permute.xlu0 %4148
      %4150 = vrot.lane.b32.xlu0 %v3788, 32
      %v4151 = vpop.permute.xlu0 %4150
      %4152 = vrot.lane.b32.xlu0 %v3789, 32
      %v4153 = vpop.permute.xlu0 %4152
      %4154 = vrot.lane.b32.xlu0 %v3790, 32
      %v4155 = vpop.permute.xlu0 %4154
      %4156 = vrot.lane.b32.xlu0 %v3791, 32
      %v4157 = vpop.permute.xlu0 %4156
      %4158 = vrot.lane.b32.xlu0 %v3792, 32
      %v4159 = vpop.permute.xlu0 %4158
      %4160 = vrot.lane.b32.xlu0 %v3793, 32
      %v4161 = vpop.permute.xlu0 %4160
      %4162 = vrot.lane.b32.xlu0 %v3794, 32
      %v4163 = vpop.permute.xlu0 %4162
      %4164 = vrot.lane.b32.xlu0 %v3795, 32
      %v4165 = vpop.permute.xlu0 %4164
      %4166 = vrot.lane.b32.xlu0 %v3796, 32
      %v4167 = vpop.permute.xlu0 %4166
      %4168 = vrot.lane.b32.xlu0 %v3797, 32
      %v4169 = vpop.permute.xlu0 %4168
      %4170 = vrot.lane.b32.xlu0 %v3798, 32
      %v4171 = vpop.permute.xlu0 %4170
      %4172 = vrot.lane.b32.xlu0 %v3799, 32
      %v4173 = vpop.permute.xlu0 %4172
      %4174 = vrot.lane.b32.xlu0 %v3800, 32
      %v4175 = vpop.permute.xlu0 %4174
      %4176 = vrot.lane.b32.xlu0 %v3801, 32
      %v4177 = vpop.permute.xlu0 %4176
      %4178 = vrot.lane.b32.xlu0 %v3802, 32
      %v4179 = vpop.permute.xlu0 %4178
      %4180 = vrot.lane.b32.xlu0 %v3803, 32
      %v4181 = vpop.permute.xlu0 %4180
      %4182 = vrot.lane.b32.xlu0 %v3804, 32
      %v4183 = vpop.permute.xlu0 %4182
      %4184 = vrot.lane.b32.xlu0 %v3805, 32
      %v4185 = vpop.permute.xlu0 %4184
      %4186 = vrot.lane.b32.xlu0 %v3806, 32
      %v4187 = vpop.permute.xlu0 %4186
      %4188 = vrot.lane.b32.xlu0 %v3807, 32
      %v4189 = vpop.permute.xlu0 %4188
      %4190 = vrot.lane.b32.xlu0 %v3808, 32
      %v4191 = vpop.permute.xlu0 %4190
      %4192 = vrot.lane.b32.xlu0 %v3809, 32
      %v4193 = vpop.permute.xlu0 %4192
      %4194 = vrot.lane.b32.xlu0 %v3810, 32
      %v4195 = vpop.permute.xlu0 %4194
      %4196 = vrot.lane.b32.xlu0 %v3811, 32
      %v4197 = vpop.permute.xlu0 %4196
      %4198 = vrot.lane.b32.xlu0 %v3812, 32
      %v4199 = vpop.permute.xlu0 %4198
      %s4232 = scalar_lea.vmem %s228, 68
      %4233 = vst.msk [vmem:[%s4232] sm:$0xf] %vm3813, %v4137
      %4234 = vst.msk [vmem:[%s4232 + $0x8] sm:$0xf] %vm3813, %v4139
      %4235 = vst.msk [vmem:[%s4232 + $0x10] sm:$0xf] %vm3813, %v4141
      %4236 = vst.msk [vmem:[%s4232 + $0x18] sm:$0xf] %vm3813, %v4143
      %4237 = vst.msk [vmem:[%s4232 + $0x20] sm:$0xf] %vm3813, %v4145
      %4238 = vst.msk [vmem:[%s4232 + $0x28] sm:$0xf] %vm3813, %v4147
      %4239 = vst.msk [vmem:[%s4232 + $0x30] sm:$0xf] %vm3813, %v4149
      %4240 = vst.msk [vmem:[%s4232 + $0x38] sm:$0xf] %vm3813, %v4151
      %4241 = vst.msk [vmem:[%s4232 + $0x80] sm:$0xf] %vm3813, %v4153
      %4242 = vst.msk [vmem:[%s4232 + $0x88] sm:$0xf] %vm3813, %v4155
      %4243 = vst.msk [vmem:[%s4232 + $0x90] sm:$0xf] %vm3813, %v4157
      %4244 = vst.msk [vmem:[%s4232 + $0x98] sm:$0xf] %vm3813, %v4159
      %4245 = vst.msk [vmem:[%s4232 + $0xa0] sm:$0xf] %vm3813, %v4161
      %4246 = vst.msk [vmem:[%s4232 + $0xa8] sm:$0xf] %vm3813, %v4163
      %4247 = vst.msk [vmem:[%s4232 + $0xb0] sm:$0xf] %vm3813, %v4165
      %4248 = vst.msk [vmem:[%s4232 + $0xb8] sm:$0xf] %vm3813, %v4167
      %4249 = vst.msk [vmem:[%s4232 + $0x100] sm:$0xf] %vm3813, %v4169
      %4250 = vst.msk [vmem:[%s4232 + $0x108] sm:$0xf] %vm3813, %v4171
      %4251 = vst.msk [vmem:[%s4232 + $0x110] sm:$0xf] %vm3813, %v4173
      %4252 = vst.msk [vmem:[%s4232 + $0x118] sm:$0xf] %vm3813, %v4175
      %4253 = vst.msk [vmem:[%s4232 + $0x120] sm:$0xf] %vm3813, %v4177
      %4254 = vst.msk [vmem:[%s4232 + $0x128] sm:$0xf] %vm3813, %v4179
      %4255 = vst.msk [vmem:[%s4232 + $0x130] sm:$0xf] %vm3813, %v4181
      %4256 = vst.msk [vmem:[%s4232 + $0x138] sm:$0xf] %vm3813, %v4183
      %4257 = vst.msk [vmem:[%s4232 + $0x180] sm:$0xf] %vm3813, %v4185
      %4258 = vst.msk [vmem:[%s4232 + $0x188] sm:$0xf] %vm3813, %v4187
      %4259 = vst.msk [vmem:[%s4232 + $0x190] sm:$0xf] %vm3813, %v4189
      %4260 = vst.msk [vmem:[%s4232 + $0x198] sm:$0xf] %vm3813, %v4191
      %4261 = vst.msk [vmem:[%s4232 + $0x1a0] sm:$0xf] %vm3813, %v4193
      %4262 = vst.msk [vmem:[%s4232 + $0x1a8] sm:$0xf] %vm3813, %v4195
      %4263 = vst.msk [vmem:[%s4232 + $0x1b0] sm:$0xf] %vm3813, %v4197
      %4264 = vst.msk [vmem:[%s4232 + $0x1b8] sm:$0xf] %vm3813, %v4199
      %s4265 = smul.u32 4, %s16
      %p4266 = scmp.lt.s32.totalorder %s4265, 7
      %s4267 = scalar_select %p4266, %s4265, 7
      %s4268 = smul.addr %s4267, 32
      %s4269 = smul.addr %s4268, 4
      %s4270 = scalar_lea.vmem %s5, %s4269
      // Predicated region
      $region41: #{decoder_map_forward.2} parent=39 // pred_check
        %p4271 = pneg %p144
      $region42: #{decoder_map_forward.2} parent=39 // pred_check_branch
        %4273 = sbr.rel (%p4271) target = $region44
      $region43: #{decoder_map_forward.2} parent=39 // pred_region
        %s4274 = smul.u32 4, %s16
      $region44: #{decoder_map_forward.2} parent=39 // pred_fallthru
        _
    $region40: #{decoder_map_forward.2} parent=5 // pred_fallthru
      _
    %p4275 = scmp.le.s32.totalorder 2, %s11
    // Predicated region
    $region45: #{decoder_map_forward.2} parent=5 // pred_check
      %p4276 = pneg %p4275
    $region46: #{decoder_map_forward.2} parent=5 // pred_check_branch
      %4278 = sbr.rel (%p4276) target = $region48
    $region47: #{decoder_map_forward.2} parent=5 // pred_region
      %s4279 = ssub.s32 %s11, 2
      // Predicated region
      $region49: #{decoder_map_forward.2} parent=47 // pred_check
        %p4280 = pneg %p150
      $region50: #{decoder_map_forward.2} parent=47 // pred_check_branch
        %4282 = sbr.rel (%p4280) target = $region52
      $region51: #{decoder_map_forward.2} parent=47 // pred_region
        %s4283 = smul.u32 4, %s17
        %p4284 = scmp.lt.s32.totalorder %s4283, 7
        %s4285 = scalar_select %p4284, %s4283, 7
        %s4286 = smul.addr %s4285, 32
        %s4287 = smul.addr %s4286, 4
        %s4288 = scalar_lea.vmem %s5, %s4287
      $region52: #{decoder_map_forward.2} parent=47 // pred_fallthru
        _
    $region48: #{decoder_map_forward.2} parent=5 // pred_fallthru
      _
  $region6: #{decoder_map_forward.2} parent=0 // loop_footer
    %s15 = sadd.s32 1, %s11
  $region7: #{decoder_map_forward.2} parent=0 // loop_footer_branch
    %10 = sbr.rel target = $region3
  $region8: #{decoder_map_forward.2} parent=0 // loop_exit
    _

// kernel: tile.54
$region0: #{tile.54}
  #allocation0 [shape = 's32[1]{0}', space=sflag, size = 0x4, scoped, tag = 'scoped memory for tile.54']
  %s0 = inlined_call_operand.vmem [shape: f32[16], index: 0, kind: input, shape index: {}]
  %s1 = inlined_call_operand.vmem [shape: f32[16,16], index: 1, kind: output, shape index: {}]
  // Predicated region
  $region2: #{tile.54} parent=0 // pred_check
    _
  $region3: #{tile.54} parent=0 // pred_check_branch
    %3 = sbr.rel (0) target = $region5
  $region4: #{tile.54} parent=0 // pred_region
    _
  $region5: #{tile.54} parent=0 // pred_fallthru
    _
  %v4 = vld [vmem:[%s0] ss:$0 sm:$0xff]
  %5 = vst [vmem:[%s1] sm:$0xff] %v4
  %s6 = scalar_lea.vmem %s1, 8
  %7 = vst [vmem:[%s6] sm:$0xff] %v4

// kernel: tile.55
$region0: #{tile.55}
  %s0 = inlined_call_operand.vmem [shape: f32[16,16], index: 0, kind: input, shape index: {}]
  %s1 = inlined_call_operand.vmem [shape: f32[1,256], index: 1, kind: output, shape index: {}]
  $region1: #{tile.55} parent=0
    #allocation0 [shape = 'u8[8192]{0}', space=vmem, size = 0x2000, scoped, tag = 'scoped mem for output reshape']
    %s2 = smov 3
    %v3 = vld [vmem:[%s0] ss:$8 sm:%s2]
    %vm4 = vcmask 130048
    %5 = vst.msk [vmem:[#allocation0] ss:$8 sm:$0x3] %vm4, %v3
    %s6 = scalar_lea.vmem %s0, 7
    %s7 = smov 3
    %v8 = vld [vmem:[%s6] ss:$8 sm:%s7]
    %9 = vrot.lane.b32.xlu0 %v8, 112
    %v10 = vpop.permute.xlu0 %9
    %vm11 = vcmask 1048448
    %12 = vst.msk [vmem:[#allocation0] ss:$8 sm:$0x3] %vm11, %v10
    %s13 = scalar_lea.vmem %s0, 6
    %s14 = smov 3
    %v15 = vld [vmem:[%s13] ss:$8 sm:%s14]
    %16 = vrot.lane.b32.xlu0 %v15, 96
    %v17 = vpop.permute.xlu0 %16
    %vm18 = vcmask 917248
    %19 = vst.msk [vmem:[#allocation0] ss:$8 sm:$0x3] %vm18, %v17
    %s20 = scalar_lea.vmem %s0, 5
    %s21 = smov 3
    %v22 = vld [vmem:[%s20] ss:$8 sm:%s21]
    %23 = vrot.lane.b32.xlu0 %v22, 80
    %v24 = vpop.permute.xlu0 %23
    %vm25 = vcmask 786048
    %26 = vst.msk [vmem:[#allocation0] ss:$8 sm:$0x3] %vm25, %v24
    %s27 = scalar_lea.vmem %s0, 4
    %s28 = smov 3
    %v29 = vld [vmem:[%s27] ss:$8 sm:%s28]
    %30 = vrot.lane.b32.xlu0 %v29, 64
    %v31 = vpop.permute.xlu0 %30
    %vm32 = vcmask 654848
    %33 = vst.msk [vmem:[#allocation0] ss:$8 sm:$0x3] %vm32, %v31
    %s34 = scalar_lea.vmem %s0, 3
    %s35 = smov 3
    %v36 = vld [vmem:[%s34] ss:$8 sm:%s35]
    %37 = vrot.lane.b32.xlu0 %v36, 48
    %v38 = vpop.permute.xlu0 %37
    %vm39 = vcmask 523648
    %40 = vst.msk [vmem:[#allocation0] ss:$8 sm:$0x3] %vm39, %v38
    %s41 = scalar_lea.vmem %s0, 2
    %s42 = smov 3
    %v43 = vld [vmem:[%s41] ss:$8 sm:%s42]
    %44 = vrot.lane.b32.xlu0 %v43, 32
    %v45 = vpop.permute.xlu0 %44
    %vm46 = vcmask 392448
    %47 = vst.msk [vmem:[#allocation0] ss:$8 sm:$0x3] %vm46, %v45
    %s48 = scalar_lea.vmem %s0, 1
    %s49 = smov 3
    %v50 = vld [vmem:[%s48] ss:$8 sm:%s49]
    %51 = vrot.lane.b32.xlu0 %v50, 16
    %v52 = vpop.permute.xlu0 %51
    %vm53 = vcmask 261248
    %54 = vst.msk [vmem:[#allocation0] ss:$8 sm:$0x3] %vm53, %v52
    %s56 = ssub.s32 2, 1
    %v57 = vld [vmem:[#allocation0] sm:%s56]
    %s59 = ssub.s32 2, 1
    %60 = vst [vmem:[%s1] sm:%s59] %v57
    %s61 = scalar_lea.vmem [#allocation0], 8
    %v62 = vld [vmem:[%s61] sm:%s56]
    %s64 = ssub.s32 2, 1
    %s65 = scalar_lea.vmem %s1, 1
    %66 = vst [vmem:[%s65] sm:%s64] %v62

// kernel: decoder_map_forward.3
$region0: #{decoder_map_forward.3}
  #allocation0 [shape = 'u32[]', space=smem, size = 0x4, offset = 0x4, fixed_abs, tag = 'smem constant byte address 0x4 - core index']
  #allocation1 [shape = 'u32[72,128]{1,0:T(1,128)}', space=vmem, size = 0x9000, scoped, tag = 'internal scratch']
  #allocation2 [shape = 'bf16[10,18,256]{2,1,0:T(8,128)(2,1)}', space=vmem, size = 0x1e000, scoped, tag = 'scratch operand']
  %s0 = inlined_call_operand.vmem [shape: bf16[2,8,16,256], index: 0, kind: input, shape index: {}]
  %s1 = inlined_call_operand.vmem [shape: bf16[3,3,256,256], index: 1, kind: input, shape index: {}]
  %s2 = inlined_call_operand.vmem [shape: f32[1,256], index: 2, kind: input, shape index: {}]
  %s3 = inlined_call_operand.vmem [shape: f32[2,8,16,256], index: 3, kind: output, shape index: {}]
  %s4 = sld [smem:[#allocation0]]
  $region49: #{decoder_map_forward.3} parent=0
    _
  %s6 = ssub.s32 1, %s4
  %s7 = scalar_select 0, %s6, %s4
  loop: start=0, step=1, limit=4
  $region2: #{decoder_map_forward.3} parent=0 // loop_pre_header
    _
  $region3: #{decoder_map_forward.3} parent=0 // loop_header
    %s9 = sphi 0, %s13
    %p10 = scmp.ge.s32.totalorder %s9, 4
    %s16 = sphi 0, %s28
    %s17 = sphi 0, %s24
    %s18 = sphi 0, %s16
    %s19 = sphi 0, %s17
    %s20 = sphi 0, %s18
    %s21 = sphi 0, %s19
    %s31 = sphi 0, %s33
    %s34 = sphi 0, %s31
    %s35 = sphi 0, %s34
    %s51 = sphi 0, %s35
    %s55 = sphi 0, %s55
    %s57 = sphi 0, %s55
    %s58 = sphi 0, %s57
    %s72 = sphi 0, %s58
    %s76 = sphi 0, %s76
    %s78 = sphi 0, %s76
    %s79 = sphi 0, %s78
    %s93 = sphi 0, %s79
    %s101 = sphi 0, %s103
    %s104 = sphi 0, %s101
    %s105 = sphi 0, %s104
    %s121 = sphi 0, %s105
  $region4: #{decoder_map_forward.3} parent=0 // loop_header_branch
    %12 = sbr.rel (%p10) target = $region8
  $region5: #{decoder_map_forward.3} parent=0 // loop_body
    %s14 = ssub.s32 %s9, 1
    %s15 = ssub.s32 %s9, 2
    %s22 = sadd.s32 1, %s17
    %p23 = scmp.ge.s32.totalorder %s22, 1
    %s24 = scalar_select %p23, 0, %s22
    %s25 = sadd.s32 1, %s16
    %s26 = scalar_select %p23, %s25, %s16
    %p27 = scmp.ge.s32.totalorder %s26, 2
    %s28 = scalar_select %p27, 0, %s26
    %s29 = ssub.s32 %s16, %s28
    %p30 = scmp.eq.s32.totalorder %s29, 0
    %s32 = sadd.s32 %s31, 1
    %s33 = scalar_select %p30, %s31, %s32
    %p36 = pneg %p30
    %p37 = scmp.eq.s32.totalorder %s9, 1
    %p38 = por %p36, %p37
    %p39 = scmp.ne.s32.totalorder %s31, %s34
    %p40 = scmp.eq.s32.totalorder %s9, 0
    %p41 = por %p39, %p40
    %p42 = scmp.ne.s32.totalorder %s31, %s34
    %p43 = scmp.eq.s32.totalorder %s14, 1
    %p44 = por %p42, %p43
    %p45 = scmp.ne.s32.totalorder %s34, %s35
    %p46 = scmp.eq.s32.totalorder %s14, 0
    %p47 = por %p45, %p46
    %p48 = scmp.ne.s32.totalorder %s34, %s35
    %p49 = scmp.eq.s32.totalorder %s15, 1
    %p50 = por %p48, %p49
    %p52 = scmp.ne.s32.totalorder %s35, %s51
    %p53 = scmp.eq.s32.totalorder %s15, 0
    %p54 = por %p52, %p53
    %s56 = sadd.s32 %s55, 1
    %p59 = scmp.eq.s32.totalorder %s9, 1
    %p60 = scmp.ne.s32.totalorder %s55, %s57
    %p61 = scmp.eq.s32.totalorder %s9, 0
    %p62 = por %p60, %p61
    %p63 = scmp.ne.s32.totalorder %s55, %s57
    %p64 = scmp.eq.s32.totalorder %s14, 1
    %p65 = por %p63, %p64
    %p66 = scmp.ne.s32.totalorder %s57, %s58
    %p67 = scmp.eq.s32.totalorder %s14, 0
    %p68 = por %p66, %p67
    %p69 = scmp.ne.s32.totalorder %s57, %s58
    %p70 = scmp.eq.s32.totalorder %s15, 1
    %p71 = por %p69, %p70
    %p73 = scmp.ne.s32.totalorder %s58, %s72
    %p74 = scmp.eq.s32.totalorder %s15, 0
    %p75 = por %p73, %p74
    %s77 = sadd.s32 %s76, 1
    %p80 = scmp.eq.s32.totalorder %s9, 1
    %p81 = scmp.ne.s32.totalorder %s76, %s78
    %p82 = scmp.eq.s32.totalorder %s9, 0
    %p83 = por %p81, %p82
    %p84 = scmp.ne.s32.totalorder %s76, %s78
    %p85 = scmp.eq.s32.totalorder %s14, 1
    %p86 = por %p84, %p85
    %p87 = scmp.ne.s32.totalorder %s78, %s79
    %p88 = scmp.eq.s32.totalorder %s14, 0
    %p89 = por %p87, %p88
    %p90 = scmp.ne.s32.totalorder %s78, %s79
    %p91 = scmp.eq.s32.totalorder %s15, 1
    %p92 = por %p90, %p91
    %p94 = scmp.ne.s32.totalorder %s79, %s93
    %p95 = scmp.eq.s32.totalorder %s15, 0
    %p96 = por %p94, %p95
    %s97 = ssub.s32 %s16, %s28
    %s98 = ssub.s32 %s17, %s24
    %s99 = sor.u32 %s97, %s98
    %p100 = scmp.eq.s32.totalorder %s99, 0
    %s102 = sadd.s32 %s101, 1
    %s103 = scalar_select %p100, %s101, %s102
    %p106 = pneg %p100
    %p107 = scmp.eq.s32.totalorder %s9, 1
    %p108 = por %p106, %p107
    %p109 = scmp.ne.s32.totalorder %s101, %s104
    %p110 = scmp.eq.s32.totalorder %s9, 0
    %p111 = por %p109, %p110
    %p112 = scmp.ne.s32.totalorder %s101, %s104
    %p113 = scmp.eq.s32.totalorder %s14, 1
    %p114 = por %p112, %p113
    %p115 = scmp.ne.s32.totalorder %s104, %s105
    %p116 = scmp.eq.s32.totalorder %s14, 0
    %p117 = por %p115, %p116
    %p118 = scmp.ne.s32.totalorder %s104, %s105
    %p119 = scmp.eq.s32.totalorder %s15, 1
    %p120 = por %p118, %p119
    %p122 = scmp.ne.s32.totalorder %s105, %s121
    %p123 = scmp.eq.s32.totalorder %s15, 0
    %p124 = por %p122, %p123
    %p125 = scmp.le.s32.totalorder 1, %s9
    %p126 = scmp.lt.s32.totalorder %s9, 3
    %p127 = pnand %p125, %p126
    %p128 = pneg %p127
    // Predicated region
    $region9: #{decoder_map_forward.3} parent=5 // pred_check
      _
    $region10: #{decoder_map_forward.3} parent=5 // pred_check_branch
      %130 = sbr.rel (%p127) target = $region12
    $region11: #{decoder_map_forward.3} parent=5 // pred_region
      %s131 = ssub.s32 %s9, 1
      // Predicated region
      $region13: #{decoder_map_forward.3} parent=11 // pred_check
        %p132 = pneg %p68
      $region14: #{decoder_map_forward.3} parent=11 // pred_check_branch
        %134 = sbr.rel (%p132) target = $region16
      $region15: #{decoder_map_forward.3} parent=11 // pred_region
        _
      $region16: #{decoder_map_forward.3} parent=11 // pred_fallthru
        _
      // Predicated region
      $region17: #{decoder_map_forward.3} parent=11 // pred_check
        %p135 = pneg %p89
      $region18: #{decoder_map_forward.3} parent=11 // pred_check_branch
        %137 = sbr.rel (%p135) target = $region20
      $region19: #{decoder_map_forward.3} parent=11 // pred_region
        _
      $region20: #{decoder_map_forward.3} parent=11 // pred_fallthru
        _
    $region12: #{decoder_map_forward.3} parent=5 // pred_fallthru
      _
    %p138 = scmp.lt.s32.totalorder %s9, 2
    // Predicated region
    $region21: #{decoder_map_forward.3} parent=5 // pred_check
      %p139 = pneg %p138
    $region22: #{decoder_map_forward.3} parent=5 // pred_check_branch
      %141 = sbr.rel (%p139) target = $region24
    $region23: #{decoder_map_forward.3} parent=5 // pred_region
      // Predicated region
      $region25: #{decoder_map_forward.3} parent=23 // pred_check
        %p142 = pneg %p41
      $region26: #{decoder_map_forward.3} parent=23 // pred_check_branch
        %144 = sbr.rel (%p142) target = $region28
      $region27: #{decoder_map_forward.3} parent=23 // pred_region
        %p145 = scmp.lt.s32.totalorder %s16, 1
        %s146 = scalar_select %p145, %s16, 1
        %s147 = smul.addr %s146, 32
        %s148 = smul.addr %s147, 4
        %s149 = scalar_lea.vmem %s0, %s148
      $region28: #{decoder_map_forward.3} parent=23 // pred_fallthru
        _
    $region24: #{decoder_map_forward.3} parent=5 // pred_fallthru
      _
    %p150 = scmp.le.s32.totalorder 1, %s9
    %p151 = scmp.lt.s32.totalorder %s9, 3
    %p152 = pnand %p150, %p151
    %p153 = pneg %p152
    // Predicated region
    $region29: #{decoder_map_forward.3} parent=5 // pred_check
      _
    $region30: #{decoder_map_forward.3} parent=5 // pred_check_branch
      %155 = sbr.rel (%p152) target = $region32
    $region31: #{decoder_map_forward.3} parent=5 // pred_region
      %s156 = ssub.s32 %s9, 1
      %p157 = scmp.lt.s32.totalorder %s18, 1
      %s158 = scalar_select %p157, %s18, 1
      %s159 = smul.addr %s158, 32
      %s160 = smul.addr %s159, 4
      %s161 = scalar_lea.vmem %s0, %s160
      %p162 = pneg %p47
      %p163 = pneg %p44
      %p164 = pneg %p68
      %p165 = pneg %p65
      %p166 = pneg %p89
      %p167 = pneg %p86
      %p168 = pneg %p117
      %p169 = pneg %p114
      %s170 = smul.u32 8, %s19
      %p171 = scmp.lt.s32.totalorder %s18, 1
      %s172 = scalar_select %p171, %s18, 1
      %p173 = scmp.lt.s32.totalorder %s170, 7
      %s174 = scalar_select %p173, %s170, 7
      %s175 = smul.addr %s174, 4
      %s176 = smul.addr %s172, 32
      %s177 = sadd.s32 %s175, %s176
      %s178 = smul.addr %s177, 8
      %s179 = scalar_lea.vmem %s3, %s178
      %p180 = scmp.lt.s32.totalorder %s18, 1
      %s181 = scalar_select %p180, %s18, 1
      %s182 = smul.addr %s181, 32
      %s183 = smul.addr %s182, 4
      %s184 = scalar_lea.vmem %s0, %s183
      %s185 = smul.u32 8, %s19
      %p186 = scmp.lt.s32.totalorder %s18, 1
      %s187 = scalar_select %p186, %s18, 1
      %p188 = scmp.lt.s32.totalorder %s185, 7
      %s189 = scalar_select %p188, %s185, 7
      %s190 = smul.addr %s189, 4
      %s191 = smul.addr %s187, 32
      %s192 = sadd.s32 %s190, %s191
      %s193 = smul.addr %s192, 8
      %s194 = scalar_lea.vmem %s3, %s193
      %s195 = smul.u32 8, %s19
      %p197 = scmp.eq.s32.totalorder %s19, 0
      // Predicated region
      $region33: #{decoder_map_forward.3} parent=31 // pred_check
        %p198 = pneg %p197
      $region34: #{decoder_map_forward.3} parent=31 // pred_check_branch
        %200 = sbr.rel (%p198) target = $region36
      $region35: #{decoder_map_forward.3} parent=31 // pred_region
        %201 = vst [vmem:[#allocation2] sm:$0xff] 0
        %202 = vst [vmem:[#allocation2 + $0x8] sm:$0xff] 0
        %203 = vst [vmem:[#allocation2 + $0x10] sm:$0x11] 0
        %204 = vst [vmem:[#allocation2 + $0x18] sm:$0xff] 0
        %205 = vst [vmem:[#allocation2 + $0x20] sm:$0xff] 0
        %206 = vst [vmem:[#allocation2 + $0x28] sm:$0x11] 0
        %207 = vst [vmem:[#allocation2 + $0x30] sm:$0xff] 0
        %208 = vst [vmem:[#allocation2 + $0x38] sm:$0xff] 0
        %209 = vst [vmem:[#allocation2 + $0x40] sm:$0x11] 0
        %210 = vst [vmem:[#allocation2 + $0x48] sm:$0xff] 0
        %211 = vst [vmem:[#allocation2 + $0x50] sm:$0xff] 0
        %212 = vst [vmem:[#allocation2 + $0x58] sm:$0x11] 0
        %213 = vst [vmem:[#allocation2 + $0x60] sm:$0xff] 0
        %214 = vst [vmem:[#allocation2 + $0x68] sm:$0xff] 0
        %215 = vst [vmem:[#allocation2 + $0x70] sm:$0x11] 0
        %216 = vst [vmem:[#allocation2 + $0x78] sm:$0xff] 0
        %217 = vst [vmem:[#allocation2 + $0x80] sm:$0xff] 0
        %218 = vst [vmem:[#allocation2 + $0x88] sm:$0x11] 0
        %219 = vst [vmem:[#allocation2 + $0x90] sm:$0xff] 0
        %220 = vst [vmem:[#allocation2 + $0x98] sm:$0xff] 0
        %221 = vst [vmem:[#allocation2 + $0xa0] sm:$0x11] 0
        %222 = vst [vmem:[#allocation2 + $0xa8] sm:$0xff] 0
        %223 = vst [vmem:[#allocation2 + $0xb0] sm:$0xff] 0
        %224 = vst [vmem:[#allocation2 + $0xb8] sm:$0x11] 0
        %225 = vst [vmem:[#allocation2 + $0xc0] sm:$0xff] 0
        %226 = vst [vmem:[#allocation2 + $0xc8] sm:$0xff] 0
        %227 = vst [vmem:[#allocation2 + $0xd0] sm:$0x11] 0
        %228 = vst [vmem:[#allocation2 + $0xd8] sm:$0xff] 0
        %229 = vst [vmem:[#allocation2 + $0xe0] sm:$0xff] 0
        %230 = vst [vmem:[#allocation2 + $0xe8] sm:$0x11] 0
        %v231 = vld [vmem:[%s184] sm:$0xff]
        %v232 = vld [vmem:[%s184 + $0x8] sm:$0xff]
        %v233 = vld [vmem:[%s184 + $0x10] sm:$0xff]
        %v234 = vld [vmem:[%s184 + $0x18] sm:$0xff]
        %v235 = vld [vmem:[%s184 + $0x20] sm:$0xff]
        %v236 = vld [vmem:[%s184 + $0x28] sm:$0xff]
        %v237 = vld [vmem:[%s184 + $0x30] sm:$0xff]
        %v238 = vld [vmem:[%s184 + $0x38] sm:$0xff]
        %v239 = vld [vmem:[%s184 + $0x40] sm:$0xff]
        %v240 = vld [vmem:[%s184 + $0x48] sm:$0xff]
        %v241 = vld [vmem:[%s184 + $0x50] sm:$0xff]
        %v242 = vld [vmem:[%s184 + $0x58] sm:$0xff]
        %v243 = vld [vmem:[%s184 + $0x60] sm:$0xff]
        %v244 = vld [vmem:[%s184 + $0x68] sm:$0xff]
        %v245 = vld [vmem:[%s184 + $0x70] sm:$0xff]
        %v246 = vld [vmem:[%s184 + $0x78] sm:$0xff]
        %vm247 = vsmask.f32 256
        %vm248 = vsmask.f32 4368
        %vm249 = vmor %vm247, %vm248
        %v251 = vshrl.u32 %v231, 16
        %v253 = vrot.slane %v251, 7
        %v254 = vshll.u32 %v231, 16
        %v256 = vor.u32 %v253, %v254
        %v257 = vrot.slane %v253, 4
        %v259 = vshrl.u32 %v232, 16
        %v261 = vrot.slane %v259, 7
        %v262 = vshll.u32 %v232, 16
        %v264 = vor.u32 %v261, %v262
        %v265 = vsel %vm249, %v257, %v264
        %v266 = vrot.slane %v261, 4
        %v268 = vshrl.u32 %v233, 16
        %v270 = vrot.slane %v268, 7
        %v271 = vshll.u32 %v233, 16
        %v273 = vor.u32 %v270, %v271
        %v274 = vrot.slane %v270, 4
        %v276 = vshrl.u32 %v234, 16
        %v278 = vrot.slane %v276, 7
        %v279 = vshll.u32 %v234, 16
        %v281 = vor.u32 %v278, %v279
        %v282 = vsel %vm249, %v274, %v281
        %v283 = vrot.slane %v278, 4
        %v285 = vshrl.u32 %v235, 16
        %v287 = vrot.slane %v285, 7
        %v288 = vshll.u32 %v235, 16
        %v290 = vor.u32 %v287, %v288
        %v291 = vrot.slane %v287, 4
        %v293 = vshrl.u32 %v236, 16
        %v295 = vrot.slane %v293, 7
        %v296 = vshll.u32 %v236, 16
        %v298 = vor.u32 %v295, %v296
        %v299 = vsel %vm249, %v291, %v298
        %v300 = vrot.slane %v295, 4
        %v302 = vshrl.u32 %v237, 16
        %v304 = vrot.slane %v302, 7
        %v305 = vshll.u32 %v237, 16
        %v307 = vor.u32 %v304, %v305
        %v308 = vrot.slane %v304, 4
        %v310 = vshrl.u32 %v238, 16
        %v312 = vrot.slane %v310, 7
        %v313 = vshll.u32 %v238, 16
        %v315 = vor.u32 %v312, %v313
        %v316 = vsel %vm249, %v308, %v315
        %v317 = vrot.slane %v312, 4
        %v319 = vshrl.u32 %v239, 16
        %v321 = vrot.slane %v319, 7
        %v322 = vshll.u32 %v239, 16
        %v324 = vor.u32 %v321, %v322
        %v325 = vrot.slane %v321, 4
        %v327 = vshrl.u32 %v240, 16
        %v329 = vrot.slane %v327, 7
        %v330 = vshll.u32 %v240, 16
        %v332 = vor.u32 %v329, %v330
        %v333 = vsel %vm249, %v325, %v332
        %v334 = vrot.slane %v329, 4
        %v336 = vshrl.u32 %v241, 16
        %v338 = vrot.slane %v336, 7
        %v339 = vshll.u32 %v241, 16
        %v341 = vor.u32 %v338, %v339
        %v342 = vrot.slane %v338, 4
        %v344 = vshrl.u32 %v242, 16
        %v346 = vrot.slane %v344, 7
        %v347 = vshll.u32 %v242, 16
        %v349 = vor.u32 %v346, %v347
        %v350 = vsel %vm249, %v342, %v349
        %v351 = vrot.slane %v346, 4
        %v353 = vshrl.u32 %v243, 16
        %v355 = vrot.slane %v353, 7
        %v356 = vshll.u32 %v243, 16
        %v358 = vor.u32 %v355, %v356
        %v359 = vrot.slane %v355, 4
        %v361 = vshrl.u32 %v244, 16
        %v363 = vrot.slane %v361, 7
        %v364 = vshll.u32 %v244, 16
        %v366 = vor.u32 %v363, %v364
        %v367 = vsel %vm249, %v359, %v366
        %v368 = vrot.slane %v363, 4
        %v370 = vshrl.u32 %v245, 16
        %v372 = vrot.slane %v370, 7
        %v373 = vshll.u32 %v245, 16
        %v375 = vor.u32 %v372, %v373
        %v376 = vrot.slane %v372, 4
        %v378 = vshrl.u32 %v246, 16
        %v380 = vrot.slane %v378, 7
        %v381 = vshll.u32 %v246, 16
        %v383 = vor.u32 %v380, %v381
        %v384 = vsel %vm249, %v376, %v383
        %v385 = vrot.slane %v380, 4
        %s410 = scalar_lea.vmem [#allocation2], 24
        %vm411 = vcmask 1043456
        %vm412 = vsmask.f32 7938
        %vm413 = vmand %vm411, %vm412
        %vm414 = vcmask 1047556
        %vm415 = vsmask.f32 7954
        %vm416 = vmand %vm414, %vm415
        %vm417 = vmor %vm416, %vm413
        %v418 = vld [vmem:[%s410] sm:$0xff]
        %v419 = vsel %vm417, %v256, %v418
        %420 = vst [vmem:[%s410] sm:$0xff] %v419
        %421 = vst [vmem:[%s410 + $0x8] sm:$0xff] %v265
        %vm422 = vcmask 1040384
        %vm423 = vmand %vm422, %vm247
        %vm424 = vcmask 1044484
        %vm425 = vsmask.f32 4352
        %vm426 = vmand %vm424, %vm425
        %vm427 = vmor %vm426, %vm423
        %v428 = vld [vmem:[%s410 + $0x10] sm:$0x11]
        %v429 = vsel %vm427, %v266, %v428
        %430 = vst [vmem:[%s410 + $0x10] sm:$0x11] %v429
        %v431 = vld [vmem:[%s410 + $0x18] sm:$0xff]
        %v432 = vsel %vm417, %v273, %v431
        %433 = vst [vmem:[%s410 + $0x18] sm:$0xff] %v432
        %434 = vst [vmem:[%s410 + $0x20] sm:$0xff] %v282
        %v435 = vld [vmem:[%s410 + $0x28] sm:$0x11]
        %v436 = vsel %vm427, %v283, %v435
        %437 = vst [vmem:[%s410 + $0x28] sm:$0x11] %v436
        %v438 = vld [vmem:[%s410 + $0x30] sm:$0xff]
        %v439 = vsel %vm417, %v290, %v438
        %440 = vst [vmem:[%s410 + $0x30] sm:$0xff] %v439
        %441 = vst [vmem:[%s410 + $0x38] sm:$0xff] %v299
        %v442 = vld [vmem:[%s410 + $0x40] sm:$0x11]
        %v443 = vsel %vm427, %v300, %v442
        %444 = vst [vmem:[%s410 + $0x40] sm:$0x11] %v443
        %v445 = vld [vmem:[%s410 + $0x48] sm:$0xff]
        %v446 = vsel %vm417, %v307, %v445
        %447 = vst [vmem:[%s410 + $0x48] sm:$0xff] %v446
        %448 = vst [vmem:[%s410 + $0x50] sm:$0xff] %v316
        %v449 = vld [vmem:[%s410 + $0x58] sm:$0x11]
        %v450 = vsel %vm427, %v317, %v449
        %451 = vst [vmem:[%s410 + $0x58] sm:$0x11] %v450
        %v452 = vld [vmem:[%s410 + $0x60] sm:$0xff]
        %v453 = vsel %vm417, %v324, %v452
        %454 = vst [vmem:[%s410 + $0x60] sm:$0xff] %v453
        %455 = vst [vmem:[%s410 + $0x68] sm:$0xff] %v333
        %v456 = vld [vmem:[%s410 + $0x70] sm:$0x11]
        %v457 = vsel %vm427, %v334, %v456
        %458 = vst [vmem:[%s410 + $0x70] sm:$0x11] %v457
        %v459 = vld [vmem:[%s410 + $0x78] sm:$0xff]
        %v460 = vsel %vm417, %v341, %v459
        %461 = vst [vmem:[%s410 + $0x78] sm:$0xff] %v460
        %462 = vst [vmem:[%s410 + $0x80] sm:$0xff] %v350
        %v463 = vld [vmem:[%s410 + $0x88] sm:$0x11]
        %v464 = vsel %vm427, %v351, %v463
        %465 = vst [vmem:[%s410 + $0x88] sm:$0x11] %v464
        %v466 = vld [vmem:[%s410 + $0x90] sm:$0xff]
        %v467 = vsel %vm417, %v358, %v466
        %468 = vst [vmem:[%s410 + $0x90] sm:$0xff] %v467
        %469 = vst [vmem:[%s410 + $0x98] sm:$0xff] %v367
        %v470 = vld [vmem:[%s410 + $0xa0] sm:$0x11]
        %v471 = vsel %vm427, %v368, %v470
        %472 = vst [vmem:[%s410 + $0xa0] sm:$0x11] %v471
        %v473 = vld [vmem:[%s410 + $0xa8] sm:$0xff]
        %v474 = vsel %vm417, %v375, %v473
        %475 = vst [vmem:[%s410 + $0xa8] sm:$0xff] %v474
        %476 = vst [vmem:[%s410 + $0xb0] sm:$0xff] %v384
        %v477 = vld [vmem:[%s410 + $0xb8] sm:$0x11]
        %v478 = vsel %vm427, %v385, %v477
        %479 = vst [vmem:[%s410 + $0xb8] sm:$0x11] %v478
      $region36: #{decoder_map_forward.3} parent=31 // pred_fallthru
        _
      %s480 = smul.u32 %s19, 8
      %s481 = smul.u32 %s480, 6
      %s482 = smul.addr %s481, 4
      %s483 = scalar_lea.vmem [#allocation2], %s482
      %v484 = vld [vmem:[%s483] sm:$0xff]
      %v485 = vld [vmem:[%s483 + $0x8] sm:$0xff]
      %v486 = vld [vmem:[%s483 + $0x18] sm:$0xff]
      %v487 = vld [vmem:[%s483 + $0x20] sm:$0xff]
      %v488 = vld [vmem:[%s483 + $0x30] sm:$0xff]
      %v489 = vld [vmem:[%s483 + $0x38] sm:$0xff]
      %v490 = vld [vmem:[%s483 + $0x48] sm:$0xff]
      %v491 = vld [vmem:[%s483 + $0x50] sm:$0xff]
      %v492 = vld [vmem:[%s483 + $0x60] sm:$0xff]
      %v493 = vld [vmem:[%s483 + $0x68] sm:$0xff]
      %v494 = vld [vmem:[%s483 + $0x78] sm:$0xff]
      %v495 = vld [vmem:[%s483 + $0x80] sm:$0xff]
      %v496 = vld [vmem:[%s483 + $0x90] sm:$0xff]
      %v497 = vld [vmem:[%s483 + $0x98] sm:$0xff]
      %v498 = vld [vmem:[%s483 + $0xa8] sm:$0xff]
      %v499 = vld [vmem:[%s483 + $0xb0] sm:$0xff]
      %v500 = vld [vmem:[%s1] sm:$0xff]
      %v501 = vld [vmem:[%s1 + $0x8] sm:$0xff]
      %v502 = vld [vmem:[%s1 + $0x10] sm:$0xff]
      %v503 = vld [vmem:[%s1 + $0x18] sm:$0xff]
      %v504 = vld [vmem:[%s1 + $0x20] sm:$0xff]
      %v505 = vld [vmem:[%s1 + $0x28] sm:$0xff]
      %v506 = vld [vmem:[%s1 + $0x30] sm:$0xff]
      %v507 = vld [vmem:[%s1 + $0x38] sm:$0xff]
      %v508 = vld [vmem:[%s1 + $0x40] sm:$0xff]
      %v509 = vld [vmem:[%s1 + $0x48] sm:$0xff]
      %v510 = vld [vmem:[%s1 + $0x50] sm:$0xff]
      %v511 = vld [vmem:[%s1 + $0x58] sm:$0xff]
      %v512 = vld [vmem:[%s1 + $0x60] sm:$0xff]
      %v513 = vld [vmem:[%s1 + $0x68] sm:$0xff]
      %v514 = vld [vmem:[%s1 + $0x70] sm:$0xff]
      %v515 = vld [vmem:[%s1 + $0x78] sm:$0xff]
      %v516 = vld [vmem:[%s1 + $0x80] sm:$0xff]
      %v517 = vld [vmem:[%s1 + $0x88] sm:$0xff]
      %v518 = vld [vmem:[%s1 + $0x90] sm:$0xff]
      %v519 = vld [vmem:[%s1 + $0x98] sm:$0xff]
      %v520 = vld [vmem:[%s1 + $0xa0] sm:$0xff]
      %v521 = vld [vmem:[%s1 + $0xa8] sm:$0xff]
      %v522 = vld [vmem:[%s1 + $0xb0] sm:$0xff]
      %v523 = vld [vmem:[%s1 + $0xb8] sm:$0xff]
      %v524 = vld [vmem:[%s1 + $0xc0] sm:$0xff]
      %v525 = vld [vmem:[%s1 + $0xc8] sm:$0xff]
      %v526 = vld [vmem:[%s1 + $0xd0] sm:$0xff]
      %v527 = vld [vmem:[%s1 + $0xd8] sm:$0xff]
      %v528 = vld [vmem:[%s1 + $0xe0] sm:$0xff]
      %v529 = vld [vmem:[%s1 + $0xe8] sm:$0xff]
      %v530 = vld [vmem:[%s1 + $0xf0] sm:$0xff]
      %v531 = vld [vmem:[%s1 + $0xf8] sm:$0xff]
      %v532 = vld [vmem:[%s483 + $0x10] sm:$0x11]
      %v533 = vld [vmem:[%s483 + $0x28] sm:$0x11]
      %v534 = vld [vmem:[%s483 + $0x40] sm:$0x11]
      %v535 = vld [vmem:[%s483 + $0x58] sm:$0x11]
      %v536 = vld [vmem:[%s483 + $0x70] sm:$0x11]
      %v537 = vld [vmem:[%s483 + $0x88] sm:$0x11]
      %v538 = vld [vmem:[%s483 + $0xa0] sm:$0x11]
      %v539 = vld [vmem:[%s483 + $0xb8] sm:$0x11]
      %vm540 = vsmask.f32 3328
      %vm541 = vsmask.f32 7440
      %vm542 = vmor %vm540, %vm541
      %v544 = vshrl.u32 %v484, 16
      %v546 = vrot.slane %v544, 4
      %v547 = vshll.u32 %v484, 16
      %v549 = vrot.slane %v547, 5
      %v550 = vor.u32 %v546, %v549
      %v551 = vrot.slane %v550, 4
      %v553 = vshll.u32 %v485, 16
      %v555 = vrot.slane %v553, 5
      %v556 = vsel %vm542, %v551, %v555
      %v557 = vshrl.u32 %v485, 16
      %v559 = vrot.slane %v557, 4
      %v560 = vor.u32 %v559, %v555
      %v561 = vrot.slane %v560, 4
      %v563 = vshll.u32 %v532, 16
      %v565 = vrot.slane %v563, 5
      %v566 = vsel %vm542, %v561, %v565
      %v568 = vshrl.u32 %v486, 16
      %v570 = vrot.slane %v568, 4
      %v571 = vshll.u32 %v486, 16
      %v573 = vrot.slane %v571, 5
      %v574 = vor.u32 %v570, %v573
      %v575 = vrot.slane %v574, 4
      %v577 = vshll.u32 %v487, 16
      %v579 = vrot.slane %v577, 5
      %v580 = vsel %vm542, %v575, %v579
      %v581 = vshrl.u32 %v487, 16
      %v583 = vrot.slane %v581, 4
      %v584 = vor.u32 %v583, %v579
      %v585 = vrot.slane %v584, 4
      %v587 = vshll.u32 %v533, 16
      %v589 = vrot.slane %v587, 5
      %v590 = vsel %vm542, %v585, %v589
      %v592 = vshrl.u32 %v488, 16
      %v594 = vrot.slane %v592, 4
      %v595 = vshll.u32 %v488, 16
      %v597 = vrot.slane %v595, 5
      %v598 = vor.u32 %v594, %v597
      %v599 = vrot.slane %v598, 4
      %v601 = vshll.u32 %v489, 16
      %v603 = vrot.slane %v601, 5
      %v604 = vsel %vm542, %v599, %v603
      %v605 = vshrl.u32 %v489, 16
      %v607 = vrot.slane %v605, 4
      %v608 = vor.u32 %v607, %v603
      %v609 = vrot.slane %v608, 4
      %v611 = vshll.u32 %v534, 16
      %v613 = vrot.slane %v611, 5
      %v614 = vsel %vm542, %v609, %v613
      %v616 = vshrl.u32 %v490, 16
      %v618 = vrot.slane %v616, 4
      %v619 = vshll.u32 %v490, 16
      %v621 = vrot.slane %v619, 5
      %v622 = vor.u32 %v618, %v621
      %v623 = vrot.slane %v622, 4
      %v625 = vshll.u32 %v491, 16
      %v627 = vrot.slane %v625, 5
      %v628 = vsel %vm542, %v623, %v627
      %v629 = vshrl.u32 %v491, 16
      %v631 = vrot.slane %v629, 4
      %v632 = vor.u32 %v631, %v627
      %v633 = vrot.slane %v632, 4
      %v635 = vshll.u32 %v535, 16
      %v637 = vrot.slane %v635, 5
      %v638 = vsel %vm542, %v633, %v637
      %v640 = vshrl.u32 %v492, 16
      %v642 = vrot.slane %v640, 4
      %v643 = vshll.u32 %v492, 16
      %v645 = vrot.slane %v643, 5
      %v646 = vor.u32 %v642, %v645
      %v647 = vrot.slane %v646, 4
      %v649 = vshll.u32 %v493, 16
      %v651 = vrot.slane %v649, 5
      %v652 = vsel %vm542, %v647, %v651
      %v653 = vshrl.u32 %v493, 16
      %v655 = vrot.slane %v653, 4
      %v656 = vor.u32 %v655, %v651
      %v657 = vrot.slane %v656, 4
      %v659 = vshll.u32 %v536, 16
      %v661 = vrot.slane %v659, 5
      %v662 = vsel %vm542, %v657, %v661
      %v664 = vshrl.u32 %v494, 16
      %v666 = vrot.slane %v664, 4
      %v667 = vshll.u32 %v494, 16
      %v669 = vrot.slane %v667, 5
      %v670 = vor.u32 %v666, %v669
      %v671 = vrot.slane %v670, 4
      %v673 = vshll.u32 %v495, 16
      %v675 = vrot.slane %v673, 5
      %v676 = vsel %vm542, %v671, %v675
      %v677 = vshrl.u32 %v495, 16
      %v679 = vrot.slane %v677, 4
      %v680 = vor.u32 %v679, %v675
      %v681 = vrot.slane %v680, 4
      %v683 = vshll.u32 %v537, 16
      %v685 = vrot.slane %v683, 5
      %v686 = vsel %vm542, %v681, %v685
      %v688 = vshrl.u32 %v496, 16
      %v690 = vrot.slane %v688, 4
      %v691 = vshll.u32 %v496, 16
      %v693 = vrot.slane %v691, 5
      %v694 = vor.u32 %v690, %v693
      %v695 = vrot.slane %v694, 4
      %v697 = vshll.u32 %v497, 16
      %v699 = vrot.slane %v697, 5
      %v700 = vsel %vm542, %v695, %v699
      %v701 = vshrl.u32 %v497, 16
      %v703 = vrot.slane %v701, 4
      %v704 = vor.u32 %v703, %v699
      %v705 = vrot.slane %v704, 4
      %v707 = vshll.u32 %v538, 16
      %v709 = vrot.slane %v707, 5
      %v710 = vsel %vm542, %v705, %v709
      %v712 = vshrl.u32 %v498, 16
      %v714 = vrot.slane %v712, 4
      %v715 = vshll.u32 %v498, 16
      %v717 = vrot.slane %v715, 5
      %v718 = vor.u32 %v714, %v717
      %v719 = vrot.slane %v718, 4
      %v721 = vshll.u32 %v499, 16
      %v723 = vrot.slane %v721, 5
      %v724 = vsel %vm542, %v719, %v723
      %v725 = vshrl.u32 %v499, 16
      %v727 = vrot.slane %v725, 4
      %v728 = vor.u32 %v727, %v723
      %v729 = vrot.slane %v728, 4
      %v731 = vshll.u32 %v539, 16
      %v733 = vrot.slane %v731, 5
      %v734 = vsel %vm542, %v729, %v733
      %s735 = scalar_lea.vmem %s1, 256
      %v736 = vld [vmem:[%s735] sm:$0xff]
      %v737 = vld [vmem:[%s735 + $0x8] sm:$0xff]
      %v738 = vld [vmem:[%s735 + $0x10] sm:$0xff]
      %v739 = vld [vmem:[%s735 + $0x18] sm:$0xff]
      %v740 = vld [vmem:[%s735 + $0x20] sm:$0xff]
      %v741 = vld [vmem:[%s735 + $0x28] sm:$0xff]
      %v742 = vld [vmem:[%s735 + $0x30] sm:$0xff]
      %v743 = vld [vmem:[%s735 + $0x38] sm:$0xff]
      %v744 = vld [vmem:[%s735 + $0x40] sm:$0xff]
      %v745 = vld [vmem:[%s735 + $0x48] sm:$0xff]
      %v746 = vld [vmem:[%s735 + $0x50] sm:$0xff]
      %v747 = vld [vmem:[%s735 + $0x58] sm:$0xff]
      %v748 = vld [vmem:[%s735 + $0x60] sm:$0xff]
      %v749 = vld [vmem:[%s735 + $0x68] sm:$0xff]
      %v750 = vld [vmem:[%s735 + $0x70] sm:$0xff]
      %v751 = vld [vmem:[%s735 + $0x78] sm:$0xff]
      %v752 = vld [vmem:[%s735 + $0x80] sm:$0xff]
      %v753 = vld [vmem:[%s735 + $0x88] sm:$0xff]
      %v754 = vld [vmem:[%s735 + $0x90] sm:$0xff]
      %v755 = vld [vmem:[%s735 + $0x98] sm:$0xff]
      %v756 = vld [vmem:[%s735 + $0xa0] sm:$0xff]
      %v757 = vld [vmem:[%s735 + $0xa8] sm:$0xff]
      %v758 = vld [vmem:[%s735 + $0xb0] sm:$0xff]
      %v759 = vld [vmem:[%s735 + $0xb8] sm:$0xff]
      %v760 = vld [vmem:[%s735 + $0xc0] sm:$0xff]
      %v761 = vld [vmem:[%s735 + $0xc8] sm:$0xff]
      %v762 = vld [vmem:[%s735 + $0xd0] sm:$0xff]
      %v763 = vld [vmem:[%s735 + $0xd8] sm:$0xff]
      %v764 = vld [vmem:[%s735 + $0xe0] sm:$0xff]
      %v765 = vld [vmem:[%s735 + $0xe8] sm:$0xff]
      %v766 = vld [vmem:[%s735 + $0xf0] sm:$0xff]
      %v767 = vld [vmem:[%s735 + $0xf8] sm:$0xff]
      %v768 = vunpack.c.l.b16 %v556
      %v769 = vunpack.c.h.b16 %v556
      %v770 = vunpack.c.l.b16 %v566
      %v771 = vunpack.c.h.b16 %v566
      %v772 = vunpack.c.l.b16 %v580
      %v773 = vunpack.c.h.b16 %v580
      %v774 = vunpack.c.l.b16 %v590
      %v775 = vunpack.c.h.b16 %v590
      %v776 = vunpack.c.l.b16 %v604
      %v777 = vunpack.c.h.b16 %v604
      %v778 = vunpack.c.l.b16 %v614
      %v779 = vunpack.c.h.b16 %v614
      %v780 = vunpack.c.l.b16 %v628
      %v781 = vunpack.c.h.b16 %v628
      %v782 = vunpack.c.l.b16 %v638
      %v783 = vunpack.c.h.b16 %v638
      %v784 = vunpack.c.l.b16 %v652
      %v785 = vunpack.c.h.b16 %v652
      %v786 = vunpack.c.l.b16 %v662
      %v787 = vunpack.c.h.b16 %v662
      %v788 = vunpack.c.l.b16 %v676
      %v789 = vunpack.c.h.b16 %v676
      %v790 = vunpack.c.l.b16 %v686
      %v791 = vunpack.c.h.b16 %v686
      %v792 = vunpack.c.l.b16 %v700
      %v793 = vunpack.c.h.b16 %v700
      %v794 = vunpack.c.l.b16 %v710
      %v795 = vunpack.c.h.b16 %v710
      %v796 = vunpack.c.l.b16 %v724
      %v797 = vunpack.c.h.b16 %v724
      %v798 = vunpack.c.l.b16 %v734
      %v799 = vunpack.c.h.b16 %v734
      %v800 = vpack.c.b16 %v770, %v768
      %v801 = vpack.c.b16 %v771, %v769
      %v802 = vpack.c.b16 %v774, %v772
      %v803 = vpack.c.b16 %v775, %v773
      %v804 = vpack.c.b16 %v778, %v776
      %v805 = vpack.c.b16 %v779, %v777
      %v806 = vpack.c.b16 %v782, %v780
      %v807 = vpack.c.b16 %v783, %v781
      %v808 = vpack.c.b16 %v786, %v784
      %v809 = vpack.c.b16 %v787, %v785
      %v810 = vpack.c.b16 %v790, %v788
      %v811 = vpack.c.b16 %v791, %v789
      %v812 = vpack.c.b16 %v794, %v792
      %v813 = vpack.c.b16 %v795, %v793
      %v814 = vpack.c.b16 %v798, %v796
      %v815 = vpack.c.b16 %v799, %v797
      %v864 = vunpack.c.l.b16 %v736
      %v865 = vunpack.c.h.b16 %v736
      %v866 = vunpack.c.l.b16 %v737
      %v867 = vunpack.c.h.b16 %v737
      %v868 = vunpack.c.l.b16 %v738
      %v869 = vunpack.c.h.b16 %v738
      %v870 = vunpack.c.l.b16 %v739
      %v871 = vunpack.c.h.b16 %v739
      %v872 = vunpack.c.l.b16 %v740
      %v873 = vunpack.c.h.b16 %v740
      %v874 = vunpack.c.l.b16 %v741
      %v875 = vunpack.c.h.b16 %v741
      %v876 = vunpack.c.l.b16 %v742
      %v877 = vunpack.c.h.b16 %v742
      %v878 = vunpack.c.l.b16 %v743
      %v879 = vunpack.c.h.b16 %v743
      %v880 = vunpack.c.l.b16 %v744
      %v881 = vunpack.c.h.b16 %v744
      %v882 = vunpack.c.l.b16 %v745
      %v883 = vunpack.c.h.b16 %v745
      %v884 = vunpack.c.l.b16 %v746
      %v885 = vunpack.c.h.b16 %v746
      %v886 = vunpack.c.l.b16 %v747
      %v887 = vunpack.c.h.b16 %v747
      %v888 = vunpack.c.l.b16 %v748
      %v889 = vunpack.c.h.b16 %v748
      %v890 = vunpack.c.l.b16 %v749
      %v891 = vunpack.c.h.b16 %v749
      %v892 = vunpack.c.l.b16 %v750
      %v893 = vunpack.c.h.b16 %v750
      %v894 = vunpack.c.l.b16 %v751
      %v895 = vunpack.c.h.b16 %v751
      %v896 = vunpack.c.l.b16 %v752
      %v897 = vunpack.c.h.b16 %v752
      %v898 = vunpack.c.l.b16 %v753
      %v899 = vunpack.c.h.b16 %v753
      %v900 = vunpack.c.l.b16 %v754
      %v901 = vunpack.c.h.b16 %v754
      %v902 = vunpack.c.l.b16 %v755
      %v903 = vunpack.c.h.b16 %v755
      %v904 = vunpack.c.l.b16 %v756
      %v905 = vunpack.c.h.b16 %v756
      %v906 = vunpack.c.l.b16 %v757
      %v907 = vunpack.c.h.b16 %v757
      %v908 = vunpack.c.l.b16 %v758
      %v909 = vunpack.c.h.b16 %v758
      %v910 = vunpack.c.l.b16 %v759
      %v911 = vunpack.c.h.b16 %v759
      %v912 = vunpack.c.l.b16 %v760
      %v913 = vunpack.c.h.b16 %v760
      %v914 = vunpack.c.l.b16 %v761
      %v915 = vunpack.c.h.b16 %v761
      %v916 = vunpack.c.l.b16 %v762
      %v917 = vunpack.c.h.b16 %v762
      %v918 = vunpack.c.l.b16 %v763
      %v919 = vunpack.c.h.b16 %v763
      %v920 = vunpack.c.l.b16 %v764
      %v921 = vunpack.c.h.b16 %v764
      %v922 = vunpack.c.l.b16 %v765
      %v923 = vunpack.c.h.b16 %v765
      %v924 = vunpack.c.l.b16 %v766
      %v925 = vunpack.c.h.b16 %v766
      %v926 = vunpack.c.l.b16 %v767
      %v927 = vunpack.c.h.b16 %v767
      %v928 = vpack.c.b16 %v866, %v864
      %v929 = vpack.c.b16 %v867, %v865
      %v930 = vpack.c.b16 %v870, %v868
      %v931 = vpack.c.b16 %v871, %v869
      %v932 = vpack.c.b16 %v874, %v872
      %v933 = vpack.c.b16 %v875, %v873
      %v934 = vpack.c.b16 %v878, %v876
      %v935 = vpack.c.b16 %v879, %v877
      %v936 = vpack.c.b16 %v882, %v880
      %v937 = vpack.c.b16 %v883, %v881
      %v938 = vpack.c.b16 %v886, %v884
      %v939 = vpack.c.b16 %v887, %v885
      %v940 = vpack.c.b16 %v890, %v888
      %v941 = vpack.c.b16 %v891, %v889
      %v942 = vpack.c.b16 %v894, %v892
      %v943 = vpack.c.b16 %v895, %v893
      %v944 = vpack.c.b16 %v898, %v896
      %v945 = vpack.c.b16 %v899, %v897
      %v946 = vpack.c.b16 %v902, %v900
      %v947 = vpack.c.b16 %v903, %v901
      %v948 = vpack.c.b16 %v906, %v904
      %v949 = vpack.c.b16 %v907, %v905
      %v950 = vpack.c.b16 %v910, %v908
      %v951 = vpack.c.b16 %v911, %v909
      %v952 = vpack.c.b16 %v914, %v912
      %v953 = vpack.c.b16 %v915, %v913
      %v954 = vpack.c.b16 %v918, %v916
      %v955 = vpack.c.b16 %v919, %v917
      %v956 = vpack.c.b16 %v922, %v920
      %v957 = vpack.c.b16 %v923, %v921
      %v958 = vpack.c.b16 %v926, %v924
      %v959 = vpack.c.b16 %v927, %v925
      %992 = vmatpush.bf16.msra.mxu0 %v942
      %993 = vmatpush.bf16.msra.mxu0 %v940
      %994 = vmatpush.bf16.msra.mxu0 %v938
      %995 = vmatpush.bf16.msra.mxu0 %v936
      %996 = vmatpush.bf16.msra.mxu0 %v934
      %997 = vmatpush.bf16.msra.mxu0 %v932
      %998 = vmatpush.bf16.msra.mxu0 %v930
      %999 = vmatpush.bf16.msra.mxu0 %v928
      %1000 = vmatmul.bf16.gmra.mxu0 %v800
      %v1001 = vpop.f32.mrf.mxu0
      %v1002 = vadd.f32 0.0, %v1001
      %v1003 = vpop.f32.mrf.mxu0
      %v1004 = vadd.f32 0.0, %v1003
      %1005 = vmatmul.bf16.gmra.mxu0 %v802
      %v1006 = vpop.f32.mrf.mxu0
      %v1007 = vadd.f32 0.0, %v1006
      %v1008 = vpop.f32.mrf.mxu0
      %v1009 = vadd.f32 0.0, %v1008
      %1010 = vmatmul.bf16.gmra.mxu0 %v804
      %v1011 = vpop.f32.mrf.mxu0
      %v1012 = vadd.f32 0.0, %v1011
      %v1013 = vpop.f32.mrf.mxu0
      %v1014 = vadd.f32 0.0, %v1013
      %1015 = vmatmul.bf16.gmra.mxu0 %v806
      %v1016 = vpop.f32.mrf.mxu0
      %v1017 = vadd.f32 0.0, %v1016
      %v1018 = vpop.f32.mrf.mxu0
      %v1019 = vadd.f32 0.0, %v1018
      %1020 = vmatmul.bf16.gmra.mxu0 %v808
      %v1021 = vpop.f32.mrf.mxu0
      %v1022 = vadd.f32 0.0, %v1021
      %v1023 = vpop.f32.mrf.mxu0
      %v1024 = vadd.f32 0.0, %v1023
      %1025 = vmatmul.bf16.gmra.mxu0 %v810
      %v1026 = vpop.f32.mrf.mxu0
      %v1027 = vadd.f32 0.0, %v1026
      %v1028 = vpop.f32.mrf.mxu0
      %v1029 = vadd.f32 0.0, %v1028
      %1030 = vmatmul.bf16.gmra.mxu0 %v812
      %v1031 = vpop.f32.mrf.mxu0
      %v1032 = vadd.f32 0.0, %v1031
      %v1033 = vpop.f32.mrf.mxu0
      %v1034 = vadd.f32 0.0, %v1033
      %1035 = vmatmul.bf16.gmra.mxu0 %v814
      %v1036 = vpop.f32.mrf.mxu0
      %v1037 = vadd.f32 0.0, %v1036
      %v1038 = vpop.f32.mrf.mxu0
      %v1039 = vadd.f32 0.0, %v1038
      %1040 = vdwg.mxu0
      %1041 = vmatpush.bf16.msra.mxu0 %v958
      %1042 = vmatpush.bf16.msra.mxu0 %v956
      %1043 = vmatpush.bf16.msra.mxu0 %v954
      %1044 = vmatpush.bf16.msra.mxu0 %v952
      %1045 = vmatpush.bf16.msra.mxu0 %v950
      %1046 = vmatpush.bf16.msra.mxu0 %v948
      %1047 = vmatpush.bf16.msra.mxu0 %v946
      %1048 = vmatpush.bf16.msra.mxu0 %v944
      %1049 = vmatmul.bf16.gmra.mxu0 %v801
      %v1050 = vpop.f32.mrf.mxu0
      %v1051 = vadd.f32 %v1002, %v1050
      %v1052 = vpop.f32.mrf.mxu0
      %v1053 = vadd.f32 %v1004, %v1052
      %1054 = vmatmul.bf16.gmra.mxu0 %v803
      %v1055 = vpop.f32.mrf.mxu0
      %v1056 = vadd.f32 %v1007, %v1055
      %v1057 = vpop.f32.mrf.mxu0
      %v1058 = vadd.f32 %v1009, %v1057
      %1059 = vmatmul.bf16.gmra.mxu0 %v805
      %v1060 = vpop.f32.mrf.mxu0
      %v1061 = vadd.f32 %v1012, %v1060
      %v1062 = vpop.f32.mrf.mxu0
      %v1063 = vadd.f32 %v1014, %v1062
      %1064 = vmatmul.bf16.gmra.mxu0 %v807
      %v1065 = vpop.f32.mrf.mxu0
      %v1066 = vadd.f32 %v1017, %v1065
      %v1067 = vpop.f32.mrf.mxu0
      %v1068 = vadd.f32 %v1019, %v1067
      %1069 = vmatmul.bf16.gmra.mxu0 %v809
      %v1070 = vpop.f32.mrf.mxu0
      %v1071 = vadd.f32 %v1022, %v1070
      %v1072 = vpop.f32.mrf.mxu0
      %v1073 = vadd.f32 %v1024, %v1072
      %1074 = vmatmul.bf16.gmra.mxu0 %v811
      %v1075 = vpop.f32.mrf.mxu0
      %v1076 = vadd.f32 %v1027, %v1075
      %v1077 = vpop.f32.mrf.mxu0
      %v1078 = vadd.f32 %v1029, %v1077
      %1079 = vmatmul.bf16.gmra.mxu0 %v813
      %v1080 = vpop.f32.mrf.mxu0
      %v1081 = vadd.f32 %v1032, %v1080
      %v1082 = vpop.f32.mrf.mxu0
      %v1083 = vadd.f32 %v1034, %v1082
      %1084 = vmatmul.bf16.gmra.mxu0 %v815
      %v1085 = vpop.f32.mrf.mxu0
      %v1086 = vadd.f32 %v1037, %v1085
      %v1087 = vpop.f32.mrf.mxu0
      %v1088 = vadd.f32 %v1039, %v1087
      %1089 = vdwg.mxu0
      %1090 = vmatpush.bf16.msra.mxu0 %v943
      %1091 = vmatpush.bf16.msra.mxu0 %v941
      %1092 = vmatpush.bf16.msra.mxu0 %v939
      %1093 = vmatpush.bf16.msra.mxu0 %v937
      %1094 = vmatpush.bf16.msra.mxu0 %v935
      %1095 = vmatpush.bf16.msra.mxu0 %v933
      %1096 = vmatpush.bf16.msra.mxu0 %v931
      %1097 = vmatpush.bf16.msra.mxu0 %v929
      %1098 = vmatmul.bf16.gmra.mxu0 %v800
      %v1099 = vpop.f32.mrf.mxu0
      %v1100 = vadd.f32 0.0, %v1099
      %v1101 = vpop.f32.mrf.mxu0
      %v1102 = vadd.f32 0.0, %v1101
      %1103 = vmatmul.bf16.gmra.mxu0 %v802
      %v1104 = vpop.f32.mrf.mxu0
      %v1105 = vadd.f32 0.0, %v1104
      %v1106 = vpop.f32.mrf.mxu0
      %v1107 = vadd.f32 0.0, %v1106
      %1108 = vmatmul.bf16.gmra.mxu0 %v804
      %v1109 = vpop.f32.mrf.mxu0
      %v1110 = vadd.f32 0.0, %v1109
      %v1111 = vpop.f32.mrf.mxu0
      %v1112 = vadd.f32 0.0, %v1111
      %1113 = vmatmul.bf16.gmra.mxu0 %v806
      %v1114 = vpop.f32.mrf.mxu0
      %v1115 = vadd.f32 0.0, %v1114
      %v1116 = vpop.f32.mrf.mxu0
      %v1117 = vadd.f32 0.0, %v1116
      %1118 = vmatmul.bf16.gmra.mxu0 %v808
      %v1119 = vpop.f32.mrf.mxu0
      %v1120 = vadd.f32 0.0, %v1119
      %v1121 = vpop.f32.mrf.mxu0
      %v1122 = vadd.f32 0.0, %v1121
      %1123 = vmatmul.bf16.gmra.mxu0 %v810
      %v1124 = vpop.f32.mrf.mxu0
      %v1125 = vadd.f32 0.0, %v1124
      %v1126 = vpop.f32.mrf.mxu0
      %v1127 = vadd.f32 0.0, %v1126
      %1128 = vmatmul.bf16.gmra.mxu0 %v812
      %v1129 = vpop.f32.mrf.mxu0
      %v1130 = vadd.f32 0.0, %v1129
      %v1131 = vpop.f32.mrf.mxu0
      %v1132 = vadd.f32 0.0, %v1131
      %1133 = vmatmul.bf16.gmra.mxu0 %v814
      %v1134 = vpop.f32.mrf.mxu0
      %v1135 = vadd.f32 0.0, %v1134
      %v1136 = vpop.f32.mrf.mxu0
      %v1137 = vadd.f32 0.0, %v1136
      %1138 = vdwg.mxu0
      %1139 = vmatpush.bf16.msra.mxu0 %v959
      %1140 = vmatpush.bf16.msra.mxu0 %v957
      %1141 = vmatpush.bf16.msra.mxu0 %v955
      %1142 = vmatpush.bf16.msra.mxu0 %v953
      %1143 = vmatpush.bf16.msra.mxu0 %v951
      %1144 = vmatpush.bf16.msra.mxu0 %v949
      %1145 = vmatpush.bf16.msra.mxu0 %v947
      %1146 = vmatpush.bf16.msra.mxu0 %v945
      %1147 = vmatmul.bf16.gmra.mxu0 %v801
      %v1148 = vpop.f32.mrf.mxu0
      %v1149 = vadd.f32 %v1100, %v1148
      %v1150 = vpop.f32.mrf.mxu0
      %v1151 = vadd.f32 %v1102, %v1150
      %1152 = vmatmul.bf16.gmra.mxu0 %v803
      %v1153 = vpop.f32.mrf.mxu0
      %v1154 = vadd.f32 %v1105, %v1153
      %v1155 = vpop.f32.mrf.mxu0
      %v1156 = vadd.f32 %v1107, %v1155
      %1157 = vmatmul.bf16.gmra.mxu0 %v805
      %v1158 = vpop.f32.mrf.mxu0
      %v1159 = vadd.f32 %v1110, %v1158
      %v1160 = vpop.f32.mrf.mxu0
      %v1161 = vadd.f32 %v1112, %v1160
      %1162 = vmatmul.bf16.gmra.mxu0 %v807
      %v1163 = vpop.f32.mrf.mxu0
      %v1164 = vadd.f32 %v1115, %v1163
      %v1165 = vpop.f32.mrf.mxu0
      %v1166 = vadd.f32 %v1117, %v1165
      %1167 = vmatmul.bf16.gmra.mxu0 %v809
      %v1168 = vpop.f32.mrf.mxu0
      %v1169 = vadd.f32 %v1120, %v1168
      %v1170 = vpop.f32.mrf.mxu0
      %v1171 = vadd.f32 %v1122, %v1170
      %1172 = vmatmul.bf16.gmra.mxu0 %v811
      %v1173 = vpop.f32.mrf.mxu0
      %v1174 = vadd.f32 %v1125, %v1173
      %v1175 = vpop.f32.mrf.mxu0
      %v1176 = vadd.f32 %v1127, %v1175
      %1177 = vmatmul.bf16.gmra.mxu0 %v813
      %v1178 = vpop.f32.mrf.mxu0
      %v1179 = vadd.f32 %v1130, %v1178
      %v1180 = vpop.f32.mrf.mxu0
      %v1181 = vadd.f32 %v1132, %v1180
      %1182 = vmatmul.bf16.gmra.mxu0 %v815
      %v1183 = vpop.f32.mrf.mxu0
      %v1184 = vadd.f32 %v1135, %v1183
      %v1185 = vpop.f32.mrf.mxu0
      %v1186 = vadd.f32 %v1137, %v1185
      %1187 = vdwg.mxu0
      %v1204 = vunpack.c.l.b16 %v484
      %v1205 = vunpack.c.h.b16 %v484
      %v1206 = vunpack.c.l.b16 %v485
      %v1207 = vunpack.c.h.b16 %v485
      %v1208 = vunpack.c.l.b16 %v486
      %v1209 = vunpack.c.h.b16 %v486
      %v1210 = vunpack.c.l.b16 %v487
      %v1211 = vunpack.c.h.b16 %v487
      %v1212 = vunpack.c.l.b16 %v488
      %v1213 = vunpack.c.h.b16 %v488
      %v1214 = vunpack.c.l.b16 %v489
      %v1215 = vunpack.c.h.b16 %v489
      %v1216 = vunpack.c.l.b16 %v490
      %v1217 = vunpack.c.h.b16 %v490
      %v1218 = vunpack.c.l.b16 %v491
      %v1219 = vunpack.c.h.b16 %v491
      %v1220 = vunpack.c.l.b16 %v492
      %v1221 = vunpack.c.h.b16 %v492
      %v1222 = vunpack.c.l.b16 %v493
      %v1223 = vunpack.c.h.b16 %v493
      %v1224 = vunpack.c.l.b16 %v494
      %v1225 = vunpack.c.h.b16 %v494
      %v1226 = vunpack.c.l.b16 %v495
      %v1227 = vunpack.c.h.b16 %v495
      %v1228 = vunpack.c.l.b16 %v496
      %v1229 = vunpack.c.h.b16 %v496
      %v1230 = vunpack.c.l.b16 %v497
      %v1231 = vunpack.c.h.b16 %v497
      %v1232 = vunpack.c.l.b16 %v498
      %v1233 = vunpack.c.h.b16 %v498
      %v1234 = vunpack.c.l.b16 %v499
      %v1235 = vunpack.c.h.b16 %v499
      %v1236 = vpack.c.b16 %v1206, %v1204
      %v1237 = vpack.c.b16 %v1207, %v1205
      %v1238 = vpack.c.b16 %v1210, %v1208
      %v1239 = vpack.c.b16 %v1211, %v1209
      %v1240 = vpack.c.b16 %v1214, %v1212
      %v1241 = vpack.c.b16 %v1215, %v1213
      %v1242 = vpack.c.b16 %v1218, %v1216
      %v1243 = vpack.c.b16 %v1219, %v1217
      %v1244 = vpack.c.b16 %v1222, %v1220
      %v1245 = vpack.c.b16 %v1223, %v1221
      %v1246 = vpack.c.b16 %v1226, %v1224
      %v1247 = vpack.c.b16 %v1227, %v1225
      %v1248 = vpack.c.b16 %v1230, %v1228
      %v1249 = vpack.c.b16 %v1231, %v1229
      %v1250 = vpack.c.b16 %v1234, %v1232
      %v1251 = vpack.c.b16 %v1235, %v1233
      %v1300 = vunpack.c.l.b16 %v500
      %v1301 = vunpack.c.h.b16 %v500
      %v1302 = vunpack.c.l.b16 %v501
      %v1303 = vunpack.c.h.b16 %v501
      %v1304 = vunpack.c.l.b16 %v502
      %v1305 = vunpack.c.h.b16 %v502
      %v1306 = vunpack.c.l.b16 %v503
      %v1307 = vunpack.c.h.b16 %v503
      %v1308 = vunpack.c.l.b16 %v504
      %v1309 = vunpack.c.h.b16 %v504
      %v1310 = vunpack.c.l.b16 %v505
      %v1311 = vunpack.c.h.b16 %v505
      %v1312 = vunpack.c.l.b16 %v506
      %v1313 = vunpack.c.h.b16 %v506
      %v1314 = vunpack.c.l.b16 %v507
      %v1315 = vunpack.c.h.b16 %v507
      %v1316 = vunpack.c.l.b16 %v508
      %v1317 = vunpack.c.h.b16 %v508
      %v1318 = vunpack.c.l.b16 %v509
      %v1319 = vunpack.c.h.b16 %v509
      %v1320 = vunpack.c.l.b16 %v510
      %v1321 = vunpack.c.h.b16 %v510
      %v1322 = vunpack.c.l.b16 %v511
      %v1323 = vunpack.c.h.b16 %v511
      %v1324 = vunpack.c.l.b16 %v512
      %v1325 = vunpack.c.h.b16 %v512
      %v1326 = vunpack.c.l.b16 %v513
      %v1327 = vunpack.c.h.b16 %v513
      %v1328 = vunpack.c.l.b16 %v514
      %v1329 = vunpack.c.h.b16 %v514
      %v1330 = vunpack.c.l.b16 %v515
      %v1331 = vunpack.c.h.b16 %v515
      %v1332 = vunpack.c.l.b16 %v516
      %v1333 = vunpack.c.h.b16 %v516
      %v1334 = vunpack.c.l.b16 %v517
      %v1335 = vunpack.c.h.b16 %v517
      %v1336 = vunpack.c.l.b16 %v518
      %v1337 = vunpack.c.h.b16 %v518
      %v1338 = vunpack.c.l.b16 %v519
      %v1339 = vunpack.c.h.b16 %v519
      %v1340 = vunpack.c.l.b16 %v520
      %v1341 = vunpack.c.h.b16 %v520
      %v1342 = vunpack.c.l.b16 %v521
      %v1343 = vunpack.c.h.b16 %v521
      %v1344 = vunpack.c.l.b16 %v522
      %v1345 = vunpack.c.h.b16 %v522
      %v1346 = vunpack.c.l.b16 %v523
      %v1347 = vunpack.c.h.b16 %v523
      %v1348 = vunpack.c.l.b16 %v524
      %v1349 = vunpack.c.h.b16 %v524
      %v1350 = vunpack.c.l.b16 %v525
      %v1351 = vunpack.c.h.b16 %v525
      %v1352 = vunpack.c.l.b16 %v526
      %v1353 = vunpack.c.h.b16 %v526
      %v1354 = vunpack.c.l.b16 %v527
      %v1355 = vunpack.c.h.b16 %v527
      %v1356 = vunpack.c.l.b16 %v528
      %v1357 = vunpack.c.h.b16 %v528
      %v1358 = vunpack.c.l.b16 %v529
      %v1359 = vunpack.c.h.b16 %v529
      %v1360 = vunpack.c.l.b16 %v530
      %v1361 = vunpack.c.h.b16 %v530
      %v1362 = vunpack.c.l.b16 %v531
      %v1363 = vunpack.c.h.b16 %v531
      %v1364 = vpack.c.b16 %v1302, %v1300
      %v1365 = vpack.c.b16 %v1303, %v1301
      %v1366 = vpack.c.b16 %v1306, %v1304
      %v1367 = vpack.c.b16 %v1307, %v1305
      %v1368 = vpack.c.b16 %v1310, %v1308
      %v1369 = vpack.c.b16 %v1311, %v1309
      %v1370 = vpack.c.b16 %v1314, %v1312
      %v1371 = vpack.c.b16 %v1315, %v1313
      %v1372 = vpack.c.b16 %v1318, %v1316
      %v1373 = vpack.c.b16 %v1319, %v1317
      %v1374 = vpack.c.b16 %v1322, %v1320
      %v1375 = vpack.c.b16 %v1323, %v1321
      %v1376 = vpack.c.b16 %v1326, %v1324
      %v1377 = vpack.c.b16 %v1327, %v1325
      %v1378 = vpack.c.b16 %v1330, %v1328
      %v1379 = vpack.c.b16 %v1331, %v1329
      %v1380 = vpack.c.b16 %v1334, %v1332
      %v1381 = vpack.c.b16 %v1335, %v1333
      %v1382 = vpack.c.b16 %v1338, %v1336
      %v1383 = vpack.c.b16 %v1339, %v1337
      %v1384 = vpack.c.b16 %v1342, %v1340
      %v1385 = vpack.c.b16 %v1343, %v1341
      %v1386 = vpack.c.b16 %v1346, %v1344
      %v1387 = vpack.c.b16 %v1347, %v1345
      %v1388 = vpack.c.b16 %v1350, %v1348
      %v1389 = vpack.c.b16 %v1351, %v1349
      %v1390 = vpack.c.b16 %v1354, %v1352
      %v1391 = vpack.c.b16 %v1355, %v1353
      %v1392 = vpack.c.b16 %v1358, %v1356
      %v1393 = vpack.c.b16 %v1359, %v1357
      %v1394 = vpack.c.b16 %v1362, %v1360
      %v1395 = vpack.c.b16 %v1363, %v1361
      %1428 = vmatpush.bf16.msra.mxu0 %v1378
      %1429 = vmatpush.bf16.msra.mxu0 %v1376
      %1430 = vmatpush.bf16.msra.mxu0 %v1374
      %1431 = vmatpush.bf16.msra.mxu0 %v1372
      %1432 = vmatpush.bf16.msra.mxu0 %v1370
      %1433 = vmatpush.bf16.msra.mxu0 %v1368
      %1434 = vmatpush.bf16.msra.mxu0 %v1366
      %1435 = vmatpush.bf16.msra.mxu0 %v1364
      %1436 = vmatmul.bf16.gmra.mxu0 %v1236
      %v1437 = vpop.f32.mrf.mxu0
      %v1438 = vadd.f32 %v1051, %v1437
      %v1439 = vpop.f32.mrf.mxu0
      %v1440 = vadd.f32 %v1053, %v1439
      %1441 = vmatmul.bf16.gmra.mxu0 %v1238
      %v1442 = vpop.f32.mrf.mxu0
      %v1443 = vadd.f32 %v1056, %v1442
      %v1444 = vpop.f32.mrf.mxu0
      %v1445 = vadd.f32 %v1058, %v1444
      %1446 = vmatmul.bf16.gmra.mxu0 %v1240
      %v1447 = vpop.f32.mrf.mxu0
      %v1448 = vadd.f32 %v1061, %v1447
      %v1449 = vpop.f32.mrf.mxu0
      %v1450 = vadd.f32 %v1063, %v1449
      %1451 = vmatmul.bf16.gmra.mxu0 %v1242
      %v1452 = vpop.f32.mrf.mxu0
      %v1453 = vadd.f32 %v1066, %v1452
      %v1454 = vpop.f32.mrf.mxu0
      %v1455 = vadd.f32 %v1068, %v1454
      %1456 = vmatmul.bf16.gmra.mxu0 %v1244
      %v1457 = vpop.f32.mrf.mxu0
      %v1458 = vadd.f32 %v1071, %v1457
      %v1459 = vpop.f32.mrf.mxu0
      %v1460 = vadd.f32 %v1073, %v1459
      %1461 = vmatmul.bf16.gmra.mxu0 %v1246
      %v1462 = vpop.f32.mrf.mxu0
      %v1463 = vadd.f32 %v1076, %v1462
      %v1464 = vpop.f32.mrf.mxu0
      %v1465 = vadd.f32 %v1078, %v1464
      %1466 = vmatmul.bf16.gmra.mxu0 %v1248
      %v1467 = vpop.f32.mrf.mxu0
      %v1468 = vadd.f32 %v1081, %v1467
      %v1469 = vpop.f32.mrf.mxu0
      %v1470 = vadd.f32 %v1083, %v1469
      %1471 = vmatmul.bf16.gmra.mxu0 %v1250
      %v1472 = vpop.f32.mrf.mxu0
      %v1473 = vadd.f32 %v1086, %v1472
      %v1474 = vpop.f32.mrf.mxu0
      %v1475 = vadd.f32 %v1088, %v1474
      %1476 = vdwg.mxu0
      %1477 = vmatpush.bf16.msra.mxu0 %v1394
      %1478 = vmatpush.bf16.msra.mxu0 %v1392
      %1479 = vmatpush.bf16.msra.mxu0 %v1390
      %1480 = vmatpush.bf16.msra.mxu0 %v1388
      %1481 = vmatpush.bf16.msra.mxu0 %v1386
      %1482 = vmatpush.bf16.msra.mxu0 %v1384
      %1483 = vmatpush.bf16.msra.mxu0 %v1382
      %1484 = vmatpush.bf16.msra.mxu0 %v1380
      %1485 = vmatmul.bf16.gmra.mxu0 %v1237
      %v1486 = vpop.f32.mrf.mxu0
      %v1487 = vadd.f32 %v1438, %v1486
      %v1488 = vpop.f32.mrf.mxu0
      %v1489 = vadd.f32 %v1440, %v1488
      %1490 = vmatmul.bf16.gmra.mxu0 %v1239
      %v1491 = vpop.f32.mrf.mxu0
      %v1492 = vadd.f32 %v1443, %v1491
      %v1493 = vpop.f32.mrf.mxu0
      %v1494 = vadd.f32 %v1445, %v1493
      %1495 = vmatmul.bf16.gmra.mxu0 %v1241
      %v1496 = vpop.f32.mrf.mxu0
      %v1497 = vadd.f32 %v1448, %v1496
      %v1498 = vpop.f32.mrf.mxu0
      %v1499 = vadd.f32 %v1450, %v1498
      %1500 = vmatmul.bf16.gmra.mxu0 %v1243
      %v1501 = vpop.f32.mrf.mxu0
      %v1502 = vadd.f32 %v1453, %v1501
      %v1503 = vpop.f32.mrf.mxu0
      %v1504 = vadd.f32 %v1455, %v1503
      %1505 = vmatmul.bf16.gmra.mxu0 %v1245
      %v1506 = vpop.f32.mrf.mxu0
      %v1507 = vadd.f32 %v1458, %v1506
      %v1508 = vpop.f32.mrf.mxu0
      %v1509 = vadd.f32 %v1460, %v1508
      %1510 = vmatmul.bf16.gmra.mxu0 %v1247
      %v1511 = vpop.f32.mrf.mxu0
      %v1512 = vadd.f32 %v1463, %v1511
      %v1513 = vpop.f32.mrf.mxu0
      %v1514 = vadd.f32 %v1465, %v1513
      %1515 = vmatmul.bf16.gmra.mxu0 %v1249
      %v1516 = vpop.f32.mrf.mxu0
      %v1517 = vadd.f32 %v1468, %v1516
      %v1518 = vpop.f32.mrf.mxu0
      %v1519 = vadd.f32 %v1470, %v1518
      %1520 = vmatmul.bf16.gmra.mxu0 %v1251
      %v1521 = vpop.f32.mrf.mxu0
      %v1522 = vadd.f32 %v1473, %v1521
      %v1523 = vpop.f32.mrf.mxu0
      %v1524 = vadd.f32 %v1475, %v1523
      %1525 = vdwg.mxu0
      %1526 = vmatpush.bf16.msra.mxu0 %v1379
      %1527 = vmatpush.bf16.msra.mxu0 %v1377
      %1528 = vmatpush.bf16.msra.mxu0 %v1375
      %1529 = vmatpush.bf16.msra.mxu0 %v1373
      %1530 = vmatpush.bf16.msra.mxu0 %v1371
      %1531 = vmatpush.bf16.msra.mxu0 %v1369
      %1532 = vmatpush.bf16.msra.mxu0 %v1367
      %1533 = vmatpush.bf16.msra.mxu0 %v1365
      %1534 = vmatmul.bf16.gmra.mxu0 %v1236
      %v1535 = vpop.f32.mrf.mxu0
      %v1536 = vadd.f32 %v1149, %v1535
      %v1537 = vpop.f32.mrf.mxu0
      %v1538 = vadd.f32 %v1151, %v1537
      %1539 = vmatmul.bf16.gmra.mxu0 %v1238
      %v1540 = vpop.f32.mrf.mxu0
      %v1541 = vadd.f32 %v1154, %v1540
      %v1542 = vpop.f32.mrf.mxu0
      %v1543 = vadd.f32 %v1156, %v1542
      %1544 = vmatmul.bf16.gmra.mxu0 %v1240
      %v1545 = vpop.f32.mrf.mxu0
      %v1546 = vadd.f32 %v1159, %v1545
      %v1547 = vpop.f32.mrf.mxu0
      %v1548 = vadd.f32 %v1161, %v1547
      %1549 = vmatmul.bf16.gmra.mxu0 %v1242
      %v1550 = vpop.f32.mrf.mxu0
      %v1551 = vadd.f32 %v1164, %v1550
      %v1552 = vpop.f32.mrf.mxu0
      %v1553 = vadd.f32 %v1166, %v1552
      %1554 = vmatmul.bf16.gmra.mxu0 %v1244
      %v1555 = vpop.f32.mrf.mxu0
      %v1556 = vadd.f32 %v1169, %v1555
      %v1557 = vpop.f32.mrf.mxu0
      %v1558 = vadd.f32 %v1171, %v1557
      %1559 = vmatmul.bf16.gmra.mxu0 %v1246
      %v1560 = vpop.f32.mrf.mxu0
      %v1561 = vadd.f32 %v1174, %v1560
      %v1562 = vpop.f32.mrf.mxu0
      %v1563 = vadd.f32 %v1176, %v1562
      %1564 = vmatmul.bf16.gmra.mxu0 %v1248
      %v1565 = vpop.f32.mrf.mxu0
      %v1566 = vadd.f32 %v1179, %v1565
      %v1567 = vpop.f32.mrf.mxu0
      %v1568 = vadd.f32 %v1181, %v1567
      %1569 = vmatmul.bf16.gmra.mxu0 %v1250
      %v1570 = vpop.f32.mrf.mxu0
      %v1571 = vadd.f32 %v1184, %v1570
      %v1572 = vpop.f32.mrf.mxu0
      %v1573 = vadd.f32 %v1186, %v1572
      %1574 = vdwg.mxu0
      %1575 = vmatpush.bf16.msra.mxu0 %v1395
      %1576 = vmatpush.bf16.msra.mxu0 %v1393
      %1577 = vmatpush.bf16.msra.mxu0 %v1391
      %1578 = vmatpush.bf16.msra.mxu0 %v1389
      %1579 = vmatpush.bf16.msra.mxu0 %v1387
      %1580 = vmatpush.bf16.msra.mxu0 %v1385
      %1581 = vmatpush.bf16.msra.mxu0 %v1383
      %1582 = vmatpush.bf16.msra.mxu0 %v1381
      %1583 = vmatmul.bf16.gmra.mxu0 %v1237
      %v1584 = vpop.f32.mrf.mxu0
      %v1585 = vadd.f32 %v1536, %v1584
      %v1586 = vpop.f32.mrf.mxu0
      %v1587 = vadd.f32 %v1538, %v1586
      %1588 = vmatmul.bf16.gmra.mxu0 %v1239
      %v1589 = vpop.f32.mrf.mxu0
      %v1590 = vadd.f32 %v1541, %v1589
      %v1591 = vpop.f32.mrf.mxu0
      %v1592 = vadd.f32 %v1543, %v1591
      %1593 = vmatmul.bf16.gmra.mxu0 %v1241
      %v1594 = vpop.f32.mrf.mxu0
      %v1595 = vadd.f32 %v1546, %v1594
      %v1596 = vpop.f32.mrf.mxu0
      %v1597 = vadd.f32 %v1548, %v1596
      %1598 = vmatmul.bf16.gmra.mxu0 %v1243
      %v1599 = vpop.f32.mrf.mxu0
      %v1600 = vadd.f32 %v1551, %v1599
      %v1601 = vpop.f32.mrf.mxu0
      %v1602 = vadd.f32 %v1553, %v1601
      %1603 = vmatmul.bf16.gmra.mxu0 %v1245
      %v1604 = vpop.f32.mrf.mxu0
      %v1605 = vadd.f32 %v1556, %v1604
      %v1606 = vpop.f32.mrf.mxu0
      %v1607 = vadd.f32 %v1558, %v1606
      %1608 = vmatmul.bf16.gmra.mxu0 %v1247
      %v1609 = vpop.f32.mrf.mxu0
      %v1610 = vadd.f32 %v1561, %v1609
      %v1611 = vpop.f32.mrf.mxu0
      %v1612 = vadd.f32 %v1563, %v1611
      %1613 = vmatmul.bf16.gmra.mxu0 %v1249
      %v1614 = vpop.f32.mrf.mxu0
      %v1615 = vadd.f32 %v1566, %v1614
      %v1616 = vpop.f32.mrf.mxu0
      %v1617 = vadd.f32 %v1568, %v1616
      %1618 = vmatmul.bf16.gmra.mxu0 %v1251
      %v1619 = vpop.f32.mrf.mxu0
      %v1620 = vadd.f32 %v1571, %v1619
      %v1621 = vpop.f32.mrf.mxu0
      %v1622 = vadd.f32 %v1573, %v1621
      %1623 = vdwg.mxu0
      %v1624 = vld [vmem:[%s483] sm:$0xee]
      %v1625 = vld [vmem:[%s483 + $0x18] sm:$0xee]
      %v1626 = vld [vmem:[%s483 + $0x30] sm:$0xee]
      %v1627 = vld [vmem:[%s483 + $0x48] sm:$0xee]
      %v1628 = vld [vmem:[%s483 + $0x60] sm:$0xee]
      %v1629 = vld [vmem:[%s483 + $0x78] sm:$0xee]
      %v1630 = vld [vmem:[%s483 + $0x90] sm:$0xee]
      %v1631 = vld [vmem:[%s483 + $0xa8] sm:$0xee]
      %vm1648 = vcmask 1042432
      %vm1649 = vcmask 1046532
      %vm1650 = vmor %vm1648, %vm1649
      %v1651 = vrot.slane %v1624, 5
      %v1652 = vrot.slane %v1651, 4
      %v1653 = vrot.slane %v485, 5
      %v1654 = vsel %vm1650, %v1652, %v1653
      %v1655 = vrot.slane %v1653, 4
      %v1656 = vrot.slane %v532, 5
      %v1657 = vsel %vm1650, %v1655, %v1656
      %v1658 = vrot.slane %v1625, 5
      %v1659 = vrot.slane %v1658, 4
      %v1660 = vrot.slane %v487, 5
      %v1661 = vsel %vm1650, %v1659, %v1660
      %v1662 = vrot.slane %v1660, 4
      %v1663 = vrot.slane %v533, 5
      %v1664 = vsel %vm1650, %v1662, %v1663
      %v1665 = vrot.slane %v1626, 5
      %v1666 = vrot.slane %v1665, 4
      %v1667 = vrot.slane %v489, 5
      %v1668 = vsel %vm1650, %v1666, %v1667
      %v1669 = vrot.slane %v1667, 4
      %v1670 = vrot.slane %v534, 5
      %v1671 = vsel %vm1650, %v1669, %v1670
      %v1672 = vrot.slane %v1627, 5
      %v1673 = vrot.slane %v1672, 4
      %v1674 = vrot.slane %v491, 5
      %v1675 = vsel %vm1650, %v1673, %v1674
      %v1676 = vrot.slane %v1674, 4
      %v1677 = vrot.slane %v535, 5
      %v1678 = vsel %vm1650, %v1676, %v1677
      %v1679 = vrot.slane %v1628, 5
      %v1680 = vrot.slane %v1679, 4
      %v1681 = vrot.slane %v493, 5
      %v1682 = vsel %vm1650, %v1680, %v1681
      %v1683 = vrot.slane %v1681, 4
      %v1684 = vrot.slane %v536, 5
      %v1685 = vsel %vm1650, %v1683, %v1684
      %v1686 = vrot.slane %v1629, 5
      %v1687 = vrot.slane %v1686, 4
      %v1688 = vrot.slane %v495, 5
      %v1689 = vsel %vm1650, %v1687, %v1688
      %v1690 = vrot.slane %v1688, 4
      %v1691 = vrot.slane %v537, 5
      %v1692 = vsel %vm1650, %v1690, %v1691
      %v1693 = vrot.slane %v1630, 5
      %v1694 = vrot.slane %v1693, 4
      %v1695 = vrot.slane %v497, 5
      %v1696 = vsel %vm1650, %v1694, %v1695
      %v1697 = vrot.slane %v1695, 4
      %v1698 = vrot.slane %v538, 5
      %v1699 = vsel %vm1650, %v1697, %v1698
      %v1700 = vrot.slane %v1631, 5
      %v1701 = vrot.slane %v1700, 4
      %v1702 = vrot.slane %v499, 5
      %v1703 = vsel %vm1650, %v1701, %v1702
      %v1704 = vrot.slane %v1702, 4
      %v1705 = vrot.slane %v539, 5
      %v1706 = vsel %vm1650, %v1704, %v1705
      %s1707 = scalar_lea.vmem %s1, 512
      %v1708 = vld [vmem:[%s1707] sm:$0xff]
      %v1709 = vld [vmem:[%s1707 + $0x8] sm:$0xff]
      %v1710 = vld [vmem:[%s1707 + $0x10] sm:$0xff]
      %v1711 = vld [vmem:[%s1707 + $0x18] sm:$0xff]
      %v1712 = vld [vmem:[%s1707 + $0x20] sm:$0xff]
      %v1713 = vld [vmem:[%s1707 + $0x28] sm:$0xff]
      %v1714 = vld [vmem:[%s1707 + $0x30] sm:$0xff]
      %v1715 = vld [vmem:[%s1707 + $0x38] sm:$0xff]
      %v1716 = vld [vmem:[%s1707 + $0x40] sm:$0xff]
      %v1717 = vld [vmem:[%s1707 + $0x48] sm:$0xff]
      %v1718 = vld [vmem:[%s1707 + $0x50] sm:$0xff]
      %v1719 = vld [vmem:[%s1707 + $0x58] sm:$0xff]
      %v1720 = vld [vmem:[%s1707 + $0x60] sm:$0xff]
      %v1721 = vld [vmem:[%s1707 + $0x68] sm:$0xff]
      %v1722 = vld [vmem:[%s1707 + $0x70] sm:$0xff]
      %v1723 = vld [vmem:[%s1707 + $0x78] sm:$0xff]
      %v1724 = vld [vmem:[%s1707 + $0x80] sm:$0xff]
      %v1725 = vld [vmem:[%s1707 + $0x88] sm:$0xff]
      %v1726 = vld [vmem:[%s1707 + $0x90] sm:$0xff]
      %v1727 = vld [vmem:[%s1707 + $0x98] sm:$0xff]
      %v1728 = vld [vmem:[%s1707 + $0xa0] sm:$0xff]
      %v1729 = vld [vmem:[%s1707 + $0xa8] sm:$0xff]
      %v1730 = vld [vmem:[%s1707 + $0xb0] sm:$0xff]
      %v1731 = vld [vmem:[%s1707 + $0xb8] sm:$0xff]
      %v1732 = vld [vmem:[%s1707 + $0xc0] sm:$0xff]
      %v1733 = vld [vmem:[%s1707 + $0xc8] sm:$0xff]
      %v1734 = vld [vmem:[%s1707 + $0xd0] sm:$0xff]
      %v1735 = vld [vmem:[%s1707 + $0xd8] sm:$0xff]
      %v1736 = vld [vmem:[%s1707 + $0xe0] sm:$0xff]
      %v1737 = vld [vmem:[%s1707 + $0xe8] sm:$0xff]
      %v1738 = vld [vmem:[%s1707 + $0xf0] sm:$0xff]
      %v1739 = vld [vmem:[%s1707 + $0xf8] sm:$0xff]
      %v1740 = vunpack.c.l.b16 %v1654
      %v1741 = vunpack.c.h.b16 %v1654
      %v1742 = vunpack.c.l.b16 %v1657
      %v1743 = vunpack.c.h.b16 %v1657
      %v1744 = vunpack.c.l.b16 %v1661
      %v1745 = vunpack.c.h.b16 %v1661
      %v1746 = vunpack.c.l.b16 %v1664
      %v1747 = vunpack.c.h.b16 %v1664
      %v1748 = vunpack.c.l.b16 %v1668
      %v1749 = vunpack.c.h.b16 %v1668
      %v1750 = vunpack.c.l.b16 %v1671
      %v1751 = vunpack.c.h.b16 %v1671
      %v1752 = vunpack.c.l.b16 %v1675
      %v1753 = vunpack.c.h.b16 %v1675
      %v1754 = vunpack.c.l.b16 %v1678
      %v1755 = vunpack.c.h.b16 %v1678
      %v1756 = vunpack.c.l.b16 %v1682
      %v1757 = vunpack.c.h.b16 %v1682
      %v1758 = vunpack.c.l.b16 %v1685
      %v1759 = vunpack.c.h.b16 %v1685
      %v1760 = vunpack.c.l.b16 %v1689
      %v1761 = vunpack.c.h.b16 %v1689
      %v1762 = vunpack.c.l.b16 %v1692
      %v1763 = vunpack.c.h.b16 %v1692
      %v1764 = vunpack.c.l.b16 %v1696
      %v1765 = vunpack.c.h.b16 %v1696
      %v1766 = vunpack.c.l.b16 %v1699
      %v1767 = vunpack.c.h.b16 %v1699
      %v1768 = vunpack.c.l.b16 %v1703
      %v1769 = vunpack.c.h.b16 %v1703
      %v1770 = vunpack.c.l.b16 %v1706
      %v1771 = vunpack.c.h.b16 %v1706
      %v1772 = vpack.c.b16 %v1742, %v1740
      %v1773 = vpack.c.b16 %v1743, %v1741
      %v1774 = vpack.c.b16 %v1746, %v1744
      %v1775 = vpack.c.b16 %v1747, %v1745
      %v1776 = vpack.c.b16 %v1750, %v1748
      %v1777 = vpack.c.b16 %v1751, %v1749
      %v1778 = vpack.c.b16 %v1754, %v1752
      %v1779 = vpack.c.b16 %v1755, %v1753
      %v1780 = vpack.c.b16 %v1758, %v1756
      %v1781 = vpack.c.b16 %v1759, %v1757
      %v1782 = vpack.c.b16 %v1762, %v1760
      %v1783 = vpack.c.b16 %v1763, %v1761
      %v1784 = vpack.c.b16 %v1766, %v1764
      %v1785 = vpack.c.b16 %v1767, %v1765
      %v1786 = vpack.c.b16 %v1770, %v1768
      %v1787 = vpack.c.b16 %v1771, %v1769
      %v1836 = vunpack.c.l.b16 %v1708
      %v1837 = vunpack.c.h.b16 %v1708
      %v1838 = vunpack.c.l.b16 %v1709
      %v1839 = vunpack.c.h.b16 %v1709
      %v1840 = vunpack.c.l.b16 %v1710
      %v1841 = vunpack.c.h.b16 %v1710
      %v1842 = vunpack.c.l.b16 %v1711
      %v1843 = vunpack.c.h.b16 %v1711
      %v1844 = vunpack.c.l.b16 %v1712
      %v1845 = vunpack.c.h.b16 %v1712
      %v1846 = vunpack.c.l.b16 %v1713
      %v1847 = vunpack.c.h.b16 %v1713
      %v1848 = vunpack.c.l.b16 %v1714
      %v1849 = vunpack.c.h.b16 %v1714
      %v1850 = vunpack.c.l.b16 %v1715
      %v1851 = vunpack.c.h.b16 %v1715
      %v1852 = vunpack.c.l.b16 %v1716
      %v1853 = vunpack.c.h.b16 %v1716
      %v1854 = vunpack.c.l.b16 %v1717
      %v1855 = vunpack.c.h.b16 %v1717
      %v1856 = vunpack.c.l.b16 %v1718
      %v1857 = vunpack.c.h.b16 %v1718
      %v1858 = vunpack.c.l.b16 %v1719
      %v1859 = vunpack.c.h.b16 %v1719
      %v1860 = vunpack.c.l.b16 %v1720
      %v1861 = vunpack.c.h.b16 %v1720
      %v1862 = vunpack.c.l.b16 %v1721
      %v1863 = vunpack.c.h.b16 %v1721
      %v1864 = vunpack.c.l.b16 %v1722
      %v1865 = vunpack.c.h.b16 %v1722
      %v1866 = vunpack.c.l.b16 %v1723
      %v1867 = vunpack.c.h.b16 %v1723
      %v1868 = vunpack.c.l.b16 %v1724
      %v1869 = vunpack.c.h.b16 %v1724
      %v1870 = vunpack.c.l.b16 %v1725
      %v1871 = vunpack.c.h.b16 %v1725
      %v1872 = vunpack.c.l.b16 %v1726
      %v1873 = vunpack.c.h.b16 %v1726
      %v1874 = vunpack.c.l.b16 %v1727
      %v1875 = vunpack.c.h.b16 %v1727
      %v1876 = vunpack.c.l.b16 %v1728
      %v1877 = vunpack.c.h.b16 %v1728
      %v1878 = vunpack.c.l.b16 %v1729
      %v1879 = vunpack.c.h.b16 %v1729
      %v1880 = vunpack.c.l.b16 %v1730
      %v1881 = vunpack.c.h.b16 %v1730
      %v1882 = vunpack.c.l.b16 %v1731
      %v1883 = vunpack.c.h.b16 %v1731
      %v1884 = vunpack.c.l.b16 %v1732
      %v1885 = vunpack.c.h.b16 %v1732
      %v1886 = vunpack.c.l.b16 %v1733
      %v1887 = vunpack.c.h.b16 %v1733
      %v1888 = vunpack.c.l.b16 %v1734
      %v1889 = vunpack.c.h.b16 %v1734
      %v1890 = vunpack.c.l.b16 %v1735
      %v1891 = vunpack.c.h.b16 %v1735
      %v1892 = vunpack.c.l.b16 %v1736
      %v1893 = vunpack.c.h.b16 %v1736
      %v1894 = vunpack.c.l.b16 %v1737
      %v1895 = vunpack.c.h.b16 %v1737
      %v1896 = vunpack.c.l.b16 %v1738
      %v1897 = vunpack.c.h.b16 %v1738
      %v1898 = vunpack.c.l.b16 %v1739
      %v1899 = vunpack.c.h.b16 %v1739
      %v1900 = vpack.c.b16 %v1838, %v1836
      %v1901 = vpack.c.b16 %v1839, %v1837
      %v1902 = vpack.c.b16 %v1842, %v1840
      %v1903 = vpack.c.b16 %v1843, %v1841
      %v1904 = vpack.c.b16 %v1846, %v1844
      %v1905 = vpack.c.b16 %v1847, %v1845
      %v1906 = vpack.c.b16 %v1850, %v1848
      %v1907 = vpack.c.b16 %v1851, %v1849
      %v1908 = vpack.c.b16 %v1854, %v1852
      %v1909 = vpack.c.b16 %v1855, %v1853
      %v1910 = vpack.c.b16 %v1858, %v1856
      %v1911 = vpack.c.b16 %v1859, %v1857
      %v1912 = vpack.c.b16 %v1862, %v1860
      %v1913 = vpack.c.b16 %v1863, %v1861
      %v1914 = vpack.c.b16 %v1866, %v1864
      %v1915 = vpack.c.b16 %v1867, %v1865
      %v1916 = vpack.c.b16 %v1870, %v1868
      %v1917 = vpack.c.b16 %v1871, %v1869
      %v1918 = vpack.c.b16 %v1874, %v1872
      %v1919 = vpack.c.b16 %v1875, %v1873
      %v1920 = vpack.c.b16 %v1878, %v1876
      %v1921 = vpack.c.b16 %v1879, %v1877
      %v1922 = vpack.c.b16 %v1882, %v1880
      %v1923 = vpack.c.b16 %v1883, %v1881
      %v1924 = vpack.c.b16 %v1886, %v1884
      %v1925 = vpack.c.b16 %v1887, %v1885
      %v1926 = vpack.c.b16 %v1890, %v1888
      %v1927 = vpack.c.b16 %v1891, %v1889
      %v1928 = vpack.c.b16 %v1894, %v1892
      %v1929 = vpack.c.b16 %v1895, %v1893
      %v1930 = vpack.c.b16 %v1898, %v1896
      %v1931 = vpack.c.b16 %v1899, %v1897
      %1964 = vmatpush.bf16.msra.mxu0 %v1914
      %1965 = vmatpush.bf16.msra.mxu0 %v1912
      %1966 = vmatpush.bf16.msra.mxu0 %v1910
      %1967 = vmatpush.bf16.msra.mxu0 %v1908
      %1968 = vmatpush.bf16.msra.mxu0 %v1906
      %1969 = vmatpush.bf16.msra.mxu0 %v1904
      %1970 = vmatpush.bf16.msra.mxu0 %v1902
      %1971 = vmatpush.bf16.msra.mxu0 %v1900
      %1972 = vmatmul.bf16.gmra.mxu0 %v1772
      %v1973 = vpop.f32.mrf.mxu0
      %v1974 = vadd.f32 0.0, %v1973
      %v1975 = vpop.f32.mrf.mxu0
      %v1976 = vadd.f32 0.0, %v1975
      %1977 = vmatmul.bf16.gmra.mxu0 %v1774
      %v1978 = vpop.f32.mrf.mxu0
      %v1979 = vadd.f32 0.0, %v1978
      %v1980 = vpop.f32.mrf.mxu0
      %v1981 = vadd.f32 0.0, %v1980
      %1982 = vmatmul.bf16.gmra.mxu0 %v1776
      %v1983 = vpop.f32.mrf.mxu0
      %v1984 = vadd.f32 0.0, %v1983
      %v1985 = vpop.f32.mrf.mxu0
      %v1986 = vadd.f32 0.0, %v1985
      %1987 = vmatmul.bf16.gmra.mxu0 %v1778
      %v1988 = vpop.f32.mrf.mxu0
      %v1989 = vadd.f32 0.0, %v1988
      %v1990 = vpop.f32.mrf.mxu0
      %v1991 = vadd.f32 0.0, %v1990
      %1992 = vmatmul.bf16.gmra.mxu0 %v1780
      %v1993 = vpop.f32.mrf.mxu0
      %v1994 = vadd.f32 0.0, %v1993
      %v1995 = vpop.f32.mrf.mxu0
      %v1996 = vadd.f32 0.0, %v1995
      %1997 = vmatmul.bf16.gmra.mxu0 %v1782
      %v1998 = vpop.f32.mrf.mxu0
      %v1999 = vadd.f32 0.0, %v1998
      %v2000 = vpop.f32.mrf.mxu0
      %v2001 = vadd.f32 0.0, %v2000
      %2002 = vmatmul.bf16.gmra.mxu0 %v1784
      %v2003 = vpop.f32.mrf.mxu0
      %v2004 = vadd.f32 0.0, %v2003
      %v2005 = vpop.f32.mrf.mxu0
      %v2006 = vadd.f32 0.0, %v2005
      %2007 = vmatmul.bf16.gmra.mxu0 %v1786
      %v2008 = vpop.f32.mrf.mxu0
      %v2009 = vadd.f32 0.0, %v2008
      %v2010 = vpop.f32.mrf.mxu0
      %v2011 = vadd.f32 0.0, %v2010
      %2012 = vdwg.mxu0
      %2013 = vmatpush.bf16.msra.mxu0 %v1930
      %2014 = vmatpush.bf16.msra.mxu0 %v1928
      %2015 = vmatpush.bf16.msra.mxu0 %v1926
      %2016 = vmatpush.bf16.msra.mxu0 %v1924
      %2017 = vmatpush.bf16.msra.mxu0 %v1922
      %2018 = vmatpush.bf16.msra.mxu0 %v1920
      %2019 = vmatpush.bf16.msra.mxu0 %v1918
      %2020 = vmatpush.bf16.msra.mxu0 %v1916
      %2021 = vmatmul.bf16.gmra.mxu0 %v1773
      %v2022 = vpop.f32.mrf.mxu0
      %v2023 = vadd.f32 %v1974, %v2022
      %v2024 = vpop.f32.mrf.mxu0
      %v2025 = vadd.f32 %v1976, %v2024
      %2026 = vmatmul.bf16.gmra.mxu0 %v1775
      %v2027 = vpop.f32.mrf.mxu0
      %v2028 = vadd.f32 %v1979, %v2027
      %v2029 = vpop.f32.mrf.mxu0
      %v2030 = vadd.f32 %v1981, %v2029
      %2031 = vmatmul.bf16.gmra.mxu0 %v1777
      %v2032 = vpop.f32.mrf.mxu0
      %v2033 = vadd.f32 %v1984, %v2032
      %v2034 = vpop.f32.mrf.mxu0
      %v2035 = vadd.f32 %v1986, %v2034
      %2036 = vmatmul.bf16.gmra.mxu0 %v1779
      %v2037 = vpop.f32.mrf.mxu0
      %v2038 = vadd.f32 %v1989, %v2037
      %v2039 = vpop.f32.mrf.mxu0
      %v2040 = vadd.f32 %v1991, %v2039
      %2041 = vmatmul.bf16.gmra.mxu0 %v1781
      %v2042 = vpop.f32.mrf.mxu0
      %v2043 = vadd.f32 %v1994, %v2042
      %v2044 = vpop.f32.mrf.mxu0
      %v2045 = vadd.f32 %v1996, %v2044
      %2046 = vmatmul.bf16.gmra.mxu0 %v1783
      %v2047 = vpop.f32.mrf.mxu0
      %v2048 = vadd.f32 %v1999, %v2047
      %v2049 = vpop.f32.mrf.mxu0
      %v2050 = vadd.f32 %v2001, %v2049
      %2051 = vmatmul.bf16.gmra.mxu0 %v1785
      %v2052 = vpop.f32.mrf.mxu0
      %v2053 = vadd.f32 %v2004, %v2052
      %v2054 = vpop.f32.mrf.mxu0
      %v2055 = vadd.f32 %v2006, %v2054
      %2056 = vmatmul.bf16.gmra.mxu0 %v1787
      %v2057 = vpop.f32.mrf.mxu0
      %v2058 = vadd.f32 %v2009, %v2057
      %v2059 = vpop.f32.mrf.mxu0
      %v2060 = vadd.f32 %v2011, %v2059
      %2061 = vdwg.mxu0
      %2062 = vmatpush.bf16.msra.mxu0 %v1915
      %2063 = vmatpush.bf16.msra.mxu0 %v1913
      %2064 = vmatpush.bf16.msra.mxu0 %v1911
      %2065 = vmatpush.bf16.msra.mxu0 %v1909
      %2066 = vmatpush.bf16.msra.mxu0 %v1907
      %2067 = vmatpush.bf16.msra.mxu0 %v1905
      %2068 = vmatpush.bf16.msra.mxu0 %v1903
      %2069 = vmatpush.bf16.msra.mxu0 %v1901
      %2070 = vmatmul.bf16.gmra.mxu0 %v1772
      %v2071 = vpop.f32.mrf.mxu0
      %v2072 = vadd.f32 0.0, %v2071
      %v2073 = vpop.f32.mrf.mxu0
      %v2074 = vadd.f32 0.0, %v2073
      %2075 = vmatmul.bf16.gmra.mxu0 %v1774
      %v2076 = vpop.f32.mrf.mxu0
      %v2077 = vadd.f32 0.0, %v2076
      %v2078 = vpop.f32.mrf.mxu0
      %v2079 = vadd.f32 0.0, %v2078
      %2080 = vmatmul.bf16.gmra.mxu0 %v1776
      %v2081 = vpop.f32.mrf.mxu0
      %v2082 = vadd.f32 0.0, %v2081
      %v2083 = vpop.f32.mrf.mxu0
      %v2084 = vadd.f32 0.0, %v2083
      %2085 = vmatmul.bf16.gmra.mxu0 %v1778
      %v2086 = vpop.f32.mrf.mxu0
      %v2087 = vadd.f32 0.0, %v2086
      %v2088 = vpop.f32.mrf.mxu0
      %v2089 = vadd.f32 0.0, %v2088
      %2090 = vmatmul.bf16.gmra.mxu0 %v1780
      %v2091 = vpop.f32.mrf.mxu0
      %v2092 = vadd.f32 0.0, %v2091
      %v2093 = vpop.f32.mrf.mxu0
      %v2094 = vadd.f32 0.0, %v2093
      %2095 = vmatmul.bf16.gmra.mxu0 %v1782
      %v2096 = vpop.f32.mrf.mxu0
      %v2097 = vadd.f32 0.0, %v2096
      %v2098 = vpop.f32.mrf.mxu0
      %v2099 = vadd.f32 0.0, %v2098
      %2100 = vmatmul.bf16.gmra.mxu0 %v1784
      %v2101 = vpop.f32.mrf.mxu0
      %v2102 = vadd.f32 0.0, %v2101
      %v2103 = vpop.f32.mrf.mxu0
      %v2104 = vadd.f32 0.0, %v2103
      %2105 = vmatmul.bf16.gmra.mxu0 %v1786
      %v2106 = vpop.f32.mrf.mxu0
      %v2107 = vadd.f32 0.0, %v2106
      %v2108 = vpop.f32.mrf.mxu0
      %v2109 = vadd.f32 0.0, %v2108
      %2110 = vdwg.mxu0
      %2111 = vmatpush.bf16.msra.mxu0 %v1931
      %2112 = vmatpush.bf16.msra.mxu0 %v1929
      %2113 = vmatpush.bf16.msra.mxu0 %v1927
      %2114 = vmatpush.bf16.msra.mxu0 %v1925
      %2115 = vmatpush.bf16.msra.mxu0 %v1923
      %2116 = vmatpush.bf16.msra.mxu0 %v1921
      %2117 = vmatpush.bf16.msra.mxu0 %v1919
      %2118 = vmatpush.bf16.msra.mxu0 %v1917
      %2119 = vmatmul.bf16.gmra.mxu0 %v1773
      %v2120 = vpop.f32.mrf.mxu0
      %v2121 = vadd.f32 %v2072, %v2120
      %v2122 = vpop.f32.mrf.mxu0
      %v2123 = vadd.f32 %v2074, %v2122
      %2124 = vmatmul.bf16.gmra.mxu0 %v1775
      %v2125 = vpop.f32.mrf.mxu0
      %v2126 = vadd.f32 %v2077, %v2125
      %v2127 = vpop.f32.mrf.mxu0
      %v2128 = vadd.f32 %v2079, %v2127
      %2129 = vmatmul.bf16.gmra.mxu0 %v1777
      %v2130 = vpop.f32.mrf.mxu0
      %v2131 = vadd.f32 %v2082, %v2130
      %v2132 = vpop.f32.mrf.mxu0
      %v2133 = vadd.f32 %v2084, %v2132
      %2134 = vmatmul.bf16.gmra.mxu0 %v1779
      %v2135 = vpop.f32.mrf.mxu0
      %v2136 = vadd.f32 %v2087, %v2135
      %v2137 = vpop.f32.mrf.mxu0
      %v2138 = vadd.f32 %v2089, %v2137
      %2139 = vmatmul.bf16.gmra.mxu0 %v1781
      %v2140 = vpop.f32.mrf.mxu0
      %v2141 = vadd.f32 %v2092, %v2140
      %v2142 = vpop.f32.mrf.mxu0
      %v2143 = vadd.f32 %v2094, %v2142
      %2144 = vmatmul.bf16.gmra.mxu0 %v1783
      %v2145 = vpop.f32.mrf.mxu0
      %v2146 = vadd.f32 %v2097, %v2145
      %v2147 = vpop.f32.mrf.mxu0
      %v2148 = vadd.f32 %v2099, %v2147
      %2149 = vmatmul.bf16.gmra.mxu0 %v1785
      %v2150 = vpop.f32.mrf.mxu0
      %v2151 = vadd.f32 %v2102, %v2150
      %v2152 = vpop.f32.mrf.mxu0
      %v2153 = vadd.f32 %v2104, %v2152
      %2154 = vmatmul.bf16.gmra.mxu0 %v1787
      %v2155 = vpop.f32.mrf.mxu0
      %v2156 = vadd.f32 %v2107, %v2155
      %v2157 = vpop.f32.mrf.mxu0
      %v2158 = vadd.f32 %v2109, %v2157
      %2159 = vdwg.mxu0
      %v2160 = vadd.f32 %v1487, %v2023
      %v2161 = vadd.f32 %v1585, %v2121
      %v2162 = vadd.f32 %v1489, %v2025
      %v2163 = vadd.f32 %v1587, %v2123
      %v2164 = vadd.f32 %v1492, %v2028
      %v2165 = vadd.f32 %v1590, %v2126
      %v2166 = vadd.f32 %v1494, %v2030
      %v2167 = vadd.f32 %v1592, %v2128
      %v2168 = vadd.f32 %v1497, %v2033
      %v2169 = vadd.f32 %v1595, %v2131
      %v2170 = vadd.f32 %v1499, %v2035
      %v2171 = vadd.f32 %v1597, %v2133
      %v2172 = vadd.f32 %v1502, %v2038
      %v2173 = vadd.f32 %v1600, %v2136
      %v2174 = vadd.f32 %v1504, %v2040
      %v2175 = vadd.f32 %v1602, %v2138
      %v2176 = vadd.f32 %v1507, %v2043
      %v2177 = vadd.f32 %v1605, %v2141
      %v2178 = vadd.f32 %v1509, %v2045
      %v2179 = vadd.f32 %v1607, %v2143
      %v2180 = vadd.f32 %v1512, %v2048
      %v2181 = vadd.f32 %v1610, %v2146
      %v2182 = vadd.f32 %v1514, %v2050
      %v2183 = vadd.f32 %v1612, %v2148
      %v2184 = vadd.f32 %v1517, %v2053
      %v2185 = vadd.f32 %v1615, %v2151
      %v2186 = vadd.f32 %v1519, %v2055
      %v2187 = vadd.f32 %v1617, %v2153
      %v2188 = vadd.f32 %v1522, %v2058
      %v2189 = vadd.f32 %v1620, %v2156
      %v2190 = vadd.f32 %v1524, %v2060
      %v2191 = vadd.f32 %v1622, %v2158
      %s2192 = sadd.s32 %s480, 1
      %s2193 = smul.u32 %s2192, 6
      %s2194 = smul.addr %s2193, 4
      %s2195 = scalar_lea.vmem [#allocation2], %s2194
      %v2196 = vld [vmem:[%s2195] sm:$0xff]
      %v2197 = vld [vmem:[%s2195 + $0x8] sm:$0xff]
      %v2198 = vld [vmem:[%s2195 + $0x18] sm:$0xff]
      %v2199 = vld [vmem:[%s2195 + $0x20] sm:$0xff]
      %v2200 = vld [vmem:[%s2195 + $0x30] sm:$0xff]
      %v2201 = vld [vmem:[%s2195 + $0x38] sm:$0xff]
      %v2202 = vld [vmem:[%s2195 + $0x48] sm:$0xff]
      %v2203 = vld [vmem:[%s2195 + $0x50] sm:$0xff]
      %v2204 = vld [vmem:[%s2195 + $0x60] sm:$0xff]
      %v2205 = vld [vmem:[%s2195 + $0x68] sm:$0xff]
      %v2206 = vld [vmem:[%s2195 + $0x78] sm:$0xff]
      %v2207 = vld [vmem:[%s2195 + $0x80] sm:$0xff]
      %v2208 = vld [vmem:[%s2195 + $0x90] sm:$0xff]
      %v2209 = vld [vmem:[%s2195 + $0x98] sm:$0xff]
      %v2210 = vld [vmem:[%s2195 + $0xa8] sm:$0xff]
      %v2211 = vld [vmem:[%s2195 + $0xb0] sm:$0xff]
      %s2212 = scalar_lea.vmem %s1, 768
      %v2213 = vld [vmem:[%s2212] sm:$0xff]
      %v2214 = vld [vmem:[%s2212 + $0x8] sm:$0xff]
      %v2215 = vld [vmem:[%s2212 + $0x10] sm:$0xff]
      %v2216 = vld [vmem:[%s2212 + $0x18] sm:$0xff]
      %v2217 = vld [vmem:[%s2212 + $0x20] sm:$0xff]
      %v2218 = vld [vmem:[%s2212 + $0x28] sm:$0xff]
      %v2219 = vld [vmem:[%s2212 + $0x30] sm:$0xff]
      %v2220 = vld [vmem:[%s2212 + $0x38] sm:$0xff]
      %v2221 = vld [vmem:[%s2212 + $0x40] sm:$0xff]
      %v2222 = vld [vmem:[%s2212 + $0x48] sm:$0xff]
      %v2223 = vld [vmem:[%s2212 + $0x50] sm:$0xff]
      %v2224 = vld [vmem:[%s2212 + $0x58] sm:$0xff]
      %v2225 = vld [vmem:[%s2212 + $0x60] sm:$0xff]
      %v2226 = vld [vmem:[%s2212 + $0x68] sm:$0xff]
      %v2227 = vld [vmem:[%s2212 + $0x70] sm:$0xff]
      %v2228 = vld [vmem:[%s2212 + $0x78] sm:$0xff]
      %v2229 = vld [vmem:[%s2212 + $0x80] sm:$0xff]
      %v2230 = vld [vmem:[%s2212 + $0x88] sm:$0xff]
      %v2231 = vld [vmem:[%s2212 + $0x90] sm:$0xff]
      %v2232 = vld [vmem:[%s2212 + $0x98] sm:$0xff]
      %v2233 = vld [vmem:[%s2212 + $0xa0] sm:$0xff]
      %v2234 = vld [vmem:[%s2212 + $0xa8] sm:$0xff]
      %v2235 = vld [vmem:[%s2212 + $0xb0] sm:$0xff]
      %v2236 = vld [vmem:[%s2212 + $0xb8] sm:$0xff]
      %v2237 = vld [vmem:[%s2212 + $0xc0] sm:$0xff]
      %v2238 = vld [vmem:[%s2212 + $0xc8] sm:$0xff]
      %v2239 = vld [vmem:[%s2212 + $0xd0] sm:$0xff]
      %v2240 = vld [vmem:[%s2212 + $0xd8] sm:$0xff]
      %v2241 = vld [vmem:[%s2212 + $0xe0] sm:$0xff]
      %v2242 = vld [vmem:[%s2212 + $0xe8] sm:$0xff]
      %v2243 = vld [vmem:[%s2212 + $0xf0] sm:$0xff]
      %v2244 = vld [vmem:[%s2212 + $0xf8] sm:$0xff]
      %v2261 = vunpack.c.l.b16 %v2196
      %v2262 = vunpack.c.h.b16 %v2196
      %v2263 = vunpack.c.l.b16 %v2197
      %v2264 = vunpack.c.h.b16 %v2197
      %v2265 = vunpack.c.l.b16 %v2198
      %v2266 = vunpack.c.h.b16 %v2198
      %v2267 = vunpack.c.l.b16 %v2199
      %v2268 = vunpack.c.h.b16 %v2199
      %v2269 = vunpack.c.l.b16 %v2200
      %v2270 = vunpack.c.h.b16 %v2200
      %v2271 = vunpack.c.l.b16 %v2201
      %v2272 = vunpack.c.h.b16 %v2201
      %v2273 = vunpack.c.l.b16 %v2202
      %v2274 = vunpack.c.h.b16 %v2202
      %v2275 = vunpack.c.l.b16 %v2203
      %v2276 = vunpack.c.h.b16 %v2203
      %v2277 = vunpack.c.l.b16 %v2204
      %v2278 = vunpack.c.h.b16 %v2204
      %v2279 = vunpack.c.l.b16 %v2205
      %v2280 = vunpack.c.h.b16 %v2205
      %v2281 = vunpack.c.l.b16 %v2206
      %v2282 = vunpack.c.h.b16 %v2206
      %v2283 = vunpack.c.l.b16 %v2207
      %v2284 = vunpack.c.h.b16 %v2207
      %v2285 = vunpack.c.l.b16 %v2208
      %v2286 = vunpack.c.h.b16 %v2208
      %v2287 = vunpack.c.l.b16 %v2209
      %v2288 = vunpack.c.h.b16 %v2209
      %v2289 = vunpack.c.l.b16 %v2210
      %v2290 = vunpack.c.h.b16 %v2210
      %v2291 = vunpack.c.l.b16 %v2211
      %v2292 = vunpack.c.h.b16 %v2211
      %v2293 = vpack.c.b16 %v2263, %v2261
      %v2294 = vpack.c.b16 %v2264, %v2262
      %v2295 = vpack.c.b16 %v2267, %v2265
      %v2296 = vpack.c.b16 %v2268, %v2266
      %v2297 = vpack.c.b16 %v2271, %v2269
      %v2298 = vpack.c.b16 %v2272, %v2270
      %v2299 = vpack.c.b16 %v2275, %v2273
      %v2300 = vpack.c.b16 %v2276, %v2274
      %v2301 = vpack.c.b16 %v2279, %v2277
      %v2302 = vpack.c.b16 %v2280, %v2278
      %v2303 = vpack.c.b16 %v2283, %v2281
      %v2304 = vpack.c.b16 %v2284, %v2282
      %v2305 = vpack.c.b16 %v2287, %v2285
      %v2306 = vpack.c.b16 %v2288, %v2286
      %v2307 = vpack.c.b16 %v2291, %v2289
      %v2308 = vpack.c.b16 %v2292, %v2290
      %v2357 = vunpack.c.l.b16 %v2213
      %v2358 = vunpack.c.h.b16 %v2213
      %v2359 = vunpack.c.l.b16 %v2214
      %v2360 = vunpack.c.h.b16 %v2214
      %v2361 = vunpack.c.l.b16 %v2215
      %v2362 = vunpack.c.h.b16 %v2215
      %v2363 = vunpack.c.l.b16 %v2216
      %v2364 = vunpack.c.h.b16 %v2216
      %v2365 = vunpack.c.l.b16 %v2217
      %v2366 = vunpack.c.h.b16 %v2217
      %v2367 = vunpack.c.l.b16 %v2218
      %v2368 = vunpack.c.h.b16 %v2218
      %v2369 = vunpack.c.l.b16 %v2219
      %v2370 = vunpack.c.h.b16 %v2219
      %v2371 = vunpack.c.l.b16 %v2220
      %v2372 = vunpack.c.h.b16 %v2220
      %v2373 = vunpack.c.l.b16 %v2221
      %v2374 = vunpack.c.h.b16 %v2221
      %v2375 = vunpack.c.l.b16 %v2222
      %v2376 = vunpack.c.h.b16 %v2222
      %v2377 = vunpack.c.l.b16 %v2223
      %v2378 = vunpack.c.h.b16 %v2223
      %v2379 = vunpack.c.l.b16 %v2224
      %v2380 = vunpack.c.h.b16 %v2224
      %v2381 = vunpack.c.l.b16 %v2225
      %v2382 = vunpack.c.h.b16 %v2225
      %v2383 = vunpack.c.l.b16 %v2226
      %v2384 = vunpack.c.h.b16 %v2226
      %v2385 = vunpack.c.l.b16 %v2227
      %v2386 = vunpack.c.h.b16 %v2227
      %v2387 = vunpack.c.l.b16 %v2228
      %v2388 = vunpack.c.h.b16 %v2228
      %v2389 = vunpack.c.l.b16 %v2229
      %v2390 = vunpack.c.h.b16 %v2229
      %v2391 = vunpack.c.l.b16 %v2230
      %v2392 = vunpack.c.h.b16 %v2230
      %v2393 = vunpack.c.l.b16 %v2231
      %v2394 = vunpack.c.h.b16 %v2231
      %v2395 = vunpack.c.l.b16 %v2232
      %v2396 = vunpack.c.h.b16 %v2232
      %v2397 = vunpack.c.l.b16 %v2233
      %v2398 = vunpack.c.h.b16 %v2233
      %v2399 = vunpack.c.l.b16 %v2234
      %v2400 = vunpack.c.h.b16 %v2234
      %v2401 = vunpack.c.l.b16 %v2235
      %v2402 = vunpack.c.h.b16 %v2235
      %v2403 = vunpack.c.l.b16 %v2236
      %v2404 = vunpack.c.h.b16 %v2236
      %v2405 = vunpack.c.l.b16 %v2237
      %v2406 = vunpack.c.h.b16 %v2237
      %v2407 = vunpack.c.l.b16 %v2238
      %v2408 = vunpack.c.h.b16 %v2238
      %v2409 = vunpack.c.l.b16 %v2239
      %v2410 = vunpack.c.h.b16 %v2239
      %v2411 = vunpack.c.l.b16 %v2240
      %v2412 = vunpack.c.h.b16 %v2240
      %v2413 = vunpack.c.l.b16 %v2241
      %v2414 = vunpack.c.h.b16 %v2241
      %v2415 = vunpack.c.l.b16 %v2242
      %v2416 = vunpack.c.h.b16 %v2242
      %v2417 = vunpack.c.l.b16 %v2243
      %v2418 = vunpack.c.h.b16 %v2243
      %v2419 = vunpack.c.l.b16 %v2244
      %v2420 = vunpack.c.h.b16 %v2244
      %v2421 = vpack.c.b16 %v2359, %v2357
      %v2422 = vpack.c.b16 %v2360, %v2358
      %v2423 = vpack.c.b16 %v2363, %v2361
      %v2424 = vpack.c.b16 %v2364, %v2362
      %v2425 = vpack.c.b16 %v2367, %v2365
      %v2426 = vpack.c.b16 %v2368, %v2366
      %v2427 = vpack.c.b16 %v2371, %v2369
      %v2428 = vpack.c.b16 %v2372, %v2370
      %v2429 = vpack.c.b16 %v2375, %v2373
      %v2430 = vpack.c.b16 %v2376, %v2374
      %v2431 = vpack.c.b16 %v2379, %v2377
      %v2432 = vpack.c.b16 %v2380, %v2378
      %v2433 = vpack.c.b16 %v2383, %v2381
      %v2434 = vpack.c.b16 %v2384, %v2382
      %v2435 = vpack.c.b16 %v2387, %v2385
      %v2436 = vpack.c.b16 %v2388, %v2386
      %v2437 = vpack.c.b16 %v2391, %v2389
      %v2438 = vpack.c.b16 %v2392, %v2390
      %v2439 = vpack.c.b16 %v2395, %v2393
      %v2440 = vpack.c.b16 %v2396, %v2394
      %v2441 = vpack.c.b16 %v2399, %v2397
      %v2442 = vpack.c.b16 %v2400, %v2398
      %v2443 = vpack.c.b16 %v2403, %v2401
      %v2444 = vpack.c.b16 %v2404, %v2402
      %v2445 = vpack.c.b16 %v2407, %v2405
      %v2446 = vpack.c.b16 %v2408, %v2406
      %v2447 = vpack.c.b16 %v2411, %v2409
      %v2448 = vpack.c.b16 %v2412, %v2410
      %v2449 = vpack.c.b16 %v2415, %v2413
      %v2450 = vpack.c.b16 %v2416, %v2414
      %v2451 = vpack.c.b16 %v2419, %v2417
      %v2452 = vpack.c.b16 %v2420, %v2418
      %2485 = vmatpush.bf16.msra.mxu0 %v2435
      %2486 = vmatpush.bf16.msra.mxu0 %v2433
      %2487 = vmatpush.bf16.msra.mxu0 %v2431
      %2488 = vmatpush.bf16.msra.mxu0 %v2429
      %2489 = vmatpush.bf16.msra.mxu0 %v2427
      %2490 = vmatpush.bf16.msra.mxu0 %v2425
      %2491 = vmatpush.bf16.msra.mxu0 %v2423
      %2492 = vmatpush.bf16.msra.mxu0 %v2421
      %2493 = vmatmul.bf16.gmra.mxu0 %v2293
      %v2494 = vpop.f32.mrf.mxu0
      %v2495 = vadd.f32 0.0, %v2494
      %v2496 = vpop.f32.mrf.mxu0
      %v2497 = vadd.f32 0.0, %v2496
      %2498 = vmatmul.bf16.gmra.mxu0 %v2295
      %v2499 = vpop.f32.mrf.mxu0
      %v2500 = vadd.f32 0.0, %v2499
      %v2501 = vpop.f32.mrf.mxu0
      %v2502 = vadd.f32 0.0, %v2501
      %2503 = vmatmul.bf16.gmra.mxu0 %v2297
      %v2504 = vpop.f32.mrf.mxu0
      %v2505 = vadd.f32 0.0, %v2504
      %v2506 = vpop.f32.mrf.mxu0
      %v2507 = vadd.f32 0.0, %v2506
      %2508 = vmatmul.bf16.gmra.mxu0 %v2299
      %v2509 = vpop.f32.mrf.mxu0
      %v2510 = vadd.f32 0.0, %v2509
      %v2511 = vpop.f32.mrf.mxu0
      %v2512 = vadd.f32 0.0, %v2511
      %2513 = vmatmul.bf16.gmra.mxu0 %v2301
      %v2514 = vpop.f32.mrf.mxu0
      %v2515 = vadd.f32 0.0, %v2514
      %v2516 = vpop.f32.mrf.mxu0
      %v2517 = vadd.f32 0.0, %v2516
      %2518 = vmatmul.bf16.gmra.mxu0 %v2303
      %v2519 = vpop.f32.mrf.mxu0
      %v2520 = vadd.f32 0.0, %v2519
      %v2521 = vpop.f32.mrf.mxu0
      %v2522 = vadd.f32 0.0, %v2521
      %2523 = vmatmul.bf16.gmra.mxu0 %v2305
      %v2524 = vpop.f32.mrf.mxu0
      %v2525 = vadd.f32 0.0, %v2524
      %v2526 = vpop.f32.mrf.mxu0
      %v2527 = vadd.f32 0.0, %v2526
      %2528 = vmatmul.bf16.gmra.mxu0 %v2307
      %v2529 = vpop.f32.mrf.mxu0
      %v2530 = vadd.f32 0.0, %v2529
      %v2531 = vpop.f32.mrf.mxu0
      %v2532 = vadd.f32 0.0, %v2531
      %2533 = vdwg.mxu0
      %2534 = vmatpush.bf16.msra.mxu0 %v2451
      %2535 = vmatpush.bf16.msra.mxu0 %v2449
      %2536 = vmatpush.bf16.msra.mxu0 %v2447
      %2537 = vmatpush.bf16.msra.mxu0 %v2445
      %2538 = vmatpush.bf16.msra.mxu0 %v2443
      %2539 = vmatpush.bf16.msra.mxu0 %v2441
      %2540 = vmatpush.bf16.msra.mxu0 %v2439
      %2541 = vmatpush.bf16.msra.mxu0 %v2437
      %2542 = vmatmul.bf16.gmra.mxu0 %v2294
      %v2543 = vpop.f32.mrf.mxu0
      %v2544 = vadd.f32 %v2495, %v2543
      %v2545 = vpop.f32.mrf.mxu0
      %v2546 = vadd.f32 %v2497, %v2545
      %2547 = vmatmul.bf16.gmra.mxu0 %v2296
      %v2548 = vpop.f32.mrf.mxu0
      %v2549 = vadd.f32 %v2500, %v2548
      %v2550 = vpop.f32.mrf.mxu0
      %v2551 = vadd.f32 %v2502, %v2550
      %2552 = vmatmul.bf16.gmra.mxu0 %v2298
      %v2553 = vpop.f32.mrf.mxu0
      %v2554 = vadd.f32 %v2505, %v2553
      %v2555 = vpop.f32.mrf.mxu0
      %v2556 = vadd.f32 %v2507, %v2555
      %2557 = vmatmul.bf16.gmra.mxu0 %v2300
      %v2558 = vpop.f32.mrf.mxu0
      %v2559 = vadd.f32 %v2510, %v2558
      %v2560 = vpop.f32.mrf.mxu0
      %v2561 = vadd.f32 %v2512, %v2560
      %2562 = vmatmul.bf16.gmra.mxu0 %v2302
      %v2563 = vpop.f32.mrf.mxu0
      %v2564 = vadd.f32 %v2515, %v2563
      %v2565 = vpop.f32.mrf.mxu0
      %v2566 = vadd.f32 %v2517, %v2565
      %2567 = vmatmul.bf16.gmra.mxu0 %v2304
      %v2568 = vpop.f32.mrf.mxu0
      %v2569 = vadd.f32 %v2520, %v2568
      %v2570 = vpop.f32.mrf.mxu0
      %v2571 = vadd.f32 %v2522, %v2570
      %2572 = vmatmul.bf16.gmra.mxu0 %v2306
      %v2573 = vpop.f32.mrf.mxu0
      %v2574 = vadd.f32 %v2525, %v2573
      %v2575 = vpop.f32.mrf.mxu0
      %v2576 = vadd.f32 %v2527, %v2575
      %2577 = vmatmul.bf16.gmra.mxu0 %v2308
      %v2578 = vpop.f32.mrf.mxu0
      %v2579 = vadd.f32 %v2530, %v2578
      %v2580 = vpop.f32.mrf.mxu0
      %v2581 = vadd.f32 %v2532, %v2580
      %2582 = vdwg.mxu0
      %2583 = vmatpush.bf16.msra.mxu0 %v2436
      %2584 = vmatpush.bf16.msra.mxu0 %v2434
      %2585 = vmatpush.bf16.msra.mxu0 %v2432
      %2586 = vmatpush.bf16.msra.mxu0 %v2430
      %2587 = vmatpush.bf16.msra.mxu0 %v2428
      %2588 = vmatpush.bf16.msra.mxu0 %v2426
      %2589 = vmatpush.bf16.msra.mxu0 %v2424
      %2590 = vmatpush.bf16.msra.mxu0 %v2422
      %2591 = vmatmul.bf16.gmra.mxu0 %v2293
      %v2592 = vpop.f32.mrf.mxu0
      %v2593 = vadd.f32 0.0, %v2592
      %v2594 = vpop.f32.mrf.mxu0
      %v2595 = vadd.f32 0.0, %v2594
      %2596 = vmatmul.bf16.gmra.mxu0 %v2295
      %v2597 = vpop.f32.mrf.mxu0
      %v2598 = vadd.f32 0.0, %v2597
      %v2599 = vpop.f32.mrf.mxu0
      %v2600 = vadd.f32 0.0, %v2599
      %2601 = vmatmul.bf16.gmra.mxu0 %v2297
      %v2602 = vpop.f32.mrf.mxu0
      %v2603 = vadd.f32 0.0, %v2602
      %v2604 = vpop.f32.mrf.mxu0
      %v2605 = vadd.f32 0.0, %v2604
      %2606 = vmatmul.bf16.gmra.mxu0 %v2299
      %v2607 = vpop.f32.mrf.mxu0
      %v2608 = vadd.f32 0.0, %v2607
      %v2609 = vpop.f32.mrf.mxu0
      %v2610 = vadd.f32 0.0, %v2609
      %2611 = vmatmul.bf16.gmra.mxu0 %v2301
      %v2612 = vpop.f32.mrf.mxu0
      %v2613 = vadd.f32 0.0, %v2612
      %v2614 = vpop.f32.mrf.mxu0
      %v2615 = vadd.f32 0.0, %v2614
      %2616 = vmatmul.bf16.gmra.mxu0 %v2303
      %v2617 = vpop.f32.mrf.mxu0
      %v2618 = vadd.f32 0.0, %v2617
      %v2619 = vpop.f32.mrf.mxu0
      %v2620 = vadd.f32 0.0, %v2619
      %2621 = vmatmul.bf16.gmra.mxu0 %v2305
      %v2622 = vpop.f32.mrf.mxu0
      %v2623 = vadd.f32 0.0, %v2622
      %v2624 = vpop.f32.mrf.mxu0
      %v2625 = vadd.f32 0.0, %v2624
      %2626 = vmatmul.bf16.gmra.mxu0 %v2307
      %v2627 = vpop.f32.mrf.mxu0
      %v2628 = vadd.f32 0.0, %v2627
      %v2629 = vpop.f32.mrf.mxu0
      %v2630 = vadd.f32 0.0, %v2629
      %2631 = vdwg.mxu0
      %2632 = vmatpush.bf16.msra.mxu0 %v2452
      %2633 = vmatpush.bf16.msra.mxu0 %v2450
      %2634 = vmatpush.bf16.msra.mxu0 %v2448
      %2635 = vmatpush.bf16.msra.mxu0 %v2446
      %2636 = vmatpush.bf16.msra.mxu0 %v2444
      %2637 = vmatpush.bf16.msra.mxu0 %v2442
      %2638 = vmatpush.bf16.msra.mxu0 %v2440
      %2639 = vmatpush.bf16.msra.mxu0 %v2438
      %2640 = vmatmul.bf16.gmra.mxu0 %v2294
      %v2641 = vpop.f32.mrf.mxu0
      %v2642 = vadd.f32 %v2593, %v2641
      %v2643 = vpop.f32.mrf.mxu0
      %v2644 = vadd.f32 %v2595, %v2643
      %2645 = vmatmul.bf16.gmra.mxu0 %v2296
      %v2646 = vpop.f32.mrf.mxu0
      %v2647 = vadd.f32 %v2598, %v2646
      %v2648 = vpop.f32.mrf.mxu0
      %v2649 = vadd.f32 %v2600, %v2648
      %2650 = vmatmul.bf16.gmra.mxu0 %v2298
      %v2651 = vpop.f32.mrf.mxu0
      %v2652 = vadd.f32 %v2603, %v2651
      %v2653 = vpop.f32.mrf.mxu0
      %v2654 = vadd.f32 %v2605, %v2653
      %2655 = vmatmul.bf16.gmra.mxu0 %v2300
      %v2656 = vpop.f32.mrf.mxu0
      %v2657 = vadd.f32 %v2608, %v2656
      %v2658 = vpop.f32.mrf.mxu0
      %v2659 = vadd.f32 %v2610, %v2658
      %2660 = vmatmul.bf16.gmra.mxu0 %v2302
      %v2661 = vpop.f32.mrf.mxu0
      %v2662 = vadd.f32 %v2613, %v2661
      %v2663 = vpop.f32.mrf.mxu0
      %v2664 = vadd.f32 %v2615, %v2663
      %2665 = vmatmul.bf16.gmra.mxu0 %v2304
      %v2666 = vpop.f32.mrf.mxu0
      %v2667 = vadd.f32 %v2618, %v2666
      %v2668 = vpop.f32.mrf.mxu0
      %v2669 = vadd.f32 %v2620, %v2668
      %2670 = vmatmul.bf16.gmra.mxu0 %v2306
      %v2671 = vpop.f32.mrf.mxu0
      %v2672 = vadd.f32 %v2623, %v2671
      %v2673 = vpop.f32.mrf.mxu0
      %v2674 = vadd.f32 %v2625, %v2673
      %2675 = vmatmul.bf16.gmra.mxu0 %v2308
      %v2676 = vpop.f32.mrf.mxu0
      %v2677 = vadd.f32 %v2628, %v2676
      %v2678 = vpop.f32.mrf.mxu0
      %v2679 = vadd.f32 %v2630, %v2678
      %2680 = vdwg.mxu0
      %v2681 = vadd.f32 %v2160, %v2544
      %v2682 = vadd.f32 %v2161, %v2642
      %v2683 = vadd.f32 %v2162, %v2546
      %v2684 = vadd.f32 %v2163, %v2644
      %v2685 = vadd.f32 %v2164, %v2549
      %v2686 = vadd.f32 %v2165, %v2647
      %v2687 = vadd.f32 %v2166, %v2551
      %v2688 = vadd.f32 %v2167, %v2649
      %v2689 = vadd.f32 %v2168, %v2554
      %v2690 = vadd.f32 %v2169, %v2652
      %v2691 = vadd.f32 %v2170, %v2556
      %v2692 = vadd.f32 %v2171, %v2654
      %v2693 = vadd.f32 %v2172, %v2559
      %v2694 = vadd.f32 %v2173, %v2657
      %v2695 = vadd.f32 %v2174, %v2561
      %v2696 = vadd.f32 %v2175, %v2659
      %v2697 = vadd.f32 %v2176, %v2564
      %v2698 = vadd.f32 %v2177, %v2662
      %v2699 = vadd.f32 %v2178, %v2566
      %v2700 = vadd.f32 %v2179, %v2664
      %v2701 = vadd.f32 %v2180, %v2569
      %v2702 = vadd.f32 %v2181, %v2667
      %v2703 = vadd.f32 %v2182, %v2571
      %v2704 = vadd.f32 %v2183, %v2669
      %v2705 = vadd.f32 %v2184, %v2574
      %v2706 = vadd.f32 %v2185, %v2672
      %v2707 = vadd.f32 %v2186, %v2576
      %v2708 = vadd.f32 %v2187, %v2674
      %v2709 = vadd.f32 %v2188, %v2579
      %v2710 = vadd.f32 %v2189, %v2677
      %v2711 = vadd.f32 %v2190, %v2581
      %v2712 = vadd.f32 %v2191, %v2679
      %v2713 = vld [vmem:[%s2195] sm:$0xff]
      %v2714 = vld [vmem:[%s2195 + $0x8] sm:$0xff]
      %v2715 = vld [vmem:[%s2195 + $0x10] sm:$0x11]
      %v2716 = vld [vmem:[%s2195 + $0x18] sm:$0xff]
      %v2717 = vld [vmem:[%s2195 + $0x20] sm:$0xff]
      %v2718 = vld [vmem:[%s2195 + $0x28] sm:$0x11]
      %v2719 = vld [vmem:[%s2195 + $0x30] sm:$0xff]
      %v2720 = vld [vmem:[%s2195 + $0x38] sm:$0xff]
      %v2721 = vld [vmem:[%s2195 + $0x40] sm:$0x11]
      %v2722 = vld [vmem:[%s2195 + $0x48] sm:$0xff]
      %v2723 = vld [vmem:[%s2195 + $0x50] sm:$0xff]
      %v2724 = vld [vmem:[%s2195 + $0x58] sm:$0x11]
      %v2725 = vld [vmem:[%s2195 + $0x60] sm:$0xff]
      %v2726 = vld [vmem:[%s2195 + $0x68] sm:$0xff]
      %v2727 = vld [vmem:[%s2195 + $0x70] sm:$0x11]
      %v2728 = vld [vmem:[%s2195 + $0x78] sm:$0xff]
      %v2729 = vld [vmem:[%s2195 + $0x80] sm:$0xff]
      %v2730 = vld [vmem:[%s2195 + $0x88] sm:$0x11]
      %v2731 = vld [vmem:[%s2195 + $0x90] sm:$0xff]
      %v2732 = vld [vmem:[%s2195 + $0x98] sm:$0xff]
      %v2733 = vld [vmem:[%s2195 + $0xa0] sm:$0x11]
      %v2734 = vld [vmem:[%s2195 + $0xa8] sm:$0xff]
      %v2735 = vld [vmem:[%s2195 + $0xb0] sm:$0xff]
      %v2736 = vld [vmem:[%s2195 + $0xb8] sm:$0x11]
      %v2738 = vshrl.u32 %v2713, 16
      %v2740 = vrot.slane %v2738, 4
      %v2741 = vshll.u32 %v2713, 16
      %v2743 = vrot.slane %v2741, 5
      %v2744 = vor.u32 %v2740, %v2743
      %v2745 = vrot.slane %v2744, 4
      %v2747 = vshll.u32 %v2714, 16
      %v2749 = vrot.slane %v2747, 5
      %v2750 = vsel %vm542, %v2745, %v2749
      %v2751 = vshrl.u32 %v2714, 16
      %v2753 = vrot.slane %v2751, 4
      %v2754 = vor.u32 %v2753, %v2749
      %v2755 = vrot.slane %v2754, 4
      %v2757 = vshll.u32 %v2715, 16
      %v2759 = vrot.slane %v2757, 5
      %v2760 = vsel %vm542, %v2755, %v2759
      %v2762 = vshrl.u32 %v2716, 16
      %v2764 = vrot.slane %v2762, 4
      %v2765 = vshll.u32 %v2716, 16
      %v2767 = vrot.slane %v2765, 5
      %v2768 = vor.u32 %v2764, %v2767
      %v2769 = vrot.slane %v2768, 4
      %v2771 = vshll.u32 %v2717, 16
      %v2773 = vrot.slane %v2771, 5
      %v2774 = vsel %vm542, %v2769, %v2773
      %v2775 = vshrl.u32 %v2717, 16
      %v2777 = vrot.slane %v2775, 4
      %v2778 = vor.u32 %v2777, %v2773
      %v2779 = vrot.slane %v2778, 4
      %v2781 = vshll.u32 %v2718, 16
      %v2783 = vrot.slane %v2781, 5
      %v2784 = vsel %vm542, %v2779, %v2783
      %v2786 = vshrl.u32 %v2719, 16
      %v2788 = vrot.slane %v2786, 4
      %v2789 = vshll.u32 %v2719, 16
      %v2791 = vrot.slane %v2789, 5
      %v2792 = vor.u32 %v2788, %v2791
      %v2793 = vrot.slane %v2792, 4
      %v2795 = vshll.u32 %v2720, 16
      %v2797 = vrot.slane %v2795, 5
      %v2798 = vsel %vm542, %v2793, %v2797
      %v2799 = vshrl.u32 %v2720, 16
      %v2801 = vrot.slane %v2799, 4
      %v2802 = vor.u32 %v2801, %v2797
      %v2803 = vrot.slane %v2802, 4
      %v2805 = vshll.u32 %v2721, 16
      %v2807 = vrot.slane %v2805, 5
      %v2808 = vsel %vm542, %v2803, %v2807
      %v2810 = vshrl.u32 %v2722, 16
      %v2812 = vrot.slane %v2810, 4
      %v2813 = vshll.u32 %v2722, 16
      %v2815 = vrot.slane %v2813, 5
      %v2816 = vor.u32 %v2812, %v2815
      %v2817 = vrot.slane %v2816, 4
      %v2819 = vshll.u32 %v2723, 16
      %v2821 = vrot.slane %v2819, 5
      %v2822 = vsel %vm542, %v2817, %v2821
      %v2823 = vshrl.u32 %v2723, 16
      %v2825 = vrot.slane %v2823, 4
      %v2826 = vor.u32 %v2825, %v2821
      %v2827 = vrot.slane %v2826, 4
      %v2829 = vshll.u32 %v2724, 16
      %v2831 = vrot.slane %v2829, 5
      %v2832 = vsel %vm542, %v2827, %v2831
      %v2834 = vshrl.u32 %v2725, 16
      %v2836 = vrot.slane %v2834, 4
      %v2837 = vshll.u32 %v2725, 16
      %v2839 = vrot.slane %v2837, 5
      %v2840 = vor.u32 %v2836, %v2839
      %v2841 = vrot.slane %v2840, 4
      %v2843 = vshll.u32 %v2726, 16
      %v2845 = vrot.slane %v2843, 5
      %v2846 = vsel %vm542, %v2841, %v2845
      %v2847 = vshrl.u32 %v2726, 16
      %v2849 = vrot.slane %v2847, 4
      %v2850 = vor.u32 %v2849, %v2845
      %v2851 = vrot.slane %v2850, 4
      %v2853 = vshll.u32 %v2727, 16
      %v2855 = vrot.slane %v2853, 5
      %v2856 = vsel %vm542, %v2851, %v2855
      %v2858 = vshrl.u32 %v2728, 16
      %v2860 = vrot.slane %v2858, 4
      %v2861 = vshll.u32 %v2728, 16
      %v2863 = vrot.slane %v2861, 5
      %v2864 = vor.u32 %v2860, %v2863
      %v2865 = vrot.slane %v2864, 4
      %v2867 = vshll.u32 %v2729, 16
      %v2869 = vrot.slane %v2867, 5
      %v2870 = vsel %vm542, %v2865, %v2869
      %v2871 = vshrl.u32 %v2729, 16
      %v2873 = vrot.slane %v2871, 4
      %v2874 = vor.u32 %v2873, %v2869
      %v2875 = vrot.slane %v2874, 4
      %v2877 = vshll.u32 %v2730, 16
      %v2879 = vrot.slane %v2877, 5
      %v2880 = vsel %vm542, %v2875, %v2879
      %v2882 = vshrl.u32 %v2731, 16
      %v2884 = vrot.slane %v2882, 4
      %v2885 = vshll.u32 %v2731, 16
      %v2887 = vrot.slane %v2885, 5
      %v2888 = vor.u32 %v2884, %v2887
      %v2889 = vrot.slane %v2888, 4
      %v2891 = vshll.u32 %v2732, 16
      %v2893 = vrot.slane %v2891, 5
      %v2894 = vsel %vm542, %v2889, %v2893
      %v2895 = vshrl.u32 %v2732, 16
      %v2897 = vrot.slane %v2895, 4
      %v2898 = vor.u32 %v2897, %v2893
      %v2899 = vrot.slane %v2898, 4
      %v2901 = vshll.u32 %v2733, 16
      %v2903 = vrot.slane %v2901, 5
      %v2904 = vsel %vm542, %v2899, %v2903
      %v2906 = vshrl.u32 %v2734, 16
      %v2908 = vrot.slane %v2906, 4
      %v2909 = vshll.u32 %v2734, 16
      %v2911 = vrot.slane %v2909, 5
      %v2912 = vor.u32 %v2908, %v2911
      %v2913 = vrot.slane %v2912, 4
      %v2915 = vshll.u32 %v2735, 16
      %v2917 = vrot.slane %v2915, 5
      %v2918 = vsel %vm542, %v2913, %v2917
      %v2919 = vshrl.u32 %v2735, 16
      %v2921 = vrot.slane %v2919, 4
      %v2922 = vor.u32 %v2921, %v2917
      %v2923 = vrot.slane %v2922, 4
      %v2925 = vshll.u32 %v2736, 16
      %v2927 = vrot.slane %v2925, 5
      %v2928 = vsel %vm542, %v2923, %v2927
      %s2929 = scalar_lea.vmem %s1, 1024
      %v2930 = vld [vmem:[%s2929] sm:$0xff]
      %v2931 = vld [vmem:[%s2929 + $0x8] sm:$0xff]
      %v2932 = vld [vmem:[%s2929 + $0x10] sm:$0xff]
      %v2933 = vld [vmem:[%s2929 + $0x18] sm:$0xff]
      %v2934 = vld [vmem:[%s2929 + $0x20] sm:$0xff]
      %v2935 = vld [vmem:[%s2929 + $0x28] sm:$0xff]
      %v2936 = vld [vmem:[%s2929 + $0x30] sm:$0xff]
      %v2937 = vld [vmem:[%s2929 + $0x38] sm:$0xff]
      %v2938 = vld [vmem:[%s2929 + $0x40] sm:$0xff]
      %v2939 = vld [vmem:[%s2929 + $0x48] sm:$0xff]
      %v2940 = vld [vmem:[%s2929 + $0x50] sm:$0xff]
      %v2941 = vld [vmem:[%s2929 + $0x58] sm:$0xff]
      %v2942 = vld [vmem:[%s2929 + $0x60] sm:$0xff]
      %v2943 = vld [vmem:[%s2929 + $0x68] sm:$0xff]
      %v2944 = vld [vmem:[%s2929 + $0x70] sm:$0xff]
      %v2945 = vld [vmem:[%s2929 + $0x78] sm:$0xff]
      %v2946 = vld [vmem:[%s2929 + $0x80] sm:$0xff]
      %v2947 = vld [vmem:[%s2929 + $0x88] sm:$0xff]
      %v2948 = vld [vmem:[%s2929 + $0x90] sm:$0xff]
      %v2949 = vld [vmem:[%s2929 + $0x98] sm:$0xff]
      %v2950 = vld [vmem:[%s2929 + $0xa0] sm:$0xff]
      %v2951 = vld [vmem:[%s2929 + $0xa8] sm:$0xff]
      %v2952 = vld [vmem:[%s2929 + $0xb0] sm:$0xff]
      %v2953 = vld [vmem:[%s2929 + $0xb8] sm:$0xff]
      %v2954 = vld [vmem:[%s2929 + $0xc0] sm:$0xff]
      %v2955 = vld [vmem:[%s2929 + $0xc8] sm:$0xff]
      %v2956 = vld [vmem:[%s2929 + $0xd0] sm:$0xff]
      %v2957 = vld [vmem:[%s2929 + $0xd8] sm:$0xff]
      %v2958 = vld [vmem:[%s2929 + $0xe0] sm:$0xff]
      %v2959 = vld [vmem:[%s2929 + $0xe8] sm:$0xff]
      %v2960 = vld [vmem:[%s2929 + $0xf0] sm:$0xff]
      %v2961 = vld [vmem:[%s2929 + $0xf8] sm:$0xff]
      %v2962 = vunpack.c.l.b16 %v2750
      %v2963 = vunpack.c.h.b16 %v2750
      %v2964 = vunpack.c.l.b16 %v2760
      %v2965 = vunpack.c.h.b16 %v2760
      %v2966 = vunpack.c.l.b16 %v2774
      %v2967 = vunpack.c.h.b16 %v2774
      %v2968 = vunpack.c.l.b16 %v2784
      %v2969 = vunpack.c.h.b16 %v2784
      %v2970 = vunpack.c.l.b16 %v2798
      %v2971 = vunpack.c.h.b16 %v2798
      %v2972 = vunpack.c.l.b16 %v2808
      %v2973 = vunpack.c.h.b16 %v2808
      %v2974 = vunpack.c.l.b16 %v2822
      %v2975 = vunpack.c.h.b16 %v2822
      %v2976 = vunpack.c.l.b16 %v2832
      %v2977 = vunpack.c.h.b16 %v2832
      %v2978 = vunpack.c.l.b16 %v2846
      %v2979 = vunpack.c.h.b16 %v2846
      %v2980 = vunpack.c.l.b16 %v2856
      %v2981 = vunpack.c.h.b16 %v2856
      %v2982 = vunpack.c.l.b16 %v2870
      %v2983 = vunpack.c.h.b16 %v2870
      %v2984 = vunpack.c.l.b16 %v2880
      %v2985 = vunpack.c.h.b16 %v2880
      %v2986 = vunpack.c.l.b16 %v2894
      %v2987 = vunpack.c.h.b16 %v2894
      %v2988 = vunpack.c.l.b16 %v2904
      %v2989 = vunpack.c.h.b16 %v2904
      %v2990 = vunpack.c.l.b16 %v2918
      %v2991 = vunpack.c.h.b16 %v2918
      %v2992 = vunpack.c.l.b16 %v2928
      %v2993 = vunpack.c.h.b16 %v2928
      %v2994 = vpack.c.b16 %v2964, %v2962
      %v2995 = vpack.c.b16 %v2965, %v2963
      %v2996 = vpack.c.b16 %v2968, %v2966
      %v2997 = vpack.c.b16 %v2969, %v2967
      %v2998 = vpack.c.b16 %v2972, %v2970
      %v2999 = vpack.c.b16 %v2973, %v2971
      %v3000 = vpack.c.b16 %v2976, %v2974
      %v3001 = vpack.c.b16 %v2977, %v2975
      %v3002 = vpack.c.b16 %v2980, %v2978
      %v3003 = vpack.c.b16 %v2981, %v2979
      %v3004 = vpack.c.b16 %v2984, %v2982
      %v3005 = vpack.c.b16 %v2985, %v2983
      %v3006 = vpack.c.b16 %v2988, %v2986
      %v3007 = vpack.c.b16 %v2989, %v2987
      %v3008 = vpack.c.b16 %v2992, %v2990
      %v3009 = vpack.c.b16 %v2993, %v2991
      %v3058 = vunpack.c.l.b16 %v2930
      %v3059 = vunpack.c.h.b16 %v2930
      %v3060 = vunpack.c.l.b16 %v2931
      %v3061 = vunpack.c.h.b16 %v2931
      %v3062 = vunpack.c.l.b16 %v2932
      %v3063 = vunpack.c.h.b16 %v2932
      %v3064 = vunpack.c.l.b16 %v2933
      %v3065 = vunpack.c.h.b16 %v2933
      %v3066 = vunpack.c.l.b16 %v2934
      %v3067 = vunpack.c.h.b16 %v2934
      %v3068 = vunpack.c.l.b16 %v2935
      %v3069 = vunpack.c.h.b16 %v2935
      %v3070 = vunpack.c.l.b16 %v2936
      %v3071 = vunpack.c.h.b16 %v2936
      %v3072 = vunpack.c.l.b16 %v2937
      %v3073 = vunpack.c.h.b16 %v2937
      %v3074 = vunpack.c.l.b16 %v2938
      %v3075 = vunpack.c.h.b16 %v2938
      %v3076 = vunpack.c.l.b16 %v2939
      %v3077 = vunpack.c.h.b16 %v2939
      %v3078 = vunpack.c.l.b16 %v2940
      %v3079 = vunpack.c.h.b16 %v2940
      %v3080 = vunpack.c.l.b16 %v2941
      %v3081 = vunpack.c.h.b16 %v2941
      %v3082 = vunpack.c.l.b16 %v2942
      %v3083 = vunpack.c.h.b16 %v2942
      %v3084 = vunpack.c.l.b16 %v2943
      %v3085 = vunpack.c.h.b16 %v2943
      %v3086 = vunpack.c.l.b16 %v2944
      %v3087 = vunpack.c.h.b16 %v2944
      %v3088 = vunpack.c.l.b16 %v2945
      %v3089 = vunpack.c.h.b16 %v2945
      %v3090 = vunpack.c.l.b16 %v2946
      %v3091 = vunpack.c.h.b16 %v2946
      %v3092 = vunpack.c.l.b16 %v2947
      %v3093 = vunpack.c.h.b16 %v2947
      %v3094 = vunpack.c.l.b16 %v2948
      %v3095 = vunpack.c.h.b16 %v2948
      %v3096 = vunpack.c.l.b16 %v2949
      %v3097 = vunpack.c.h.b16 %v2949
      %v3098 = vunpack.c.l.b16 %v2950
      %v3099 = vunpack.c.h.b16 %v2950
      %v3100 = vunpack.c.l.b16 %v2951
      %v3101 = vunpack.c.h.b16 %v2951
      %v3102 = vunpack.c.l.b16 %v2952
      %v3103 = vunpack.c.h.b16 %v2952
      %v3104 = vunpack.c.l.b16 %v2953
      %v3105 = vunpack.c.h.b16 %v2953
      %v3106 = vunpack.c.l.b16 %v2954
      %v3107 = vunpack.c.h.b16 %v2954
      %v3108 = vunpack.c.l.b16 %v2955
      %v3109 = vunpack.c.h.b16 %v2955
      %v3110 = vunpack.c.l.b16 %v2956
      %v3111 = vunpack.c.h.b16 %v2956
      %v3112 = vunpack.c.l.b16 %v2957
      %v3113 = vunpack.c.h.b16 %v2957
      %v3114 = vunpack.c.l.b16 %v2958
      %v3115 = vunpack.c.h.b16 %v2958
      %v3116 = vunpack.c.l.b16 %v2959
      %v3117 = vunpack.c.h.b16 %v2959
      %v3118 = vunpack.c.l.b16 %v2960
      %v3119 = vunpack.c.h.b16 %v2960
      %v3120 = vunpack.c.l.b16 %v2961
      %v3121 = vunpack.c.h.b16 %v2961
      %v3122 = vpack.c.b16 %v3060, %v3058
      %v3123 = vpack.c.b16 %v3061, %v3059
      %v3124 = vpack.c.b16 %v3064, %v3062
      %v3125 = vpack.c.b16 %v3065, %v3063
      %v3126 = vpack.c.b16 %v3068, %v3066
      %v3127 = vpack.c.b16 %v3069, %v3067
      %v3128 = vpack.c.b16 %v3072, %v3070
      %v3129 = vpack.c.b16 %v3073, %v3071
      %v3130 = vpack.c.b16 %v3076, %v3074
      %v3131 = vpack.c.b16 %v3077, %v3075
      %v3132 = vpack.c.b16 %v3080, %v3078
      %v3133 = vpack.c.b16 %v3081, %v3079
      %v3134 = vpack.c.b16 %v3084, %v3082
      %v3135 = vpack.c.b16 %v3085, %v3083
      %v3136 = vpack.c.b16 %v3088, %v3086
      %v3137 = vpack.c.b16 %v3089, %v3087
      %v3138 = vpack.c.b16 %v3092, %v3090
      %v3139 = vpack.c.b16 %v3093, %v3091
      %v3140 = vpack.c.b16 %v3096, %v3094
      %v3141 = vpack.c.b16 %v3097, %v3095
      %v3142 = vpack.c.b16 %v3100, %v3098
      %v3143 = vpack.c.b16 %v3101, %v3099
      %v3144 = vpack.c.b16 %v3104, %v3102
      %v3145 = vpack.c.b16 %v3105, %v3103
      %v3146 = vpack.c.b16 %v3108, %v3106
      %v3147 = vpack.c.b16 %v3109, %v3107
      %v3148 = vpack.c.b16 %v3112, %v3110
      %v3149 = vpack.c.b16 %v3113, %v3111
      %v3150 = vpack.c.b16 %v3116, %v3114
      %v3151 = vpack.c.b16 %v3117, %v3115
      %v3152 = vpack.c.b16 %v3120, %v3118
      %v3153 = vpack.c.b16 %v3121, %v3119
      %3186 = vmatpush.bf16.msra.mxu0 %v3136
      %3187 = vmatpush.bf16.msra.mxu0 %v3134
      %3188 = vmatpush.bf16.msra.mxu0 %v3132
      %3189 = vmatpush.bf16.msra.mxu0 %v3130
      %3190 = vmatpush.bf16.msra.mxu0 %v3128
      %3191 = vmatpush.bf16.msra.mxu0 %v3126
      %3192 = vmatpush.bf16.msra.mxu0 %v3124
      %3193 = vmatpush.bf16.msra.mxu0 %v3122
      %3194 = vmatmul.bf16.gmra.mxu0 %v2994
      %v3195 = vpop.f32.mrf.mxu0
      %v3196 = vadd.f32 0.0, %v3195
      %v3197 = vpop.f32.mrf.mxu0
      %v3198 = vadd.f32 0.0, %v3197
      %3199 = vmatmul.bf16.gmra.mxu0 %v2996
      %v3200 = vpop.f32.mrf.mxu0
      %v3201 = vadd.f32 0.0, %v3200
      %v3202 = vpop.f32.mrf.mxu0
      %v3203 = vadd.f32 0.0, %v3202
      %3204 = vmatmul.bf16.gmra.mxu0 %v2998
      %v3205 = vpop.f32.mrf.mxu0
      %v3206 = vadd.f32 0.0, %v3205
      %v3207 = vpop.f32.mrf.mxu0
      %v3208 = vadd.f32 0.0, %v3207
      %3209 = vmatmul.bf16.gmra.mxu0 %v3000
      %v3210 = vpop.f32.mrf.mxu0
      %v3211 = vadd.f32 0.0, %v3210
      %v3212 = vpop.f32.mrf.mxu0
      %v3213 = vadd.f32 0.0, %v3212
      %3214 = vmatmul.bf16.gmra.mxu0 %v3002
      %v3215 = vpop.f32.mrf.mxu0
      %v3216 = vadd.f32 0.0, %v3215
      %v3217 = vpop.f32.mrf.mxu0
      %v3218 = vadd.f32 0.0, %v3217
      %3219 = vmatmul.bf16.gmra.mxu0 %v3004
      %v3220 = vpop.f32.mrf.mxu0
      %v3221 = vadd.f32 0.0, %v3220
      %v3222 = vpop.f32.mrf.mxu0
      %v3223 = vadd.f32 0.0, %v3222
      %3224 = vmatmul.bf16.gmra.mxu0 %v3006
      %v3225 = vpop.f32.mrf.mxu0
      %v3226 = vadd.f32 0.0, %v3225
      %v3227 = vpop.f32.mrf.mxu0
      %v3228 = vadd.f32 0.0, %v3227
      %3229 = vmatmul.bf16.gmra.mxu0 %v3008
      %v3230 = vpop.f32.mrf.mxu0
      %v3231 = vadd.f32 0.0, %v3230
      %v3232 = vpop.f32.mrf.mxu0
      %v3233 = vadd.f32 0.0, %v3232
      %3234 = vdwg.mxu0
      %3235 = vmatpush.bf16.msra.mxu0 %v3152
      %3236 = vmatpush.bf16.msra.mxu0 %v3150
      %3237 = vmatpush.bf16.msra.mxu0 %v3148
      %3238 = vmatpush.bf16.msra.mxu0 %v3146
      %3239 = vmatpush.bf16.msra.mxu0 %v3144
      %3240 = vmatpush.bf16.msra.mxu0 %v3142
      %3241 = vmatpush.bf16.msra.mxu0 %v3140
      %3242 = vmatpush.bf16.msra.mxu0 %v3138
      %3243 = vmatmul.bf16.gmra.mxu0 %v2995
      %v3244 = vpop.f32.mrf.mxu0
      %v3245 = vadd.f32 %v3196, %v3244
      %v3246 = vpop.f32.mrf.mxu0
      %v3247 = vadd.f32 %v3198, %v3246
      %3248 = vmatmul.bf16.gmra.mxu0 %v2997
      %v3249 = vpop.f32.mrf.mxu0
      %v3250 = vadd.f32 %v3201, %v3249
      %v3251 = vpop.f32.mrf.mxu0
      %v3252 = vadd.f32 %v3203, %v3251
      %3253 = vmatmul.bf16.gmra.mxu0 %v2999
      %v3254 = vpop.f32.mrf.mxu0
      %v3255 = vadd.f32 %v3206, %v3254
      %v3256 = vpop.f32.mrf.mxu0
      %v3257 = vadd.f32 %v3208, %v3256
      %3258 = vmatmul.bf16.gmra.mxu0 %v3001
      %v3259 = vpop.f32.mrf.mxu0
      %v3260 = vadd.f32 %v3211, %v3259
      %v3261 = vpop.f32.mrf.mxu0
      %v3262 = vadd.f32 %v3213, %v3261
      %3263 = vmatmul.bf16.gmra.mxu0 %v3003
      %v3264 = vpop.f32.mrf.mxu0
      %v3265 = vadd.f32 %v3216, %v3264
      %v3266 = vpop.f32.mrf.mxu0
      %v3267 = vadd.f32 %v3218, %v3266
      %3268 = vmatmul.bf16.gmra.mxu0 %v3005
      %v3269 = vpop.f32.mrf.mxu0
      %v3270 = vadd.f32 %v3221, %v3269
      %v3271 = vpop.f32.mrf.mxu0
      %v3272 = vadd.f32 %v3223, %v3271
      %3273 = vmatmul.bf16.gmra.mxu0 %v3007
      %v3274 = vpop.f32.mrf.mxu0
      %v3275 = vadd.f32 %v3226, %v3274
      %v3276 = vpop.f32.mrf.mxu0
      %v3277 = vadd.f32 %v3228, %v3276
      %3278 = vmatmul.bf16.gmra.mxu0 %v3009
      %v3279 = vpop.f32.mrf.mxu0
      %v3280 = vadd.f32 %v3231, %v3279
      %v3281 = vpop.f32.mrf.mxu0
      %v3282 = vadd.f32 %v3233, %v3281
      %3283 = vdwg.mxu0
      %3284 = vmatpush.bf16.msra.mxu0 %v3137
      %3285 = vmatpush.bf16.msra.mxu0 %v3135
      %3286 = vmatpush.bf16.msra.mxu0 %v3133
      %3287 = vmatpush.bf16.msra.mxu0 %v3131
      %3288 = vmatpush.bf16.msra.mxu0 %v3129
      %3289 = vmatpush.bf16.msra.mxu0 %v3127
      %3290 = vmatpush.bf16.msra.mxu0 %v3125
      %3291 = vmatpush.bf16.msra.mxu0 %v3123
      %3292 = vmatmul.bf16.gmra.mxu0 %v2994
      %v3293 = vpop.f32.mrf.mxu0
      %v3294 = vadd.f32 0.0, %v3293
      %v3295 = vpop.f32.mrf.mxu0
      %v3296 = vadd.f32 0.0, %v3295
      %3297 = vmatmul.bf16.gmra.mxu0 %v2996
      %v3298 = vpop.f32.mrf.mxu0
      %v3299 = vadd.f32 0.0, %v3298
      %v3300 = vpop.f32.mrf.mxu0
      %v3301 = vadd.f32 0.0, %v3300
      %3302 = vmatmul.bf16.gmra.mxu0 %v2998
      %v3303 = vpop.f32.mrf.mxu0
      %v3304 = vadd.f32 0.0, %v3303
      %v3305 = vpop.f32.mrf.mxu0
      %v3306 = vadd.f32 0.0, %v3305
      %3307 = vmatmul.bf16.gmra.mxu0 %v3000
      %v3308 = vpop.f32.mrf.mxu0
      %v3309 = vadd.f32 0.0, %v3308
      %v3310 = vpop.f32.mrf.mxu0
      %v3311 = vadd.f32 0.0, %v3310
      %3312 = vmatmul.bf16.gmra.mxu0 %v3002
      %v3313 = vpop.f32.mrf.mxu0
      %v3314 = vadd.f32 0.0, %v3313
      %v3315 = vpop.f32.mrf.mxu0
      %v3316 = vadd.f32 0.0, %v3315
      %3317 = vmatmul.bf16.gmra.mxu0 %v3004
      %v3318 = vpop.f32.mrf.mxu0
      %v3319 = vadd.f32 0.0, %v3318
      %v3320 = vpop.f32.mrf.mxu0
      %v3321 = vadd.f32 0.0, %v3320
      %3322 = vmatmul.bf16.gmra.mxu0 %v3006
      %v3323 = vpop.f32.mrf.mxu0
      %v3324 = vadd.f32 0.0, %v3323
      %v3325 = vpop.f32.mrf.mxu0
      %v3326 = vadd.f32 0.0, %v3325
      %3327 = vmatmul.bf16.gmra.mxu0 %v3008
      %v3328 = vpop.f32.mrf.mxu0
      %v3329 = vadd.f32 0.0, %v3328
      %v3330 = vpop.f32.mrf.mxu0
      %v3331 = vadd.f32 0.0, %v3330
      %3332 = vdwg.mxu0
      %3333 = vmatpush.bf16.msra.mxu0 %v3153
      %3334 = vmatpush.bf16.msra.mxu0 %v3151
      %3335 = vmatpush.bf16.msra.mxu0 %v3149
      %3336 = vmatpush.bf16.msra.mxu0 %v3147
      %3337 = vmatpush.bf16.msra.mxu0 %v3145
      %3338 = vmatpush.bf16.msra.mxu0 %v3143
      %3339 = vmatpush.bf16.msra.mxu0 %v3141
      %3340 = vmatpush.bf16.msra.mxu0 %v3139
      %3341 = vmatmul.bf16.gmra.mxu0 %v2995
      %v3342 = vpop.f32.mrf.mxu0
      %v3343 = vadd.f32 %v3294, %v3342
      %v3344 = vpop.f32.mrf.mxu0
      %v3345 = vadd.f32 %v3296, %v3344
      %3346 = vmatmul.bf16.gmra.mxu0 %v2997
      %v3347 = vpop.f32.mrf.mxu0
      %v3348 = vadd.f32 %v3299, %v3347
      %v3349 = vpop.f32.mrf.mxu0
      %v3350 = vadd.f32 %v3301, %v3349
      %3351 = vmatmul.bf16.gmra.mxu0 %v2999
      %v3352 = vpop.f32.mrf.mxu0
      %v3353 = vadd.f32 %v3304, %v3352
      %v3354 = vpop.f32.mrf.mxu0
      %v3355 = vadd.f32 %v3306, %v3354
      %3356 = vmatmul.bf16.gmra.mxu0 %v3001
      %v3357 = vpop.f32.mrf.mxu0
      %v3358 = vadd.f32 %v3309, %v3357
      %v3359 = vpop.f32.mrf.mxu0
      %v3360 = vadd.f32 %v3311, %v3359
      %3361 = vmatmul.bf16.gmra.mxu0 %v3003
      %v3362 = vpop.f32.mrf.mxu0
      %v3363 = vadd.f32 %v3314, %v3362
      %v3364 = vpop.f32.mrf.mxu0
      %v3365 = vadd.f32 %v3316, %v3364
      %3366 = vmatmul.bf16.gmra.mxu0 %v3005
      %v3367 = vpop.f32.mrf.mxu0
      %v3368 = vadd.f32 %v3319, %v3367
      %v3369 = vpop.f32.mrf.mxu0
      %v3370 = vadd.f32 %v3321, %v3369
      %3371 = vmatmul.bf16.gmra.mxu0 %v3007
      %v3372 = vpop.f32.mrf.mxu0
      %v3373 = vadd.f32 %v3324, %v3372
      %v3374 = vpop.f32.mrf.mxu0
      %v3375 = vadd.f32 %v3326, %v3374
      %3376 = vmatmul.bf16.gmra.mxu0 %v3009
      %v3377 = vpop.f32.mrf.mxu0
      %v3378 = vadd.f32 %v3329, %v3377
      %v3379 = vpop.f32.mrf.mxu0
      %v3380 = vadd.f32 %v3331, %v3379
      %3381 = vdwg.mxu0
      %v3382 = vadd.f32 %v2681, %v3245
      %v3383 = vadd.f32 %v2682, %v3343
      %v3384 = vadd.f32 %v2683, %v3247
      %v3385 = vadd.f32 %v2684, %v3345
      %v3386 = vadd.f32 %v2685, %v3250
      %v3387 = vadd.f32 %v2686, %v3348
      %v3388 = vadd.f32 %v2687, %v3252
      %v3389 = vadd.f32 %v2688, %v3350
      %v3390 = vadd.f32 %v2689, %v3255
      %v3391 = vadd.f32 %v2690, %v3353
      %v3392 = vadd.f32 %v2691, %v3257
      %v3393 = vadd.f32 %v2692, %v3355
      %v3394 = vadd.f32 %v2693, %v3260
      %v3395 = vadd.f32 %v2694, %v3358
      %v3396 = vadd.f32 %v2695, %v3262
      %v3397 = vadd.f32 %v2696, %v3360
      %v3398 = vadd.f32 %v2697, %v3265
      %v3399 = vadd.f32 %v2698, %v3363
      %v3400 = vadd.f32 %v2699, %v3267
      %v3401 = vadd.f32 %v2700, %v3365
      %v3402 = vadd.f32 %v2701, %v3270
      %v3403 = vadd.f32 %v2702, %v3368
      %v3404 = vadd.f32 %v2703, %v3272
      %v3405 = vadd.f32 %v2704, %v3370
      %v3406 = vadd.f32 %v2705, %v3275
      %v3407 = vadd.f32 %v2706, %v3373
      %v3408 = vadd.f32 %v2707, %v3277
      %v3409 = vadd.f32 %v2708, %v3375
      %v3410 = vadd.f32 %v2709, %v3280
      %v3411 = vadd.f32 %v2710, %v3378
      %v3412 = vadd.f32 %v2711, %v3282
      %v3413 = vadd.f32 %v2712, %v3380
      %v3414 = vld [vmem:[%s2195] sm:$0xee]
      %v3415 = vld [vmem:[%s2195 + $0x18] sm:$0xee]
      %v3416 = vld [vmem:[%s2195 + $0x30] sm:$0xee]
      %v3417 = vld [vmem:[%s2195 + $0x48] sm:$0xee]
      %v3418 = vld [vmem:[%s2195 + $0x60] sm:$0xee]
      %v3419 = vld [vmem:[%s2195 + $0x78] sm:$0xee]
      %v3420 = vld [vmem:[%s2195 + $0x90] sm:$0xee]
      %v3421 = vld [vmem:[%s2195 + $0xa8] sm:$0xee]
      %v3446 = vrot.slane %v3414, 5
      %v3447 = vrot.slane %v3446, 4
      %v3448 = vrot.slane %v2714, 5
      %v3449 = vsel %vm1650, %v3447, %v3448
      %v3450 = vrot.slane %v3448, 4
      %v3451 = vrot.slane %v2715, 5
      %v3452 = vsel %vm1650, %v3450, %v3451
      %v3453 = vrot.slane %v3415, 5
      %v3454 = vrot.slane %v3453, 4
      %v3455 = vrot.slane %v2717, 5
      %v3456 = vsel %vm1650, %v3454, %v3455
      %v3457 = vrot.slane %v3455, 4
      %v3458 = vrot.slane %v2718, 5
      %v3459 = vsel %vm1650, %v3457, %v3458
      %v3460 = vrot.slane %v3416, 5
      %v3461 = vrot.slane %v3460, 4
      %v3462 = vrot.slane %v2720, 5
      %v3463 = vsel %vm1650, %v3461, %v3462
      %v3464 = vrot.slane %v3462, 4
      %v3465 = vrot.slane %v2721, 5
      %v3466 = vsel %vm1650, %v3464, %v3465
      %v3467 = vrot.slane %v3417, 5
      %v3468 = vrot.slane %v3467, 4
      %v3469 = vrot.slane %v2723, 5
      %v3470 = vsel %vm1650, %v3468, %v3469
      %v3471 = vrot.slane %v3469, 4
      %v3472 = vrot.slane %v2724, 5
      %v3473 = vsel %vm1650, %v3471, %v3472
      %v3474 = vrot.slane %v3418, 5
      %v3475 = vrot.slane %v3474, 4
      %v3476 = vrot.slane %v2726, 5
      %v3477 = vsel %vm1650, %v3475, %v3476
      %v3478 = vrot.slane %v3476, 4
      %v3479 = vrot.slane %v2727, 5
      %v3480 = vsel %vm1650, %v3478, %v3479
      %v3481 = vrot.slane %v3419, 5
      %v3482 = vrot.slane %v3481, 4
      %v3483 = vrot.slane %v2729, 5
      %v3484 = vsel %vm1650, %v3482, %v3483
      %v3485 = vrot.slane %v3483, 4
      %v3486 = vrot.slane %v2730, 5
      %v3487 = vsel %vm1650, %v3485, %v3486
      %v3488 = vrot.slane %v3420, 5
      %v3489 = vrot.slane %v3488, 4
      %v3490 = vrot.slane %v2732, 5
      %v3491 = vsel %vm1650, %v3489, %v3490
      %v3492 = vrot.slane %v3490, 4
      %v3493 = vrot.slane %v2733, 5
      %v3494 = vsel %vm1650, %v3492, %v3493
      %v3495 = vrot.slane %v3421, 5
      %v3496 = vrot.slane %v3495, 4
      %v3497 = vrot.slane %v2735, 5
      %v3498 = vsel %vm1650, %v3496, %v3497
      %v3499 = vrot.slane %v3497, 4
      %v3500 = vrot.slane %v2736, 5
      %v3501 = vsel %vm1650, %v3499, %v3500
      %s3502 = scalar_lea.vmem %s1, 1280
      %v3503 = vld [vmem:[%s3502] sm:$0xff]
      %v3504 = vld [vmem:[%s3502 + $0x8] sm:$0xff]
      %v3505 = vld [vmem:[%s3502 + $0x10] sm:$0xff]
      %v3506 = vld [vmem:[%s3502 + $0x18] sm:$0xff]
      %v3507 = vld [vmem:[%s3502 + $0x20] sm:$0xff]
      %v3508 = vld [vmem:[%s3502 + $0x28] sm:$0xff]
      %v3509 = vld [vmem:[%s3502 + $0x30] sm:$0xff]
      %v3510 = vld [vmem:[%s3502 + $0x38] sm:$0xff]
      %v3511 = vld [vmem:[%s3502 + $0x40] sm:$0xff]
      %v3512 = vld [vmem:[%s3502 + $0x48] sm:$0xff]
      %v3513 = vld [vmem:[%s3502 + $0x50] sm:$0xff]
      %v3514 = vld [vmem:[%s3502 + $0x58] sm:$0xff]
      %v3515 = vld [vmem:[%s3502 + $0x60] sm:$0xff]
      %v3516 = vld [vmem:[%s3502 + $0x68] sm:$0xff]
      %v3517 = vld [vmem:[%s3502 + $0x70] sm:$0xff]
      %v3518 = vld [vmem:[%s3502 + $0x78] sm:$0xff]
      %v3519 = vld [vmem:[%s3502 + $0x80] sm:$0xff]
      %v3520 = vld [vmem:[%s3502 + $0x88] sm:$0xff]
      %v3521 = vld [vmem:[%s3502 + $0x90] sm:$0xff]
      %v3522 = vld [vmem:[%s3502 + $0x98] sm:$0xff]
      %v3523 = vld [vmem:[%s3502 + $0xa0] sm:$0xff]
      %v3524 = vld [vmem:[%s3502 + $0xa8] sm:$0xff]
      %v3525 = vld [vmem:[%s3502 + $0xb0] sm:$0xff]
      %v3526 = vld [vmem:[%s3502 + $0xb8] sm:$0xff]
      %v3527 = vld [vmem:[%s3502 + $0xc0] sm:$0xff]
      %v3528 = vld [vmem:[%s3502 + $0xc8] sm:$0xff]
      %v3529 = vld [vmem:[%s3502 + $0xd0] sm:$0xff]
      %v3530 = vld [vmem:[%s3502 + $0xd8] sm:$0xff]
      %v3531 = vld [vmem:[%s3502 + $0xe0] sm:$0xff]
      %v3532 = vld [vmem:[%s3502 + $0xe8] sm:$0xff]
      %v3533 = vld [vmem:[%s3502 + $0xf0] sm:$0xff]
      %v3534 = vld [vmem:[%s3502 + $0xf8] sm:$0xff]
      %v3535 = vunpack.c.l.b16 %v3449
      %v3536 = vunpack.c.h.b16 %v3449
      %v3537 = vunpack.c.l.b16 %v3452
      %v3538 = vunpack.c.h.b16 %v3452
      %v3539 = vunpack.c.l.b16 %v3456
      %v3540 = vunpack.c.h.b16 %v3456
      %v3541 = vunpack.c.l.b16 %v3459
      %v3542 = vunpack.c.h.b16 %v3459
      %v3543 = vunpack.c.l.b16 %v3463
      %v3544 = vunpack.c.h.b16 %v3463
      %v3545 = vunpack.c.l.b16 %v3466
      %v3546 = vunpack.c.h.b16 %v3466
      %v3547 = vunpack.c.l.b16 %v3470
      %v3548 = vunpack.c.h.b16 %v3470
      %v3549 = vunpack.c.l.b16 %v3473
      %v3550 = vunpack.c.h.b16 %v3473
      %v3551 = vunpack.c.l.b16 %v3477
      %v3552 = vunpack.c.h.b16 %v3477
      %v3553 = vunpack.c.l.b16 %v3480
      %v3554 = vunpack.c.h.b16 %v3480
      %v3555 = vunpack.c.l.b16 %v3484
      %v3556 = vunpack.c.h.b16 %v3484
      %v3557 = vunpack.c.l.b16 %v3487
      %v3558 = vunpack.c.h.b16 %v3487
      %v3559 = vunpack.c.l.b16 %v3491
      %v3560 = vunpack.c.h.b16 %v3491
      %v3561 = vunpack.c.l.b16 %v3494
      %v3562 = vunpack.c.h.b16 %v3494
      %v3563 = vunpack.c.l.b16 %v3498
      %v3564 = vunpack.c.h.b16 %v3498
      %v3565 = vunpack.c.l.b16 %v3501
      %v3566 = vunpack.c.h.b16 %v3501
      %v3567 = vpack.c.b16 %v3537, %v3535
      %v3568 = vpack.c.b16 %v3538, %v3536
      %v3569 = vpack.c.b16 %v3541, %v3539
      %v3570 = vpack.c.b16 %v3542, %v3540
      %v3571 = vpack.c.b16 %v3545, %v3543
      %v3572 = vpack.c.b16 %v3546, %v3544
      %v3573 = vpack.c.b16 %v3549, %v3547
      %v3574 = vpack.c.b16 %v3550, %v3548
      %v3575 = vpack.c.b16 %v3553, %v3551
      %v3576 = vpack.c.b16 %v3554, %v3552
      %v3577 = vpack.c.b16 %v3557, %v3555
      %v3578 = vpack.c.b16 %v3558, %v3556
      %v3579 = vpack.c.b16 %v3561, %v3559
      %v3580 = vpack.c.b16 %v3562, %v3560
      %v3581 = vpack.c.b16 %v3565, %v3563
      %v3582 = vpack.c.b16 %v3566, %v3564
      %v3631 = vunpack.c.l.b16 %v3503
      %v3632 = vunpack.c.h.b16 %v3503
      %v3633 = vunpack.c.l.b16 %v3504
      %v3634 = vunpack.c.h.b16 %v3504
      %v3635 = vunpack.c.l.b16 %v3505
      %v3636 = vunpack.c.h.b16 %v3505
      %v3637 = vunpack.c.l.b16 %v3506
      %v3638 = vunpack.c.h.b16 %v3506
      %v3639 = vunpack.c.l.b16 %v3507
      %v3640 = vunpack.c.h.b16 %v3507
      %v3641 = vunpack.c.l.b16 %v3508
      %v3642 = vunpack.c.h.b16 %v3508
      %v3643 = vunpack.c.l.b16 %v3509
      %v3644 = vunpack.c.h.b16 %v3509
      %v3645 = vunpack.c.l.b16 %v3510
      %v3646 = vunpack.c.h.b16 %v3510
      %v3647 = vunpack.c.l.b16 %v3511
      %v3648 = vunpack.c.h.b16 %v3511
      %v3649 = vunpack.c.l.b16 %v3512
      %v3650 = vunpack.c.h.b16 %v3512
      %v3651 = vunpack.c.l.b16 %v3513
      %v3652 = vunpack.c.h.b16 %v3513
      %v3653 = vunpack.c.l.b16 %v3514
      %v3654 = vunpack.c.h.b16 %v3514
      %v3655 = vunpack.c.l.b16 %v3515
      %v3656 = vunpack.c.h.b16 %v3515
      %v3657 = vunpack.c.l.b16 %v3516
      %v3658 = vunpack.c.h.b16 %v3516
      %v3659 = vunpack.c.l.b16 %v3517
      %v3660 = vunpack.c.h.b16 %v3517
      %v3661 = vunpack.c.l.b16 %v3518
      %v3662 = vunpack.c.h.b16 %v3518
      %v3663 = vunpack.c.l.b16 %v3519
      %v3664 = vunpack.c.h.b16 %v3519
      %v3665 = vunpack.c.l.b16 %v3520
      %v3666 = vunpack.c.h.b16 %v3520
      %v3667 = vunpack.c.l.b16 %v3521
      %v3668 = vunpack.c.h.b16 %v3521
      %v3669 = vunpack.c.l.b16 %v3522
      %v3670 = vunpack.c.h.b16 %v3522
      %v3671 = vunpack.c.l.b16 %v3523
      %v3672 = vunpack.c.h.b16 %v3523
      %v3673 = vunpack.c.l.b16 %v3524
      %v3674 = vunpack.c.h.b16 %v3524
      %v3675 = vunpack.c.l.b16 %v3525
      %v3676 = vunpack.c.h.b16 %v3525
      %v3677 = vunpack.c.l.b16 %v3526
      %v3678 = vunpack.c.h.b16 %v3526
      %v3679 = vunpack.c.l.b16 %v3527
      %v3680 = vunpack.c.h.b16 %v3527
      %v3681 = vunpack.c.l.b16 %v3528
      %v3682 = vunpack.c.h.b16 %v3528
      %v3683 = vunpack.c.l.b16 %v3529
      %v3684 = vunpack.c.h.b16 %v3529
      %v3685 = vunpack.c.l.b16 %v3530
      %v3686 = vunpack.c.h.b16 %v3530
      %v3687 = vunpack.c.l.b16 %v3531
      %v3688 = vunpack.c.h.b16 %v3531
      %v3689 = vunpack.c.l.b16 %v3532
      %v3690 = vunpack.c.h.b16 %v3532
      %v3691 = vunpack.c.l.b16 %v3533
      %v3692 = vunpack.c.h.b16 %v3533
      %v3693 = vunpack.c.l.b16 %v3534
      %v3694 = vunpack.c.h.b16 %v3534
      %v3695 = vpack.c.b16 %v3633, %v3631
      %v3696 = vpack.c.b16 %v3634, %v3632
      %v3697 = vpack.c.b16 %v3637, %v3635
      %v3698 = vpack.c.b16 %v3638, %v3636
      %v3699 = vpack.c.b16 %v3641, %v3639
      %v3700 = vpack.c.b16 %v3642, %v3640
      %v3701 = vpack.c.b16 %v3645, %v3643
      %v3702 = vpack.c.b16 %v3646, %v3644
      %v3703 = vpack.c.b16 %v3649, %v3647
      %v3704 = vpack.c.b16 %v3650, %v3648
      %v3705 = vpack.c.b16 %v3653, %v3651
      %v3706 = vpack.c.b16 %v3654, %v3652
      %v3707 = vpack.c.b16 %v3657, %v3655
      %v3708 = vpack.c.b16 %v3658, %v3656
      %v3709 = vpack.c.b16 %v3661, %v3659
      %v3710 = vpack.c.b16 %v3662, %v3660
      %v3711 = vpack.c.b16 %v3665, %v3663
      %v3712 = vpack.c.b16 %v3666, %v3664
      %v3713 = vpack.c.b16 %v3669, %v3667
      %v3714 = vpack.c.b16 %v3670, %v3668
      %v3715 = vpack.c.b16 %v3673, %v3671
      %v3716 = vpack.c.b16 %v3674, %v3672
      %v3717 = vpack.c.b16 %v3677, %v3675
      %v3718 = vpack.c.b16 %v3678, %v3676
      %v3719 = vpack.c.b16 %v3681, %v3679
      %v3720 = vpack.c.b16 %v3682, %v3680
      %v3721 = vpack.c.b16 %v3685, %v3683
      %v3722 = vpack.c.b16 %v3686, %v3684
      %v3723 = vpack.c.b16 %v3689, %v3687
      %v3724 = vpack.c.b16 %v3690, %v3688
      %v3725 = vpack.c.b16 %v3693, %v3691
      %v3726 = vpack.c.b16 %v3694, %v3692
      %3759 = vmatpush.bf16.msra.mxu0 %v3709
      %3760 = vmatpush.bf16.msra.mxu0 %v3707
      %3761 = vmatpush.bf16.msra.mxu0 %v3705
      %3762 = vmatpush.bf16.msra.mxu0 %v3703
      %3763 = vmatpush.bf16.msra.mxu0 %v3701
      %3764 = vmatpush.bf16.msra.mxu0 %v3699
      %3765 = vmatpush.bf16.msra.mxu0 %v3697
      %3766 = vmatpush.bf16.msra.mxu0 %v3695
      %3767 = vmatmul.bf16.gmra.mxu0 %v3567
      %v3768 = vpop.f32.mrf.mxu0
      %v3769 = vadd.f32 0.0, %v3768
      %v3770 = vpop.f32.mrf.mxu0
      %v3771 = vadd.f32 0.0, %v3770
      %3772 = vmatmul.bf16.gmra.mxu0 %v3569
      %v3773 = vpop.f32.mrf.mxu0
      %v3774 = vadd.f32 0.0, %v3773
      %v3775 = vpop.f32.mrf.mxu0
      %v3776 = vadd.f32 0.0, %v3775
      %3777 = vmatmul.bf16.gmra.mxu0 %v3571
      %v3778 = vpop.f32.mrf.mxu0
      %v3779 = vadd.f32 0.0, %v3778
      %v3780 = vpop.f32.mrf.mxu0
      %v3781 = vadd.f32 0.0, %v3780
      %3782 = vmatmul.bf16.gmra.mxu0 %v3573
      %v3783 = vpop.f32.mrf.mxu0
      %v3784 = vadd.f32 0.0, %v3783
      %v3785 = vpop.f32.mrf.mxu0
      %v3786 = vadd.f32 0.0, %v3785
      %3787 = vmatmul.bf16.gmra.mxu0 %v3575
      %v3788 = vpop.f32.mrf.mxu0
      %v3789 = vadd.f32 0.0, %v3788
      %v3790 = vpop.f32.mrf.mxu0
      %v3791 = vadd.f32 0.0, %v3790
      %3792 = vmatmul.bf16.gmra.mxu0 %v3577
      %v3793 = vpop.f32.mrf.mxu0
      %v3794 = vadd.f32 0.0, %v3793
      %v3795 = vpop.f32.mrf.mxu0
      %v3796 = vadd.f32 0.0, %v3795
      %3797 = vmatmul.bf16.gmra.mxu0 %v3579
      %v3798 = vpop.f32.mrf.mxu0
      %v3799 = vadd.f32 0.0, %v3798
      %v3800 = vpop.f32.mrf.mxu0
      %v3801 = vadd.f32 0.0, %v3800
      %3802 = vmatmul.bf16.gmra.mxu0 %v3581
      %v3803 = vpop.f32.mrf.mxu0
      %v3804 = vadd.f32 0.0, %v3803
      %v3805 = vpop.f32.mrf.mxu0
      %v3806 = vadd.f32 0.0, %v3805
      %3807 = vdwg.mxu0
      %3808 = vmatpush.bf16.msra.mxu0 %v3725
      %3809 = vmatpush.bf16.msra.mxu0 %v3723
      %3810 = vmatpush.bf16.msra.mxu0 %v3721
      %3811 = vmatpush.bf16.msra.mxu0 %v3719
      %3812 = vmatpush.bf16.msra.mxu0 %v3717
      %3813 = vmatpush.bf16.msra.mxu0 %v3715
      %3814 = vmatpush.bf16.msra.mxu0 %v3713
      %3815 = vmatpush.bf16.msra.mxu0 %v3711
      %3816 = vmatmul.bf16.gmra.mxu0 %v3568
      %v3817 = vpop.f32.mrf.mxu0
      %v3818 = vadd.f32 %v3769, %v3817
      %v3819 = vpop.f32.mrf.mxu0
      %v3820 = vadd.f32 %v3771, %v3819
      %3821 = vmatmul.bf16.gmra.mxu0 %v3570
      %v3822 = vpop.f32.mrf.mxu0
      %v3823 = vadd.f32 %v3774, %v3822
      %v3824 = vpop.f32.mrf.mxu0
      %v3825 = vadd.f32 %v3776, %v3824
      %3826 = vmatmul.bf16.gmra.mxu0 %v3572
      %v3827 = vpop.f32.mrf.mxu0
      %v3828 = vadd.f32 %v3779, %v3827
      %v3829 = vpop.f32.mrf.mxu0
      %v3830 = vadd.f32 %v3781, %v3829
      %3831 = vmatmul.bf16.gmra.mxu0 %v3574
      %v3832 = vpop.f32.mrf.mxu0
      %v3833 = vadd.f32 %v3784, %v3832
      %v3834 = vpop.f32.mrf.mxu0
      %v3835 = vadd.f32 %v3786, %v3834
      %3836 = vmatmul.bf16.gmra.mxu0 %v3576
      %v3837 = vpop.f32.mrf.mxu0
      %v3838 = vadd.f32 %v3789, %v3837
      %v3839 = vpop.f32.mrf.mxu0
      %v3840 = vadd.f32 %v3791, %v3839
      %3841 = vmatmul.bf16.gmra.mxu0 %v3578
      %v3842 = vpop.f32.mrf.mxu0
      %v3843 = vadd.f32 %v3794, %v3842
      %v3844 = vpop.f32.mrf.mxu0
      %v3845 = vadd.f32 %v3796, %v3844
      %3846 = vmatmul.bf16.gmra.mxu0 %v3580
      %v3847 = vpop.f32.mrf.mxu0
      %v3848 = vadd.f32 %v3799, %v3847
      %v3849 = vpop.f32.mrf.mxu0
      %v3850 = vadd.f32 %v3801, %v3849
      %3851 = vmatmul.bf16.gmra.mxu0 %v3582
      %v3852 = vpop.f32.mrf.mxu0
      %v3853 = vadd.f32 %v3804, %v3852
      %v3854 = vpop.f32.mrf.mxu0
      %v3855 = vadd.f32 %v3806, %v3854
      %3856 = vdwg.mxu0
      %3857 = vmatpush.bf16.msra.mxu0 %v3710
      %3858 = vmatpush.bf16.msra.mxu0 %v3708
      %3859 = vmatpush.bf16.msra.mxu0 %v3706
      %3860 = vmatpush.bf16.msra.mxu0 %v3704
      %3861 = vmatpush.bf16.msra.mxu0 %v3702
      %3862 = vmatpush.bf16.msra.mxu0 %v3700
      %3863 = vmatpush.bf16.msra.mxu0 %v3698
      %3864 = vmatpush.bf16.msra.mxu0 %v3696
      %3865 = vmatmul.bf16.gmra.mxu0 %v3567
      %v3866 = vpop.f32.mrf.mxu0
      %v3867 = vadd.f32 0.0, %v3866
      %v3868 = vpop.f32.mrf.mxu0
      %v3869 = vadd.f32 0.0, %v3868
      %3870 = vmatmul.bf16.gmra.mxu0 %v3569
      %v3871 = vpop.f32.mrf.mxu0
      %v3872 = vadd.f32 0.0, %v3871
      %v3873 = vpop.f32.mrf.mxu0
      %v3874 = vadd.f32 0.0, %v3873
      %3875 = vmatmul.bf16.gmra.mxu0 %v3571
      %v3876 = vpop.f32.mrf.mxu0
      %v3877 = vadd.f32 0.0, %v3876
      %v3878 = vpop.f32.mrf.mxu0
      %v3879 = vadd.f32 0.0, %v3878
      %3880 = vmatmul.bf16.gmra.mxu0 %v3573
      %v3881 = vpop.f32.mrf.mxu0
      %v3882 = vadd.f32 0.0, %v3881
      %v3883 = vpop.f32.mrf.mxu0
      %v3884 = vadd.f32 0.0, %v3883
      %3885 = vmatmul.bf16.gmra.mxu0 %v3575
      %v3886 = vpop.f32.mrf.mxu0
      %v3887 = vadd.f32 0.0, %v3886
      %v3888 = vpop.f32.mrf.mxu0
      %v3889 = vadd.f32 0.0, %v3888
      %3890 = vmatmul.bf16.gmra.mxu0 %v3577
      %v3891 = vpop.f32.mrf.mxu0
      %v3892 = vadd.f32 0.0, %v3891
      %v3893 = vpop.f32.mrf.mxu0
      %v3894 = vadd.f32 0.0, %v3893
      %3895 = vmatmul.bf16.gmra.mxu0 %v3579
      %v3896 = vpop.f32.mrf.mxu0
      %v3897 = vadd.f32 0.0, %v3896
      %v3898 = vpop.f32.mrf.mxu0
      %v3899 = vadd.f32 0.0, %v3898
      %3900 = vmatmul.bf16.gmra.mxu0 %v3581
      %v3901 = vpop.f32.mrf.mxu0
      %v3902 = vadd.f32 0.0, %v3901
      %v3903 = vpop.f32.mrf.mxu0
      %v3904 = vadd.f32 0.0, %v3903
      %3905 = vdwg.mxu0
      %3906 = vmatpush.bf16.msra.mxu0 %v3726
      %3907 = vmatpush.bf16.msra.mxu0 %v3724
      %3908 = vmatpush.bf16.msra.mxu0 %v3722
      %3909 = vmatpush.bf16.msra.mxu0 %v3720
      %3910 = vmatpush.bf16.msra.mxu0 %v3718
      %3911 = vmatpush.bf16.msra.mxu0 %v3716
      %3912 = vmatpush.bf16.msra.mxu0 %v3714
      %3913 = vmatpush.bf16.msra.mxu0 %v3712
      %3914 = vmatmul.bf16.gmra.mxu0 %v3568
      %v3915 = vpop.f32.mrf.mxu0
      %v3916 = vadd.f32 %v3867, %v3915
      %v3917 = vpop.f32.mrf.mxu0
      %v3918 = vadd.f32 %v3869, %v3917
      %3919 = vmatmul.bf16.gmra.mxu0 %v3570
      %v3920 = vpop.f32.mrf.mxu0
      %v3921 = vadd.f32 %v3872, %v3920
      %v3922 = vpop.f32.mrf.mxu0
      %v3923 = vadd.f32 %v3874, %v3922
      %3924 = vmatmul.bf16.gmra.mxu0 %v3572
      %v3925 = vpop.f32.mrf.mxu0
      %v3926 = vadd.f32 %v3877, %v3925
      %v3927 = vpop.f32.mrf.mxu0
      %v3928 = vadd.f32 %v3879, %v3927
      %3929 = vmatmul.bf16.gmra.mxu0 %v3574
      %v3930 = vpop.f32.mrf.mxu0
      %v3931 = vadd.f32 %v3882, %v3930
      %v3932 = vpop.f32.mrf.mxu0
      %v3933 = vadd.f32 %v3884, %v3932
      %3934 = vmatmul.bf16.gmra.mxu0 %v3576
      %v3935 = vpop.f32.mrf.mxu0
      %v3936 = vadd.f32 %v3887, %v3935
      %v3937 = vpop.f32.mrf.mxu0
      %v3938 = vadd.f32 %v3889, %v3937
      %3939 = vmatmul.bf16.gmra.mxu0 %v3578
      %v3940 = vpop.f32.mrf.mxu0
      %v3941 = vadd.f32 %v3892, %v3940
      %v3942 = vpop.f32.mrf.mxu0
      %v3943 = vadd.f32 %v3894, %v3942
      %3944 = vmatmul.bf16.gmra.mxu0 %v3580
      %v3945 = vpop.f32.mrf.mxu0
      %v3946 = vadd.f32 %v3897, %v3945
      %v3947 = vpop.f32.mrf.mxu0
      %v3948 = vadd.f32 %v3899, %v3947
      %3949 = vmatmul.bf16.gmra.mxu0 %v3582
      %v3950 = vpop.f32.mrf.mxu0
      %v3951 = vadd.f32 %v3902, %v3950
      %v3952 = vpop.f32.mrf.mxu0
      %v3953 = vadd.f32 %v3904, %v3952
      %3954 = vdwg.mxu0
      %v3955 = vadd.f32 %v3382, %v3818
      %v3956 = vadd.f32 %v3383, %v3916
      %v3957 = vadd.f32 %v3384, %v3820
      %v3958 = vadd.f32 %v3385, %v3918
      %v3959 = vadd.f32 %v3386, %v3823
      %v3960 = vadd.f32 %v3387, %v3921
      %v3961 = vadd.f32 %v3388, %v3825
      %v3962 = vadd.f32 %v3389, %v3923
      %v3963 = vadd.f32 %v3390, %v3828
      %v3964 = vadd.f32 %v3391, %v3926
      %v3965 = vadd.f32 %v3392, %v3830
      %v3966 = vadd.f32 %v3393, %v3928
      %v3967 = vadd.f32 %v3394, %v3833
      %v3968 = vadd.f32 %v3395, %v3931
      %v3969 = vadd.f32 %v3396, %v3835
      %v3970 = vadd.f32 %v3397, %v3933
      %v3971 = vadd.f32 %v3398, %v3838
      %v3972 = vadd.f32 %v3399, %v3936
      %v3973 = vadd.f32 %v3400, %v3840
      %v3974 = vadd.f32 %v3401, %v3938
      %v3975 = vadd.f32 %v3402, %v3843
      %v3976 = vadd.f32 %v3403, %v3941
      %v3977 = vadd.f32 %v3404, %v3845
      %v3978 = vadd.f32 %v3405, %v3943
      %v3979 = vadd.f32 %v3406, %v3848
      %v3980 = vadd.f32 %v3407, %v3946
      %v3981 = vadd.f32 %v3408, %v3850
      %v3982 = vadd.f32 %v3409, %v3948
      %v3983 = vadd.f32 %v3410, %v3853
      %v3984 = vadd.f32 %v3411, %v3951
      %v3985 = vadd.f32 %v3412, %v3855
      %v3986 = vadd.f32 %v3413, %v3953
      %s3987 = sadd.s32 %s480, 2
      %s3988 = smul.u32 %s3987, 6
      %s3989 = smul.addr %s3988, 4
      %s3990 = scalar_lea.vmem [#allocation2], %s3989
      %v3991 = vld [vmem:[%s3990] sm:$0xff]
      %v3992 = vld [vmem:[%s3990 + $0x8] sm:$0xff]
      %v3993 = vld [vmem:[%s3990 + $0x18] sm:$0xff]
      %v3994 = vld [vmem:[%s3990 + $0x20] sm:$0xff]
      %v3995 = vld [vmem:[%s3990 + $0x30] sm:$0xff]
      %v3996 = vld [vmem:[%s3990 + $0x38] sm:$0xff]
      %v3997 = vld [vmem:[%s3990 + $0x48] sm:$0xff]
      %v3998 = vld [vmem:[%s3990 + $0x50] sm:$0xff]
      %v3999 = vld [vmem:[%s3990 + $0x60] sm:$0xff]
      %v4000 = vld [vmem:[%s3990 + $0x68] sm:$0xff]
      %v4001 = vld [vmem:[%s3990 + $0x78] sm:$0xff]
      %v4002 = vld [vmem:[%s3990 + $0x80] sm:$0xff]
      %v4003 = vld [vmem:[%s3990 + $0x90] sm:$0xff]
      %v4004 = vld [vmem:[%s3990 + $0x98] sm:$0xff]
      %v4005 = vld [vmem:[%s3990 + $0xa8] sm:$0xff]
      %v4006 = vld [vmem:[%s3990 + $0xb0] sm:$0xff]
      %s4007 = scalar_lea.vmem %s1, 1536
      %v4008 = vld [vmem:[%s4007] sm:$0xff]
      %v4009 = vld [vmem:[%s4007 + $0x8] sm:$0xff]
      %v4010 = vld [vmem:[%s4007 + $0x10] sm:$0xff]
      %v4011 = vld [vmem:[%s4007 + $0x18] sm:$0xff]
      %v4012 = vld [vmem:[%s4007 + $0x20] sm:$0xff]
      %v4013 = vld [vmem:[%s4007 + $0x28] sm:$0xff]
      %v4014 = vld [vmem:[%s4007 + $0x30] sm:$0xff]
      %v4015 = vld [vmem:[%s4007 + $0x38] sm:$0xff]
      %v4016 = vld [vmem:[%s4007 + $0x40] sm:$0xff]
      %v4017 = vld [vmem:[%s4007 + $0x48] sm:$0xff]
      %v4018 = vld [vmem:[%s4007 + $0x50] sm:$0xff]
      %v4019 = vld [vmem:[%s4007 + $0x58] sm:$0xff]
      %v4020 = vld [vmem:[%s4007 + $0x60] sm:$0xff]
      %v4021 = vld [vmem:[%s4007 + $0x68] sm:$0xff]
      %v4022 = vld [vmem:[%s4007 + $0x70] sm:$0xff]
      %v4023 = vld [vmem:[%s4007 + $0x78] sm:$0xff]
      %v4024 = vld [vmem:[%s4007 + $0x80] sm:$0xff]
      %v4025 = vld [vmem:[%s4007 + $0x88] sm:$0xff]
      %v4026 = vld [vmem:[%s4007 + $0x90] sm:$0xff]
      %v4027 = vld [vmem:[%s4007 + $0x98] sm:$0xff]
      %v4028 = vld [vmem:[%s4007 + $0xa0] sm:$0xff]
      %v4029 = vld [vmem:[%s4007 + $0xa8] sm:$0xff]
      %v4030 = vld [vmem:[%s4007 + $0xb0] sm:$0xff]
      %v4031 = vld [vmem:[%s4007 + $0xb8] sm:$0xff]
      %v4032 = vld [vmem:[%s4007 + $0xc0] sm:$0xff]
      %v4033 = vld [vmem:[%s4007 + $0xc8] sm:$0xff]
      %v4034 = vld [vmem:[%s4007 + $0xd0] sm:$0xff]
      %v4035 = vld [vmem:[%s4007 + $0xd8] sm:$0xff]
      %v4036 = vld [vmem:[%s4007 + $0xe0] sm:$0xff]
      %v4037 = vld [vmem:[%s4007 + $0xe8] sm:$0xff]
      %v4038 = vld [vmem:[%s4007 + $0xf0] sm:$0xff]
      %v4039 = vld [vmem:[%s4007 + $0xf8] sm:$0xff]
      %v4056 = vunpack.c.l.b16 %v3991
      %v4057 = vunpack.c.h.b16 %v3991
      %v4058 = vunpack.c.l.b16 %v3992
      %v4059 = vunpack.c.h.b16 %v3992
      %v4060 = vunpack.c.l.b16 %v3993
      %v4061 = vunpack.c.h.b16 %v3993
      %v4062 = vunpack.c.l.b16 %v3994
      %v4063 = vunpack.c.h.b16 %v3994
      %v4064 = vunpack.c.l.b16 %v3995
      %v4065 = vunpack.c.h.b16 %v3995
      %v4066 = vunpack.c.l.b16 %v3996
      %v4067 = vunpack.c.h.b16 %v3996
      %v4068 = vunpack.c.l.b16 %v3997
      %v4069 = vunpack.c.h.b16 %v3997
      %v4070 = vunpack.c.l.b16 %v3998
      %v4071 = vunpack.c.h.b16 %v3998
      %v4072 = vunpack.c.l.b16 %v3999
      %v4073 = vunpack.c.h.b16 %v3999
      %v4074 = vunpack.c.l.b16 %v4000
      %v4075 = vunpack.c.h.b16 %v4000
      %v4076 = vunpack.c.l.b16 %v4001
      %v4077 = vunpack.c.h.b16 %v4001
      %v4078 = vunpack.c.l.b16 %v4002
      %v4079 = vunpack.c.h.b16 %v4002
      %v4080 = vunpack.c.l.b16 %v4003
      %v4081 = vunpack.c.h.b16 %v4003
      %v4082 = vunpack.c.l.b16 %v4004
      %v4083 = vunpack.c.h.b16 %v4004
      %v4084 = vunpack.c.l.b16 %v4005
      %v4085 = vunpack.c.h.b16 %v4005
      %v4086 = vunpack.c.l.b16 %v4006
      %v4087 = vunpack.c.h.b16 %v4006
      %v4088 = vpack.c.b16 %v4058, %v4056
      %v4089 = vpack.c.b16 %v4059, %v4057
      %v4090 = vpack.c.b16 %v4062, %v4060
      %v4091 = vpack.c.b16 %v4063, %v4061
      %v4092 = vpack.c.b16 %v4066, %v4064
      %v4093 = vpack.c.b16 %v4067, %v4065
      %v4094 = vpack.c.b16 %v4070, %v4068
      %v4095 = vpack.c.b16 %v4071, %v4069
      %v4096 = vpack.c.b16 %v4074, %v4072
      %v4097 = vpack.c.b16 %v4075, %v4073
      %v4098 = vpack.c.b16 %v4078, %v4076
      %v4099 = vpack.c.b16 %v4079, %v4077
      %v4100 = vpack.c.b16 %v4082, %v4080
      %v4101 = vpack.c.b16 %v4083, %v4081
      %v4102 = vpack.c.b16 %v4086, %v4084
      %v4103 = vpack.c.b16 %v4087, %v4085
      %v4152 = vunpack.c.l.b16 %v4008
      %v4153 = vunpack.c.h.b16 %v4008
      %v4154 = vunpack.c.l.b16 %v4009
      %v4155 = vunpack.c.h.b16 %v4009
      %v4156 = vunpack.c.l.b16 %v4010
      %v4157 = vunpack.c.h.b16 %v4010
      %v4158 = vunpack.c.l.b16 %v4011
      %v4159 = vunpack.c.h.b16 %v4011
      %v4160 = vunpack.c.l.b16 %v4012
      %v4161 = vunpack.c.h.b16 %v4012
      %v4162 = vunpack.c.l.b16 %v4013
      %v4163 = vunpack.c.h.b16 %v4013
      %v4164 = vunpack.c.l.b16 %v4014
      %v4165 = vunpack.c.h.b16 %v4014
      %v4166 = vunpack.c.l.b16 %v4015
      %v4167 = vunpack.c.h.b16 %v4015
      %v4168 = vunpack.c.l.b16 %v4016
      %v4169 = vunpack.c.h.b16 %v4016
      %v4170 = vunpack.c.l.b16 %v4017
      %v4171 = vunpack.c.h.b16 %v4017
      %v4172 = vunpack.c.l.b16 %v4018
      %v4173 = vunpack.c.h.b16 %v4018
      %v4174 = vunpack.c.l.b16 %v4019
      %v4175 = vunpack.c.h.b16 %v4019
      %v4176 = vunpack.c.l.b16 %v4020
      %v4177 = vunpack.c.h.b16 %v4020
      %v4178 = vunpack.c.l.b16 %v4021
      %v4179 = vunpack.c.h.b16 %v4021
      %v4180 = vunpack.c.l.b16 %v4022
      %v4181 = vunpack.c.h.b16 %v4022
      %v4182 = vunpack.c.l.b16 %v4023
      %v4183 = vunpack.c.h.b16 %v4023
      %v4184 = vunpack.c.l.b16 %v4024
      %v4185 = vunpack.c.h.b16 %v4024
      %v4186 = vunpack.c.l.b16 %v4025
      %v4187 = vunpack.c.h.b16 %v4025
      %v4188 = vunpack.c.l.b16 %v4026
      %v4189 = vunpack.c.h.b16 %v4026
      %v4190 = vunpack.c.l.b16 %v4027
      %v4191 = vunpack.c.h.b16 %v4027
      %v4192 = vunpack.c.l.b16 %v4028
      %v4193 = vunpack.c.h.b16 %v4028
      %v4194 = vunpack.c.l.b16 %v4029
      %v4195 = vunpack.c.h.b16 %v4029
      %v4196 = vunpack.c.l.b16 %v4030
      %v4197 = vunpack.c.h.b16 %v4030
      %v4198 = vunpack.c.l.b16 %v4031
      %v4199 = vunpack.c.h.b16 %v4031
      %v4200 = vunpack.c.l.b16 %v4032
      %v4201 = vunpack.c.h.b16 %v4032
      %v4202 = vunpack.c.l.b16 %v4033
      %v4203 = vunpack.c.h.b16 %v4033
      %v4204 = vunpack.c.l.b16 %v4034
      %v4205 = vunpack.c.h.b16 %v4034
      %v4206 = vunpack.c.l.b16 %v4035
      %v4207 = vunpack.c.h.b16 %v4035
      %v4208 = vunpack.c.l.b16 %v4036
      %v4209 = vunpack.c.h.b16 %v4036
      %v4210 = vunpack.c.l.b16 %v4037
      %v4211 = vunpack.c.h.b16 %v4037
      %v4212 = vunpack.c.l.b16 %v4038
      %v4213 = vunpack.c.h.b16 %v4038
      %v4214 = vunpack.c.l.b16 %v4039
      %v4215 = vunpack.c.h.b16 %v4039
      %v4216 = vpack.c.b16 %v4154, %v4152
      %v4217 = vpack.c.b16 %v4155, %v4153
      %v4218 = vpack.c.b16 %v4158, %v4156
      %v4219 = vpack.c.b16 %v4159, %v4157
      %v4220 = vpack.c.b16 %v4162, %v4160
      %v4221 = vpack.c.b16 %v4163, %v4161
      %v4222 = vpack.c.b16 %v4166, %v4164
      %v4223 = vpack.c.b16 %v4167, %v4165
      %v4224 = vpack.c.b16 %v4170, %v4168
      %v4225 = vpack.c.b16 %v4171, %v4169
      %v4226 = vpack.c.b16 %v4174, %v4172
      %v4227 = vpack.c.b16 %v4175, %v4173
      %v4228 = vpack.c.b16 %v4178, %v4176
      %v4229 = vpack.c.b16 %v4179, %v4177
      %v4230 = vpack.c.b16 %v4182, %v4180
      %v4231 = vpack.c.b16 %v4183, %v4181
      %v4232 = vpack.c.b16 %v4186, %v4184
      %v4233 = vpack.c.b16 %v4187, %v4185
      %v4234 = vpack.c.b16 %v4190, %v4188
      %v4235 = vpack.c.b16 %v4191, %v4189
      %v4236 = vpack.c.b16 %v4194, %v4192
      %v4237 = vpack.c.b16 %v4195, %v4193
      %v4238 = vpack.c.b16 %v4198, %v4196
      %v4239 = vpack.c.b16 %v4199, %v4197
      %v4240 = vpack.c.b16 %v4202, %v4200
      %v4241 = vpack.c.b16 %v4203, %v4201
      %v4242 = vpack.c.b16 %v4206, %v4204
      %v4243 = vpack.c.b16 %v4207, %v4205
      %v4244 = vpack.c.b16 %v4210, %v4208
      %v4245 = vpack.c.b16 %v4211, %v4209
      %v4246 = vpack.c.b16 %v4214, %v4212
      %v4247 = vpack.c.b16 %v4215, %v4213
      %4280 = vmatpush.bf16.msra.mxu0 %v4230
      %4281 = vmatpush.bf16.msra.mxu0 %v4228
      %4282 = vmatpush.bf16.msra.mxu0 %v4226
      %4283 = vmatpush.bf16.msra.mxu0 %v4224
      %4284 = vmatpush.bf16.msra.mxu0 %v4222
      %4285 = vmatpush.bf16.msra.mxu0 %v4220
      %4286 = vmatpush.bf16.msra.mxu0 %v4218
      %4287 = vmatpush.bf16.msra.mxu0 %v4216
      %4288 = vmatmul.bf16.gmra.mxu0 %v4088
      %v4289 = vpop.f32.mrf.mxu0
      %v4290 = vadd.f32 0.0, %v4289
      %v4291 = vpop.f32.mrf.mxu0
      %v4292 = vadd.f32 0.0, %v4291
      %4293 = vmatmul.bf16.gmra.mxu0 %v4090
      %v4294 = vpop.f32.mrf.mxu0
      %v4295 = vadd.f32 0.0, %v4294
      %v4296 = vpop.f32.mrf.mxu0
      %v4297 = vadd.f32 0.0, %v4296
      %4298 = vmatmul.bf16.gmra.mxu0 %v4092
      %v4299 = vpop.f32.mrf.mxu0
      %v4300 = vadd.f32 0.0, %v4299
      %v4301 = vpop.f32.mrf.mxu0
      %v4302 = vadd.f32 0.0, %v4301
      %4303 = vmatmul.bf16.gmra.mxu0 %v4094
      %v4304 = vpop.f32.mrf.mxu0
      %v4305 = vadd.f32 0.0, %v4304
      %v4306 = vpop.f32.mrf.mxu0
      %v4307 = vadd.f32 0.0, %v4306
      %4308 = vmatmul.bf16.gmra.mxu0 %v4096
      %v4309 = vpop.f32.mrf.mxu0
      %v4310 = vadd.f32 0.0, %v4309
      %v4311 = vpop.f32.mrf.mxu0
      %v4312 = vadd.f32 0.0, %v4311
      %4313 = vmatmul.bf16.gmra.mxu0 %v4098
      %v4314 = vpop.f32.mrf.mxu0
      %v4315 = vadd.f32 0.0, %v4314
      %v4316 = vpop.f32.mrf.mxu0
      %v4317 = vadd.f32 0.0, %v4316
      %4318 = vmatmul.bf16.gmra.mxu0 %v4100
      %v4319 = vpop.f32.mrf.mxu0
      %v4320 = vadd.f32 0.0, %v4319
      %v4321 = vpop.f32.mrf.mxu0
      %v4322 = vadd.f32 0.0, %v4321
      %4323 = vmatmul.bf16.gmra.mxu0 %v4102
      %v4324 = vpop.f32.mrf.mxu0
      %v4325 = vadd.f32 0.0, %v4324
      %v4326 = vpop.f32.mrf.mxu0
      %v4327 = vadd.f32 0.0, %v4326
      %4328 = vdwg.mxu0
      %4329 = vmatpush.bf16.msra.mxu0 %v4246
      %4330 = vmatpush.bf16.msra.mxu0 %v4244
      %4331 = vmatpush.bf16.msra.mxu0 %v4242
      %4332 = vmatpush.bf16.msra.mxu0 %v4240
      %4333 = vmatpush.bf16.msra.mxu0 %v4238
      %4334 = vmatpush.bf16.msra.mxu0 %v4236
      %4335 = vmatpush.bf16.msra.mxu0 %v4234
      %4336 = vmatpush.bf16.msra.mxu0 %v4232
      %4337 = vmatmul.bf16.gmra.mxu0 %v4089
      %v4338 = vpop.f32.mrf.mxu0
      %v4339 = vadd.f32 %v4290, %v4338
      %v4340 = vpop.f32.mrf.mxu0
      %v4341 = vadd.f32 %v4292, %v4340
      %4342 = vmatmul.bf16.gmra.mxu0 %v4091
      %v4343 = vpop.f32.mrf.mxu0
      %v4344 = vadd.f32 %v4295, %v4343
      %v4345 = vpop.f32.mrf.mxu0
      %v4346 = vadd.f32 %v4297, %v4345
      %4347 = vmatmul.bf16.gmra.mxu0 %v4093
      %v4348 = vpop.f32.mrf.mxu0
      %v4349 = vadd.f32 %v4300, %v4348
      %v4350 = vpop.f32.mrf.mxu0
      %v4351 = vadd.f32 %v4302, %v4350
      %4352 = vmatmul.bf16.gmra.mxu0 %v4095
      %v4353 = vpop.f32.mrf.mxu0
      %v4354 = vadd.f32 %v4305, %v4353
      %v4355 = vpop.f32.mrf.mxu0
      %v4356 = vadd.f32 %v4307, %v4355
      %4357 = vmatmul.bf16.gmra.mxu0 %v4097
      %v4358 = vpop.f32.mrf.mxu0
      %v4359 = vadd.f32 %v4310, %v4358
      %v4360 = vpop.f32.mrf.mxu0
      %v4361 = vadd.f32 %v4312, %v4360
      %4362 = vmatmul.bf16.gmra.mxu0 %v4099
      %v4363 = vpop.f32.mrf.mxu0
      %v4364 = vadd.f32 %v4315, %v4363
      %v4365 = vpop.f32.mrf.mxu0
      %v4366 = vadd.f32 %v4317, %v4365
      %4367 = vmatmul.bf16.gmra.mxu0 %v4101
      %v4368 = vpop.f32.mrf.mxu0
      %v4369 = vadd.f32 %v4320, %v4368
      %v4370 = vpop.f32.mrf.mxu0
      %v4371 = vadd.f32 %v4322, %v4370
      %4372 = vmatmul.bf16.gmra.mxu0 %v4103
      %v4373 = vpop.f32.mrf.mxu0
      %v4374 = vadd.f32 %v4325, %v4373
      %v4375 = vpop.f32.mrf.mxu0
      %v4376 = vadd.f32 %v4327, %v4375
      %4377 = vdwg.mxu0
      %4378 = vmatpush.bf16.msra.mxu0 %v4231
      %4379 = vmatpush.bf16.msra.mxu0 %v4229
      %4380 = vmatpush.bf16.msra.mxu0 %v4227
      %4381 = vmatpush.bf16.msra.mxu0 %v4225
      %4382 = vmatpush.bf16.msra.mxu0 %v4223
      %4383 = vmatpush.bf16.msra.mxu0 %v4221
      %4384 = vmatpush.bf16.msra.mxu0 %v4219
      %4385 = vmatpush.bf16.msra.mxu0 %v4217
      %4386 = vmatmul.bf16.gmra.mxu0 %v4088
      %v4387 = vpop.f32.mrf.mxu0
      %v4388 = vadd.f32 0.0, %v4387
      %v4389 = vpop.f32.mrf.mxu0
      %v4390 = vadd.f32 0.0, %v4389
      %4391 = vmatmul.bf16.gmra.mxu0 %v4090
      %v4392 = vpop.f32.mrf.mxu0
      %v4393 = vadd.f32 0.0, %v4392
      %v4394 = vpop.f32.mrf.mxu0
      %v4395 = vadd.f32 0.0, %v4394
      %4396 = vmatmul.bf16.gmra.mxu0 %v4092
      %v4397 = vpop.f32.mrf.mxu0
      %v4398 = vadd.f32 0.0, %v4397
      %v4399 = vpop.f32.mrf.mxu0
      %v4400 = vadd.f32 0.0, %v4399
      %4401 = vmatmul.bf16.gmra.mxu0 %v4094
      %v4402 = vpop.f32.mrf.mxu0
      %v4403 = vadd.f32 0.0, %v4402
      %v4404 = vpop.f32.mrf.mxu0
      %v4405 = vadd.f32 0.0, %v4404
      %4406 = vmatmul.bf16.gmra.mxu0 %v4096
      %v4407 = vpop.f32.mrf.mxu0
      %v4408 = vadd.f32 0.0, %v4407
      %v4409 = vpop.f32.mrf.mxu0
      %v4410 = vadd.f32 0.0, %v4409
      %4411 = vmatmul.bf16.gmra.mxu0 %v4098
      %v4412 = vpop.f32.mrf.mxu0
      %v4413 = vadd.f32 0.0, %v4412
      %v4414 = vpop.f32.mrf.mxu0
      %v4415 = vadd.f32 0.0, %v4414
      %4416 = vmatmul.bf16.gmra.mxu0 %v4100
      %v4417 = vpop.f32.mrf.mxu0
      %v4418 = vadd.f32 0.0, %v4417
      %v4419 = vpop.f32.mrf.mxu0
      %v4420 = vadd.f32 0.0, %v4419
      %4421 = vmatmul.bf16.gmra.mxu0 %v4102
      %v4422 = vpop.f32.mrf.mxu0
      %v4423 = vadd.f32 0.0, %v4422
      %v4424 = vpop.f32.mrf.mxu0
      %v4425 = vadd.f32 0.0, %v4424
      %4426 = vdwg.mxu0
      %4427 = vmatpush.bf16.msra.mxu0 %v4247
      %4428 = vmatpush.bf16.msra.mxu0 %v4245
      %4429 = vmatpush.bf16.msra.mxu0 %v4243
      %4430 = vmatpush.bf16.msra.mxu0 %v4241
      %4431 = vmatpush.bf16.msra.mxu0 %v4239
      %4432 = vmatpush.bf16.msra.mxu0 %v4237
      %4433 = vmatpush.bf16.msra.mxu0 %v4235
      %4434 = vmatpush.bf16.msra.mxu0 %v4233
      %4435 = vmatmul.bf16.gmra.mxu0 %v4089
      %v4436 = vpop.f32.mrf.mxu0
      %v4437 = vadd.f32 %v4388, %v4436
      %v4438 = vpop.f32.mrf.mxu0
      %v4439 = vadd.f32 %v4390, %v4438
      %4440 = vmatmul.bf16.gmra.mxu0 %v4091
      %v4441 = vpop.f32.mrf.mxu0
      %v4442 = vadd.f32 %v4393, %v4441
      %v4443 = vpop.f32.mrf.mxu0
      %v4444 = vadd.f32 %v4395, %v4443
      %4445 = vmatmul.bf16.gmra.mxu0 %v4093
      %v4446 = vpop.f32.mrf.mxu0
      %v4447 = vadd.f32 %v4398, %v4446
      %v4448 = vpop.f32.mrf.mxu0
      %v4449 = vadd.f32 %v4400, %v4448
      %4450 = vmatmul.bf16.gmra.mxu0 %v4095
      %v4451 = vpop.f32.mrf.mxu0
      %v4452 = vadd.f32 %v4403, %v4451
      %v4453 = vpop.f32.mrf.mxu0
      %v4454 = vadd.f32 %v4405, %v4453
      %4455 = vmatmul.bf16.gmra.mxu0 %v4097
      %v4456 = vpop.f32.mrf.mxu0
      %v4457 = vadd.f32 %v4408, %v4456
      %v4458 = vpop.f32.mrf.mxu0
      %v4459 = vadd.f32 %v4410, %v4458
      %4460 = vmatmul.bf16.gmra.mxu0 %v4099
      %v4461 = vpop.f32.mrf.mxu0
      %v4462 = vadd.f32 %v4413, %v4461
      %v4463 = vpop.f32.mrf.mxu0
      %v4464 = vadd.f32 %v4415, %v4463
      %4465 = vmatmul.bf16.gmra.mxu0 %v4101
      %v4466 = vpop.f32.mrf.mxu0
      %v4467 = vadd.f32 %v4418, %v4466
      %v4468 = vpop.f32.mrf.mxu0
      %v4469 = vadd.f32 %v4420, %v4468
      %4470 = vmatmul.bf16.gmra.mxu0 %v4103
      %v4471 = vpop.f32.mrf.mxu0
      %v4472 = vadd.f32 %v4423, %v4471
      %v4473 = vpop.f32.mrf.mxu0
      %v4474 = vadd.f32 %v4425, %v4473
      %4475 = vdwg.mxu0
      %v4476 = vadd.f32 %v3955, %v4339
      %v4477 = vadd.f32 %v3956, %v4437
      %v4478 = vadd.f32 %v3957, %v4341
      %v4479 = vadd.f32 %v3958, %v4439
      %v4480 = vadd.f32 %v3959, %v4344
      %v4481 = vadd.f32 %v3960, %v4442
      %v4482 = vadd.f32 %v3961, %v4346
      %v4483 = vadd.f32 %v3962, %v4444
      %v4484 = vadd.f32 %v3963, %v4349
      %v4485 = vadd.f32 %v3964, %v4447
      %v4486 = vadd.f32 %v3965, %v4351
      %v4487 = vadd.f32 %v3966, %v4449
      %v4488 = vadd.f32 %v3967, %v4354
      %v4489 = vadd.f32 %v3968, %v4452
      %v4490 = vadd.f32 %v3969, %v4356
      %v4491 = vadd.f32 %v3970, %v4454
      %v4492 = vadd.f32 %v3971, %v4359
      %v4493 = vadd.f32 %v3972, %v4457
      %v4494 = vadd.f32 %v3973, %v4361
      %v4495 = vadd.f32 %v3974, %v4459
      %v4496 = vadd.f32 %v3975, %v4364
      %v4497 = vadd.f32 %v3976, %v4462
      %v4498 = vadd.f32 %v3977, %v4366
      %v4499 = vadd.f32 %v3978, %v4464
      %v4500 = vadd.f32 %v3979, %v4369
      %v4501 = vadd.f32 %v3980, %v4467
      %v4502 = vadd.f32 %v3981, %v4371
      %v4503 = vadd.f32 %v3982, %v4469
      %v4504 = vadd.f32 %v3983, %v4374
      %v4505 = vadd.f32 %v3984, %v4472
      %v4506 = vadd.f32 %v3985, %v4376
      %v4507 = vadd.f32 %v3986, %v4474
      %v4508 = vld [vmem:[%s3990] sm:$0xff]
      %v4509 = vld [vmem:[%s3990 + $0x8] sm:$0xff]
      %v4510 = vld [vmem:[%s3990 + $0x10] sm:$0x11]
      %v4511 = vld [vmem:[%s3990 + $0x18] sm:$0xff]
      %v4512 = vld [vmem:[%s3990 + $0x20] sm:$0xff]
      %v4513 = vld [vmem:[%s3990 + $0x28] sm:$0x11]
      %v4514 = vld [vmem:[%s3990 + $0x30] sm:$0xff]
      %v4515 = vld [vmem:[%s3990 + $0x38] sm:$0xff]
      %v4516 = vld [vmem:[%s3990 + $0x40] sm:$0x11]
      %v4517 = vld [vmem:[%s3990 + $0x48] sm:$0xff]
      %v4518 = vld [vmem:[%s3990 + $0x50] sm:$0xff]
      %v4519 = vld [vmem:[%s3990 + $0x58] sm:$0x11]
      %v4520 = vld [vmem:[%s3990 + $0x60] sm:$0xff]
      %v4521 = vld [vmem:[%s3990 + $0x68] sm:$0xff]
      %v4522 = vld [vmem:[%s3990 + $0x70] sm:$0x11]
      %v4523 = vld [vmem:[%s3990 + $0x78] sm:$0xff]
      %v4524 = vld [vmem:[%s3990 + $0x80] sm:$0xff]
      %v4525 = vld [vmem:[%s3990 + $0x88] sm:$0x11]
      %v4526 = vld [vmem:[%s3990 + $0x90] sm:$0xff]
      %v4527 = vld [vmem:[%s3990 + $0x98] sm:$0xff]
      %v4528 = vld [vmem:[%s3990 + $0xa0] sm:$0x11]
      %v4529 = vld [vmem:[%s3990 + $0xa8] sm:$0xff]
      %v4530 = vld [vmem:[%s3990 + $0xb0] sm:$0xff]
      %v4531 = vld [vmem:[%s3990 + $0xb8] sm:$0x11]
      %v4533 = vshrl.u32 %v4508, 16
      %v4535 = vrot.slane %v4533, 4
      %v4536 = vshll.u32 %v4508, 16
      %v4538 = vrot.slane %v4536, 5
      %v4539 = vor.u32 %v4535, %v4538
      %v4540 = vrot.slane %v4539, 4
      %v4542 = vshll.u32 %v4509, 16
      %v4544 = vrot.slane %v4542, 5
      %v4545 = vsel %vm542, %v4540, %v4544
      %v4546 = vshrl.u32 %v4509, 16
      %v4548 = vrot.slane %v4546, 4
      %v4549 = vor.u32 %v4548, %v4544
      %v4550 = vrot.slane %v4549, 4
      %v4552 = vshll.u32 %v4510, 16
      %v4554 = vrot.slane %v4552, 5
      %v4555 = vsel %vm542, %v4550, %v4554
      %v4557 = vshrl.u32 %v4511, 16
      %v4559 = vrot.slane %v4557, 4
      %v4560 = vshll.u32 %v4511, 16
      %v4562 = vrot.slane %v4560, 5
      %v4563 = vor.u32 %v4559, %v4562
      %v4564 = vrot.slane %v4563, 4
      %v4566 = vshll.u32 %v4512, 16
      %v4568 = vrot.slane %v4566, 5
      %v4569 = vsel %vm542, %v4564, %v4568
      %v4570 = vshrl.u32 %v4512, 16
      %v4572 = vrot.slane %v4570, 4
      %v4573 = vor.u32 %v4572, %v4568
      %v4574 = vrot.slane %v4573, 4
      %v4576 = vshll.u32 %v4513, 16
      %v4578 = vrot.slane %v4576, 5
      %v4579 = vsel %vm542, %v4574, %v4578
      %v4581 = vshrl.u32 %v4514, 16
      %v4583 = vrot.slane %v4581, 4
      %v4584 = vshll.u32 %v4514, 16
      %v4586 = vrot.slane %v4584, 5
      %v4587 = vor.u32 %v4583, %v4586
      %v4588 = vrot.slane %v4587, 4
      %v4590 = vshll.u32 %v4515, 16
      %v4592 = vrot.slane %v4590, 5
      %v4593 = vsel %vm542, %v4588, %v4592
      %v4594 = vshrl.u32 %v4515, 16
      %v4596 = vrot.slane %v4594, 4
      %v4597 = vor.u32 %v4596, %v4592
      %v4598 = vrot.slane %v4597, 4
      %v4600 = vshll.u32 %v4516, 16
      %v4602 = vrot.slane %v4600, 5
      %v4603 = vsel %vm542, %v4598, %v4602
      %v4605 = vshrl.u32 %v4517, 16
      %v4607 = vrot.slane %v4605, 4
      %v4608 = vshll.u32 %v4517, 16
      %v4610 = vrot.slane %v4608, 5
      %v4611 = vor.u32 %v4607, %v4610
      %v4612 = vrot.slane %v4611, 4
      %v4614 = vshll.u32 %v4518, 16
      %v4616 = vrot.slane %v4614, 5
      %v4617 = vsel %vm542, %v4612, %v4616
      %v4618 = vshrl.u32 %v4518, 16
      %v4620 = vrot.slane %v4618, 4
      %v4621 = vor.u32 %v4620, %v4616
      %v4622 = vrot.slane %v4621, 4
      %v4624 = vshll.u32 %v4519, 16
      %v4626 = vrot.slane %v4624, 5
      %v4627 = vsel %vm542, %v4622, %v4626
      %v4629 = vshrl.u32 %v4520, 16
      %v4631 = vrot.slane %v4629, 4
      %v4632 = vshll.u32 %v4520, 16
      %v4634 = vrot.slane %v4632, 5
      %v4635 = vor.u32 %v4631, %v4634
      %v4636 = vrot.slane %v4635, 4
      %v4638 = vshll.u32 %v4521, 16
      %v4640 = vrot.slane %v4638, 5
      %v4641 = vsel %vm542, %v4636, %v4640
      %v4642 = vshrl.u32 %v4521, 16
      %v4644 = vrot.slane %v4642, 4
      %v4645 = vor.u32 %v4644, %v4640
      %v4646 = vrot.slane %v4645, 4
      %v4648 = vshll.u32 %v4522, 16
      %v4650 = vrot.slane %v4648, 5
      %v4651 = vsel %vm542, %v4646, %v4650
      %v4653 = vshrl.u32 %v4523, 16
      %v4655 = vrot.slane %v4653, 4
      %v4656 = vshll.u32 %v4523, 16
      %v4658 = vrot.slane %v4656, 5
      %v4659 = vor.u32 %v4655, %v4658
      %v4660 = vrot.slane %v4659, 4
      %v4662 = vshll.u32 %v4524, 16
      %v4664 = vrot.slane %v4662, 5
      %v4665 = vsel %vm542, %v4660, %v4664
      %v4666 = vshrl.u32 %v4524, 16
      %v4668 = vrot.slane %v4666, 4
      %v4669 = vor.u32 %v4668, %v4664
      %v4670 = vrot.slane %v4669, 4
      %v4672 = vshll.u32 %v4525, 16
      %v4674 = vrot.slane %v4672, 5
      %v4675 = vsel %vm542, %v4670, %v4674
      %v4677 = vshrl.u32 %v4526, 16
      %v4679 = vrot.slane %v4677, 4
      %v4680 = vshll.u32 %v4526, 16
      %v4682 = vrot.slane %v4680, 5
      %v4683 = vor.u32 %v4679, %v4682
      %v4684 = vrot.slane %v4683, 4
      %v4686 = vshll.u32 %v4527, 16
      %v4688 = vrot.slane %v4686, 5
      %v4689 = vsel %vm542, %v4684, %v4688
      %v4690 = vshrl.u32 %v4527, 16
      %v4692 = vrot.slane %v4690, 4
      %v4693 = vor.u32 %v4692, %v4688
      %v4694 = vrot.slane %v4693, 4
      %v4696 = vshll.u32 %v4528, 16
      %v4698 = vrot.slane %v4696, 5
      %v4699 = vsel %vm542, %v4694, %v4698
      %v4701 = vshrl.u32 %v4529, 16
      %v4703 = vrot.slane %v4701, 4
      %v4704 = vshll.u32 %v4529, 16
      %v4706 = vrot.slane %v4704, 5
      %v4707 = vor.u32 %v4703, %v4706
      %v4708 = vrot.slane %v4707, 4
      %v4710 = vshll.u32 %v4530, 16
      %v4712 = vrot.slane %v4710, 5
      %v4713 = vsel %vm542, %v4708, %v4712
      %v4714 = vshrl.u32 %v4530, 16
      %v4716 = vrot.slane %v4714, 4
      %v4717 = vor.u32 %v4716, %v4712
      %v4718 = vrot.slane %v4717, 4
      %v4720 = vshll.u32 %v4531, 16
      %v4722 = vrot.slane %v4720, 5
      %v4723 = vsel %vm542, %v4718, %v4722
      %s4724 = scalar_lea.vmem %s1, 1792
      %v4725 = vld [vmem:[%s4724] sm:$0xff]
      %v4726 = vld [vmem:[%s4724 + $0x8] sm:$0xff]
      %v4727 = vld [vmem:[%s4724 + $0x10] sm:$0xff]
      %v4728 = vld [vmem:[%s4724 + $0x18] sm:$0xff]
      %v4729 = vld [vmem:[%s4724 + $0x20] sm:$0xff]
      %v4730 = vld [vmem:[%s4724 + $0x28] sm:$0xff]
      %v4731 = vld [vmem:[%s4724 + $0x30] sm:$0xff]
      %v4732 = vld [vmem:[%s4724 + $0x38] sm:$0xff]
      %v4733 = vld [vmem:[%s4724 + $0x40] sm:$0xff]
      %v4734 = vld [vmem:[%s4724 + $0x48] sm:$0xff]
      %v4735 = vld [vmem:[%s4724 + $0x50] sm:$0xff]
      %v4736 = vld [vmem:[%s4724 + $0x58] sm:$0xff]
      %v4737 = vld [vmem:[%s4724 + $0x60] sm:$0xff]
      %v4738 = vld [vmem:[%s4724 + $0x68] sm:$0xff]
      %v4739 = vld [vmem:[%s4724 + $0x70] sm:$0xff]
      %v4740 = vld [vmem:[%s4724 + $0x78] sm:$0xff]
      %v4741 = vld [vmem:[%s4724 + $0x80] sm:$0xff]
      %v4742 = vld [vmem:[%s4724 + $0x88] sm:$0xff]
      %v4743 = vld [vmem:[%s4724 + $0x90] sm:$0xff]
      %v4744 = vld [vmem:[%s4724 + $0x98] sm:$0xff]
      %v4745 = vld [vmem:[%s4724 + $0xa0] sm:$0xff]
      %v4746 = vld [vmem:[%s4724 + $0xa8] sm:$0xff]
      %v4747 = vld [vmem:[%s4724 + $0xb0] sm:$0xff]
      %v4748 = vld [vmem:[%s4724 + $0xb8] sm:$0xff]
      %v4749 = vld [vmem:[%s4724 + $0xc0] sm:$0xff]
      %v4750 = vld [vmem:[%s4724 + $0xc8] sm:$0xff]
      %v4751 = vld [vmem:[%s4724 + $0xd0] sm:$0xff]
      %v4752 = vld [vmem:[%s4724 + $0xd8] sm:$0xff]
      %v4753 = vld [vmem:[%s4724 + $0xe0] sm:$0xff]
      %v4754 = vld [vmem:[%s4724 + $0xe8] sm:$0xff]
      %v4755 = vld [vmem:[%s4724 + $0xf0] sm:$0xff]
      %v4756 = vld [vmem:[%s4724 + $0xf8] sm:$0xff]
      %v4757 = vunpack.c.l.b16 %v4545
      %v4758 = vunpack.c.h.b16 %v4545
      %v4759 = vunpack.c.l.b16 %v4555
      %v4760 = vunpack.c.h.b16 %v4555
      %v4761 = vunpack.c.l.b16 %v4569
      %v4762 = vunpack.c.h.b16 %v4569
      %v4763 = vunpack.c.l.b16 %v4579
      %v4764 = vunpack.c.h.b16 %v4579
      %v4765 = vunpack.c.l.b16 %v4593
      %v4766 = vunpack.c.h.b16 %v4593
      %v4767 = vunpack.c.l.b16 %v4603
      %v4768 = vunpack.c.h.b16 %v4603
      %v4769 = vunpack.c.l.b16 %v4617
      %v4770 = vunpack.c.h.b16 %v4617
      %v4771 = vunpack.c.l.b16 %v4627
      %v4772 = vunpack.c.h.b16 %v4627
      %v4773 = vunpack.c.l.b16 %v4641
      %v4774 = vunpack.c.h.b16 %v4641
      %v4775 = vunpack.c.l.b16 %v4651
      %v4776 = vunpack.c.h.b16 %v4651
      %v4777 = vunpack.c.l.b16 %v4665
      %v4778 = vunpack.c.h.b16 %v4665
      %v4779 = vunpack.c.l.b16 %v4675
      %v4780 = vunpack.c.h.b16 %v4675
      %v4781 = vunpack.c.l.b16 %v4689
      %v4782 = vunpack.c.h.b16 %v4689
      %v4783 = vunpack.c.l.b16 %v4699
      %v4784 = vunpack.c.h.b16 %v4699
      %v4785 = vunpack.c.l.b16 %v4713
      %v4786 = vunpack.c.h.b16 %v4713
      %v4787 = vunpack.c.l.b16 %v4723
      %v4788 = vunpack.c.h.b16 %v4723
      %v4789 = vpack.c.b16 %v4759, %v4757
      %v4790 = vpack.c.b16 %v4760, %v4758
      %v4791 = vpack.c.b16 %v4763, %v4761
      %v4792 = vpack.c.b16 %v4764, %v4762
      %v4793 = vpack.c.b16 %v4767, %v4765
      %v4794 = vpack.c.b16 %v4768, %v4766
      %v4795 = vpack.c.b16 %v4771, %v4769
      %v4796 = vpack.c.b16 %v4772, %v4770
      %v4797 = vpack.c.b16 %v4775, %v4773
      %v4798 = vpack.c.b16 %v4776, %v4774
      %v4799 = vpack.c.b16 %v4779, %v4777
      %v4800 = vpack.c.b16 %v4780, %v4778
      %v4801 = vpack.c.b16 %v4783, %v4781
      %v4802 = vpack.c.b16 %v4784, %v4782
      %v4803 = vpack.c.b16 %v4787, %v4785
      %v4804 = vpack.c.b16 %v4788, %v4786
      %v4853 = vunpack.c.l.b16 %v4725
      %v4854 = vunpack.c.h.b16 %v4725
      %v4855 = vunpack.c.l.b16 %v4726
      %v4856 = vunpack.c.h.b16 %v4726
      %v4857 = vunpack.c.l.b16 %v4727
      %v4858 = vunpack.c.h.b16 %v4727
      %v4859 = vunpack.c.l.b16 %v4728
      %v4860 = vunpack.c.h.b16 %v4728
      %v4861 = vunpack.c.l.b16 %v4729
      %v4862 = vunpack.c.h.b16 %v4729
      %v4863 = vunpack.c.l.b16 %v4730
      %v4864 = vunpack.c.h.b16 %v4730
      %v4865 = vunpack.c.l.b16 %v4731
      %v4866 = vunpack.c.h.b16 %v4731
      %v4867 = vunpack.c.l.b16 %v4732
      %v4868 = vunpack.c.h.b16 %v4732
      %v4869 = vunpack.c.l.b16 %v4733
      %v4870 = vunpack.c.h.b16 %v4733
      %v4871 = vunpack.c.l.b16 %v4734
      %v4872 = vunpack.c.h.b16 %v4734
      %v4873 = vunpack.c.l.b16 %v4735
      %v4874 = vunpack.c.h.b16 %v4735
      %v4875 = vunpack.c.l.b16 %v4736
      %v4876 = vunpack.c.h.b16 %v4736
      %v4877 = vunpack.c.l.b16 %v4737
      %v4878 = vunpack.c.h.b16 %v4737
      %v4879 = vunpack.c.l.b16 %v4738
      %v4880 = vunpack.c.h.b16 %v4738
      %v4881 = vunpack.c.l.b16 %v4739
      %v4882 = vunpack.c.h.b16 %v4739
      %v4883 = vunpack.c.l.b16 %v4740
      %v4884 = vunpack.c.h.b16 %v4740
      %v4885 = vunpack.c.l.b16 %v4741
      %v4886 = vunpack.c.h.b16 %v4741
      %v4887 = vunpack.c.l.b16 %v4742
      %v4888 = vunpack.c.h.b16 %v4742
      %v4889 = vunpack.c.l.b16 %v4743
      %v4890 = vunpack.c.h.b16 %v4743
      %v4891 = vunpack.c.l.b16 %v4744
      %v4892 = vunpack.c.h.b16 %v4744
      %v4893 = vunpack.c.l.b16 %v4745
      %v4894 = vunpack.c.h.b16 %v4745
      %v4895 = vunpack.c.l.b16 %v4746
      %v4896 = vunpack.c.h.b16 %v4746
      %v4897 = vunpack.c.l.b16 %v4747
      %v4898 = vunpack.c.h.b16 %v4747
      %v4899 = vunpack.c.l.b16 %v4748
      %v4900 = vunpack.c.h.b16 %v4748
      %v4901 = vunpack.c.l.b16 %v4749
      %v4902 = vunpack.c.h.b16 %v4749
      %v4903 = vunpack.c.l.b16 %v4750
      %v4904 = vunpack.c.h.b16 %v4750
      %v4905 = vunpack.c.l.b16 %v4751
      %v4906 = vunpack.c.h.b16 %v4751
      %v4907 = vunpack.c.l.b16 %v4752
      %v4908 = vunpack.c.h.b16 %v4752
      %v4909 = vunpack.c.l.b16 %v4753
      %v4910 = vunpack.c.h.b16 %v4753
      %v4911 = vunpack.c.l.b16 %v4754
      %v4912 = vunpack.c.h.b16 %v4754
      %v4913 = vunpack.c.l.b16 %v4755
      %v4914 = vunpack.c.h.b16 %v4755
      %v4915 = vunpack.c.l.b16 %v4756
      %v4916 = vunpack.c.h.b16 %v4756
      %v4917 = vpack.c.b16 %v4855, %v4853
      %v4918 = vpack.c.b16 %v4856, %v4854
      %v4919 = vpack.c.b16 %v4859, %v4857
      %v4920 = vpack.c.b16 %v4860, %v4858
      %v4921 = vpack.c.b16 %v4863, %v4861
      %v4922 = vpack.c.b16 %v4864, %v4862
      %v4923 = vpack.c.b16 %v4867, %v4865
      %v4924 = vpack.c.b16 %v4868, %v4866
      %v4925 = vpack.c.b16 %v4871, %v4869
      %v4926 = vpack.c.b16 %v4872, %v4870
      %v4927 = vpack.c.b16 %v4875, %v4873
      %v4928 = vpack.c.b16 %v4876, %v4874
      %v4929 = vpack.c.b16 %v4879, %v4877
      %v4930 = vpack.c.b16 %v4880, %v4878
      %v4931 = vpack.c.b16 %v4883, %v4881
      %v4932 = vpack.c.b16 %v4884, %v4882
      %v4933 = vpack.c.b16 %v4887, %v4885
      %v4934 = vpack.c.b16 %v4888, %v4886
      %v4935 = vpack.c.b16 %v4891, %v4889
      %v4936 = vpack.c.b16 %v4892, %v4890
      %v4937 = vpack.c.b16 %v4895, %v4893
      %v4938 = vpack.c.b16 %v4896, %v4894
      %v4939 = vpack.c.b16 %v4899, %v4897
      %v4940 = vpack.c.b16 %v4900, %v4898
      %v4941 = vpack.c.b16 %v4903, %v4901
      %v4942 = vpack.c.b16 %v4904, %v4902
      %v4943 = vpack.c.b16 %v4907, %v4905
      %v4944 = vpack.c.b16 %v4908, %v4906
      %v4945 = vpack.c.b16 %v4911, %v4909
      %v4946 = vpack.c.b16 %v4912, %v4910
      %v4947 = vpack.c.b16 %v4915, %v4913
      %v4948 = vpack.c.b16 %v4916, %v4914
      %4981 = vmatpush.bf16.msra.mxu0 %v4931
      %4982 = vmatpush.bf16.msra.mxu0 %v4929
      %4983 = vmatpush.bf16.msra.mxu0 %v4927
      %4984 = vmatpush.bf16.msra.mxu0 %v4925
      %4985 = vmatpush.bf16.msra.mxu0 %v4923
      %4986 = vmatpush.bf16.msra.mxu0 %v4921
      %4987 = vmatpush.bf16.msra.mxu0 %v4919
      %4988 = vmatpush.bf16.msra.mxu0 %v4917
      %4989 = vmatmul.bf16.gmra.mxu0 %v4789
      %v4990 = vpop.f32.mrf.mxu0
      %v4991 = vadd.f32 0.0, %v4990
      %v4992 = vpop.f32.mrf.mxu0
      %v4993 = vadd.f32 0.0, %v4992
      %4994 = vmatmul.bf16.gmra.mxu0 %v4791
      %v4995 = vpop.f32.mrf.mxu0
      %v4996 = vadd.f32 0.0, %v4995
      %v4997 = vpop.f32.mrf.mxu0
      %v4998 = vadd.f32 0.0, %v4997
      %4999 = vmatmul.bf16.gmra.mxu0 %v4793
      %v5000 = vpop.f32.mrf.mxu0
      %v5001 = vadd.f32 0.0, %v5000
      %v5002 = vpop.f32.mrf.mxu0
      %v5003 = vadd.f32 0.0, %v5002
      %5004 = vmatmul.bf16.gmra.mxu0 %v4795
      %v5005 = vpop.f32.mrf.mxu0
      %v5006 = vadd.f32 0.0, %v5005
      %v5007 = vpop.f32.mrf.mxu0
      %v5008 = vadd.f32 0.0, %v5007
      %5009 = vmatmul.bf16.gmra.mxu0 %v4797
      %v5010 = vpop.f32.mrf.mxu0
      %v5011 = vadd.f32 0.0, %v5010
      %v5012 = vpop.f32.mrf.mxu0
      %v5013 = vadd.f32 0.0, %v5012
      %5014 = vmatmul.bf16.gmra.mxu0 %v4799
      %v5015 = vpop.f32.mrf.mxu0
      %v5016 = vadd.f32 0.0, %v5015
      %v5017 = vpop.f32.mrf.mxu0
      %v5018 = vadd.f32 0.0, %v5017
      %5019 = vmatmul.bf16.gmra.mxu0 %v4801
      %v5020 = vpop.f32.mrf.mxu0
      %v5021 = vadd.f32 0.0, %v5020
      %v5022 = vpop.f32.mrf.mxu0
      %v5023 = vadd.f32 0.0, %v5022
      %5024 = vmatmul.bf16.gmra.mxu0 %v4803
      %v5025 = vpop.f32.mrf.mxu0
      %v5026 = vadd.f32 0.0, %v5025
      %v5027 = vpop.f32.mrf.mxu0
      %v5028 = vadd.f32 0.0, %v5027
      %5029 = vdwg.mxu0
      %5030 = vmatpush.bf16.msra.mxu0 %v4947
      %5031 = vmatpush.bf16.msra.mxu0 %v4945
      %5032 = vmatpush.bf16.msra.mxu0 %v4943
      %5033 = vmatpush.bf16.msra.mxu0 %v4941
      %5034 = vmatpush.bf16.msra.mxu0 %v4939
      %5035 = vmatpush.bf16.msra.mxu0 %v4937
      %5036 = vmatpush.bf16.msra.mxu0 %v4935
      %5037 = vmatpush.bf16.msra.mxu0 %v4933
      %5038 = vmatmul.bf16.gmra.mxu0 %v4790
      %v5039 = vpop.f32.mrf.mxu0
      %v5040 = vadd.f32 %v4991, %v5039
      %v5041 = vpop.f32.mrf.mxu0
      %v5042 = vadd.f32 %v4993, %v5041
      %5043 = vmatmul.bf16.gmra.mxu0 %v4792
      %v5044 = vpop.f32.mrf.mxu0
      %v5045 = vadd.f32 %v4996, %v5044
      %v5046 = vpop.f32.mrf.mxu0
      %v5047 = vadd.f32 %v4998, %v5046
      %5048 = vmatmul.bf16.gmra.mxu0 %v4794
      %v5049 = vpop.f32.mrf.mxu0
      %v5050 = vadd.f32 %v5001, %v5049
      %v5051 = vpop.f32.mrf.mxu0
      %v5052 = vadd.f32 %v5003, %v5051
      %5053 = vmatmul.bf16.gmra.mxu0 %v4796
      %v5054 = vpop.f32.mrf.mxu0
      %v5055 = vadd.f32 %v5006, %v5054
      %v5056 = vpop.f32.mrf.mxu0
      %v5057 = vadd.f32 %v5008, %v5056
      %5058 = vmatmul.bf16.gmra.mxu0 %v4798
      %v5059 = vpop.f32.mrf.mxu0
      %v5060 = vadd.f32 %v5011, %v5059
      %v5061 = vpop.f32.mrf.mxu0
      %v5062 = vadd.f32 %v5013, %v5061
      %5063 = vmatmul.bf16.gmra.mxu0 %v4800
      %v5064 = vpop.f32.mrf.mxu0
      %v5065 = vadd.f32 %v5016, %v5064
      %v5066 = vpop.f32.mrf.mxu0
      %v5067 = vadd.f32 %v5018, %v5066
      %5068 = vmatmul.bf16.gmra.mxu0 %v4802
      %v5069 = vpop.f32.mrf.mxu0
      %v5070 = vadd.f32 %v5021, %v5069
      %v5071 = vpop.f32.mrf.mxu0
      %v5072 = vadd.f32 %v5023, %v5071
      %5073 = vmatmul.bf16.gmra.mxu0 %v4804
      %v5074 = vpop.f32.mrf.mxu0
      %v5075 = vadd.f32 %v5026, %v5074
      %v5076 = vpop.f32.mrf.mxu0
      %v5077 = vadd.f32 %v5028, %v5076
      %5078 = vdwg.mxu0
      %5079 = vmatpush.bf16.msra.mxu0 %v4932
      %5080 = vmatpush.bf16.msra.mxu0 %v4930
      %5081 = vmatpush.bf16.msra.mxu0 %v4928
      %5082 = vmatpush.bf16.msra.mxu0 %v4926
      %5083 = vmatpush.bf16.msra.mxu0 %v4924
      %5084 = vmatpush.bf16.msra.mxu0 %v4922
      %5085 = vmatpush.bf16.msra.mxu0 %v4920
      %5086 = vmatpush.bf16.msra.mxu0 %v4918
      %5087 = vmatmul.bf16.gmra.mxu0 %v4789
      %v5088 = vpop.f32.mrf.mxu0
      %v5089 = vadd.f32 0.0, %v5088
      %v5090 = vpop.f32.mrf.mxu0
      %v5091 = vadd.f32 0.0, %v5090
      %5092 = vmatmul.bf16.gmra.mxu0 %v4791
      %v5093 = vpop.f32.mrf.mxu0
      %v5094 = vadd.f32 0.0, %v5093
      %v5095 = vpop.f32.mrf.mxu0
      %v5096 = vadd.f32 0.0, %v5095
      %5097 = vmatmul.bf16.gmra.mxu0 %v4793
      %v5098 = vpop.f32.mrf.mxu0
      %v5099 = vadd.f32 0.0, %v5098
      %v5100 = vpop.f32.mrf.mxu0
      %v5101 = vadd.f32 0.0, %v5100
      %5102 = vmatmul.bf16.gmra.mxu0 %v4795
      %v5103 = vpop.f32.mrf.mxu0
      %v5104 = vadd.f32 0.0, %v5103
      %v5105 = vpop.f32.mrf.mxu0
      %v5106 = vadd.f32 0.0, %v5105
      %5107 = vmatmul.bf16.gmra.mxu0 %v4797
      %v5108 = vpop.f32.mrf.mxu0
      %v5109 = vadd.f32 0.0, %v5108
      %v5110 = vpop.f32.mrf.mxu0
      %v5111 = vadd.f32 0.0, %v5110
      %5112 = vmatmul.bf16.gmra.mxu0 %v4799
      %v5113 = vpop.f32.mrf.mxu0
      %v5114 = vadd.f32 0.0, %v5113
      %v5115 = vpop.f32.mrf.mxu0
      %v5116 = vadd.f32 0.0, %v5115
      %5117 = vmatmul.bf16.gmra.mxu0 %v4801
      %v5118 = vpop.f32.mrf.mxu0
      %v5119 = vadd.f32 0.0, %v5118
      %v5120 = vpop.f32.mrf.mxu0
      %v5121 = vadd.f32 0.0, %v5120
      %5122 = vmatmul.bf16.gmra.mxu0 %v4803
      %v5123 = vpop.f32.mrf.mxu0
      %v5124 = vadd.f32 0.0, %v5123
      %v5125 = vpop.f32.mrf.mxu0
      %v5126 = vadd.f32 0.0, %v5125
      %5127 = vdwg.mxu0
      %5128 = vmatpush.bf16.msra.mxu0 %v4948
      %5129 = vmatpush.bf16.msra.mxu0 %v4946
      %5130 = vmatpush.bf16.msra.mxu0 %v4944
      %5131 = vmatpush.bf16.msra.mxu0 %v4942
      %5132 = vmatpush.bf16.msra.mxu0 %v4940
      %5133 = vmatpush.bf16.msra.mxu0 %v4938
      %5134 = vmatpush.bf16.msra.mxu0 %v4936
      %5135 = vmatpush.bf16.msra.mxu0 %v4934
      %5136 = vmatmul.bf16.gmra.mxu0 %v4790
      %v5137 = vpop.f32.mrf.mxu0
      %v5138 = vadd.f32 %v5089, %v5137
      %v5139 = vpop.f32.mrf.mxu0
      %v5140 = vadd.f32 %v5091, %v5139
      %5141 = vmatmul.bf16.gmra.mxu0 %v4792
      %v5142 = vpop.f32.mrf.mxu0
      %v5143 = vadd.f32 %v5094, %v5142
      %v5144 = vpop.f32.mrf.mxu0
      %v5145 = vadd.f32 %v5096, %v5144
      %5146 = vmatmul.bf16.gmra.mxu0 %v4794
      %v5147 = vpop.f32.mrf.mxu0
      %v5148 = vadd.f32 %v5099, %v5147
      %v5149 = vpop.f32.mrf.mxu0
      %v5150 = vadd.f32 %v5101, %v5149
      %5151 = vmatmul.bf16.gmra.mxu0 %v4796
      %v5152 = vpop.f32.mrf.mxu0
      %v5153 = vadd.f32 %v5104, %v5152
      %v5154 = vpop.f32.mrf.mxu0
      %v5155 = vadd.f32 %v5106, %v5154
      %5156 = vmatmul.bf16.gmra.mxu0 %v4798
      %v5157 = vpop.f32.mrf.mxu0
      %v5158 = vadd.f32 %v5109, %v5157
      %v5159 = vpop.f32.mrf.mxu0
      %v5160 = vadd.f32 %v5111, %v5159
      %5161 = vmatmul.bf16.gmra.mxu0 %v4800
      %v5162 = vpop.f32.mrf.mxu0
      %v5163 = vadd.f32 %v5114, %v5162
      %v5164 = vpop.f32.mrf.mxu0
      %v5165 = vadd.f32 %v5116, %v5164
      %5166 = vmatmul.bf16.gmra.mxu0 %v4802
      %v5167 = vpop.f32.mrf.mxu0
      %v5168 = vadd.f32 %v5119, %v5167
      %v5169 = vpop.f32.mrf.mxu0
      %v5170 = vadd.f32 %v5121, %v5169
      %5171 = vmatmul.bf16.gmra.mxu0 %v4804
      %v5172 = vpop.f32.mrf.mxu0
      %v5173 = vadd.f32 %v5124, %v5172
      %v5174 = vpop.f32.mrf.mxu0
      %v5175 = vadd.f32 %v5126, %v5174
      %5176 = vdwg.mxu0
      %v5177 = vadd.f32 %v4476, %v5040
      %v5178 = vadd.f32 %v4477, %v5138
      %v5179 = vadd.f32 %v4478, %v5042
      %v5180 = vadd.f32 %v4479, %v5140
      %v5181 = vadd.f32 %v4480, %v5045
      %v5182 = vadd.f32 %v4481, %v5143
      %v5183 = vadd.f32 %v4482, %v5047
      %v5184 = vadd.f32 %v4483, %v5145
      %v5185 = vadd.f32 %v4484, %v5050
      %v5186 = vadd.f32 %v4485, %v5148
      %v5187 = vadd.f32 %v4486, %v5052
      %v5188 = vadd.f32 %v4487, %v5150
      %v5189 = vadd.f32 %v4488, %v5055
      %v5190 = vadd.f32 %v4489, %v5153
      %v5191 = vadd.f32 %v4490, %v5057
      %v5192 = vadd.f32 %v4491, %v5155
      %v5193 = vadd.f32 %v4492, %v5060
      %v5194 = vadd.f32 %v4493, %v5158
      %v5195 = vadd.f32 %v4494, %v5062
      %v5196 = vadd.f32 %v4495, %v5160
      %v5197 = vadd.f32 %v4496, %v5065
      %v5198 = vadd.f32 %v4497, %v5163
      %v5199 = vadd.f32 %v4498, %v5067
      %v5200 = vadd.f32 %v4499, %v5165
      %v5201 = vadd.f32 %v4500, %v5070
      %v5202 = vadd.f32 %v4501, %v5168
      %v5203 = vadd.f32 %v4502, %v5072
      %v5204 = vadd.f32 %v4503, %v5170
      %v5205 = vadd.f32 %v4504, %v5075
      %v5206 = vadd.f32 %v4505, %v5173
      %v5207 = vadd.f32 %v4506, %v5077
      %v5208 = vadd.f32 %v4507, %v5175
      %v5209 = vld [vmem:[%s3990] sm:$0xee]
      %v5210 = vld [vmem:[%s3990 + $0x18] sm:$0xee]
      %v5211 = vld [vmem:[%s3990 + $0x30] sm:$0xee]
      %v5212 = vld [vmem:[%s3990 + $0x48] sm:$0xee]
      %v5213 = vld [vmem:[%s3990 + $0x60] sm:$0xee]
      %v5214 = vld [vmem:[%s3990 + $0x78] sm:$0xee]
      %v5215 = vld [vmem:[%s3990 + $0x90] sm:$0xee]
      %v5216 = vld [vmem:[%s3990 + $0xa8] sm:$0xee]
      %v5241 = vrot.slane %v5209, 5
      %v5242 = vrot.slane %v5241, 4
      %v5243 = vrot.slane %v4509, 5
      %v5244 = vsel %vm1650, %v5242, %v5243
      %v5245 = vrot.slane %v5243, 4
      %v5246 = vrot.slane %v4510, 5
      %v5247 = vsel %vm1650, %v5245, %v5246
      %v5248 = vrot.slane %v5210, 5
      %v5249 = vrot.slane %v5248, 4
      %v5250 = vrot.slane %v4512, 5
      %v5251 = vsel %vm1650, %v5249, %v5250
      %v5252 = vrot.slane %v5250, 4
      %v5253 = vrot.slane %v4513, 5
      %v5254 = vsel %vm1650, %v5252, %v5253
      %v5255 = vrot.slane %v5211, 5
      %v5256 = vrot.slane %v5255, 4
      %v5257 = vrot.slane %v4515, 5
      %v5258 = vsel %vm1650, %v5256, %v5257
      %v5259 = vrot.slane %v5257, 4
      %v5260 = vrot.slane %v4516, 5
      %v5261 = vsel %vm1650, %v5259, %v5260
      %v5262 = vrot.slane %v5212, 5
      %v5263 = vrot.slane %v5262, 4
      %v5264 = vrot.slane %v4518, 5
      %v5265 = vsel %vm1650, %v5263, %v5264
      %v5266 = vrot.slane %v5264, 4
      %v5267 = vrot.slane %v4519, 5
      %v5268 = vsel %vm1650, %v5266, %v5267
      %v5269 = vrot.slane %v5213, 5
      %v5270 = vrot.slane %v5269, 4
      %v5271 = vrot.slane %v4521, 5
      %v5272 = vsel %vm1650, %v5270, %v5271
      %v5273 = vrot.slane %v5271, 4
      %v5274 = vrot.slane %v4522, 5
      %v5275 = vsel %vm1650, %v5273, %v5274
      %v5276 = vrot.slane %v5214, 5
      %v5277 = vrot.slane %v5276, 4
      %v5278 = vrot.slane %v4524, 5
      %v5279 = vsel %vm1650, %v5277, %v5278
      %v5280 = vrot.slane %v5278, 4
      %v5281 = vrot.slane %v4525, 5
      %v5282 = vsel %vm1650, %v5280, %v5281
      %v5283 = vrot.slane %v5215, 5
      %v5284 = vrot.slane %v5283, 4
      %v5285 = vrot.slane %v4527, 5
      %v5286 = vsel %vm1650, %v5284, %v5285
      %v5287 = vrot.slane %v5285, 4
      %v5288 = vrot.slane %v4528, 5
      %v5289 = vsel %vm1650, %v5287, %v5288
      %v5290 = vrot.slane %v5216, 5
      %v5291 = vrot.slane %v5290, 4
      %v5292 = vrot.slane %v4530, 5
      %v5293 = vsel %vm1650, %v5291, %v5292
      %v5294 = vrot.slane %v5292, 4
      %v5295 = vrot.slane %v4531, 5
      %v5296 = vsel %vm1650, %v5294, %v5295
      %s5297 = scalar_lea.vmem %s1, 2048
      %v5298 = vld [vmem:[%s5297] sm:$0xff]
      %v5299 = vld [vmem:[%s5297 + $0x8] sm:$0xff]
      %v5300 = vld [vmem:[%s5297 + $0x10] sm:$0xff]
      %v5301 = vld [vmem:[%s5297 + $0x18] sm:$0xff]
      %v5302 = vld [vmem:[%s5297 + $0x20] sm:$0xff]
      %v5303 = vld [vmem:[%s5297 + $0x28] sm:$0xff]
      %v5304 = vld [vmem:[%s5297 + $0x30] sm:$0xff]
      %v5305 = vld [vmem:[%s5297 + $0x38] sm:$0xff]
      %v5306 = vld [vmem:[%s5297 + $0x40] sm:$0xff]
      %v5307 = vld [vmem:[%s5297 + $0x48] sm:$0xff]
      %v5308 = vld [vmem:[%s5297 + $0x50] sm:$0xff]
      %v5309 = vld [vmem:[%s5297 + $0x58] sm:$0xff]
      %v5310 = vld [vmem:[%s5297 + $0x60] sm:$0xff]
      %v5311 = vld [vmem:[%s5297 + $0x68] sm:$0xff]
      %v5312 = vld [vmem:[%s5297 + $0x70] sm:$0xff]
      %v5313 = vld [vmem:[%s5297 + $0x78] sm:$0xff]
      %v5314 = vld [vmem:[%s5297 + $0x80] sm:$0xff]
      %v5315 = vld [vmem:[%s5297 + $0x88] sm:$0xff]
      %v5316 = vld [vmem:[%s5297 + $0x90] sm:$0xff]
      %v5317 = vld [vmem:[%s5297 + $0x98] sm:$0xff]
      %v5318 = vld [vmem:[%s5297 + $0xa0] sm:$0xff]
      %v5319 = vld [vmem:[%s5297 + $0xa8] sm:$0xff]
      %v5320 = vld [vmem:[%s5297 + $0xb0] sm:$0xff]
      %v5321 = vld [vmem:[%s5297 + $0xb8] sm:$0xff]
      %v5322 = vld [vmem:[%s5297 + $0xc0] sm:$0xff]
      %v5323 = vld [vmem:[%s5297 + $0xc8] sm:$0xff]
      %v5324 = vld [vmem:[%s5297 + $0xd0] sm:$0xff]
      %v5325 = vld [vmem:[%s5297 + $0xd8] sm:$0xff]
      %v5326 = vld [vmem:[%s5297 + $0xe0] sm:$0xff]
      %v5327 = vld [vmem:[%s5297 + $0xe8] sm:$0xff]
      %v5328 = vld [vmem:[%s5297 + $0xf0] sm:$0xff]
      %v5329 = vld [vmem:[%s5297 + $0xf8] sm:$0xff]
      %v5330 = vunpack.c.l.b16 %v5244
      %v5331 = vunpack.c.h.b16 %v5244
      %v5332 = vunpack.c.l.b16 %v5247
      %v5333 = vunpack.c.h.b16 %v5247
      %v5334 = vunpack.c.l.b16 %v5251
      %v5335 = vunpack.c.h.b16 %v5251
      %v5336 = vunpack.c.l.b16 %v5254
      %v5337 = vunpack.c.h.b16 %v5254
      %v5338 = vunpack.c.l.b16 %v5258
      %v5339 = vunpack.c.h.b16 %v5258
      %v5340 = vunpack.c.l.b16 %v5261
      %v5341 = vunpack.c.h.b16 %v5261
      %v5342 = vunpack.c.l.b16 %v5265
      %v5343 = vunpack.c.h.b16 %v5265
      %v5344 = vunpack.c.l.b16 %v5268
      %v5345 = vunpack.c.h.b16 %v5268
      %v5346 = vunpack.c.l.b16 %v5272
      %v5347 = vunpack.c.h.b16 %v5272
      %v5348 = vunpack.c.l.b16 %v5275
      %v5349 = vunpack.c.h.b16 %v5275
      %v5350 = vunpack.c.l.b16 %v5279
      %v5351 = vunpack.c.h.b16 %v5279
      %v5352 = vunpack.c.l.b16 %v5282
      %v5353 = vunpack.c.h.b16 %v5282
      %v5354 = vunpack.c.l.b16 %v5286
      %v5355 = vunpack.c.h.b16 %v5286
      %v5356 = vunpack.c.l.b16 %v5289
      %v5357 = vunpack.c.h.b16 %v5289
      %v5358 = vunpack.c.l.b16 %v5293
      %v5359 = vunpack.c.h.b16 %v5293
      %v5360 = vunpack.c.l.b16 %v5296
      %v5361 = vunpack.c.h.b16 %v5296
      %v5362 = vpack.c.b16 %v5332, %v5330
      %v5363 = vpack.c.b16 %v5333, %v5331
      %v5364 = vpack.c.b16 %v5336, %v5334
      %v5365 = vpack.c.b16 %v5337, %v5335
      %v5366 = vpack.c.b16 %v5340, %v5338
      %v5367 = vpack.c.b16 %v5341, %v5339
      %v5368 = vpack.c.b16 %v5344, %v5342
      %v5369 = vpack.c.b16 %v5345, %v5343
      %v5370 = vpack.c.b16 %v5348, %v5346
      %v5371 = vpack.c.b16 %v5349, %v5347
      %v5372 = vpack.c.b16 %v5352, %v5350
      %v5373 = vpack.c.b16 %v5353, %v5351
      %v5374 = vpack.c.b16 %v5356, %v5354
      %v5375 = vpack.c.b16 %v5357, %v5355
      %v5376 = vpack.c.b16 %v5360, %v5358
      %v5377 = vpack.c.b16 %v5361, %v5359
      %v5426 = vunpack.c.l.b16 %v5298
      %v5427 = vunpack.c.h.b16 %v5298
      %v5428 = vunpack.c.l.b16 %v5299
      %v5429 = vunpack.c.h.b16 %v5299
      %v5430 = vunpack.c.l.b16 %v5300
      %v5431 = vunpack.c.h.b16 %v5300
      %v5432 = vunpack.c.l.b16 %v5301
      %v5433 = vunpack.c.h.b16 %v5301
      %v5434 = vunpack.c.l.b16 %v5302
      %v5435 = vunpack.c.h.b16 %v5302
      %v5436 = vunpack.c.l.b16 %v5303
      %v5437 = vunpack.c.h.b16 %v5303
      %v5438 = vunpack.c.l.b16 %v5304
      %v5439 = vunpack.c.h.b16 %v5304
      %v5440 = vunpack.c.l.b16 %v5305
      %v5441 = vunpack.c.h.b16 %v5305
      %v5442 = vunpack.c.l.b16 %v5306
      %v5443 = vunpack.c.h.b16 %v5306
      %v5444 = vunpack.c.l.b16 %v5307
      %v5445 = vunpack.c.h.b16 %v5307
      %v5446 = vunpack.c.l.b16 %v5308
      %v5447 = vunpack.c.h.b16 %v5308
      %v5448 = vunpack.c.l.b16 %v5309
      %v5449 = vunpack.c.h.b16 %v5309
      %v5450 = vunpack.c.l.b16 %v5310
      %v5451 = vunpack.c.h.b16 %v5310
      %v5452 = vunpack.c.l.b16 %v5311
      %v5453 = vunpack.c.h.b16 %v5311
      %v5454 = vunpack.c.l.b16 %v5312
      %v5455 = vunpack.c.h.b16 %v5312
      %v5456 = vunpack.c.l.b16 %v5313
      %v5457 = vunpack.c.h.b16 %v5313
      %v5458 = vunpack.c.l.b16 %v5314
      %v5459 = vunpack.c.h.b16 %v5314
      %v5460 = vunpack.c.l.b16 %v5315
      %v5461 = vunpack.c.h.b16 %v5315
      %v5462 = vunpack.c.l.b16 %v5316
      %v5463 = vunpack.c.h.b16 %v5316
      %v5464 = vunpack.c.l.b16 %v5317
      %v5465 = vunpack.c.h.b16 %v5317
      %v5466 = vunpack.c.l.b16 %v5318
      %v5467 = vunpack.c.h.b16 %v5318
      %v5468 = vunpack.c.l.b16 %v5319
      %v5469 = vunpack.c.h.b16 %v5319
      %v5470 = vunpack.c.l.b16 %v5320
      %v5471 = vunpack.c.h.b16 %v5320
      %v5472 = vunpack.c.l.b16 %v5321
      %v5473 = vunpack.c.h.b16 %v5321
      %v5474 = vunpack.c.l.b16 %v5322
      %v5475 = vunpack.c.h.b16 %v5322
      %v5476 = vunpack.c.l.b16 %v5323
      %v5477 = vunpack.c.h.b16 %v5323
      %v5478 = vunpack.c.l.b16 %v5324
      %v5479 = vunpack.c.h.b16 %v5324
      %v5480 = vunpack.c.l.b16 %v5325
      %v5481 = vunpack.c.h.b16 %v5325
      %v5482 = vunpack.c.l.b16 %v5326
      %v5483 = vunpack.c.h.b16 %v5326
      %v5484 = vunpack.c.l.b16 %v5327
      %v5485 = vunpack.c.h.b16 %v5327
      %v5486 = vunpack.c.l.b16 %v5328
      %v5487 = vunpack.c.h.b16 %v5328
      %v5488 = vunpack.c.l.b16 %v5329
      %v5489 = vunpack.c.h.b16 %v5329
      %v5490 = vpack.c.b16 %v5428, %v5426
      %v5491 = vpack.c.b16 %v5429, %v5427
      %v5492 = vpack.c.b16 %v5432, %v5430
      %v5493 = vpack.c.b16 %v5433, %v5431
      %v5494 = vpack.c.b16 %v5436, %v5434
      %v5495 = vpack.c.b16 %v5437, %v5435
      %v5496 = vpack.c.b16 %v5440, %v5438
      %v5497 = vpack.c.b16 %v5441, %v5439
      %v5498 = vpack.c.b16 %v5444, %v5442
      %v5499 = vpack.c.b16 %v5445, %v5443
      %v5500 = vpack.c.b16 %v5448, %v5446
      %v5501 = vpack.c.b16 %v5449, %v5447
      %v5502 = vpack.c.b16 %v5452, %v5450
      %v5503 = vpack.c.b16 %v5453, %v5451
      %v5504 = vpack.c.b16 %v5456, %v5454
      %v5505 = vpack.c.b16 %v5457, %v5455
      %v5506 = vpack.c.b16 %v5460, %v5458
      %v5507 = vpack.c.b16 %v5461, %v5459
      %v5508 = vpack.c.b16 %v5464, %v5462
      %v5509 = vpack.c.b16 %v5465, %v5463
      %v5510 = vpack.c.b16 %v5468, %v5466
      %v5511 = vpack.c.b16 %v5469, %v5467
      %v5512 = vpack.c.b16 %v5472, %v5470
      %v5513 = vpack.c.b16 %v5473, %v5471
      %v5514 = vpack.c.b16 %v5476, %v5474
      %v5515 = vpack.c.b16 %v5477, %v5475
      %v5516 = vpack.c.b16 %v5480, %v5478
      %v5517 = vpack.c.b16 %v5481, %v5479
      %v5518 = vpack.c.b16 %v5484, %v5482
      %v5519 = vpack.c.b16 %v5485, %v5483
      %v5520 = vpack.c.b16 %v5488, %v5486
      %v5521 = vpack.c.b16 %v5489, %v5487
      %5554 = vmatpush.bf16.msra.mxu0 %v5504
      %5555 = vmatpush.bf16.msra.mxu0 %v5502
      %5556 = vmatpush.bf16.msra.mxu0 %v5500
      %5557 = vmatpush.bf16.msra.mxu0 %v5498
      %5558 = vmatpush.bf16.msra.mxu0 %v5496
      %5559 = vmatpush.bf16.msra.mxu0 %v5494
      %5560 = vmatpush.bf16.msra.mxu0 %v5492
      %5561 = vmatpush.bf16.msra.mxu0 %v5490
      %5562 = vmatmul.bf16.gmra.mxu0 %v5362
      %v5563 = vpop.f32.mrf.mxu0
      %v5564 = vadd.f32 0.0, %v5563
      %v5565 = vpop.f32.mrf.mxu0
      %v5566 = vadd.f32 0.0, %v5565
      %5567 = vmatmul.bf16.gmra.mxu0 %v5364
      %v5568 = vpop.f32.mrf.mxu0
      %v5569 = vadd.f32 0.0, %v5568
      %v5570 = vpop.f32.mrf.mxu0
      %v5571 = vadd.f32 0.0, %v5570
      %5572 = vmatmul.bf16.gmra.mxu0 %v5366
      %v5573 = vpop.f32.mrf.mxu0
      %v5574 = vadd.f32 0.0, %v5573
      %v5575 = vpop.f32.mrf.mxu0
      %v5576 = vadd.f32 0.0, %v5575
      %5577 = vmatmul.bf16.gmra.mxu0 %v5368
      %v5578 = vpop.f32.mrf.mxu0
      %v5579 = vadd.f32 0.0, %v5578
      %v5580 = vpop.f32.mrf.mxu0
      %v5581 = vadd.f32 0.0, %v5580
      %5582 = vmatmul.bf16.gmra.mxu0 %v5370
      %v5583 = vpop.f32.mrf.mxu0
      %v5584 = vadd.f32 0.0, %v5583
      %v5585 = vpop.f32.mrf.mxu0
      %v5586 = vadd.f32 0.0, %v5585
      %5587 = vmatmul.bf16.gmra.mxu0 %v5372
      %v5588 = vpop.f32.mrf.mxu0
      %v5589 = vadd.f32 0.0, %v5588
      %v5590 = vpop.f32.mrf.mxu0
      %v5591 = vadd.f32 0.0, %v5590
      %5592 = vmatmul.bf16.gmra.mxu0 %v5374
      %v5593 = vpop.f32.mrf.mxu0
      %v5594 = vadd.f32 0.0, %v5593
      %v5595 = vpop.f32.mrf.mxu0
      %v5596 = vadd.f32 0.0, %v5595
      %5597 = vmatmul.bf16.gmra.mxu0 %v5376
      %v5598 = vpop.f32.mrf.mxu0
      %v5599 = vadd.f32 0.0, %v5598
      %v5600 = vpop.f32.mrf.mxu0
      %v5601 = vadd.f32 0.0, %v5600
      %5602 = vdwg.mxu0
      %5603 = vmatpush.bf16.msra.mxu0 %v5520
      %5604 = vmatpush.bf16.msra.mxu0 %v5518
      %5605 = vmatpush.bf16.msra.mxu0 %v5516
      %5606 = vmatpush.bf16.msra.mxu0 %v5514
      %5607 = vmatpush.bf16.msra.mxu0 %v5512
      %5608 = vmatpush.bf16.msra.mxu0 %v5510
      %5609 = vmatpush.bf16.msra.mxu0 %v5508
      %5610 = vmatpush.bf16.msra.mxu0 %v5506
      %5611 = vmatmul.bf16.gmra.mxu0 %v5363
      %v5612 = vpop.f32.mrf.mxu0
      %v5613 = vadd.f32 %v5564, %v5612
      %v5614 = vpop.f32.mrf.mxu0
      %v5615 = vadd.f32 %v5566, %v5614
      %5616 = vmatmul.bf16.gmra.mxu0 %v5365
      %v5617 = vpop.f32.mrf.mxu0
      %v5618 = vadd.f32 %v5569, %v5617
      %v5619 = vpop.f32.mrf.mxu0
      %v5620 = vadd.f32 %v5571, %v5619
      %5621 = vmatmul.bf16.gmra.mxu0 %v5367
      %v5622 = vpop.f32.mrf.mxu0
      %v5623 = vadd.f32 %v5574, %v5622
      %v5624 = vpop.f32.mrf.mxu0
      %v5625 = vadd.f32 %v5576, %v5624
      %5626 = vmatmul.bf16.gmra.mxu0 %v5369
      %v5627 = vpop.f32.mrf.mxu0
      %v5628 = vadd.f32 %v5579, %v5627
      %v5629 = vpop.f32.mrf.mxu0
      %v5630 = vadd.f32 %v5581, %v5629
      %5631 = vmatmul.bf16.gmra.mxu0 %v5371
      %v5632 = vpop.f32.mrf.mxu0
      %v5633 = vadd.f32 %v5584, %v5632
      %v5634 = vpop.f32.mrf.mxu0
      %v5635 = vadd.f32 %v5586, %v5634
      %5636 = vmatmul.bf16.gmra.mxu0 %v5373
      %v5637 = vpop.f32.mrf.mxu0
      %v5638 = vadd.f32 %v5589, %v5637
      %v5639 = vpop.f32.mrf.mxu0
      %v5640 = vadd.f32 %v5591, %v5639
      %5641 = vmatmul.bf16.gmra.mxu0 %v5375
      %v5642 = vpop.f32.mrf.mxu0
      %v5643 = vadd.f32 %v5594, %v5642
      %v5644 = vpop.f32.mrf.mxu0
      %v5645 = vadd.f32 %v5596, %v5644
      %5646 = vmatmul.bf16.gmra.mxu0 %v5377
      %v5647 = vpop.f32.mrf.mxu0
      %v5648 = vadd.f32 %v5599, %v5647
      %v5649 = vpop.f32.mrf.mxu0
      %v5650 = vadd.f32 %v5601, %v5649
      %5651 = vdwg.mxu0
      %5652 = vmatpush.bf16.msra.mxu0 %v5505
      %5653 = vmatpush.bf16.msra.mxu0 %v5503
      %5654 = vmatpush.bf16.msra.mxu0 %v5501
      %5655 = vmatpush.bf16.msra.mxu0 %v5499
      %5656 = vmatpush.bf16.msra.mxu0 %v5497
      %5657 = vmatpush.bf16.msra.mxu0 %v5495
      %5658 = vmatpush.bf16.msra.mxu0 %v5493
      %5659 = vmatpush.bf16.msra.mxu0 %v5491
      %5660 = vmatmul.bf16.gmra.mxu0 %v5362
      %v5661 = vpop.f32.mrf.mxu0
      %v5662 = vadd.f32 0.0, %v5661
      %v5663 = vpop.f32.mrf.mxu0
      %v5664 = vadd.f32 0.0, %v5663
      %5665 = vmatmul.bf16.gmra.mxu0 %v5364
      %v5666 = vpop.f32.mrf.mxu0
      %v5667 = vadd.f32 0.0, %v5666
      %v5668 = vpop.f32.mrf.mxu0
      %v5669 = vadd.f32 0.0, %v5668
      %5670 = vmatmul.bf16.gmra.mxu0 %v5366
      %v5671 = vpop.f32.mrf.mxu0
      %v5672 = vadd.f32 0.0, %v5671
      %v5673 = vpop.f32.mrf.mxu0
      %v5674 = vadd.f32 0.0, %v5673
      %5675 = vmatmul.bf16.gmra.mxu0 %v5368
      %v5676 = vpop.f32.mrf.mxu0
      %v5677 = vadd.f32 0.0, %v5676
      %v5678 = vpop.f32.mrf.mxu0
      %v5679 = vadd.f32 0.0, %v5678
      %5680 = vmatmul.bf16.gmra.mxu0 %v5370
      %v5681 = vpop.f32.mrf.mxu0
      %v5682 = vadd.f32 0.0, %v5681
      %v5683 = vpop.f32.mrf.mxu0
      %v5684 = vadd.f32 0.0, %v5683
      %5685 = vmatmul.bf16.gmra.mxu0 %v5372
      %v5686 = vpop.f32.mrf.mxu0
      %v5687 = vadd.f32 0.0, %v5686
      %v5688 = vpop.f32.mrf.mxu0
      %v5689 = vadd.f32 0.0, %v5688
      %5690 = vmatmul.bf16.gmra.mxu0 %v5374
      %v5691 = vpop.f32.mrf.mxu0
      %v5692 = vadd.f32 0.0, %v5691
      %v5693 = vpop.f32.mrf.mxu0
      %v5694 = vadd.f32 0.0, %v5693
      %5695 = vmatmul.bf16.gmra.mxu0 %v5376
      %v5696 = vpop.f32.mrf.mxu0
      %v5697 = vadd.f32 0.0, %v5696
      %v5698 = vpop.f32.mrf.mxu0
      %v5699 = vadd.f32 0.0, %v5698
      %5700 = vdwg.mxu0
      %5701 = vmatpush.bf16.msra.mxu0 %v5521
      %5702 = vmatpush.bf16.msra.mxu0 %v5519
      %5703 = vmatpush.bf16.msra.mxu0 %v5517
      %5704 = vmatpush.bf16.msra.mxu0 %v5515
      %5705 = vmatpush.bf16.msra.mxu0 %v5513
      %5706 = vmatpush.bf16.msra.mxu0 %v5511
      %5707 = vmatpush.bf16.msra.mxu0 %v5509
      %5708 = vmatpush.bf16.msra.mxu0 %v5507
      %5709 = vmatmul.bf16.gmra.mxu0 %v5363
      %v5710 = vpop.f32.mrf.mxu0
      %v5711 = vadd.f32 %v5662, %v5710
      %v5712 = vpop.f32.mrf.mxu0
      %v5713 = vadd.f32 %v5664, %v5712
      %5714 = vmatmul.bf16.gmra.mxu0 %v5365
      %v5715 = vpop.f32.mrf.mxu0
      %v5716 = vadd.f32 %v5667, %v5715
      %v5717 = vpop.f32.mrf.mxu0
      %v5718 = vadd.f32 %v5669, %v5717
      %5719 = vmatmul.bf16.gmra.mxu0 %v5367
      %v5720 = vpop.f32.mrf.mxu0
      %v5721 = vadd.f32 %v5672, %v5720
      %v5722 = vpop.f32.mrf.mxu0
      %v5723 = vadd.f32 %v5674, %v5722
      %5724 = vmatmul.bf16.gmra.mxu0 %v5369
      %v5725 = vpop.f32.mrf.mxu0
      %v5726 = vadd.f32 %v5677, %v5725
      %v5727 = vpop.f32.mrf.mxu0
      %v5728 = vadd.f32 %v5679, %v5727
      %5729 = vmatmul.bf16.gmra.mxu0 %v5371
      %v5730 = vpop.f32.mrf.mxu0
      %v5731 = vadd.f32 %v5682, %v5730
      %v5732 = vpop.f32.mrf.mxu0
      %v5733 = vadd.f32 %v5684, %v5732
      %5734 = vmatmul.bf16.gmra.mxu0 %v5373
      %v5735 = vpop.f32.mrf.mxu0
      %v5736 = vadd.f32 %v5687, %v5735
      %v5737 = vpop.f32.mrf.mxu0
      %v5738 = vadd.f32 %v5689, %v5737
      %5739 = vmatmul.bf16.gmra.mxu0 %v5375
      %v5740 = vpop.f32.mrf.mxu0
      %v5741 = vadd.f32 %v5692, %v5740
      %v5742 = vpop.f32.mrf.mxu0
      %v5743 = vadd.f32 %v5694, %v5742
      %5744 = vmatmul.bf16.gmra.mxu0 %v5377
      %v5745 = vpop.f32.mrf.mxu0
      %v5746 = vadd.f32 %v5697, %v5745
      %v5747 = vpop.f32.mrf.mxu0
      %v5748 = vadd.f32 %v5699, %v5747
      %5749 = vdwg.mxu0
      %v5750 = vadd.f32 %v5177, %v5613
      %v5751 = vadd.f32 %v5178, %v5711
      %v5752 = vadd.f32 %v5179, %v5615
      %v5753 = vadd.f32 %v5180, %v5713
      %v5754 = vadd.f32 %v5181, %v5618
      %v5755 = vadd.f32 %v5182, %v5716
      %v5756 = vadd.f32 %v5183, %v5620
      %v5757 = vadd.f32 %v5184, %v5718
      %v5758 = vadd.f32 %v5185, %v5623
      %v5759 = vadd.f32 %v5186, %v5721
      %v5760 = vadd.f32 %v5187, %v5625
      %v5761 = vadd.f32 %v5188, %v5723
      %v5762 = vadd.f32 %v5189, %v5628
      %v5763 = vadd.f32 %v5190, %v5726
      %v5764 = vadd.f32 %v5191, %v5630
      %v5765 = vadd.f32 %v5192, %v5728
      %v5766 = vadd.f32 %v5193, %v5633
      %v5767 = vadd.f32 %v5194, %v5731
      %v5768 = vadd.f32 %v5195, %v5635
      %v5769 = vadd.f32 %v5196, %v5733
      %v5770 = vadd.f32 %v5197, %v5638
      %v5771 = vadd.f32 %v5198, %v5736
      %v5772 = vadd.f32 %v5199, %v5640
      %v5773 = vadd.f32 %v5200, %v5738
      %v5774 = vadd.f32 %v5201, %v5643
      %v5775 = vadd.f32 %v5202, %v5741
      %v5776 = vadd.f32 %v5203, %v5645
      %v5777 = vadd.f32 %v5204, %v5743
      %v5778 = vadd.f32 %v5205, %v5648
      %v5779 = vadd.f32 %v5206, %v5746
      %v5780 = vadd.f32 %v5207, %v5650
      %v5781 = vadd.f32 %v5208, %v5748
      %v5782 = vld [vmem:[%s2] sm:$0x3]
      %v5784 = vperm.slane %v5782, 0
      %v5785 = vperm.slane %v5782, 1
      %v5788 = vadd.f32 %v5750, %v5784
      %v5789 = vadd.f32 %v5751, %v5785
      %v5790 = vadd.f32 %v5752, %v5784
      %v5791 = vadd.f32 %v5753, %v5785
      %v5792 = vadd.f32 %v5754, %v5784
      %v5793 = vadd.f32 %v5755, %v5785
      %v5794 = vadd.f32 %v5756, %v5784
      %v5795 = vadd.f32 %v5757, %v5785
      %v5796 = vadd.f32 %v5758, %v5784
      %v5797 = vadd.f32 %v5759, %v5785
      %v5798 = vadd.f32 %v5760, %v5784
      %v5799 = vadd.f32 %v5761, %v5785
      %v5800 = vadd.f32 %v5762, %v5784
      %v5801 = vadd.f32 %v5763, %v5785
      %v5802 = vadd.f32 %v5764, %v5784
      %v5803 = vadd.f32 %v5765, %v5785
      %v5804 = vadd.f32 %v5766, %v5784
      %v5805 = vadd.f32 %v5767, %v5785
      %v5806 = vadd.f32 %v5768, %v5784
      %v5807 = vadd.f32 %v5769, %v5785
      %v5808 = vadd.f32 %v5770, %v5784
      %v5809 = vadd.f32 %v5771, %v5785
      %v5810 = vadd.f32 %v5772, %v5784
      %v5811 = vadd.f32 %v5773, %v5785
      %v5812 = vadd.f32 %v5774, %v5784
      %v5813 = vadd.f32 %v5775, %v5785
      %v5814 = vadd.f32 %v5776, %v5784
      %v5815 = vadd.f32 %v5777, %v5785
      %v5816 = vadd.f32 %v5778, %v5784
      %v5817 = vadd.f32 %v5779, %v5785
      %v5818 = vadd.f32 %v5780, %v5784
      %v5819 = vadd.f32 %v5781, %v5785
      %5820 = vst [vmem:[%s194] sm:$0xff] %v5788
      %5821 = vst [vmem:[%s194 + $0x8] sm:$0xff] %v5789
      %5822 = vst [vmem:[%s194 + $0x10] sm:$0xff] %v5790
      %5823 = vst [vmem:[%s194 + $0x18] sm:$0xff] %v5791
      %5824 = vst [vmem:[%s194 + $0x20] sm:$0xff] %v5792
      %5825 = vst [vmem:[%s194 + $0x28] sm:$0xff] %v5793
      %5826 = vst [vmem:[%s194 + $0x30] sm:$0xff] %v5794
      %5827 = vst [vmem:[%s194 + $0x38] sm:$0xff] %v5795
      %5828 = vst [vmem:[%s194 + $0x40] sm:$0xff] %v5796
      %5829 = vst [vmem:[%s194 + $0x48] sm:$0xff] %v5797
      %5830 = vst [vmem:[%s194 + $0x50] sm:$0xff] %v5798
      %5831 = vst [vmem:[%s194 + $0x58] sm:$0xff] %v5799
      %5832 = vst [vmem:[%s194 + $0x60] sm:$0xff] %v5800
      %5833 = vst [vmem:[%s194 + $0x68] sm:$0xff] %v5801
      %5834 = vst [vmem:[%s194 + $0x70] sm:$0xff] %v5802
      %5835 = vst [vmem:[%s194 + $0x78] sm:$0xff] %v5803
      %5836 = vst [vmem:[%s194 + $0x80] sm:$0xff] %v5804
      %5837 = vst [vmem:[%s194 + $0x88] sm:$0xff] %v5805
      %5838 = vst [vmem:[%s194 + $0x90] sm:$0xff] %v5806
      %5839 = vst [vmem:[%s194 + $0x98] sm:$0xff] %v5807
      %5840 = vst [vmem:[%s194 + $0xa0] sm:$0xff] %v5808
      %5841 = vst [vmem:[%s194 + $0xa8] sm:$0xff] %v5809
      %5842 = vst [vmem:[%s194 + $0xb0] sm:$0xff] %v5810
      %5843 = vst [vmem:[%s194 + $0xb8] sm:$0xff] %v5811
      %5844 = vst [vmem:[%s194 + $0xc0] sm:$0xff] %v5812
      %5845 = vst [vmem:[%s194 + $0xc8] sm:$0xff] %v5813
      %5846 = vst [vmem:[%s194 + $0xd0] sm:$0xff] %v5814
      %5847 = vst [vmem:[%s194 + $0xd8] sm:$0xff] %v5815
      %5848 = vst [vmem:[%s194 + $0xe0] sm:$0xff] %v5816
      %5849 = vst [vmem:[%s194 + $0xe8] sm:$0xff] %v5817
      %5850 = vst [vmem:[%s194 + $0xf0] sm:$0xff] %v5818
      %5851 = vst [vmem:[%s194 + $0xf8] sm:$0xff] %v5819
      %s5852 = smul.u32 8, %s19
      %p5853 = scmp.lt.s32.totalorder %s18, 1
      %s5854 = scalar_select %p5853, %s18, 1
      %p5855 = scmp.lt.s32.totalorder %s5852, 7
      %s5856 = scalar_select %p5855, %s5852, 7
      %s5857 = smul.addr %s5856, 4
      %s5858 = smul.addr %s5854, 32
      %s5859 = sadd.s32 %s5857, %s5858
      %s5860 = smul.addr %s5859, 8
      %s5861 = scalar_lea.vmem %s3, %s5860
      // Predicated region
      $region37: #{decoder_map_forward.3} parent=31 // pred_check
        %p5862 = pneg %p114
      $region38: #{decoder_map_forward.3} parent=31 // pred_check_branch
        %5864 = sbr.rel (%p5862) target = $region40
      $region39: #{decoder_map_forward.3} parent=31 // pred_region
        %s5865 = smul.u32 8, %s19
      $region40: #{decoder_map_forward.3} parent=31 // pred_fallthru
        _
    $region32: #{decoder_map_forward.3} parent=5 // pred_fallthru
      _
    %p5866 = scmp.le.s32.totalorder 2, %s9
    // Predicated region
    $region41: #{decoder_map_forward.3} parent=5 // pred_check
      %p5867 = pneg %p5866
    $region42: #{decoder_map_forward.3} parent=5 // pred_check_branch
      %5869 = sbr.rel (%p5867) target = $region44
    $region43: #{decoder_map_forward.3} parent=5 // pred_region
      %s5870 = ssub.s32 %s9, 2
      // Predicated region
      $region45: #{decoder_map_forward.3} parent=43 // pred_check
        %p5871 = pneg %p120
      $region46: #{decoder_map_forward.3} parent=43 // pred_check_branch
        %5873 = sbr.rel (%p5871) target = $region48
      $region47: #{decoder_map_forward.3} parent=43 // pred_region
        %s5874 = smul.u32 8, %s21
        %p5875 = scmp.lt.s32.totalorder %s20, 1
        %s5876 = scalar_select %p5875, %s20, 1
        %p5877 = scmp.lt.s32.totalorder %s5874, 7
        %s5878 = scalar_select %p5877, %s5874, 7
        %s5879 = smul.addr %s5878, 4
        %s5880 = smul.addr %s5876, 32
        %s5881 = sadd.s32 %s5879, %s5880
        %s5882 = smul.addr %s5881, 8
        %s5883 = scalar_lea.vmem %s3, %s5882
      $region48: #{decoder_map_forward.3} parent=43 // pred_fallthru
        _
    $region44: #{decoder_map_forward.3} parent=5 // pred_fallthru
      _
  $region6: #{decoder_map_forward.3} parent=0 // loop_footer
    %s13 = sadd.s32 1, %s9
  $region7: #{decoder_map_forward.3} parent=0 // loop_footer_branch
    %8 = sbr.rel target = $region3
  $region8: #{decoder_map_forward.3} parent=0 // loop_exit
    _

</llo_original>
